<compile_context>
chip_gen: v5e
topology: v5e:2x2
jax: 0.10.0
libtpu: 0.0.40
codegen_flags: <defaults>
</compile_context>

<pallas_src>
import functools

import jax
import jax.numpy as jnp
import numpy as np
from jax.experimental import pallas as pl
from jax.experimental.pallas import tpu as pltpu


# Row indices inside the packed (16, P) parameter slab.
_W1_R0, _W1_R1, _B1, _B2, _B3, _W4, _B4, _B6, _B7, _W5G, _W5L, _B5 = range(12)
_VEC_ROWS = 16  # padded to a multiple of 8 sublanes


def qnet_kernel(T, xv_ref, ws_ref, mats_ref, vec_ref, o_ref):
    TB, N, _ = ws_ref.shape
    P = mats_ref.shape[-1]
    R = TB * N
    f32 = jnp.float32

    # ---- packed parameters ------------------------------------------------
    w2t = mats_ref[0]                       # (P, P)  theta2 (pre-transposed)
    w3t = mats_ref[1]                       # (P, P)  theta3
    w6t = mats_ref[2]                       # (P, P)  theta6
    w7t = mats_ref[3]                       # (P, P)  theta7
    vec = vec_ref[...]                      # (16, P)
    w1r0 = vec[_W1_R0:_W1_R0 + 1]           # (1, P)
    w1r1 = vec[_W1_R1:_W1_R1 + 1]
    b1 = vec[_B1:_B1 + 1]
    b2 = vec[_B2:_B2 + 1]
    b3 = vec[_B3:_B3 + 1]
    w4r = vec[_W4:_W4 + 1]
    b4 = vec[_B4:_B4 + 1]
    b6 = vec[_B6:_B6 + 1]
    b7 = vec[_B7:_B7 + 1]
    w5g = vec[_W5G:_W5G + 1]                # theta5 weight, global half
    w5l = vec[_W5L:_W5L + 1]                # theta5 weight, local half
    b5 = vec[_B5:_B5 + 1, 0:1]              # (1, 1)

    # ---- inputs (batch folded into the row dimension) ----------------------
    x = xv_ref[...].reshape(R, 2)           # (R, 2)
    W = ws_ref[...]                         # (TB, N, N)
    conn = jnp.where(W > 0, 1.0, 0.0).astype(f32)

    # theta1 via two VPU broadcast-FMAs (K=2 matmul would be a degenerate MXU pass).
    s1 = x[:, 0:1] * w1r0 + x[:, 1:2] * w1r1 + b1                       # (R, P)

    # theta4 / theta3 edge term: per-edge lift then sum over source node i.
    Wf = W.reshape(R, N)                                                # rows = (graph, i)
    lifted = jnp.maximum(
        Wf[:, :, None] * w4r.reshape(1, 1, P) + b4.reshape(1, 1, P), 0.0
    )                                                                   # (R, N_j, P)
    s3_2 = jnp.sum(lifted.reshape(TB, N, N, P), axis=1).reshape(R, P)   # sum over i
    s3 = jnp.dot(s3_2, w3t, preferred_element_type=f32) + b3
    s13 = s1 + s3                                                       # hoisted out of loop

    # T message-passing rounds; first round peeled (mu_0 == 0 => s2 == b2).
    mu = jnp.maximum(s13 + b2, 0.0)                                     # (R, P)
    for _ in range(T - 1):
        agg = jnp.einsum(
            "bij,bjp->bip", conn, mu.reshape(TB, N, P),
            preferred_element_type=f32).reshape(R, P)
        s2 = jnp.dot(agg, w2t, preferred_element_type=f32) + b2
        mu = jnp.maximum(s13 + s2, 0.0)

    # Per-graph summation / broadcast matrix S[t, k] = 1 iff row k is in graph t.
    kk = jax.lax.broadcasted_iota(jnp.int32, (TB, R), 1)
    tt = jax.lax.broadcasted_iota(jnp.int32, (TB, R), 0)
    S = jnp.where((kk >= tt * N) & (kk < tt * N + N), 1.0, 0.0).astype(f32)

    # ---- prediction head ----------------------------------------------------
    mu_sum = jnp.dot(S, mu, preferred_element_type=f32)                 # (TB, P)
    g = jnp.dot(mu_sum, w6t, preferred_element_type=f32) + b6           # (TB, P)
    gr = jnp.maximum(g, 0.0)
    locr = jnp.maximum(jnp.dot(mu, w7t, preferred_element_type=f32) + b7, 0.0)

    # theta5 = global half + local half, contracted over P so the result is a
    # lane-dense (1, R) row (unmasked vector stores).
    dn = (((1,), (1,)), ((), ()))           # contract last dims: A @ B^T
    q_g = jax.lax.dot_general(w5g, gr, dn, preferred_element_type=f32)  # (1, TB)
    q_g = jnp.dot(q_g, S, preferred_element_type=f32)                   # (1, R)
    q_l = jax.lax.dot_general(w5l, locr, dn, preferred_element_type=f32)  # (1, R)
    o_ref[...] = (q_g + q_l + b5).astype(o_ref.dtype)


def _pack_params(params):
    """Pack all small weights/biases into one (4,P,P) slab and one (16,P) slab."""
    P = params["w1"].shape[0]
    mats = jnp.stack(
        [params["w2"].T, params["w3"].T, params["w6"].T, params["w7"].T],
        axis=0).astype(jnp.float32)                                     # (4, P, P)
    w1t = params["w1"].T                                                # (2, P)
    rows = jnp.zeros((_VEC_ROWS, P), jnp.float32)
    rows = rows.at[_W1_R0].set(w1t[0])
    rows = rows.at[_W1_R1].set(w1t[1])
    rows = rows.at[_B1].set(params["b1"])
    rows = rows.at[_B2].set(params["b2"])
    rows = rows.at[_B3].set(params["b3"])
    rows = rows.at[_W4].set(params["w4"][:, 0])
    rows = rows.at[_B4].set(params["b4"])
    rows = rows.at[_B6].set(params["b6"])
    rows = rows.at[_B7].set(params["b7"])
    rows = rows.at[_W5G].set(params["w5"][0, :P])
    rows = rows.at[_W5L].set(params["w5"][0, P:])
    rows = rows.at[_B5].set(jnp.full((P,), params["b5"][0]))
    return mats, rows


def qnet_forward(xv, Ws, params, T=4, batch_tile=16):
    """Pallas forward.  `batch_tile` graphs are processed per grid step
    (batch_tile*N rows of MXU work per dense layer; use >=16 on v6e/v7x, 8 on v5e)."""
    B, N, node_dim = xv.shape
    TB = batch_tile
    G = (B + TB - 1) // TB
    B_pad = G * TB
    if B_pad != B:
        pad = B_pad - B
        xv = jnp.pad(xv, ((0, pad), (0, 0), (0, 0)))
        Ws = jnp.pad(Ws, ((0, pad), (0, 0), (0, 0)))
    xv = xv.astype(jnp.float32)
    Ws = Ws.astype(jnp.float32)
    mats, vec = _pack_params(params)
    R = TB * N

    out = pl.pallas_call(
        functools.partial(qnet_kernel, T),
        out_shape=jax.ShapeDtypeStruct((G, 1, R), jnp.float32),
        grid=(G,),
        in_specs=[
            pl.BlockSpec((TB, N, node_dim), lambda g: (g, 0, 0)),
            pl.BlockSpec((TB, N, N), lambda g: (g, 0, 0)),
            pl.BlockSpec(mats.shape, lambda g: (0, 0, 0)),
            pl.BlockSpec(vec.shape, lambda g: (0, 0)),
        ],
        out_specs=pl.BlockSpec((None, 1, R), lambda g: (g, 0, 0)),
        compiler_params=pltpu.CompilerParams(
            dimension_semantics=("parallel",)),
    )(xv, Ws, mats, vec)
    return out.reshape(B_pad, N)[:B]                                    # (B, N)


def qnet_reference(xv, Ws, params, T=4):
    """Pure-JAX mirror of the PyTorch forward, for correctness checking."""
    B, N, _ = xv.shape
    P = params["w1"].shape[0]
    conn = jnp.where(Ws > 0, 1.0, 0.0)
    mu = jnp.zeros((B, N, P), jnp.float32)
    s1 = xv @ params["w1"].T + params["b1"]
    s3_1 = jax.nn.relu(Ws[..., None] * params["w4"].reshape(1, 1, 1, P) + params["b4"])
    s3_2 = jnp.sum(s3_1, axis=1)
    s3 = s3_2 @ params["w3"].T + params["b3"]
    for _ in range(T):
        s2 = (conn @ mu) @ params["w2"].T + params["b2"]
        mu = jax.nn.relu(s1 + s2 + s3)
    g = jnp.sum(mu, axis=1, keepdims=True) @ params["w6"].T + params["b6"]
    g = jnp.broadcast_to(g, (B, N, P))
    loc = mu @ params["w7"].T + params["b7"]
    out = jax.nn.relu(jnp.concatenate([g, loc], axis=2))
    return (out @ params["w5"].T + params["b5"])[..., 0]


def init_params(key, emb_dim):
    """Deterministic init matching nn.Linear default (uniform +/- 1/sqrt(fan_in))."""
    P = emb_dim
    shapes = {
        "w1": (P, 2), "b1": (P,),
        "w2": (P, P), "b2": (P,),
        "w3": (P, P), "b3": (P,),
        "w4": (P, 1), "b4": (P,),
        "w5": (1, 2 * P), "b5": (1,),
        "w6": (P, P), "b6": (P,),
        "w7": (P, P), "b7": (P,),
    }
    fan_in = {"w1": 2, "b1": 2, "w2": P, "b2": P, "w3": P, "b3": P,
              "w4": 1, "b4": 1, "w5": 2 * P, "b5": 2 * P,
              "w6": P, "b6": P, "w7": P, "b7": P}
    names = sorted(shapes)
    keys = jax.random.split(key, len(names))
    params = {}
    for k, name in zip(keys, names):
        bound = 1.0 / float(np.sqrt(fan_in[name]))
        params[name] = jax.random.uniform(
            k, shapes[name], jnp.float32, minval=-bound, maxval=bound)
    return params


if __name__ == "__main__":
    key = jax.random.PRNGKey(0)
    k_xv, k_ws, k_mask, k_par = jax.random.split(key, 4)

    # B=20 deliberately not a multiple of the batch tile to exercise padding;
    # grid = 2 steps so both v7x TensorCores get work.
    B, N, emb_dim, T = 20, 16, 32, 4
    # nr_extra_layers_1 == 0 in the module, so theta1_extras is empty (nothing to do).
    xv = jax.random.normal(k_xv, (B, N, 2), jnp.float32)
    Ws = jnp.abs(jax.random.normal(k_ws, (B, N, N), jnp.float32))
    mask = jax.random.bernoulli(k_mask, 0.5, (B, N, N)).astype(jnp.float32)
    Ws = Ws * mask   # some zero edges so conn_matrices is nontrivial

    params = init_params(k_par, emb_dim)

    out = qnet_forward(xv, Ws, params, T=T, batch_tile=16)
    out = jax.block_until_ready(out)

    ref = qnet_reference(xv, Ws, params, T=T)
    np.testing.assert_allclose(np.asarray(out), np.asarray(ref), rtol=1e-3, atol=1e-3)
    print("KERNEL_OK")
</pallas_src>

<mosaic_0001>
module attributes {stable_mosaic.version = 11 : i64} {
  func.func @qnet_kernel(%arg0: i32, %arg1: memref<16x16x2xf32, #tpu.memory_space<vmem>>, %arg2: memref<16x16x16xf32, #tpu.memory_space<vmem>>, %arg3: memref<4x32x32xf32, #tpu.memory_space<vmem>>, %arg4: memref<16x32xf32, #tpu.memory_space<vmem>>, %arg5: memref<1x1x256xf32, #tpu.memory_space<vmem>>) attributes {dimension_semantics = [#tpu.dimension_semantics<parallel>], iteration_bounds = array<i64: 2>, scalar_prefetch = 0 : i64, scratch_operands = 0 : i64, tpu.core_type = #tpu.core_type<tc>, window_params = [{transform_indices = @transform_0, window_bounds = array<i64: 16, 16, 2>}, {transform_indices = @transform_1, window_bounds = array<i64: 16, 16, 16>}, {pipeline_mode = #tpu.pipeline_mode<synchronous>, transform_indices = @transform_2, window_bounds = array<i64: 4, 32, 32>}, {pipeline_mode = #tpu.pipeline_mode<synchronous>, transform_indices = @transform_3, window_bounds = array<i64: 16, 32>}, {transform_indices = @transform_4, window_bounds = array<i64: 1, 1, 256>}]} {
    %c0 = arith.constant 0 : index
    %c0_0 = arith.constant 0 : index
    %c0_1 = arith.constant 0 : index
    %0 = vector.load %arg3[%c0, %c0_0, %c0_1] : memref<4x32x32xf32, #tpu.memory_space<vmem>>, vector<1x32x32xf32>
    %1 = vector.shape_cast %0 : vector<1x32x32xf32> to vector<32x32xf32>
    %c1 = arith.constant 1 : index
    %c0_2 = arith.constant 0 : index
    %c0_3 = arith.constant 0 : index
    %2 = vector.load %arg3[%c1, %c0_2, %c0_3] : memref<4x32x32xf32, #tpu.memory_space<vmem>>, vector<1x32x32xf32>
    %3 = vector.shape_cast %2 : vector<1x32x32xf32> to vector<32x32xf32>
    %c2 = arith.constant 2 : index
    %c0_4 = arith.constant 0 : index
    %c0_5 = arith.constant 0 : index
    %4 = vector.load %arg3[%c2, %c0_4, %c0_5] : memref<4x32x32xf32, #tpu.memory_space<vmem>>, vector<1x32x32xf32>
    %5 = vector.shape_cast %4 : vector<1x32x32xf32> to vector<32x32xf32>
    %c3 = arith.constant 3 : index
    %c0_6 = arith.constant 0 : index
    %c0_7 = arith.constant 0 : index
    %6 = vector.load %arg3[%c3, %c0_6, %c0_7] : memref<4x32x32xf32, #tpu.memory_space<vmem>>, vector<1x32x32xf32>
    %7 = vector.shape_cast %6 : vector<1x32x32xf32> to vector<32x32xf32>
    %c0_8 = arith.constant 0 : index
    %c0_9 = arith.constant 0 : index
    %8 = vector.load %arg4[%c0_8, %c0_9] : memref<16x32xf32, #tpu.memory_space<vmem>>, vector<16x32xf32>
    %9 = vector.extract_strided_slice %8 {offsets = [0, 0], sizes = [1, 32], strides = [1, 1]} : vector<16x32xf32> to vector<1x32xf32>
    %10 = vector.extract_strided_slice %8 {offsets = [1, 0], sizes = [1, 32], strides = [1, 1]} : vector<16x32xf32> to vector<1x32xf32>
    %11 = vector.extract_strided_slice %8 {offsets = [2, 0], sizes = [1, 32], strides = [1, 1]} : vector<16x32xf32> to vector<1x32xf32>
    %12 = vector.extract_strided_slice %8 {offsets = [3, 0], sizes = [1, 32], strides = [1, 1]} : vector<16x32xf32> to vector<1x32xf32>
    %13 = vector.extract_strided_slice %8 {offsets = [4, 0], sizes = [1, 32], strides = [1, 1]} : vector<16x32xf32> to vector<1x32xf32>
    %14 = vector.extract_strided_slice %8 {offsets = [5, 0], sizes = [1, 32], strides = [1, 1]} : vector<16x32xf32> to vector<1x32xf32>
    %15 = vector.extract_strided_slice %8 {offsets = [6, 0], sizes = [1, 32], strides = [1, 1]} : vector<16x32xf32> to vector<1x32xf32>
    %16 = vector.extract_strided_slice %8 {offsets = [7, 0], sizes = [1, 32], strides = [1, 1]} : vector<16x32xf32> to vector<1x32xf32>
    %17 = vector.extract_strided_slice %8 {offsets = [8, 0], sizes = [1, 32], strides = [1, 1]} : vector<16x32xf32> to vector<1x32xf32>
    %18 = vector.extract_strided_slice %8 {offsets = [9, 0], sizes = [1, 32], strides = [1, 1]} : vector<16x32xf32> to vector<1x32xf32>
    %19 = vector.extract_strided_slice %8 {offsets = [10, 0], sizes = [1, 32], strides = [1, 1]} : vector<16x32xf32> to vector<1x32xf32>
    %20 = vector.extract_strided_slice %8 {offsets = [11, 0], sizes = [1, 1], strides = [1, 1]} : vector<16x32xf32> to vector<1x1xf32>
    %c0_10 = arith.constant 0 : index
    %c0_11 = arith.constant 0 : index
    %c0_12 = arith.constant 0 : index
    %21 = vector.load %arg1[%c0_10, %c0_11, %c0_12] : memref<16x16x2xf32, #tpu.memory_space<vmem>>, vector<16x16x2xf32>
    %22 = vector.shape_cast %21 : vector<16x16x2xf32> to vector<256x2xf32>
    %c0_13 = arith.constant 0 : index
    %c0_14 = arith.constant 0 : index
    %c0_15 = arith.constant 0 : index
    %23 = vector.load %arg2[%c0_13, %c0_14, %c0_15] : memref<16x16x16xf32, #tpu.memory_space<vmem>>, vector<16x16x16xf32>
    %cst = arith.constant 0.000000e+00 : f32
    %24 = vector.broadcast %cst : f32 to vector<16x16x16xf32>
    %25 = arith.cmpf ogt, %23, %24 : vector<16x16x16xf32>
    %cst_16 = arith.constant 1.000000e+00 : f32
    %cst_17 = arith.constant 0.000000e+00 : f32
    %26 = vector.broadcast %cst_16 : f32 to vector<16x16x16xf32>
    %27 = vector.broadcast %cst_17 : f32 to vector<16x16x16xf32>
    %28 = arith.select %25, %26, %27 : vector<16x16x16xi1>, vector<16x16x16xf32>
    %29 = vector.extract_strided_slice %22 {offsets = [0, 0], sizes = [256, 1], strides = [1, 1]} : vector<256x2xf32> to vector<256x1xf32>
    %30 = vector.broadcast %29 : vector<256x1xf32> to vector<256x32xf32>
    %31 = vector.broadcast %9 : vector<1x32xf32> to vector<256x32xf32>
    %32 = arith.mulf %30, %31 : vector<256x32xf32>
    %33 = vector.extract_strided_slice %22 {offsets = [0, 1], sizes = [256, 1], strides = [1, 1]} : vector<256x2xf32> to vector<256x1xf32>
    %34 = vector.broadcast %33 : vector<256x1xf32> to vector<256x32xf32>
    %35 = vector.broadcast %10 : vector<1x32xf32> to vector<256x32xf32>
    %36 = arith.mulf %34, %35 : vector<256x32xf32>
    %37 = arith.addf %32, %36 : vector<256x32xf32>
    %38 = vector.broadcast %11 : vector<1x32xf32> to vector<256x32xf32>
    %39 = arith.addf %37, %38 : vector<256x32xf32>
    %40 = vector.shape_cast %23 : vector<16x16x16xf32> to vector<256x16xf32>
    %41 = vector.shape_cast %40 : vector<256x16xf32> to vector<256x16x1xf32>
    %42 = vector.shape_cast %14 : vector<1x32xf32> to vector<1x1x32xf32>
    %43 = vector.broadcast %41 : vector<256x16x1xf32> to vector<256x16x32xf32>
    %44 = vector.broadcast %42 : vector<1x1x32xf32> to vector<256x16x32xf32>
    %45 = arith.mulf %43, %44 : vector<256x16x32xf32>
    %46 = vector.shape_cast %15 : vector<1x32xf32> to vector<1x1x32xf32>
    %47 = vector.broadcast %46 : vector<1x1x32xf32> to vector<256x16x32xf32>
    %48 = arith.addf %45, %47 : vector<256x16x32xf32>
    %cst_18 = arith.constant 0.000000e+00 : f32
    %49 = vector.broadcast %cst_18 : f32 to vector<256x16x32xf32>
    %50 = arith.maximumf %48, %49 : vector<256x16x32xf32>
    %51 = vector.shape_cast %50 : vector<256x16x32xf32> to vector<16x16x16x32xf32>
    %cst_19 = arith.constant dense<0.000000e+00> : vector<16x16x32xf32>
    %52 = vector.multi_reduction <add>, %51, %cst_19 [1] : vector<16x16x16x32xf32> to vector<16x16x32xf32>
    %53 = vector.shape_cast %52 : vector<16x16x32xf32> to vector<256x32xf32>
    %cst_20 = arith.constant dense<0.000000e+00> : vector<256x32xf32>
    %54 = tpu.matmul %53, %3, %cst_20 {dimension_numbers = #tpu.dot_dimension_numbers<[1], [0], [0], [1], [0, 0, 1, 1], [], []>} : vector<256x32xf32>, vector<32x32xf32>, vector<256x32xf32> -> vector<256x32xf32>
    %55 = vector.broadcast %13 : vector<1x32xf32> to vector<256x32xf32>
    %56 = arith.addf %54, %55 : vector<256x32xf32>
    %57 = arith.addf %39, %56 : vector<256x32xf32>
    %58 = vector.broadcast %12 : vector<1x32xf32> to vector<256x32xf32>
    %59 = arith.addf %57, %58 : vector<256x32xf32>
    %cst_21 = arith.constant 0.000000e+00 : f32
    %60 = vector.broadcast %cst_21 : f32 to vector<256x32xf32>
    %61 = arith.maximumf %59, %60 : vector<256x32xf32>
    %62 = vector.shape_cast %61 : vector<256x32xf32> to vector<16x16x32xf32>
    "tpu.trace_start"() <{level = 10 : i32, message = "bij,bjp->bip"}> : () -> ()
    %cst_22 = arith.constant dense<0.000000e+00> : vector<16x16x32xf32>
    %63 = tpu.matmul %28, %62, %cst_22 {dimension_numbers = #tpu.dot_dimension_numbers<[2], [1], [1], [2], [0, 0, 0, 1, 1, 2], [0], [0]>} : vector<16x16x16xf32>, vector<16x16x32xf32>, vector<16x16x32xf32> -> vector<16x16x32xf32>
    "tpu.trace_stop"() : () -> ()
    %64 = vector.shape_cast %63 : vector<16x16x32xf32> to vector<256x32xf32>
    %cst_23 = arith.constant dense<0.000000e+00> : vector<256x32xf32>
    %65 = tpu.matmul %64, %1, %cst_23 {dimension_numbers = #tpu.dot_dimension_numbers<[1], [0], [0], [1], [0, 0, 1, 1], [], []>} : vector<256x32xf32>, vector<32x32xf32>, vector<256x32xf32> -> vector<256x32xf32>
    %66 = vector.broadcast %12 : vector<1x32xf32> to vector<256x32xf32>
    %67 = arith.addf %65, %66 : vector<256x32xf32>
    %68 = arith.addf %57, %67 : vector<256x32xf32>
    %cst_24 = arith.constant 0.000000e+00 : f32
    %69 = vector.broadcast %cst_24 : f32 to vector<256x32xf32>
    %70 = arith.maximumf %68, %69 : vector<256x32xf32>
    %71 = vector.shape_cast %70 : vector<256x32xf32> to vector<16x16x32xf32>
    "tpu.trace_start"() <{level = 10 : i32, message = "bij,bjp->bip"}> : () -> ()
    %cst_25 = arith.constant dense<0.000000e+00> : vector<16x16x32xf32>
    %72 = tpu.matmul %28, %71, %cst_25 {dimension_numbers = #tpu.dot_dimension_numbers<[2], [1], [1], [2], [0, 0, 0, 1, 1, 2], [0], [0]>} : vector<16x16x16xf32>, vector<16x16x32xf32>, vector<16x16x32xf32> -> vector<16x16x32xf32>
    "tpu.trace_stop"() : () -> ()
    %73 = vector.shape_cast %72 : vector<16x16x32xf32> to vector<256x32xf32>
    %cst_26 = arith.constant dense<0.000000e+00> : vector<256x32xf32>
    %74 = tpu.matmul %73, %1, %cst_26 {dimension_numbers = #tpu.dot_dimension_numbers<[1], [0], [0], [1], [0, 0, 1, 1], [], []>} : vector<256x32xf32>, vector<32x32xf32>, vector<256x32xf32> -> vector<256x32xf32>
    %75 = vector.broadcast %12 : vector<1x32xf32> to vector<256x32xf32>
    %76 = arith.addf %74, %75 : vector<256x32xf32>
    %77 = arith.addf %57, %76 : vector<256x32xf32>
    %cst_27 = arith.constant 0.000000e+00 : f32
    %78 = vector.broadcast %cst_27 : f32 to vector<256x32xf32>
    %79 = arith.maximumf %77, %78 : vector<256x32xf32>
    %80 = vector.shape_cast %79 : vector<256x32xf32> to vector<16x16x32xf32>
    "tpu.trace_start"() <{level = 10 : i32, message = "bij,bjp->bip"}> : () -> ()
    %cst_28 = arith.constant dense<0.000000e+00> : vector<16x16x32xf32>
    %81 = tpu.matmul %28, %80, %cst_28 {dimension_numbers = #tpu.dot_dimension_numbers<[2], [1], [1], [2], [0, 0, 0, 1, 1, 2], [0], [0]>} : vector<16x16x16xf32>, vector<16x16x32xf32>, vector<16x16x32xf32> -> vector<16x16x32xf32>
    "tpu.trace_stop"() : () -> ()
    %82 = vector.shape_cast %81 : vector<16x16x32xf32> to vector<256x32xf32>
    %cst_29 = arith.constant dense<0.000000e+00> : vector<256x32xf32>
    %83 = tpu.matmul %82, %1, %cst_29 {dimension_numbers = #tpu.dot_dimension_numbers<[1], [0], [0], [1], [0, 0, 1, 1], [], []>} : vector<256x32xf32>, vector<32x32xf32>, vector<256x32xf32> -> vector<256x32xf32>
    %84 = vector.broadcast %12 : vector<1x32xf32> to vector<256x32xf32>
    %85 = arith.addf %83, %84 : vector<256x32xf32>
    %86 = arith.addf %57, %85 : vector<256x32xf32>
    %cst_30 = arith.constant 0.000000e+00 : f32
    %87 = vector.broadcast %cst_30 : f32 to vector<256x32xf32>
    %88 = arith.maximumf %86, %87 : vector<256x32xf32>
    %89 = tpu.iota {dimensions = array<i32: 1>} : vector<16x256xi32>
    %90 = tpu.iota {dimensions = array<i32: 0>} : vector<16x256xi32>
    %c16_i32 = arith.constant 16 : i32
    %91 = vector.broadcast %c16_i32 : i32 to vector<16x256xi32>
    %92 = arith.muli %90, %91 : vector<16x256xi32>
    %93 = arith.cmpi sge, %89, %92 : vector<16x256xi32>
    %c16_i32_31 = arith.constant 16 : i32
    %94 = vector.broadcast %c16_i32_31 : i32 to vector<16x256xi32>
    %95 = arith.muli %90, %94 : vector<16x256xi32>
    %c16_i32_32 = arith.constant 16 : i32
    %96 = vector.broadcast %c16_i32_32 : i32 to vector<16x256xi32>
    %97 = arith.addi %95, %96 : vector<16x256xi32>
    %98 = arith.cmpi slt, %89, %97 : vector<16x256xi32>
    %99 = arith.andi %93, %98 : vector<16x256xi1>
    %cst_33 = arith.constant 1.000000e+00 : f32
    %cst_34 = arith.constant 0.000000e+00 : f32
    %100 = vector.broadcast %cst_33 : f32 to vector<16x256xf32>
    %101 = vector.broadcast %cst_34 : f32 to vector<16x256xf32>
    %102 = arith.select %99, %100, %101 : vector<16x256xi1>, vector<16x256xf32>
    %cst_35 = arith.constant dense<0.000000e+00> : vector<16x32xf32>
    %103 = tpu.matmul %102, %88, %cst_35 {dimension_numbers = #tpu.dot_dimension_numbers<[1], [0], [0], [1], [0, 0, 1, 1], [], []>} : vector<16x256xf32>, vector<256x32xf32>, vector<16x32xf32> -> vector<16x32xf32>
    %cst_36 = arith.constant dense<0.000000e+00> : vector<16x32xf32>
    %104 = tpu.matmul %103, %5, %cst_36 {dimension_numbers = #tpu.dot_dimension_numbers<[1], [0], [0], [1], [0, 0, 1, 1], [], []>} : vector<16x32xf32>, vector<32x32xf32>, vector<16x32xf32> -> vector<16x32xf32>
    %105 = vector.broadcast %16 : vector<1x32xf32> to vector<16x32xf32>
    %106 = arith.addf %104, %105 : vector<16x32xf32>
    %cst_37 = arith.constant 0.000000e+00 : f32
    %107 = vector.broadcast %cst_37 : f32 to vector<16x32xf32>
    %108 = arith.maximumf %106, %107 : vector<16x32xf32>
    %cst_38 = arith.constant dense<0.000000e+00> : vector<256x32xf32>
    %109 = tpu.matmul %88, %7, %cst_38 {dimension_numbers = #tpu.dot_dimension_numbers<[1], [0], [0], [1], [0, 0, 1, 1], [], []>} : vector<256x32xf32>, vector<32x32xf32>, vector<256x32xf32> -> vector<256x32xf32>
    %110 = vector.broadcast %17 : vector<1x32xf32> to vector<256x32xf32>
    %111 = arith.addf %109, %110 : vector<256x32xf32>
    %cst_39 = arith.constant 0.000000e+00 : f32
    %112 = vector.broadcast %cst_39 : f32 to vector<256x32xf32>
    %113 = arith.maximumf %111, %112 : vector<256x32xf32>
    %cst_40 = arith.constant dense<0.000000e+00> : vector<1x16xf32>
    %114 = tpu.matmul %18, %108, %cst_40 {dimension_numbers = #tpu.dot_dimension_numbers<[1], [1], [0], [0], [0, 0, 1, 0], [], []>} : vector<1x32xf32>, vector<16x32xf32>, vector<1x16xf32> -> vector<1x16xf32>
    %cst_41 = arith.constant dense<0.000000e+00> : vector<1x256xf32>
    %115 = tpu.matmul %114, %102, %cst_41 {dimension_numbers = #tpu.dot_dimension_numbers<[1], [0], [0], [1], [0, 0, 1, 1], [], []>} : vector<1x16xf32>, vector<16x256xf32>, vector<1x256xf32> -> vector<1x256xf32>
    %cst_42 = arith.constant dense<0.000000e+00> : vector<1x256xf32>
    %116 = tpu.matmul %19, %113, %cst_42 {dimension_numbers = #tpu.dot_dimension_numbers<[1], [1], [0], [0], [0, 0, 1, 0], [], []>} : vector<1x32xf32>, vector<256x32xf32>, vector<1x256xf32> -> vector<1x256xf32>
    %117 = arith.addf %115, %116 : vector<1x256xf32>
    %118 = vector.broadcast %20 : vector<1x1xf32> to vector<1x256xf32>
    %119 = arith.addf %117, %118 : vector<1x256xf32>
    %c0_43 = arith.constant 0 : index
    %c0_44 = arith.constant 0 : index
    %c0_45 = arith.constant 0 : index
    %120 = vector.load %arg5[%c0_43, %c0_44, %c0_45] : memref<1x1x256xf32, #tpu.memory_space<vmem>>, vector<1x1x256xf32>
    %121 = vector.shape_cast %120 : vector<1x1x256xf32> to vector<1x256xf32>
    %122 = vector.shape_cast %119 : vector<1x256xf32> to vector<1x1x256xf32>
    tpu.vector_store %arg5[%c0_43, %c0_44, %c0_45], %122 {strides = array<i32>} : memref<1x1x256xf32, #tpu.memory_space<vmem>>, vector<1x1x256xf32>,
    return
  }
  func.func @transform_0(%arg0: i32) -> (i32, i32, i32) {
    %c0_i32 = arith.constant 0 : i32
    %c0_i32_0 = arith.constant 0 : i32
    %c0_i32_1 = arith.constant 0 : i32
    return %arg0, %c0_i32, %c0_i32_0 : i32, i32, i32
  }
  func.func @transform_1(%arg0: i32) -> (i32, i32, i32) {
    %c0_i32 = arith.constant 0 : i32
    %c0_i32_0 = arith.constant 0 : i32
    %c0_i32_1 = arith.constant 0 : i32
    return %arg0, %c0_i32, %c0_i32_0 : i32, i32, i32
  }
  func.func @transform_2(%arg0: i32) -> (i32, i32, i32) {
    %c0_i32 = arith.constant 0 : i32
    %c0_i32_0 = arith.constant 0 : i32
    %c0_i32_1 = arith.constant 0 : i32
    %c0_i32_2 = arith.constant 0 : i32
    return %c0_i32, %c0_i32_0, %c0_i32_1 : i32, i32, i32
  }
  func.func @transform_3(%arg0: i32) -> (i32, i32) {
    %c0_i32 = arith.constant 0 : i32
    %c0_i32_0 = arith.constant 0 : i32
    %c0_i32_1 = arith.constant 0 : i32
    return %c0_i32, %c0_i32_0 : i32, i32
  }
  func.func @transform_4(%arg0: i32) -> (i32, i32, i32) {
    %c0_i32 = arith.constant 0 : i32
    %c0_i32_0 = arith.constant 0 : i32
    %c0_i32_1 = arith.constant 0 : i32
    return %arg0, %c0_i32, %c0_i32_0 : i32, i32, i32
  }
}

</mosaic_0001>

<llo_original>
// kernel: tpu_custom_call.1
$region0: #{tpu_custom_call.1}
  #allocation0 [shape = 'u32[]', space=smem, size = 0x4, offset = 0x4, fixed_abs, tag = 'smem constant byte address 0x4 - core index']
  #allocation1 [shape = 'u32[72,128]{1,0:T(1,128)}', space=vmem, size = 0x9000, scoped, tag = 'internal scratch']
  %s0 = inlined_call_operand.vmem [shape: f32[32,16,2], index: 0, kind: input, shape index: {}]
  %s1 = inlined_call_operand.vmem [shape: f32[32,16,16], index: 1, kind: input, shape index: {}]
  %s2 = inlined_call_operand.vmem [shape: f32[4,32,32], index: 2, kind: input, shape index: {}]
  %s3 = inlined_call_operand.vmem [shape: f32[16,32], index: 3, kind: input, shape index: {}]
  %s4 = inlined_call_operand.hbm [shape: f32[2,1,256], index: 4, kind: output, shape index: {}]
  %s5 = sld [smem:[#allocation0]]
  $region49: #{tpu_custom_call.1} parent=0
    _
  %s7 = ssub.s32 1, %s5
  %s8 = scalar_select 0, %s7, %s5
  $region1: #{tpu_custom_call.1} parent=0
    #allocation2 [shape = 'u8[2048]{0}', space=vmem, size = 0x800, scoped, tag = 'output window, operand 0']
    #allocation3 [shape = 's32[2]{0}', space=sflag, size = 0x8, scoped, tag = 'scoped memory for tpu_custom_call.1']
    %9 = vsyncpa [#allocation3], 0
    %s10 = scalar_lea.sflag [#allocation3], 1
    %11 = vsyncpa %s10, 0
    loop: start=0, step=1, limit=4
    $region2: #{tpu_custom_call.1} parent=1 // loop_pre_header
      _
    $region3: #{tpu_custom_call.1} parent=1 // loop_header
      %s13 = sphi 0, %s17
      %p14 = scmp.ge.s32.totalorder %s13, 4
      %s23 = sphi 0, %s25
      %s26 = sphi 0, %s23
      %s27 = sphi 0, %s26
      %s43 = sphi 0, %s27
      %s49 = sphi 0, %s51
      %s52 = sphi 0, %s49
      %s53 = sphi 0, %s52
      %s69 = sphi 0, %s53
      %s73 = sphi 0, %s73
      %s75 = sphi 0, %s73
      %s76 = sphi 0, %s75
      %s90 = sphi 0, %s76
      %s94 = sphi 0, %s94
      %s96 = sphi 0, %s94
      %s97 = sphi 0, %s96
      %s111 = sphi 0, %s97
      %s117 = sphi 0, %s119
      %s120 = sphi 0, %s117
      %s121 = sphi 0, %s120
      %s137 = sphi 0, %s121
    $region4: #{tpu_custom_call.1} parent=1 // loop_header_branch
      %16 = sbr.rel (%p14) target = $region8
    $region5: #{tpu_custom_call.1} parent=1 // loop_body
      %s18 = ssub.s32 %s13, 1
      %s19 = ssub.s32 %s13, 2
      %s20 = sadd.s32 %s13, 1
      %s21 = ssub.s32 %s13, %s20
      %p22 = scmp.eq.s32.totalorder %s21, 0
      %s24 = sadd.s32 %s23, 1
      %s25 = scalar_select %p22, %s23, %s24
      %p28 = pneg %p22
      %p29 = scmp.eq.s32.totalorder %s13, 1
      %p30 = por %p28, %p29
      %p31 = scmp.ne.s32.totalorder %s23, %s26
      %p32 = scmp.eq.s32.totalorder %s13, 0
      %p33 = por %p31, %p32
      %p34 = scmp.ne.s32.totalorder %s23, %s26
      %p35 = scmp.eq.s32.totalorder %s18, 1
      %p36 = por %p34, %p35
      %p37 = scmp.ne.s32.totalorder %s26, %s27
      %p38 = scmp.eq.s32.totalorder %s18, 0
      %p39 = por %p37, %p38
      %p40 = scmp.ne.s32.totalorder %s26, %s27
      %p41 = scmp.eq.s32.totalorder %s19, 1
      %p42 = por %p40, %p41
      %p44 = scmp.ne.s32.totalorder %s27, %s43
      %p45 = scmp.eq.s32.totalorder %s19, 0
      %p46 = por %p44, %p45
      %s47 = ssub.s32 %s13, %s20
      %p48 = scmp.eq.s32.totalorder %s47, 0
      %s50 = sadd.s32 %s49, 1
      %s51 = scalar_select %p48, %s49, %s50
      %p54 = pneg %p48
      %p55 = scmp.eq.s32.totalorder %s13, 1
      %p56 = por %p54, %p55
      %p57 = scmp.ne.s32.totalorder %s49, %s52
      %p58 = scmp.eq.s32.totalorder %s13, 0
      %p59 = por %p57, %p58
      %p60 = scmp.ne.s32.totalorder %s49, %s52
      %p61 = scmp.eq.s32.totalorder %s18, 1
      %p62 = por %p60, %p61
      %p63 = scmp.ne.s32.totalorder %s52, %s53
      %p64 = scmp.eq.s32.totalorder %s18, 0
      %p65 = por %p63, %p64
      %p66 = scmp.ne.s32.totalorder %s52, %s53
      %p67 = scmp.eq.s32.totalorder %s19, 1
      %p68 = por %p66, %p67
      %p70 = scmp.ne.s32.totalorder %s53, %s69
      %p71 = scmp.eq.s32.totalorder %s19, 0
      %p72 = por %p70, %p71
      %s74 = sadd.s32 %s73, 1
      %p77 = scmp.eq.s32.totalorder %s13, 1
      %p78 = scmp.ne.s32.totalorder %s73, %s75
      %p79 = scmp.eq.s32.totalorder %s13, 0
      %p80 = por %p78, %p79
      %p81 = scmp.ne.s32.totalorder %s73, %s75
      %p82 = scmp.eq.s32.totalorder %s18, 1
      %p83 = por %p81, %p82
      %p84 = scmp.ne.s32.totalorder %s75, %s76
      %p85 = scmp.eq.s32.totalorder %s18, 0
      %p86 = por %p84, %p85
      %p87 = scmp.ne.s32.totalorder %s75, %s76
      %p88 = scmp.eq.s32.totalorder %s19, 1
      %p89 = por %p87, %p88
      %p91 = scmp.ne.s32.totalorder %s76, %s90
      %p92 = scmp.eq.s32.totalorder %s19, 0
      %p93 = por %p91, %p92
      %s95 = sadd.s32 %s94, 1
      %p98 = scmp.eq.s32.totalorder %s13, 1
      %p99 = scmp.ne.s32.totalorder %s94, %s96
      %p100 = scmp.eq.s32.totalorder %s13, 0
      %p101 = por %p99, %p100
      %p102 = scmp.ne.s32.totalorder %s94, %s96
      %p103 = scmp.eq.s32.totalorder %s18, 1
      %p104 = por %p102, %p103
      %p105 = scmp.ne.s32.totalorder %s96, %s97
      %p106 = scmp.eq.s32.totalorder %s18, 0
      %p107 = por %p105, %p106
      %p108 = scmp.ne.s32.totalorder %s96, %s97
      %p109 = scmp.eq.s32.totalorder %s19, 1
      %p110 = por %p108, %p109
      %p112 = scmp.ne.s32.totalorder %s97, %s111
      %p113 = scmp.eq.s32.totalorder %s19, 0
      %p114 = por %p112, %p113
      %s115 = ssub.s32 %s13, %s20
      %p116 = scmp.eq.s32.totalorder %s115, 0
      %s118 = sadd.s32 %s117, 1
      %s119 = scalar_select %p116, %s117, %s118
      %p122 = pneg %p116
      %p123 = scmp.eq.s32.totalorder %s13, 1
      %p124 = por %p122, %p123
      %p125 = scmp.ne.s32.totalorder %s117, %s120
      %p126 = scmp.eq.s32.totalorder %s13, 0
      %p127 = por %p125, %p126
      %p128 = scmp.ne.s32.totalorder %s117, %s120
      %p129 = scmp.eq.s32.totalorder %s18, 1
      %p130 = por %p128, %p129
      %p131 = scmp.ne.s32.totalorder %s120, %s121
      %p132 = scmp.eq.s32.totalorder %s18, 0
      %p133 = por %p131, %p132
      %p134 = scmp.ne.s32.totalorder %s120, %s121
      %p135 = scmp.eq.s32.totalorder %s19, 1
      %p136 = por %p134, %p135
      %p138 = scmp.ne.s32.totalorder %s121, %s137
      %p139 = scmp.eq.s32.totalorder %s19, 0
      %p140 = por %p138, %p139
      %p141 = scmp.le.s32.totalorder 1, %s13
      %p142 = scmp.lt.s32.totalorder %s13, 3
      %p143 = pnand %p141, %p142
      %p144 = pneg %p143
      // Predicated region
      $region9: #{tpu_custom_call.1} parent=5 // pred_check
        _
      $region10: #{tpu_custom_call.1} parent=5 // pred_check_branch
        %146 = sbr.rel (%p143) target = $region12
      $region11: #{tpu_custom_call.1} parent=5 // pred_region
        %s147 = ssub.s32 %s13, 1
        // Predicated region
        $region13: #{tpu_custom_call.1} parent=11 // pred_check
          %p148 = pneg %p86
        $region14: #{tpu_custom_call.1} parent=11 // pred_check_branch
          %150 = sbr.rel (%p148) target = $region16
        $region15: #{tpu_custom_call.1} parent=11 // pred_region
          _
        $region16: #{tpu_custom_call.1} parent=11 // pred_fallthru
          _
        // Predicated region
        $region17: #{tpu_custom_call.1} parent=11 // pred_check
          %p151 = pneg %p107
        $region18: #{tpu_custom_call.1} parent=11 // pred_check_branch
          %153 = sbr.rel (%p151) target = $region20
        $region19: #{tpu_custom_call.1} parent=11 // pred_region
          _
        $region20: #{tpu_custom_call.1} parent=11 // pred_fallthru
          _
      $region12: #{tpu_custom_call.1} parent=5 // pred_fallthru
        _
      %p154 = scmp.lt.s32.totalorder %s13, 2
      // Predicated region
      $region21: #{tpu_custom_call.1} parent=5 // pred_check
        %p155 = pneg %p154
      $region22: #{tpu_custom_call.1} parent=5 // pred_check_branch
        %157 = sbr.rel (%p155) target = $region24
      $region23: #{tpu_custom_call.1} parent=5 // pred_region
        // Predicated region
        $region25: #{tpu_custom_call.1} parent=23 // pred_check
          %p158 = pneg %p33
        $region26: #{tpu_custom_call.1} parent=23 // pred_check_branch
          %160 = sbr.rel (%p158) target = $region28
        $region27: #{tpu_custom_call.1} parent=23 // pred_region
          %s161 = smul.u32 16, %s13
          %p162 = scmp.lt.s32.totalorder %s161, 31
          %s163 = scalar_select %p162, %s161, 31
          %s164 = smul.addr %s163, 2
          %s165 = smul.addr %s164, 8
          %s166 = scalar_lea.vmem %s0, %s165
          %s167 = smul.u32 16, %s13
        $region28: #{tpu_custom_call.1} parent=23 // pred_fallthru
          _
        // Predicated region
        $region29: #{tpu_custom_call.1} parent=23 // pred_check
          %p168 = pneg %p59
        $region30: #{tpu_custom_call.1} parent=23 // pred_check_branch
          %170 = sbr.rel (%p168) target = $region32
        $region31: #{tpu_custom_call.1} parent=23 // pred_region
          %s171 = smul.u32 16, %s13
          %p172 = scmp.lt.s32.totalorder %s171, 31
          %s173 = scalar_select %p172, %s171, 31
          %s174 = smul.addr %s173, 2
          %s175 = smul.addr %s174, 8
          %s176 = scalar_lea.vmem %s1, %s175
          %s177 = smul.u32 16, %s13
        $region32: #{tpu_custom_call.1} parent=23 // pred_fallthru
          _
      $region24: #{tpu_custom_call.1} parent=5 // pred_fallthru
        _
      %p178 = scmp.le.s32.totalorder 1, %s13
      %p179 = scmp.lt.s32.totalorder %s13, 3
      %p180 = pnand %p178, %p179
      %p181 = pneg %p180
      // Predicated region
      $region33: #{tpu_custom_call.1} parent=5 // pred_check
        _
      $region34: #{tpu_custom_call.1} parent=5 // pred_check_branch
        %183 = sbr.rel (%p180) target = $region36
      $region35: #{tpu_custom_call.1} parent=5 // pred_region
        %s184 = ssub.s32 %s13, 1
        %s185 = smul.u32 16, %s18
        %p186 = scmp.lt.s32.totalorder %s185, 31
        %s187 = scalar_select %p186, %s185, 31
        %s188 = smul.addr %s187, 2
        %s189 = smul.addr %s188, 8
        %s190 = scalar_lea.vmem %s0, %s189
        %p191 = pneg %p39
        %p192 = pneg %p36
        %s193 = smul.u32 16, %s18
        %p194 = scmp.lt.s32.totalorder %s193, 31
        %s195 = scalar_select %p194, %s193, 31
        %s196 = smul.addr %s195, 2
        %s197 = smul.addr %s196, 8
        %s198 = scalar_lea.vmem %s1, %s197
        %p199 = pneg %p65
        %p200 = pneg %p62
        %p201 = pneg %p86
        %p202 = pneg %p83
        %p203 = pneg %p107
        %p204 = pneg %p104
        %p205 = pneg %p133
        %p206 = pneg %p130
        %s207 = sand.u32 %s120, 1
        %s208 = scalar_lea.sflag [#allocation3], %s207
        %s209 = sand.u32 %s120, 1
        %s210 = smul.addr %s209, 2
        %s211 = scalar_lea.vmem [#allocation2], %s210
        %s212 = smul.u32 16, %s18
        %p213 = scmp.lt.s32.totalorder %s212, 31
        %s214 = scalar_select %p213, %s212, 31
        %s215 = smul.addr %s214, 2
        %s216 = smul.addr %s215, 8
        %s217 = scalar_lea.vmem %s0, %s216
        %s218 = smul.u32 16, %s18
        %s219 = smul.u32 16, %s18
        %p220 = scmp.lt.s32.totalorder %s219, 31
        %s221 = scalar_select %p220, %s219, 31
        %s222 = smul.addr %s221, 2
        %s223 = smul.addr %s222, 8
        %s224 = scalar_lea.vmem %s1, %s223
        %s225 = smul.u32 16, %s18
        %v226 = vld [vmem:[%s2] sm:$0xff]
        %v227 = vld [vmem:[%s2 + $0x8] sm:$0xff]
        %v228 = vld [vmem:[%s2 + $0x10] sm:$0xff]
        %v229 = vld [vmem:[%s2 + $0x18] sm:$0xff]
        %s230 = scalar_lea.vmem %s2, 32
        %v231 = vld [vmem:[%s230] sm:$0xff]
        %v232 = vld [vmem:[%s230 + $0x8] sm:$0xff]
        %v233 = vld [vmem:[%s230 + $0x10] sm:$0xff]
        %v234 = vld [vmem:[%s230 + $0x18] sm:$0xff]
        %s235 = scalar_lea.vmem %s2, 64
        %v236 = vld [vmem:[%s235] sm:$0xff]
        %v237 = vld [vmem:[%s235 + $0x8] sm:$0xff]
        %v238 = vld [vmem:[%s235 + $0x10] sm:$0xff]
        %v239 = vld [vmem:[%s235 + $0x18] sm:$0xff]
        %s240 = scalar_lea.vmem %s2, 96
        %v241 = vld [vmem:[%s240] sm:$0xff]
        %v242 = vld [vmem:[%s240 + $0x8] sm:$0xff]
        %v243 = vld [vmem:[%s240 + $0x10] sm:$0xff]
        %v244 = vld [vmem:[%s240 + $0x18] sm:$0xff]
        %v245 = vld [vmem:[%s3] sm:$0xff]
        %v246 = vld [vmem:[%s3 + $0x8] sm:$0xff]
        %v247 = vld [vmem:[%s217] sm:$0xff]
        %v248 = vld [vmem:[%s217 + $0x8] sm:$0xff]
        %v249 = vld [vmem:[%s217 + $0x10] sm:$0xff]
        %v250 = vld [vmem:[%s217 + $0x18] sm:$0xff]
        %v251 = vld [vmem:[%s217 + $0x20] sm:$0xff]
        %v252 = vld [vmem:[%s217 + $0x28] sm:$0xff]
        %v253 = vld [vmem:[%s217 + $0x30] sm:$0xff]
        %v254 = vld [vmem:[%s217 + $0x38] sm:$0xff]
        %v255 = vld [vmem:[%s217 + $0x40] sm:$0xff]
        %v256 = vld [vmem:[%s217 + $0x48] sm:$0xff]
        %v257 = vld [vmem:[%s217 + $0x50] sm:$0xff]
        %v258 = vld [vmem:[%s217 + $0x58] sm:$0xff]
        %v259 = vld [vmem:[%s217 + $0x60] sm:$0xff]
        %v260 = vld [vmem:[%s217 + $0x68] sm:$0xff]
        %v261 = vld [vmem:[%s217 + $0x70] sm:$0xff]
        %v262 = vld [vmem:[%s217 + $0x78] sm:$0xff]
        %v263 = vld [vmem:[%s217 + $0x80] sm:$0xff]
        %v264 = vld [vmem:[%s217 + $0x88] sm:$0xff]
        %v265 = vld [vmem:[%s217 + $0x90] sm:$0xff]
        %v266 = vld [vmem:[%s217 + $0x98] sm:$0xff]
        %v267 = vld [vmem:[%s217 + $0xa0] sm:$0xff]
        %v268 = vld [vmem:[%s217 + $0xa8] sm:$0xff]
        %v269 = vld [vmem:[%s217 + $0xb0] sm:$0xff]
        %v270 = vld [vmem:[%s217 + $0xb8] sm:$0xff]
        %v271 = vld [vmem:[%s217 + $0xc0] sm:$0xff]
        %v272 = vld [vmem:[%s217 + $0xc8] sm:$0xff]
        %v273 = vld [vmem:[%s217 + $0xd0] sm:$0xff]
        %v274 = vld [vmem:[%s217 + $0xd8] sm:$0xff]
        %v275 = vld [vmem:[%s217 + $0xe0] sm:$0xff]
        %v276 = vld [vmem:[%s217 + $0xe8] sm:$0xff]
        %v277 = vld [vmem:[%s217 + $0xf0] sm:$0xff]
        %v278 = vld [vmem:[%s217 + $0xf8] sm:$0xff]
        %v279 = vld [vmem:[%s224] sm:$0xff]
        %v280 = vld [vmem:[%s224 + $0x8] sm:$0xff]
        %v281 = vld [vmem:[%s224 + $0x10] sm:$0xff]
        %v282 = vld [vmem:[%s224 + $0x18] sm:$0xff]
        %v283 = vld [vmem:[%s224 + $0x20] sm:$0xff]
        %v284 = vld [vmem:[%s224 + $0x28] sm:$0xff]
        %v285 = vld [vmem:[%s224 + $0x30] sm:$0xff]
        %v286 = vld [vmem:[%s224 + $0x38] sm:$0xff]
        %v287 = vld [vmem:[%s224 + $0x40] sm:$0xff]
        %v288 = vld [vmem:[%s224 + $0x48] sm:$0xff]
        %v289 = vld [vmem:[%s224 + $0x50] sm:$0xff]
        %v290 = vld [vmem:[%s224 + $0x58] sm:$0xff]
        %v291 = vld [vmem:[%s224 + $0x60] sm:$0xff]
        %v292 = vld [vmem:[%s224 + $0x68] sm:$0xff]
        %v293 = vld [vmem:[%s224 + $0x70] sm:$0xff]
        %v294 = vld [vmem:[%s224 + $0x78] sm:$0xff]
        %v295 = vld [vmem:[%s224 + $0x80] sm:$0xff]
        %v296 = vld [vmem:[%s224 + $0x88] sm:$0xff]
        %v297 = vld [vmem:[%s224 + $0x90] sm:$0xff]
        %v298 = vld [vmem:[%s224 + $0x98] sm:$0xff]
        %v299 = vld [vmem:[%s224 + $0xa0] sm:$0xff]
        %v300 = vld [vmem:[%s224 + $0xa8] sm:$0xff]
        %v301 = vld [vmem:[%s224 + $0xb0] sm:$0xff]
        %v302 = vld [vmem:[%s224 + $0xb8] sm:$0xff]
        %v303 = vld [vmem:[%s224 + $0xc0] sm:$0xff]
        %v304 = vld [vmem:[%s224 + $0xc8] sm:$0xff]
        %v305 = vld [vmem:[%s224 + $0xd0] sm:$0xff]
        %v306 = vld [vmem:[%s224 + $0xd8] sm:$0xff]
        %v307 = vld [vmem:[%s224 + $0xe0] sm:$0xff]
        %v308 = vld [vmem:[%s224 + $0xe8] sm:$0xff]
        %v309 = vld [vmem:[%s224 + $0xf0] sm:$0xff]
        %v310 = vld [vmem:[%s224 + $0xf8] sm:$0xff]
        %vm311 = vcmp.gt.f32.partialorder %v279, 0.0
        %vm312 = vcmp.gt.f32.partialorder %v280, 0.0
        %vm313 = vcmp.gt.f32.partialorder %v281, 0.0
        %vm314 = vcmp.gt.f32.partialorder %v282, 0.0
        %vm315 = vcmp.gt.f32.partialorder %v283, 0.0
        %vm316 = vcmp.gt.f32.partialorder %v284, 0.0
        %vm317 = vcmp.gt.f32.partialorder %v285, 0.0
        %vm318 = vcmp.gt.f32.partialorder %v286, 0.0
        %vm319 = vcmp.gt.f32.partialorder %v287, 0.0
        %vm320 = vcmp.gt.f32.partialorder %v288, 0.0
        %vm321 = vcmp.gt.f32.partialorder %v289, 0.0
        %vm322 = vcmp.gt.f32.partialorder %v290, 0.0
        %vm323 = vcmp.gt.f32.partialorder %v291, 0.0
        %vm324 = vcmp.gt.f32.partialorder %v292, 0.0
        %vm325 = vcmp.gt.f32.partialorder %v293, 0.0
        %vm326 = vcmp.gt.f32.partialorder %v294, 0.0
        %vm327 = vcmp.gt.f32.partialorder %v295, 0.0
        %vm328 = vcmp.gt.f32.partialorder %v296, 0.0
        %vm329 = vcmp.gt.f32.partialorder %v297, 0.0
        %vm330 = vcmp.gt.f32.partialorder %v298, 0.0
        %vm331 = vcmp.gt.f32.partialorder %v299, 0.0
        %vm332 = vcmp.gt.f32.partialorder %v300, 0.0
        %vm333 = vcmp.gt.f32.partialorder %v301, 0.0
        %vm334 = vcmp.gt.f32.partialorder %v302, 0.0
        %vm335 = vcmp.gt.f32.partialorder %v303, 0.0
        %vm336 = vcmp.gt.f32.partialorder %v304, 0.0
        %vm337 = vcmp.gt.f32.partialorder %v305, 0.0
        %vm338 = vcmp.gt.f32.partialorder %v306, 0.0
        %vm339 = vcmp.gt.f32.partialorder %v307, 0.0
        %vm340 = vcmp.gt.f32.partialorder %v308, 0.0
        %vm341 = vcmp.gt.f32.partialorder %v309, 0.0
        %vm342 = vcmp.gt.f32.partialorder %v310, 0.0
        %v343 = vsel %vm311, 1.0, 0.0
        %v344 = vsel %vm312, 1.0, 0.0
        %v345 = vsel %vm313, 1.0, 0.0
        %v346 = vsel %vm314, 1.0, 0.0
        %v347 = vsel %vm315, 1.0, 0.0
        %v348 = vsel %vm316, 1.0, 0.0
        %v349 = vsel %vm317, 1.0, 0.0
        %v350 = vsel %vm318, 1.0, 0.0
        %v351 = vsel %vm319, 1.0, 0.0
        %v352 = vsel %vm320, 1.0, 0.0
        %v353 = vsel %vm321, 1.0, 0.0
        %v354 = vsel %vm322, 1.0, 0.0
        %v355 = vsel %vm323, 1.0, 0.0
        %v356 = vsel %vm324, 1.0, 0.0
        %v357 = vsel %vm325, 1.0, 0.0
        %v358 = vsel %vm326, 1.0, 0.0
        %v359 = vsel %vm327, 1.0, 0.0
        %v360 = vsel %vm328, 1.0, 0.0
        %v361 = vsel %vm329, 1.0, 0.0
        %v362 = vsel %vm330, 1.0, 0.0
        %v363 = vsel %vm331, 1.0, 0.0
        %v364 = vsel %vm332, 1.0, 0.0
        %v365 = vsel %vm333, 1.0, 0.0
        %v366 = vsel %vm334, 1.0, 0.0
        %v367 = vsel %vm335, 1.0, 0.0
        %v368 = vsel %vm336, 1.0, 0.0
        %v369 = vsel %vm337, 1.0, 0.0
        %v370 = vsel %vm338, 1.0, 0.0
        %v371 = vsel %vm339, 1.0, 0.0
        %v372 = vsel %vm340, 1.0, 0.0
        %v373 = vsel %vm341, 1.0, 0.0
        %v374 = vsel %vm342, 1.0, 0.0
        %376 = vset.pattern.permute.xlu0 0
        %377 = vperm.xlu0 %376, %v247
        %v378 = vpop.permute.xlu0 %377
        %381 = vset.pattern.permute.xlu0 0
        %382 = vperm.xlu0 %381, %v248
        %v383 = vpop.permute.xlu0 %382
        %386 = vset.pattern.permute.xlu0 0
        %387 = vperm.xlu0 %386, %v249
        %v388 = vpop.permute.xlu0 %387
        %391 = vset.pattern.permute.xlu0 0
        %392 = vperm.xlu0 %391, %v250
        %v393 = vpop.permute.xlu0 %392
        %396 = vset.pattern.permute.xlu0 0
        %397 = vperm.xlu0 %396, %v251
        %v398 = vpop.permute.xlu0 %397
        %401 = vset.pattern.permute.xlu0 0
        %402 = vperm.xlu0 %401, %v252
        %v403 = vpop.permute.xlu0 %402
        %406 = vset.pattern.permute.xlu0 0
        %407 = vperm.xlu0 %406, %v253
        %v408 = vpop.permute.xlu0 %407
        %411 = vset.pattern.permute.xlu0 0
        %412 = vperm.xlu0 %411, %v254
        %v413 = vpop.permute.xlu0 %412
        %416 = vset.pattern.permute.xlu0 0
        %417 = vperm.xlu0 %416, %v255
        %v418 = vpop.permute.xlu0 %417
        %421 = vset.pattern.permute.xlu0 0
        %422 = vperm.xlu0 %421, %v256
        %v423 = vpop.permute.xlu0 %422
        %426 = vset.pattern.permute.xlu0 0
        %427 = vperm.xlu0 %426, %v257
        %v428 = vpop.permute.xlu0 %427
        %431 = vset.pattern.permute.xlu0 0
        %432 = vperm.xlu0 %431, %v258
        %v433 = vpop.permute.xlu0 %432
        %436 = vset.pattern.permute.xlu0 0
        %437 = vperm.xlu0 %436, %v259
        %v438 = vpop.permute.xlu0 %437
        %441 = vset.pattern.permute.xlu0 0
        %442 = vperm.xlu0 %441, %v260
        %v443 = vpop.permute.xlu0 %442
        %446 = vset.pattern.permute.xlu0 0
        %447 = vperm.xlu0 %446, %v261
        %v448 = vpop.permute.xlu0 %447
        %451 = vset.pattern.permute.xlu0 0
        %452 = vperm.xlu0 %451, %v262
        %v453 = vpop.permute.xlu0 %452
        %456 = vset.pattern.permute.xlu0 0
        %457 = vperm.xlu0 %456, %v263
        %v458 = vpop.permute.xlu0 %457
        %461 = vset.pattern.permute.xlu0 0
        %462 = vperm.xlu0 %461, %v264
        %v463 = vpop.permute.xlu0 %462
        %466 = vset.pattern.permute.xlu0 0
        %467 = vperm.xlu0 %466, %v265
        %v468 = vpop.permute.xlu0 %467
        %471 = vset.pattern.permute.xlu0 0
        %472 = vperm.xlu0 %471, %v266
        %v473 = vpop.permute.xlu0 %472
        %476 = vset.pattern.permute.xlu0 0
        %477 = vperm.xlu0 %476, %v267
        %v478 = vpop.permute.xlu0 %477
        %481 = vset.pattern.permute.xlu0 0
        %482 = vperm.xlu0 %481, %v268
        %v483 = vpop.permute.xlu0 %482
        %486 = vset.pattern.permute.xlu0 0
        %487 = vperm.xlu0 %486, %v269
        %v488 = vpop.permute.xlu0 %487
        %491 = vset.pattern.permute.xlu0 0
        %492 = vperm.xlu0 %491, %v270
        %v493 = vpop.permute.xlu0 %492
        %496 = vset.pattern.permute.xlu0 0
        %497 = vperm.xlu0 %496, %v271
        %v498 = vpop.permute.xlu0 %497
        %501 = vset.pattern.permute.xlu0 0
        %502 = vperm.xlu0 %501, %v272
        %v503 = vpop.permute.xlu0 %502
        %506 = vset.pattern.permute.xlu0 0
        %507 = vperm.xlu0 %506, %v273
        %v508 = vpop.permute.xlu0 %507
        %511 = vset.pattern.permute.xlu0 0
        %512 = vperm.xlu0 %511, %v274
        %v513 = vpop.permute.xlu0 %512
        %516 = vset.pattern.permute.xlu0 0
        %517 = vperm.xlu0 %516, %v275
        %v518 = vpop.permute.xlu0 %517
        %521 = vset.pattern.permute.xlu0 0
        %522 = vperm.xlu0 %521, %v276
        %v523 = vpop.permute.xlu0 %522
        %526 = vset.pattern.permute.xlu0 0
        %527 = vperm.xlu0 %526, %v277
        %v528 = vpop.permute.xlu0 %527
        %531 = vset.pattern.permute.xlu0 0
        %532 = vperm.xlu0 %531, %v278
        %v533 = vpop.permute.xlu0 %532
        %v535 = vperm.slane %v245, 0
        %v536 = vmul.f32 %v378, %v535
        %v537 = vmul.f32 %v383, %v535
        %v538 = vmul.f32 %v388, %v535
        %v539 = vmul.f32 %v393, %v535
        %v540 = vmul.f32 %v398, %v535
        %v541 = vmul.f32 %v403, %v535
        %v542 = vmul.f32 %v408, %v535
        %v543 = vmul.f32 %v413, %v535
        %v544 = vmul.f32 %v418, %v535
        %v545 = vmul.f32 %v423, %v535
        %v546 = vmul.f32 %v428, %v535
        %v547 = vmul.f32 %v433, %v535
        %v548 = vmul.f32 %v438, %v535
        %v549 = vmul.f32 %v443, %v535
        %v550 = vmul.f32 %v448, %v535
        %v551 = vmul.f32 %v453, %v535
        %v552 = vmul.f32 %v458, %v535
        %v553 = vmul.f32 %v463, %v535
        %v554 = vmul.f32 %v468, %v535
        %v555 = vmul.f32 %v473, %v535
        %v556 = vmul.f32 %v478, %v535
        %v557 = vmul.f32 %v483, %v535
        %v558 = vmul.f32 %v488, %v535
        %v559 = vmul.f32 %v493, %v535
        %v560 = vmul.f32 %v498, %v535
        %v561 = vmul.f32 %v503, %v535
        %v562 = vmul.f32 %v508, %v535
        %v563 = vmul.f32 %v513, %v535
        %v564 = vmul.f32 %v518, %v535
        %v565 = vmul.f32 %v523, %v535
        %v566 = vmul.f32 %v528, %v535
        %v567 = vmul.f32 %v533, %v535
        %568 = vset.pattern.permute.xlu0 1
        %569 = vperm.xlu0 %568, %v247
        %v570 = vpop.permute.xlu0 %569
        %572 = vset.pattern.permute.xlu0 1
        %573 = vperm.xlu0 %572, %v248
        %v574 = vpop.permute.xlu0 %573
        %576 = vset.pattern.permute.xlu0 1
        %577 = vperm.xlu0 %576, %v249
        %v578 = vpop.permute.xlu0 %577
        %580 = vset.pattern.permute.xlu0 1
        %581 = vperm.xlu0 %580, %v250
        %v582 = vpop.permute.xlu0 %581
        %584 = vset.pattern.permute.xlu0 1
        %585 = vperm.xlu0 %584, %v251
        %v586 = vpop.permute.xlu0 %585
        %588 = vset.pattern.permute.xlu0 1
        %589 = vperm.xlu0 %588, %v252
        %v590 = vpop.permute.xlu0 %589
        %592 = vset.pattern.permute.xlu0 1
        %593 = vperm.xlu0 %592, %v253
        %v594 = vpop.permute.xlu0 %593
        %596 = vset.pattern.permute.xlu0 1
        %597 = vperm.xlu0 %596, %v254
        %v598 = vpop.permute.xlu0 %597
        %600 = vset.pattern.permute.xlu0 1
        %601 = vperm.xlu0 %600, %v255
        %v602 = vpop.permute.xlu0 %601
        %604 = vset.pattern.permute.xlu0 1
        %605 = vperm.xlu0 %604, %v256
        %v606 = vpop.permute.xlu0 %605
        %608 = vset.pattern.permute.xlu0 1
        %609 = vperm.xlu0 %608, %v257
        %v610 = vpop.permute.xlu0 %609
        %612 = vset.pattern.permute.xlu0 1
        %613 = vperm.xlu0 %612, %v258
        %v614 = vpop.permute.xlu0 %613
        %616 = vset.pattern.permute.xlu0 1
        %617 = vperm.xlu0 %616, %v259
        %v618 = vpop.permute.xlu0 %617
        %620 = vset.pattern.permute.xlu0 1
        %621 = vperm.xlu0 %620, %v260
        %v622 = vpop.permute.xlu0 %621
        %624 = vset.pattern.permute.xlu0 1
        %625 = vperm.xlu0 %624, %v261
        %v626 = vpop.permute.xlu0 %625
        %628 = vset.pattern.permute.xlu0 1
        %629 = vperm.xlu0 %628, %v262
        %v630 = vpop.permute.xlu0 %629
        %632 = vset.pattern.permute.xlu0 1
        %633 = vperm.xlu0 %632, %v263
        %v634 = vpop.permute.xlu0 %633
        %636 = vset.pattern.permute.xlu0 1
        %637 = vperm.xlu0 %636, %v264
        %v638 = vpop.permute.xlu0 %637
        %640 = vset.pattern.permute.xlu0 1
        %641 = vperm.xlu0 %640, %v265
        %v642 = vpop.permute.xlu0 %641
        %644 = vset.pattern.permute.xlu0 1
        %645 = vperm.xlu0 %644, %v266
        %v646 = vpop.permute.xlu0 %645
        %648 = vset.pattern.permute.xlu0 1
        %649 = vperm.xlu0 %648, %v267
        %v650 = vpop.permute.xlu0 %649
        %652 = vset.pattern.permute.xlu0 1
        %653 = vperm.xlu0 %652, %v268
        %v654 = vpop.permute.xlu0 %653
        %656 = vset.pattern.permute.xlu0 1
        %657 = vperm.xlu0 %656, %v269
        %v658 = vpop.permute.xlu0 %657
        %660 = vset.pattern.permute.xlu0 1
        %661 = vperm.xlu0 %660, %v270
        %v662 = vpop.permute.xlu0 %661
        %664 = vset.pattern.permute.xlu0 1
        %665 = vperm.xlu0 %664, %v271
        %v666 = vpop.permute.xlu0 %665
        %668 = vset.pattern.permute.xlu0 1
        %669 = vperm.xlu0 %668, %v272
        %v670 = vpop.permute.xlu0 %669
        %672 = vset.pattern.permute.xlu0 1
        %673 = vperm.xlu0 %672, %v273
        %v674 = vpop.permute.xlu0 %673
        %676 = vset.pattern.permute.xlu0 1
        %677 = vperm.xlu0 %676, %v274
        %v678 = vpop.permute.xlu0 %677
        %680 = vset.pattern.permute.xlu0 1
        %681 = vperm.xlu0 %680, %v275
        %v682 = vpop.permute.xlu0 %681
        %684 = vset.pattern.permute.xlu0 1
        %685 = vperm.xlu0 %684, %v276
        %v686 = vpop.permute.xlu0 %685
        %688 = vset.pattern.permute.xlu0 1
        %689 = vperm.xlu0 %688, %v277
        %v690 = vpop.permute.xlu0 %689
        %692 = vset.pattern.permute.xlu0 1
        %693 = vperm.xlu0 %692, %v278
        %v694 = vpop.permute.xlu0 %693
        %v696 = vperm.slane %v245, 1
        %v697 = vmul.f32 %v570, %v696
        %v698 = vmul.f32 %v574, %v696
        %v699 = vmul.f32 %v578, %v696
        %v700 = vmul.f32 %v582, %v696
        %v701 = vmul.f32 %v586, %v696
        %v702 = vmul.f32 %v590, %v696
        %v703 = vmul.f32 %v594, %v696
        %v704 = vmul.f32 %v598, %v696
        %v705 = vmul.f32 %v602, %v696
        %v706 = vmul.f32 %v606, %v696
        %v707 = vmul.f32 %v610, %v696
        %v708 = vmul.f32 %v614, %v696
        %v709 = vmul.f32 %v618, %v696
        %v710 = vmul.f32 %v622, %v696
        %v711 = vmul.f32 %v626, %v696
        %v712 = vmul.f32 %v630, %v696
        %v713 = vmul.f32 %v634, %v696
        %v714 = vmul.f32 %v638, %v696
        %v715 = vmul.f32 %v642, %v696
        %v716 = vmul.f32 %v646, %v696
        %v717 = vmul.f32 %v650, %v696
        %v718 = vmul.f32 %v654, %v696
        %v719 = vmul.f32 %v658, %v696
        %v720 = vmul.f32 %v662, %v696
        %v721 = vmul.f32 %v666, %v696
        %v722 = vmul.f32 %v670, %v696
        %v723 = vmul.f32 %v674, %v696
        %v724 = vmul.f32 %v678, %v696
        %v725 = vmul.f32 %v682, %v696
        %v726 = vmul.f32 %v686, %v696
        %v727 = vmul.f32 %v690, %v696
        %v728 = vmul.f32 %v694, %v696
        %v729 = vadd.f32 %v536, %v697
        %v730 = vadd.f32 %v537, %v698
        %v731 = vadd.f32 %v538, %v699
        %v732 = vadd.f32 %v539, %v700
        %v733 = vadd.f32 %v540, %v701
        %v734 = vadd.f32 %v541, %v702
        %v735 = vadd.f32 %v542, %v703
        %v736 = vadd.f32 %v543, %v704
        %v737 = vadd.f32 %v544, %v705
        %v738 = vadd.f32 %v545, %v706
        %v739 = vadd.f32 %v546, %v707
        %v740 = vadd.f32 %v547, %v708
        %v741 = vadd.f32 %v548, %v709
        %v742 = vadd.f32 %v549, %v710
        %v743 = vadd.f32 %v550, %v711
        %v744 = vadd.f32 %v551, %v712
        %v745 = vadd.f32 %v552, %v713
        %v746 = vadd.f32 %v553, %v714
        %v747 = vadd.f32 %v554, %v715
        %v748 = vadd.f32 %v555, %v716
        %v749 = vadd.f32 %v556, %v717
        %v750 = vadd.f32 %v557, %v718
        %v751 = vadd.f32 %v558, %v719
        %v752 = vadd.f32 %v559, %v720
        %v753 = vadd.f32 %v560, %v721
        %v754 = vadd.f32 %v561, %v722
        %v755 = vadd.f32 %v562, %v723
        %v756 = vadd.f32 %v563, %v724
        %v757 = vadd.f32 %v564, %v725
        %v758 = vadd.f32 %v565, %v726
        %v759 = vadd.f32 %v566, %v727
        %v760 = vadd.f32 %v567, %v728
        %v761 = vperm.slane %v245, 2
        %v762 = vadd.f32 %v729, %v761
        %v763 = vadd.f32 %v730, %v761
        %v764 = vadd.f32 %v731, %v761
        %v765 = vadd.f32 %v732, %v761
        %v766 = vadd.f32 %v733, %v761
        %v767 = vadd.f32 %v734, %v761
        %v768 = vadd.f32 %v735, %v761
        %v769 = vadd.f32 %v736, %v761
        %v770 = vadd.f32 %v737, %v761
        %v771 = vadd.f32 %v738, %v761
        %v772 = vadd.f32 %v739, %v761
        %v773 = vadd.f32 %v740, %v761
        %v774 = vadd.f32 %v741, %v761
        %v775 = vadd.f32 %v742, %v761
        %v776 = vadd.f32 %v743, %v761
        %v777 = vadd.f32 %v744, %v761
        %v778 = vadd.f32 %v745, %v761
        %v779 = vadd.f32 %v746, %v761
        %v780 = vadd.f32 %v747, %v761
        %v781 = vadd.f32 %v748, %v761
        %v782 = vadd.f32 %v749, %v761
        %v783 = vadd.f32 %v750, %v761
        %v784 = vadd.f32 %v751, %v761
        %v785 = vadd.f32 %v752, %v761
        %v786 = vadd.f32 %v753, %v761
        %v787 = vadd.f32 %v754, %v761
        %v788 = vadd.f32 %v755, %v761
        %v789 = vadd.f32 %v756, %v761
        %v790 = vadd.f32 %v757, %v761
        %v791 = vadd.f32 %v758, %v761
        %v792 = vadd.f32 %v759, %v761
        %v793 = vadd.f32 %v760, %v761
        %v794 = vperm.slane %v279, 0
        %v795 = vlaneseq
        %v796 = vshrl.u32 %v795, 7
        %798 = vset.pattern.permute.xlu0 %v796
        %799 = vperm.xlu0 %798, %v794
        %v800 = vpop.permute.xlu0 %799
        %v801 = vlaneseq
        %v802 = vshrl.u32 %v801, 7
        %v803 = vadd.s32 %v802, 8
        %804 = vset.pattern.permute.xlu0 %v803
        %805 = vperm.xlu0 %804, %v794
        %v806 = vpop.permute.xlu0 %805
        %v807 = vperm.slane %v279, 1
        %v808 = vlaneseq
        %v809 = vshrl.u32 %v808, 7
        %811 = vset.pattern.permute.xlu0 %v809
        %812 = vperm.xlu0 %811, %v807
        %v813 = vpop.permute.xlu0 %812
        %v814 = vlaneseq
        %v815 = vshrl.u32 %v814, 7
        %v816 = vadd.s32 %v815, 8
        %817 = vset.pattern.permute.xlu0 %v816
        %818 = vperm.xlu0 %817, %v807
        %v819 = vpop.permute.xlu0 %818
        %v820 = vperm.slane %v279, 2
        %v821 = vlaneseq
        %v822 = vshrl.u32 %v821, 7
        %824 = vset.pattern.permute.xlu0 %v822
        %825 = vperm.xlu0 %824, %v820
        %v826 = vpop.permute.xlu0 %825
        %v827 = vlaneseq
        %v828 = vshrl.u32 %v827, 7
        %v829 = vadd.s32 %v828, 8
        %830 = vset.pattern.permute.xlu0 %v829
        %831 = vperm.xlu0 %830, %v820
        %v832 = vpop.permute.xlu0 %831
        %v833 = vperm.slane %v279, 3
        %v834 = vlaneseq
        %v835 = vshrl.u32 %v834, 7
        %837 = vset.pattern.permute.xlu0 %v835
        %838 = vperm.xlu0 %837, %v833
        %v839 = vpop.permute.xlu0 %838
        %v840 = vlaneseq
        %v841 = vshrl.u32 %v840, 7
        %v842 = vadd.s32 %v841, 8
        %843 = vset.pattern.permute.xlu0 %v842
        %844 = vperm.xlu0 %843, %v833
        %v845 = vpop.permute.xlu0 %844
        %v846 = vperm.slane %v279, 4
        %v847 = vlaneseq
        %v848 = vshrl.u32 %v847, 7
        %850 = vset.pattern.permute.xlu0 %v848
        %851 = vperm.xlu0 %850, %v846
        %v852 = vpop.permute.xlu0 %851
        %v853 = vlaneseq
        %v854 = vshrl.u32 %v853, 7
        %v855 = vadd.s32 %v854, 8
        %856 = vset.pattern.permute.xlu0 %v855
        %857 = vperm.xlu0 %856, %v846
        %v858 = vpop.permute.xlu0 %857
        %v859 = vperm.slane %v279, 5
        %v860 = vlaneseq
        %v861 = vshrl.u32 %v860, 7
        %863 = vset.pattern.permute.xlu0 %v861
        %864 = vperm.xlu0 %863, %v859
        %v865 = vpop.permute.xlu0 %864
        %v866 = vlaneseq
        %v867 = vshrl.u32 %v866, 7
        %v868 = vadd.s32 %v867, 8
        %869 = vset.pattern.permute.xlu0 %v868
        %870 = vperm.xlu0 %869, %v859
        %v871 = vpop.permute.xlu0 %870
        %v872 = vperm.slane %v279, 6
        %v873 = vlaneseq
        %v874 = vshrl.u32 %v873, 7
        %876 = vset.pattern.permute.xlu0 %v874
        %877 = vperm.xlu0 %876, %v872
        %v878 = vpop.permute.xlu0 %877
        %v879 = vlaneseq
        %v880 = vshrl.u32 %v879, 7
        %v881 = vadd.s32 %v880, 8
        %882 = vset.pattern.permute.xlu0 %v881
        %883 = vperm.xlu0 %882, %v872
        %v884 = vpop.permute.xlu0 %883
        %v885 = vperm.slane %v279, 7
        %v886 = vlaneseq
        %v887 = vshrl.u32 %v886, 7
        %889 = vset.pattern.permute.xlu0 %v887
        %890 = vperm.xlu0 %889, %v885
        %v891 = vpop.permute.xlu0 %890
        %v892 = vlaneseq
        %v893 = vshrl.u32 %v892, 7
        %v894 = vadd.s32 %v893, 8
        %895 = vset.pattern.permute.xlu0 %v894
        %896 = vperm.xlu0 %895, %v885
        %v897 = vpop.permute.xlu0 %896
        %v898 = vperm.slane %v280, 0
        %v899 = vlaneseq
        %v900 = vshrl.u32 %v899, 7
        %902 = vset.pattern.permute.xlu0 %v900
        %903 = vperm.xlu0 %902, %v898
        %v904 = vpop.permute.xlu0 %903
        %v905 = vlaneseq
        %v906 = vshrl.u32 %v905, 7
        %v907 = vadd.s32 %v906, 8
        %908 = vset.pattern.permute.xlu0 %v907
        %909 = vperm.xlu0 %908, %v898
        %v910 = vpop.permute.xlu0 %909
        %v911 = vperm.slane %v280, 1
        %v912 = vlaneseq
        %v913 = vshrl.u32 %v912, 7
        %915 = vset.pattern.permute.xlu0 %v913
        %916 = vperm.xlu0 %915, %v911
        %v917 = vpop.permute.xlu0 %916
        %v918 = vlaneseq
        %v919 = vshrl.u32 %v918, 7
        %v920 = vadd.s32 %v919, 8
        %921 = vset.pattern.permute.xlu0 %v920
        %922 = vperm.xlu0 %921, %v911
        %v923 = vpop.permute.xlu0 %922
        %v924 = vperm.slane %v280, 2
        %v925 = vlaneseq
        %v926 = vshrl.u32 %v925, 7
        %928 = vset.pattern.permute.xlu0 %v926
        %929 = vperm.xlu0 %928, %v924
        %v930 = vpop.permute.xlu0 %929
        %v931 = vlaneseq
        %v932 = vshrl.u32 %v931, 7
        %v933 = vadd.s32 %v932, 8
        %934 = vset.pattern.permute.xlu0 %v933
        %935 = vperm.xlu0 %934, %v924
        %v936 = vpop.permute.xlu0 %935
        %v937 = vperm.slane %v280, 3
        %v938 = vlaneseq
        %v939 = vshrl.u32 %v938, 7
        %941 = vset.pattern.permute.xlu0 %v939
        %942 = vperm.xlu0 %941, %v937
        %v943 = vpop.permute.xlu0 %942
        %v944 = vlaneseq
        %v945 = vshrl.u32 %v944, 7
        %v946 = vadd.s32 %v945, 8
        %947 = vset.pattern.permute.xlu0 %v946
        %948 = vperm.xlu0 %947, %v937
        %v949 = vpop.permute.xlu0 %948
        %v950 = vperm.slane %v280, 4
        %v951 = vlaneseq
        %v952 = vshrl.u32 %v951, 7
        %954 = vset.pattern.permute.xlu0 %v952
        %955 = vperm.xlu0 %954, %v950
        %v956 = vpop.permute.xlu0 %955
        %v957 = vlaneseq
        %v958 = vshrl.u32 %v957, 7
        %v959 = vadd.s32 %v958, 8
        %960 = vset.pattern.permute.xlu0 %v959
        %961 = vperm.xlu0 %960, %v950
        %v962 = vpop.permute.xlu0 %961
        %v963 = vperm.slane %v280, 5
        %v964 = vlaneseq
        %v965 = vshrl.u32 %v964, 7
        %967 = vset.pattern.permute.xlu0 %v965
        %968 = vperm.xlu0 %967, %v963
        %v969 = vpop.permute.xlu0 %968
        %v970 = vlaneseq
        %v971 = vshrl.u32 %v970, 7
        %v972 = vadd.s32 %v971, 8
        %973 = vset.pattern.permute.xlu0 %v972
        %974 = vperm.xlu0 %973, %v963
        %v975 = vpop.permute.xlu0 %974
        %v976 = vperm.slane %v280, 6
        %v977 = vlaneseq
        %v978 = vshrl.u32 %v977, 7
        %980 = vset.pattern.permute.xlu0 %v978
        %981 = vperm.xlu0 %980, %v976
        %v982 = vpop.permute.xlu0 %981
        %v983 = vlaneseq
        %v984 = vshrl.u32 %v983, 7
        %v985 = vadd.s32 %v984, 8
        %986 = vset.pattern.permute.xlu0 %v985
        %987 = vperm.xlu0 %986, %v976
        %v988 = vpop.permute.xlu0 %987
        %v989 = vperm.slane %v280, 7
        %v990 = vlaneseq
        %v991 = vshrl.u32 %v990, 7
        %993 = vset.pattern.permute.xlu0 %v991
        %994 = vperm.xlu0 %993, %v989
        %v995 = vpop.permute.xlu0 %994
        %v996 = vlaneseq
        %v997 = vshrl.u32 %v996, 7
        %v998 = vadd.s32 %v997, 8
        %999 = vset.pattern.permute.xlu0 %v998
        %1000 = vperm.xlu0 %999, %v989
        %v1001 = vpop.permute.xlu0 %1000
        %v1002 = vperm.slane %v281, 0
        %v1003 = vlaneseq
        %v1004 = vshrl.u32 %v1003, 7
        %1006 = vset.pattern.permute.xlu0 %v1004
        %1007 = vperm.xlu0 %1006, %v1002
        %v1008 = vpop.permute.xlu0 %1007
        %v1009 = vlaneseq
        %v1010 = vshrl.u32 %v1009, 7
        %v1011 = vadd.s32 %v1010, 8
        %1012 = vset.pattern.permute.xlu0 %v1011
        %1013 = vperm.xlu0 %1012, %v1002
        %v1014 = vpop.permute.xlu0 %1013
        %v1015 = vperm.slane %v281, 1
        %v1016 = vlaneseq
        %v1017 = vshrl.u32 %v1016, 7
        %1019 = vset.pattern.permute.xlu0 %v1017
        %1020 = vperm.xlu0 %1019, %v1015
        %v1021 = vpop.permute.xlu0 %1020
        %v1022 = vlaneseq
        %v1023 = vshrl.u32 %v1022, 7
        %v1024 = vadd.s32 %v1023, 8
        %1025 = vset.pattern.permute.xlu0 %v1024
        %1026 = vperm.xlu0 %1025, %v1015
        %v1027 = vpop.permute.xlu0 %1026
        %v1028 = vperm.slane %v281, 2
        %v1029 = vlaneseq
        %v1030 = vshrl.u32 %v1029, 7
        %1032 = vset.pattern.permute.xlu0 %v1030
        %1033 = vperm.xlu0 %1032, %v1028
        %v1034 = vpop.permute.xlu0 %1033
        %v1035 = vlaneseq
        %v1036 = vshrl.u32 %v1035, 7
        %v1037 = vadd.s32 %v1036, 8
        %1038 = vset.pattern.permute.xlu0 %v1037
        %1039 = vperm.xlu0 %1038, %v1028
        %v1040 = vpop.permute.xlu0 %1039
        %v1041 = vperm.slane %v281, 3
        %v1042 = vlaneseq
        %v1043 = vshrl.u32 %v1042, 7
        %1045 = vset.pattern.permute.xlu0 %v1043
        %1046 = vperm.xlu0 %1045, %v1041
        %v1047 = vpop.permute.xlu0 %1046
        %v1048 = vlaneseq
        %v1049 = vshrl.u32 %v1048, 7
        %v1050 = vadd.s32 %v1049, 8
        %1051 = vset.pattern.permute.xlu0 %v1050
        %1052 = vperm.xlu0 %1051, %v1041
        %v1053 = vpop.permute.xlu0 %1052
        %v1054 = vperm.slane %v281, 4
        %v1055 = vlaneseq
        %v1056 = vshrl.u32 %v1055, 7
        %1058 = vset.pattern.permute.xlu0 %v1056
        %1059 = vperm.xlu0 %1058, %v1054
        %v1060 = vpop.permute.xlu0 %1059
        %v1061 = vlaneseq
        %v1062 = vshrl.u32 %v1061, 7
        %v1063 = vadd.s32 %v1062, 8
        %1064 = vset.pattern.permute.xlu0 %v1063
        %1065 = vperm.xlu0 %1064, %v1054
        %v1066 = vpop.permute.xlu0 %1065
        %v1067 = vperm.slane %v281, 5
        %v1068 = vlaneseq
        %v1069 = vshrl.u32 %v1068, 7
        %1071 = vset.pattern.permute.xlu0 %v1069
        %1072 = vperm.xlu0 %1071, %v1067
        %v1073 = vpop.permute.xlu0 %1072
        %v1074 = vlaneseq
        %v1075 = vshrl.u32 %v1074, 7
        %v1076 = vadd.s32 %v1075, 8
        %1077 = vset.pattern.permute.xlu0 %v1076
        %1078 = vperm.xlu0 %1077, %v1067
        %v1079 = vpop.permute.xlu0 %1078
        %v1080 = vperm.slane %v281, 6
        %v1081 = vlaneseq
        %v1082 = vshrl.u32 %v1081, 7
        %1084 = vset.pattern.permute.xlu0 %v1082
        %1085 = vperm.xlu0 %1084, %v1080
        %v1086 = vpop.permute.xlu0 %1085
        %v1087 = vlaneseq
        %v1088 = vshrl.u32 %v1087, 7
        %v1089 = vadd.s32 %v1088, 8
        %1090 = vset.pattern.permute.xlu0 %v1089
        %1091 = vperm.xlu0 %1090, %v1080
        %v1092 = vpop.permute.xlu0 %1091
        %v1093 = vperm.slane %v281, 7
        %v1094 = vlaneseq
        %v1095 = vshrl.u32 %v1094, 7
        %1097 = vset.pattern.permute.xlu0 %v1095
        %1098 = vperm.xlu0 %1097, %v1093
        %v1099 = vpop.permute.xlu0 %1098
        %v1100 = vlaneseq
        %v1101 = vshrl.u32 %v1100, 7
        %v1102 = vadd.s32 %v1101, 8
        %1103 = vset.pattern.permute.xlu0 %v1102
        %1104 = vperm.xlu0 %1103, %v1093
        %v1105 = vpop.permute.xlu0 %1104
        %v1106 = vperm.slane %v282, 0
        %v1107 = vlaneseq
        %v1108 = vshrl.u32 %v1107, 7
        %1110 = vset.pattern.permute.xlu0 %v1108
        %1111 = vperm.xlu0 %1110, %v1106
        %v1112 = vpop.permute.xlu0 %1111
        %v1113 = vlaneseq
        %v1114 = vshrl.u32 %v1113, 7
        %v1115 = vadd.s32 %v1114, 8
        %1116 = vset.pattern.permute.xlu0 %v1115
        %1117 = vperm.xlu0 %1116, %v1106
        %v1118 = vpop.permute.xlu0 %1117
        %v1119 = vperm.slane %v282, 1
        %v1120 = vlaneseq
        %v1121 = vshrl.u32 %v1120, 7
        %1123 = vset.pattern.permute.xlu0 %v1121
        %1124 = vperm.xlu0 %1123, %v1119
        %v1125 = vpop.permute.xlu0 %1124
        %v1126 = vlaneseq
        %v1127 = vshrl.u32 %v1126, 7
        %v1128 = vadd.s32 %v1127, 8
        %1129 = vset.pattern.permute.xlu0 %v1128
        %1130 = vperm.xlu0 %1129, %v1119
        %v1131 = vpop.permute.xlu0 %1130
        %v1132 = vperm.slane %v282, 2
        %v1133 = vlaneseq
        %v1134 = vshrl.u32 %v1133, 7
        %1136 = vset.pattern.permute.xlu0 %v1134
        %1137 = vperm.xlu0 %1136, %v1132
        %v1138 = vpop.permute.xlu0 %1137
        %v1139 = vlaneseq
        %v1140 = vshrl.u32 %v1139, 7
        %v1141 = vadd.s32 %v1140, 8
        %1142 = vset.pattern.permute.xlu0 %v1141
        %1143 = vperm.xlu0 %1142, %v1132
        %v1144 = vpop.permute.xlu0 %1143
        %v1145 = vperm.slane %v282, 3
        %v1146 = vlaneseq
        %v1147 = vshrl.u32 %v1146, 7
        %1149 = vset.pattern.permute.xlu0 %v1147
        %1150 = vperm.xlu0 %1149, %v1145
        %v1151 = vpop.permute.xlu0 %1150
        %v1152 = vlaneseq
        %v1153 = vshrl.u32 %v1152, 7
        %v1154 = vadd.s32 %v1153, 8
        %1155 = vset.pattern.permute.xlu0 %v1154
        %1156 = vperm.xlu0 %1155, %v1145
        %v1157 = vpop.permute.xlu0 %1156
        %v1158 = vperm.slane %v282, 4
        %v1159 = vlaneseq
        %v1160 = vshrl.u32 %v1159, 7
        %1162 = vset.pattern.permute.xlu0 %v1160
        %1163 = vperm.xlu0 %1162, %v1158
        %v1164 = vpop.permute.xlu0 %1163
        %v1165 = vlaneseq
        %v1166 = vshrl.u32 %v1165, 7
        %v1167 = vadd.s32 %v1166, 8
        %1168 = vset.pattern.permute.xlu0 %v1167
        %1169 = vperm.xlu0 %1168, %v1158
        %v1170 = vpop.permute.xlu0 %1169
        %v1171 = vperm.slane %v282, 5
        %v1172 = vlaneseq
        %v1173 = vshrl.u32 %v1172, 7
        %1175 = vset.pattern.permute.xlu0 %v1173
        %1176 = vperm.xlu0 %1175, %v1171
        %v1177 = vpop.permute.xlu0 %1176
        %v1178 = vlaneseq
        %v1179 = vshrl.u32 %v1178, 7
        %v1180 = vadd.s32 %v1179, 8
        %1181 = vset.pattern.permute.xlu0 %v1180
        %1182 = vperm.xlu0 %1181, %v1171
        %v1183 = vpop.permute.xlu0 %1182
        %v1184 = vperm.slane %v282, 6
        %v1185 = vlaneseq
        %v1186 = vshrl.u32 %v1185, 7
        %1188 = vset.pattern.permute.xlu0 %v1186
        %1189 = vperm.xlu0 %1188, %v1184
        %v1190 = vpop.permute.xlu0 %1189
        %v1191 = vlaneseq
        %v1192 = vshrl.u32 %v1191, 7
        %v1193 = vadd.s32 %v1192, 8
        %1194 = vset.pattern.permute.xlu0 %v1193
        %1195 = vperm.xlu0 %1194, %v1184
        %v1196 = vpop.permute.xlu0 %1195
        %v1197 = vperm.slane %v282, 7
        %v1198 = vlaneseq
        %v1199 = vshrl.u32 %v1198, 7
        %1201 = vset.pattern.permute.xlu0 %v1199
        %1202 = vperm.xlu0 %1201, %v1197
        %v1203 = vpop.permute.xlu0 %1202
        %v1204 = vlaneseq
        %v1205 = vshrl.u32 %v1204, 7
        %v1206 = vadd.s32 %v1205, 8
        %1207 = vset.pattern.permute.xlu0 %v1206
        %1208 = vperm.xlu0 %1207, %v1197
        %v1209 = vpop.permute.xlu0 %1208
        %v1210 = vperm.slane %v283, 0
        %v1211 = vlaneseq
        %v1212 = vshrl.u32 %v1211, 7
        %1214 = vset.pattern.permute.xlu0 %v1212
        %1215 = vperm.xlu0 %1214, %v1210
        %v1216 = vpop.permute.xlu0 %1215
        %v1217 = vlaneseq
        %v1218 = vshrl.u32 %v1217, 7
        %v1219 = vadd.s32 %v1218, 8
        %1220 = vset.pattern.permute.xlu0 %v1219
        %1221 = vperm.xlu0 %1220, %v1210
        %v1222 = vpop.permute.xlu0 %1221
        %v1223 = vperm.slane %v283, 1
        %v1224 = vlaneseq
        %v1225 = vshrl.u32 %v1224, 7
        %1227 = vset.pattern.permute.xlu0 %v1225
        %1228 = vperm.xlu0 %1227, %v1223
        %v1229 = vpop.permute.xlu0 %1228
        %v1230 = vlaneseq
        %v1231 = vshrl.u32 %v1230, 7
        %v1232 = vadd.s32 %v1231, 8
        %1233 = vset.pattern.permute.xlu0 %v1232
        %1234 = vperm.xlu0 %1233, %v1223
        %v1235 = vpop.permute.xlu0 %1234
        %v1236 = vperm.slane %v283, 2
        %v1237 = vlaneseq
        %v1238 = vshrl.u32 %v1237, 7
        %1240 = vset.pattern.permute.xlu0 %v1238
        %1241 = vperm.xlu0 %1240, %v1236
        %v1242 = vpop.permute.xlu0 %1241
        %v1243 = vlaneseq
        %v1244 = vshrl.u32 %v1243, 7
        %v1245 = vadd.s32 %v1244, 8
        %1246 = vset.pattern.permute.xlu0 %v1245
        %1247 = vperm.xlu0 %1246, %v1236
        %v1248 = vpop.permute.xlu0 %1247
        %v1249 = vperm.slane %v283, 3
        %v1250 = vlaneseq
        %v1251 = vshrl.u32 %v1250, 7
        %1253 = vset.pattern.permute.xlu0 %v1251
        %1254 = vperm.xlu0 %1253, %v1249
        %v1255 = vpop.permute.xlu0 %1254
        %v1256 = vlaneseq
        %v1257 = vshrl.u32 %v1256, 7
        %v1258 = vadd.s32 %v1257, 8
        %1259 = vset.pattern.permute.xlu0 %v1258
        %1260 = vperm.xlu0 %1259, %v1249
        %v1261 = vpop.permute.xlu0 %1260
        %v1262 = vperm.slane %v283, 4
        %v1263 = vlaneseq
        %v1264 = vshrl.u32 %v1263, 7
        %1266 = vset.pattern.permute.xlu0 %v1264
        %1267 = vperm.xlu0 %1266, %v1262
        %v1268 = vpop.permute.xlu0 %1267
        %v1269 = vlaneseq
        %v1270 = vshrl.u32 %v1269, 7
        %v1271 = vadd.s32 %v1270, 8
        %1272 = vset.pattern.permute.xlu0 %v1271
        %1273 = vperm.xlu0 %1272, %v1262
        %v1274 = vpop.permute.xlu0 %1273
        %v1275 = vperm.slane %v283, 5
        %v1276 = vlaneseq
        %v1277 = vshrl.u32 %v1276, 7
        %1279 = vset.pattern.permute.xlu0 %v1277
        %1280 = vperm.xlu0 %1279, %v1275
        %v1281 = vpop.permute.xlu0 %1280
        %v1282 = vlaneseq
        %v1283 = vshrl.u32 %v1282, 7
        %v1284 = vadd.s32 %v1283, 8
        %1285 = vset.pattern.permute.xlu0 %v1284
        %1286 = vperm.xlu0 %1285, %v1275
        %v1287 = vpop.permute.xlu0 %1286
        %v1288 = vperm.slane %v283, 6
        %v1289 = vlaneseq
        %v1290 = vshrl.u32 %v1289, 7
        %1292 = vset.pattern.permute.xlu0 %v1290
        %1293 = vperm.xlu0 %1292, %v1288
        %v1294 = vpop.permute.xlu0 %1293
        %v1295 = vlaneseq
        %v1296 = vshrl.u32 %v1295, 7
        %v1297 = vadd.s32 %v1296, 8
        %1298 = vset.pattern.permute.xlu0 %v1297
        %1299 = vperm.xlu0 %1298, %v1288
        %v1300 = vpop.permute.xlu0 %1299
        %v1301 = vperm.slane %v283, 7
        %v1302 = vlaneseq
        %v1303 = vshrl.u32 %v1302, 7
        %1305 = vset.pattern.permute.xlu0 %v1303
        %1306 = vperm.xlu0 %1305, %v1301
        %v1307 = vpop.permute.xlu0 %1306
        %v1308 = vlaneseq
        %v1309 = vshrl.u32 %v1308, 7
        %v1310 = vadd.s32 %v1309, 8
        %1311 = vset.pattern.permute.xlu0 %v1310
        %1312 = vperm.xlu0 %1311, %v1301
        %v1313 = vpop.permute.xlu0 %1312
        %v1314 = vperm.slane %v284, 0
        %v1315 = vlaneseq
        %v1316 = vshrl.u32 %v1315, 7
        %1318 = vset.pattern.permute.xlu0 %v1316
        %1319 = vperm.xlu0 %1318, %v1314
        %v1320 = vpop.permute.xlu0 %1319
        %v1321 = vlaneseq
        %v1322 = vshrl.u32 %v1321, 7
        %v1323 = vadd.s32 %v1322, 8
        %1324 = vset.pattern.permute.xlu0 %v1323
        %1325 = vperm.xlu0 %1324, %v1314
        %v1326 = vpop.permute.xlu0 %1325
        %v1327 = vperm.slane %v284, 1
        %v1328 = vlaneseq
        %v1329 = vshrl.u32 %v1328, 7
        %1331 = vset.pattern.permute.xlu0 %v1329
        %1332 = vperm.xlu0 %1331, %v1327
        %v1333 = vpop.permute.xlu0 %1332
        %v1334 = vlaneseq
        %v1335 = vshrl.u32 %v1334, 7
        %v1336 = vadd.s32 %v1335, 8
        %1337 = vset.pattern.permute.xlu0 %v1336
        %1338 = vperm.xlu0 %1337, %v1327
        %v1339 = vpop.permute.xlu0 %1338
        %v1340 = vperm.slane %v284, 2
        %v1341 = vlaneseq
        %v1342 = vshrl.u32 %v1341, 7
        %1344 = vset.pattern.permute.xlu0 %v1342
        %1345 = vperm.xlu0 %1344, %v1340
        %v1346 = vpop.permute.xlu0 %1345
        %v1347 = vlaneseq
        %v1348 = vshrl.u32 %v1347, 7
        %v1349 = vadd.s32 %v1348, 8
        %1350 = vset.pattern.permute.xlu0 %v1349
        %1351 = vperm.xlu0 %1350, %v1340
        %v1352 = vpop.permute.xlu0 %1351
        %v1353 = vperm.slane %v284, 3
        %v1354 = vlaneseq
        %v1355 = vshrl.u32 %v1354, 7
        %1357 = vset.pattern.permute.xlu0 %v1355
        %1358 = vperm.xlu0 %1357, %v1353
        %v1359 = vpop.permute.xlu0 %1358
        %v1360 = vlaneseq
        %v1361 = vshrl.u32 %v1360, 7
        %v1362 = vadd.s32 %v1361, 8
        %1363 = vset.pattern.permute.xlu0 %v1362
        %1364 = vperm.xlu0 %1363, %v1353
        %v1365 = vpop.permute.xlu0 %1364
        %v1366 = vperm.slane %v284, 4
        %v1367 = vlaneseq
        %v1368 = vshrl.u32 %v1367, 7
        %1370 = vset.pattern.permute.xlu0 %v1368
        %1371 = vperm.xlu0 %1370, %v1366
        %v1372 = vpop.permute.xlu0 %1371
        %v1373 = vlaneseq
        %v1374 = vshrl.u32 %v1373, 7
        %v1375 = vadd.s32 %v1374, 8
        %1376 = vset.pattern.permute.xlu0 %v1375
        %1377 = vperm.xlu0 %1376, %v1366
        %v1378 = vpop.permute.xlu0 %1377
        %v1379 = vperm.slane %v284, 5
        %v1380 = vlaneseq
        %v1381 = vshrl.u32 %v1380, 7
        %1383 = vset.pattern.permute.xlu0 %v1381
        %1384 = vperm.xlu0 %1383, %v1379
        %v1385 = vpop.permute.xlu0 %1384
        %v1386 = vlaneseq
        %v1387 = vshrl.u32 %v1386, 7
        %v1388 = vadd.s32 %v1387, 8
        %1389 = vset.pattern.permute.xlu0 %v1388
        %1390 = vperm.xlu0 %1389, %v1379
        %v1391 = vpop.permute.xlu0 %1390
        %v1392 = vperm.slane %v284, 6
        %v1393 = vlaneseq
        %v1394 = vshrl.u32 %v1393, 7
        %1396 = vset.pattern.permute.xlu0 %v1394
        %1397 = vperm.xlu0 %1396, %v1392
        %v1398 = vpop.permute.xlu0 %1397
        %v1399 = vlaneseq
        %v1400 = vshrl.u32 %v1399, 7
        %v1401 = vadd.s32 %v1400, 8
        %1402 = vset.pattern.permute.xlu0 %v1401
        %1403 = vperm.xlu0 %1402, %v1392
        %v1404 = vpop.permute.xlu0 %1403
        %v1405 = vperm.slane %v284, 7
        %v1406 = vlaneseq
        %v1407 = vshrl.u32 %v1406, 7
        %1409 = vset.pattern.permute.xlu0 %v1407
        %1410 = vperm.xlu0 %1409, %v1405
        %v1411 = vpop.permute.xlu0 %1410
        %v1412 = vlaneseq
        %v1413 = vshrl.u32 %v1412, 7
        %v1414 = vadd.s32 %v1413, 8
        %1415 = vset.pattern.permute.xlu0 %v1414
        %1416 = vperm.xlu0 %1415, %v1405
        %v1417 = vpop.permute.xlu0 %1416
        %v1418 = vperm.slane %v285, 0
        %v1419 = vlaneseq
        %v1420 = vshrl.u32 %v1419, 7
        %1422 = vset.pattern.permute.xlu0 %v1420
        %1423 = vperm.xlu0 %1422, %v1418
        %v1424 = vpop.permute.xlu0 %1423
        %v1425 = vlaneseq
        %v1426 = vshrl.u32 %v1425, 7
        %v1427 = vadd.s32 %v1426, 8
        %1428 = vset.pattern.permute.xlu0 %v1427
        %1429 = vperm.xlu0 %1428, %v1418
        %v1430 = vpop.permute.xlu0 %1429
        %v1431 = vperm.slane %v285, 1
        %v1432 = vlaneseq
        %v1433 = vshrl.u32 %v1432, 7
        %1435 = vset.pattern.permute.xlu0 %v1433
        %1436 = vperm.xlu0 %1435, %v1431
        %v1437 = vpop.permute.xlu0 %1436
        %v1438 = vlaneseq
        %v1439 = vshrl.u32 %v1438, 7
        %v1440 = vadd.s32 %v1439, 8
        %1441 = vset.pattern.permute.xlu0 %v1440
        %1442 = vperm.xlu0 %1441, %v1431
        %v1443 = vpop.permute.xlu0 %1442
        %v1444 = vperm.slane %v285, 2
        %v1445 = vlaneseq
        %v1446 = vshrl.u32 %v1445, 7
        %1448 = vset.pattern.permute.xlu0 %v1446
        %1449 = vperm.xlu0 %1448, %v1444
        %v1450 = vpop.permute.xlu0 %1449
        %v1451 = vlaneseq
        %v1452 = vshrl.u32 %v1451, 7
        %v1453 = vadd.s32 %v1452, 8
        %1454 = vset.pattern.permute.xlu0 %v1453
        %1455 = vperm.xlu0 %1454, %v1444
        %v1456 = vpop.permute.xlu0 %1455
        %v1457 = vperm.slane %v285, 3
        %v1458 = vlaneseq
        %v1459 = vshrl.u32 %v1458, 7
        %1461 = vset.pattern.permute.xlu0 %v1459
        %1462 = vperm.xlu0 %1461, %v1457
        %v1463 = vpop.permute.xlu0 %1462
        %v1464 = vlaneseq
        %v1465 = vshrl.u32 %v1464, 7
        %v1466 = vadd.s32 %v1465, 8
        %1467 = vset.pattern.permute.xlu0 %v1466
        %1468 = vperm.xlu0 %1467, %v1457
        %v1469 = vpop.permute.xlu0 %1468
        %v1470 = vperm.slane %v285, 4
        %v1471 = vlaneseq
        %v1472 = vshrl.u32 %v1471, 7
        %1474 = vset.pattern.permute.xlu0 %v1472
        %1475 = vperm.xlu0 %1474, %v1470
        %v1476 = vpop.permute.xlu0 %1475
        %v1477 = vlaneseq
        %v1478 = vshrl.u32 %v1477, 7
        %v1479 = vadd.s32 %v1478, 8
        %1480 = vset.pattern.permute.xlu0 %v1479
        %1481 = vperm.xlu0 %1480, %v1470
        %v1482 = vpop.permute.xlu0 %1481
        %v1483 = vperm.slane %v285, 5
        %v1484 = vlaneseq
        %v1485 = vshrl.u32 %v1484, 7
        %1487 = vset.pattern.permute.xlu0 %v1485
        %1488 = vperm.xlu0 %1487, %v1483
        %v1489 = vpop.permute.xlu0 %1488
        %v1490 = vlaneseq
        %v1491 = vshrl.u32 %v1490, 7
        %v1492 = vadd.s32 %v1491, 8
        %1493 = vset.pattern.permute.xlu0 %v1492
        %1494 = vperm.xlu0 %1493, %v1483
        %v1495 = vpop.permute.xlu0 %1494
        %v1496 = vperm.slane %v285, 6
        %v1497 = vlaneseq
        %v1498 = vshrl.u32 %v1497, 7
        %1500 = vset.pattern.permute.xlu0 %v1498
        %1501 = vperm.xlu0 %1500, %v1496
        %v1502 = vpop.permute.xlu0 %1501
        %v1503 = vlaneseq
        %v1504 = vshrl.u32 %v1503, 7
        %v1505 = vadd.s32 %v1504, 8
        %1506 = vset.pattern.permute.xlu0 %v1505
        %1507 = vperm.xlu0 %1506, %v1496
        %v1508 = vpop.permute.xlu0 %1507
        %v1509 = vperm.slane %v285, 7
        %v1510 = vlaneseq
        %v1511 = vshrl.u32 %v1510, 7
        %1513 = vset.pattern.permute.xlu0 %v1511
        %1514 = vperm.xlu0 %1513, %v1509
        %v1515 = vpop.permute.xlu0 %1514
        %v1516 = vlaneseq
        %v1517 = vshrl.u32 %v1516, 7
        %v1518 = vadd.s32 %v1517, 8
        %1519 = vset.pattern.permute.xlu0 %v1518
        %1520 = vperm.xlu0 %1519, %v1509
        %v1521 = vpop.permute.xlu0 %1520
        %v1522 = vperm.slane %v286, 0
        %v1523 = vlaneseq
        %v1524 = vshrl.u32 %v1523, 7
        %1526 = vset.pattern.permute.xlu0 %v1524
        %1527 = vperm.xlu0 %1526, %v1522
        %v1528 = vpop.permute.xlu0 %1527
        %v1529 = vlaneseq
        %v1530 = vshrl.u32 %v1529, 7
        %v1531 = vadd.s32 %v1530, 8
        %1532 = vset.pattern.permute.xlu0 %v1531
        %1533 = vperm.xlu0 %1532, %v1522
        %v1534 = vpop.permute.xlu0 %1533
        %v1535 = vperm.slane %v286, 1
        %v1536 = vlaneseq
        %v1537 = vshrl.u32 %v1536, 7
        %1539 = vset.pattern.permute.xlu0 %v1537
        %1540 = vperm.xlu0 %1539, %v1535
        %v1541 = vpop.permute.xlu0 %1540
        %v1542 = vlaneseq
        %v1543 = vshrl.u32 %v1542, 7
        %v1544 = vadd.s32 %v1543, 8
        %1545 = vset.pattern.permute.xlu0 %v1544
        %1546 = vperm.xlu0 %1545, %v1535
        %v1547 = vpop.permute.xlu0 %1546
        %v1548 = vperm.slane %v286, 2
        %v1549 = vlaneseq
        %v1550 = vshrl.u32 %v1549, 7
        %1552 = vset.pattern.permute.xlu0 %v1550
        %1553 = vperm.xlu0 %1552, %v1548
        %v1554 = vpop.permute.xlu0 %1553
        %v1555 = vlaneseq
        %v1556 = vshrl.u32 %v1555, 7
        %v1557 = vadd.s32 %v1556, 8
        %1558 = vset.pattern.permute.xlu0 %v1557
        %1559 = vperm.xlu0 %1558, %v1548
        %v1560 = vpop.permute.xlu0 %1559
        %v1561 = vperm.slane %v286, 3
        %v1562 = vlaneseq
        %v1563 = vshrl.u32 %v1562, 7
        %1565 = vset.pattern.permute.xlu0 %v1563
        %1566 = vperm.xlu0 %1565, %v1561
        %v1567 = vpop.permute.xlu0 %1566
        %v1568 = vlaneseq
        %v1569 = vshrl.u32 %v1568, 7
        %v1570 = vadd.s32 %v1569, 8
        %1571 = vset.pattern.permute.xlu0 %v1570
        %1572 = vperm.xlu0 %1571, %v1561
        %v1573 = vpop.permute.xlu0 %1572
        %v1574 = vperm.slane %v286, 4
        %v1575 = vlaneseq
        %v1576 = vshrl.u32 %v1575, 7
        %1578 = vset.pattern.permute.xlu0 %v1576
        %1579 = vperm.xlu0 %1578, %v1574
        %v1580 = vpop.permute.xlu0 %1579
        %v1581 = vlaneseq
        %v1582 = vshrl.u32 %v1581, 7
        %v1583 = vadd.s32 %v1582, 8
        %1584 = vset.pattern.permute.xlu0 %v1583
        %1585 = vperm.xlu0 %1584, %v1574
        %v1586 = vpop.permute.xlu0 %1585
        %v1587 = vperm.slane %v286, 5
        %v1588 = vlaneseq
        %v1589 = vshrl.u32 %v1588, 7
        %1591 = vset.pattern.permute.xlu0 %v1589
        %1592 = vperm.xlu0 %1591, %v1587
        %v1593 = vpop.permute.xlu0 %1592
        %v1594 = vlaneseq
        %v1595 = vshrl.u32 %v1594, 7
        %v1596 = vadd.s32 %v1595, 8
        %1597 = vset.pattern.permute.xlu0 %v1596
        %1598 = vperm.xlu0 %1597, %v1587
        %v1599 = vpop.permute.xlu0 %1598
        %v1600 = vperm.slane %v286, 6
        %v1601 = vlaneseq
        %v1602 = vshrl.u32 %v1601, 7
        %1604 = vset.pattern.permute.xlu0 %v1602
        %1605 = vperm.xlu0 %1604, %v1600
        %v1606 = vpop.permute.xlu0 %1605
        %v1607 = vlaneseq
        %v1608 = vshrl.u32 %v1607, 7
        %v1609 = vadd.s32 %v1608, 8
        %1610 = vset.pattern.permute.xlu0 %v1609
        %1611 = vperm.xlu0 %1610, %v1600
        %v1612 = vpop.permute.xlu0 %1611
        %v1613 = vperm.slane %v286, 7
        %v1614 = vlaneseq
        %v1615 = vshrl.u32 %v1614, 7
        %1617 = vset.pattern.permute.xlu0 %v1615
        %1618 = vperm.xlu0 %1617, %v1613
        %v1619 = vpop.permute.xlu0 %1618
        %v1620 = vlaneseq
        %v1621 = vshrl.u32 %v1620, 7
        %v1622 = vadd.s32 %v1621, 8
        %1623 = vset.pattern.permute.xlu0 %v1622
        %1624 = vperm.xlu0 %1623, %v1613
        %v1625 = vpop.permute.xlu0 %1624
        %v1626 = vperm.slane %v287, 0
        %v1627 = vlaneseq
        %v1628 = vshrl.u32 %v1627, 7
        %1630 = vset.pattern.permute.xlu0 %v1628
        %1631 = vperm.xlu0 %1630, %v1626
        %v1632 = vpop.permute.xlu0 %1631
        %v1633 = vlaneseq
        %v1634 = vshrl.u32 %v1633, 7
        %v1635 = vadd.s32 %v1634, 8
        %1636 = vset.pattern.permute.xlu0 %v1635
        %1637 = vperm.xlu0 %1636, %v1626
        %v1638 = vpop.permute.xlu0 %1637
        %v1639 = vperm.slane %v287, 1
        %v1640 = vlaneseq
        %v1641 = vshrl.u32 %v1640, 7
        %1643 = vset.pattern.permute.xlu0 %v1641
        %1644 = vperm.xlu0 %1643, %v1639
        %v1645 = vpop.permute.xlu0 %1644
        %v1646 = vlaneseq
        %v1647 = vshrl.u32 %v1646, 7
        %v1648 = vadd.s32 %v1647, 8
        %1649 = vset.pattern.permute.xlu0 %v1648
        %1650 = vperm.xlu0 %1649, %v1639
        %v1651 = vpop.permute.xlu0 %1650
        %v1652 = vperm.slane %v287, 2
        %v1653 = vlaneseq
        %v1654 = vshrl.u32 %v1653, 7
        %1656 = vset.pattern.permute.xlu0 %v1654
        %1657 = vperm.xlu0 %1656, %v1652
        %v1658 = vpop.permute.xlu0 %1657
        %v1659 = vlaneseq
        %v1660 = vshrl.u32 %v1659, 7
        %v1661 = vadd.s32 %v1660, 8
        %1662 = vset.pattern.permute.xlu0 %v1661
        %1663 = vperm.xlu0 %1662, %v1652
        %v1664 = vpop.permute.xlu0 %1663
        %v1665 = vperm.slane %v287, 3
        %v1666 = vlaneseq
        %v1667 = vshrl.u32 %v1666, 7
        %1669 = vset.pattern.permute.xlu0 %v1667
        %1670 = vperm.xlu0 %1669, %v1665
        %v1671 = vpop.permute.xlu0 %1670
        %v1672 = vlaneseq
        %v1673 = vshrl.u32 %v1672, 7
        %v1674 = vadd.s32 %v1673, 8
        %1675 = vset.pattern.permute.xlu0 %v1674
        %1676 = vperm.xlu0 %1675, %v1665
        %v1677 = vpop.permute.xlu0 %1676
        %v1678 = vperm.slane %v287, 4
        %v1679 = vlaneseq
        %v1680 = vshrl.u32 %v1679, 7
        %1682 = vset.pattern.permute.xlu0 %v1680
        %1683 = vperm.xlu0 %1682, %v1678
        %v1684 = vpop.permute.xlu0 %1683
        %v1685 = vlaneseq
        %v1686 = vshrl.u32 %v1685, 7
        %v1687 = vadd.s32 %v1686, 8
        %1688 = vset.pattern.permute.xlu0 %v1687
        %1689 = vperm.xlu0 %1688, %v1678
        %v1690 = vpop.permute.xlu0 %1689
        %v1691 = vperm.slane %v287, 5
        %v1692 = vlaneseq
        %v1693 = vshrl.u32 %v1692, 7
        %1695 = vset.pattern.permute.xlu0 %v1693
        %1696 = vperm.xlu0 %1695, %v1691
        %v1697 = vpop.permute.xlu0 %1696
        %v1698 = vlaneseq
        %v1699 = vshrl.u32 %v1698, 7
        %v1700 = vadd.s32 %v1699, 8
        %1701 = vset.pattern.permute.xlu0 %v1700
        %1702 = vperm.xlu0 %1701, %v1691
        %v1703 = vpop.permute.xlu0 %1702
        %v1704 = vperm.slane %v287, 6
        %v1705 = vlaneseq
        %v1706 = vshrl.u32 %v1705, 7
        %1708 = vset.pattern.permute.xlu0 %v1706
        %1709 = vperm.xlu0 %1708, %v1704
        %v1710 = vpop.permute.xlu0 %1709
        %v1711 = vlaneseq
        %v1712 = vshrl.u32 %v1711, 7
        %v1713 = vadd.s32 %v1712, 8
        %1714 = vset.pattern.permute.xlu0 %v1713
        %1715 = vperm.xlu0 %1714, %v1704
        %v1716 = vpop.permute.xlu0 %1715
        %v1717 = vperm.slane %v287, 7
        %v1718 = vlaneseq
        %v1719 = vshrl.u32 %v1718, 7
        %1721 = vset.pattern.permute.xlu0 %v1719
        %1722 = vperm.xlu0 %1721, %v1717
        %v1723 = vpop.permute.xlu0 %1722
        %v1724 = vlaneseq
        %v1725 = vshrl.u32 %v1724, 7
        %v1726 = vadd.s32 %v1725, 8
        %1727 = vset.pattern.permute.xlu0 %v1726
        %1728 = vperm.xlu0 %1727, %v1717
        %v1729 = vpop.permute.xlu0 %1728
        %v1730 = vperm.slane %v288, 0
        %v1731 = vlaneseq
        %v1732 = vshrl.u32 %v1731, 7
        %1734 = vset.pattern.permute.xlu0 %v1732
        %1735 = vperm.xlu0 %1734, %v1730
        %v1736 = vpop.permute.xlu0 %1735
        %v1737 = vlaneseq
        %v1738 = vshrl.u32 %v1737, 7
        %v1739 = vadd.s32 %v1738, 8
        %1740 = vset.pattern.permute.xlu0 %v1739
        %1741 = vperm.xlu0 %1740, %v1730
        %v1742 = vpop.permute.xlu0 %1741
        %v1743 = vperm.slane %v288, 1
        %v1744 = vlaneseq
        %v1745 = vshrl.u32 %v1744, 7
        %1747 = vset.pattern.permute.xlu0 %v1745
        %1748 = vperm.xlu0 %1747, %v1743
        %v1749 = vpop.permute.xlu0 %1748
        %v1750 = vlaneseq
        %v1751 = vshrl.u32 %v1750, 7
        %v1752 = vadd.s32 %v1751, 8
        %1753 = vset.pattern.permute.xlu0 %v1752
        %1754 = vperm.xlu0 %1753, %v1743
        %v1755 = vpop.permute.xlu0 %1754
        %v1756 = vperm.slane %v288, 2
        %v1757 = vlaneseq
        %v1758 = vshrl.u32 %v1757, 7
        %1760 = vset.pattern.permute.xlu0 %v1758
        %1761 = vperm.xlu0 %1760, %v1756
        %v1762 = vpop.permute.xlu0 %1761
        %v1763 = vlaneseq
        %v1764 = vshrl.u32 %v1763, 7
        %v1765 = vadd.s32 %v1764, 8
        %1766 = vset.pattern.permute.xlu0 %v1765
        %1767 = vperm.xlu0 %1766, %v1756
        %v1768 = vpop.permute.xlu0 %1767
        %v1769 = vperm.slane %v288, 3
        %v1770 = vlaneseq
        %v1771 = vshrl.u32 %v1770, 7
        %1773 = vset.pattern.permute.xlu0 %v1771
        %1774 = vperm.xlu0 %1773, %v1769
        %v1775 = vpop.permute.xlu0 %1774
        %v1776 = vlaneseq
        %v1777 = vshrl.u32 %v1776, 7
        %v1778 = vadd.s32 %v1777, 8
        %1779 = vset.pattern.permute.xlu0 %v1778
        %1780 = vperm.xlu0 %1779, %v1769
        %v1781 = vpop.permute.xlu0 %1780
        %v1782 = vperm.slane %v288, 4
        %v1783 = vlaneseq
        %v1784 = vshrl.u32 %v1783, 7
        %1786 = vset.pattern.permute.xlu0 %v1784
        %1787 = vperm.xlu0 %1786, %v1782
        %v1788 = vpop.permute.xlu0 %1787
        %v1789 = vlaneseq
        %v1790 = vshrl.u32 %v1789, 7
        %v1791 = vadd.s32 %v1790, 8
        %1792 = vset.pattern.permute.xlu0 %v1791
        %1793 = vperm.xlu0 %1792, %v1782
        %v1794 = vpop.permute.xlu0 %1793
        %v1795 = vperm.slane %v288, 5
        %v1796 = vlaneseq
        %v1797 = vshrl.u32 %v1796, 7
        %1799 = vset.pattern.permute.xlu0 %v1797
        %1800 = vperm.xlu0 %1799, %v1795
        %v1801 = vpop.permute.xlu0 %1800
        %v1802 = vlaneseq
        %v1803 = vshrl.u32 %v1802, 7
        %v1804 = vadd.s32 %v1803, 8
        %1805 = vset.pattern.permute.xlu0 %v1804
        %1806 = vperm.xlu0 %1805, %v1795
        %v1807 = vpop.permute.xlu0 %1806
        %v1808 = vperm.slane %v288, 6
        %v1809 = vlaneseq
        %v1810 = vshrl.u32 %v1809, 7
        %1812 = vset.pattern.permute.xlu0 %v1810
        %1813 = vperm.xlu0 %1812, %v1808
        %v1814 = vpop.permute.xlu0 %1813
        %v1815 = vlaneseq
        %v1816 = vshrl.u32 %v1815, 7
        %v1817 = vadd.s32 %v1816, 8
        %1818 = vset.pattern.permute.xlu0 %v1817
        %1819 = vperm.xlu0 %1818, %v1808
        %v1820 = vpop.permute.xlu0 %1819
        %v1821 = vperm.slane %v288, 7
        %v1822 = vlaneseq
        %v1823 = vshrl.u32 %v1822, 7
        %1825 = vset.pattern.permute.xlu0 %v1823
        %1826 = vperm.xlu0 %1825, %v1821
        %v1827 = vpop.permute.xlu0 %1826
        %v1828 = vlaneseq
        %v1829 = vshrl.u32 %v1828, 7
        %v1830 = vadd.s32 %v1829, 8
        %1831 = vset.pattern.permute.xlu0 %v1830
        %1832 = vperm.xlu0 %1831, %v1821
        %v1833 = vpop.permute.xlu0 %1832
        %v1834 = vperm.slane %v289, 0
        %v1835 = vlaneseq
        %v1836 = vshrl.u32 %v1835, 7
        %1838 = vset.pattern.permute.xlu0 %v1836
        %1839 = vperm.xlu0 %1838, %v1834
        %v1840 = vpop.permute.xlu0 %1839
        %v1841 = vlaneseq
        %v1842 = vshrl.u32 %v1841, 7
        %v1843 = vadd.s32 %v1842, 8
        %1844 = vset.pattern.permute.xlu0 %v1843
        %1845 = vperm.xlu0 %1844, %v1834
        %v1846 = vpop.permute.xlu0 %1845
        %v1847 = vperm.slane %v289, 1
        %v1848 = vlaneseq
        %v1849 = vshrl.u32 %v1848, 7
        %1851 = vset.pattern.permute.xlu0 %v1849
        %1852 = vperm.xlu0 %1851, %v1847
        %v1853 = vpop.permute.xlu0 %1852
        %v1854 = vlaneseq
        %v1855 = vshrl.u32 %v1854, 7
        %v1856 = vadd.s32 %v1855, 8
        %1857 = vset.pattern.permute.xlu0 %v1856
        %1858 = vperm.xlu0 %1857, %v1847
        %v1859 = vpop.permute.xlu0 %1858
        %v1860 = vperm.slane %v289, 2
        %v1861 = vlaneseq
        %v1862 = vshrl.u32 %v1861, 7
        %1864 = vset.pattern.permute.xlu0 %v1862
        %1865 = vperm.xlu0 %1864, %v1860
        %v1866 = vpop.permute.xlu0 %1865
        %v1867 = vlaneseq
        %v1868 = vshrl.u32 %v1867, 7
        %v1869 = vadd.s32 %v1868, 8
        %1870 = vset.pattern.permute.xlu0 %v1869
        %1871 = vperm.xlu0 %1870, %v1860
        %v1872 = vpop.permute.xlu0 %1871
        %v1873 = vperm.slane %v289, 3
        %v1874 = vlaneseq
        %v1875 = vshrl.u32 %v1874, 7
        %1877 = vset.pattern.permute.xlu0 %v1875
        %1878 = vperm.xlu0 %1877, %v1873
        %v1879 = vpop.permute.xlu0 %1878
        %v1880 = vlaneseq
        %v1881 = vshrl.u32 %v1880, 7
        %v1882 = vadd.s32 %v1881, 8
        %1883 = vset.pattern.permute.xlu0 %v1882
        %1884 = vperm.xlu0 %1883, %v1873
        %v1885 = vpop.permute.xlu0 %1884
        %v1886 = vperm.slane %v289, 4
        %v1887 = vlaneseq
        %v1888 = vshrl.u32 %v1887, 7
        %1890 = vset.pattern.permute.xlu0 %v1888
        %1891 = vperm.xlu0 %1890, %v1886
        %v1892 = vpop.permute.xlu0 %1891
        %v1893 = vlaneseq
        %v1894 = vshrl.u32 %v1893, 7
        %v1895 = vadd.s32 %v1894, 8
        %1896 = vset.pattern.permute.xlu0 %v1895
        %1897 = vperm.xlu0 %1896, %v1886
        %v1898 = vpop.permute.xlu0 %1897
        %v1899 = vperm.slane %v289, 5
        %v1900 = vlaneseq
        %v1901 = vshrl.u32 %v1900, 7
        %1903 = vset.pattern.permute.xlu0 %v1901
        %1904 = vperm.xlu0 %1903, %v1899
        %v1905 = vpop.permute.xlu0 %1904
        %v1906 = vlaneseq
        %v1907 = vshrl.u32 %v1906, 7
        %v1908 = vadd.s32 %v1907, 8
        %1909 = vset.pattern.permute.xlu0 %v1908
        %1910 = vperm.xlu0 %1909, %v1899
        %v1911 = vpop.permute.xlu0 %1910
        %v1912 = vperm.slane %v289, 6
        %v1913 = vlaneseq
        %v1914 = vshrl.u32 %v1913, 7
        %1916 = vset.pattern.permute.xlu0 %v1914
        %1917 = vperm.xlu0 %1916, %v1912
        %v1918 = vpop.permute.xlu0 %1917
        %v1919 = vlaneseq
        %v1920 = vshrl.u32 %v1919, 7
        %v1921 = vadd.s32 %v1920, 8
        %1922 = vset.pattern.permute.xlu0 %v1921
        %1923 = vperm.xlu0 %1922, %v1912
        %v1924 = vpop.permute.xlu0 %1923
        %v1925 = vperm.slane %v289, 7
        %v1926 = vlaneseq
        %v1927 = vshrl.u32 %v1926, 7
        %1929 = vset.pattern.permute.xlu0 %v1927
        %1930 = vperm.xlu0 %1929, %v1925
        %v1931 = vpop.permute.xlu0 %1930
        %v1932 = vlaneseq
        %v1933 = vshrl.u32 %v1932, 7
        %v1934 = vadd.s32 %v1933, 8
        %1935 = vset.pattern.permute.xlu0 %v1934
        %1936 = vperm.xlu0 %1935, %v1925
        %v1937 = vpop.permute.xlu0 %1936
        %v1938 = vperm.slane %v290, 0
        %v1939 = vlaneseq
        %v1940 = vshrl.u32 %v1939, 7
        %1942 = vset.pattern.permute.xlu0 %v1940
        %1943 = vperm.xlu0 %1942, %v1938
        %v1944 = vpop.permute.xlu0 %1943
        %v1945 = vlaneseq
        %v1946 = vshrl.u32 %v1945, 7
        %v1947 = vadd.s32 %v1946, 8
        %1948 = vset.pattern.permute.xlu0 %v1947
        %1949 = vperm.xlu0 %1948, %v1938
        %v1950 = vpop.permute.xlu0 %1949
        %v1951 = vperm.slane %v290, 1
        %v1952 = vlaneseq
        %v1953 = vshrl.u32 %v1952, 7
        %1955 = vset.pattern.permute.xlu0 %v1953
        %1956 = vperm.xlu0 %1955, %v1951
        %v1957 = vpop.permute.xlu0 %1956
        %v1958 = vlaneseq
        %v1959 = vshrl.u32 %v1958, 7
        %v1960 = vadd.s32 %v1959, 8
        %1961 = vset.pattern.permute.xlu0 %v1960
        %1962 = vperm.xlu0 %1961, %v1951
        %v1963 = vpop.permute.xlu0 %1962
        %v1964 = vperm.slane %v290, 2
        %v1965 = vlaneseq
        %v1966 = vshrl.u32 %v1965, 7
        %1968 = vset.pattern.permute.xlu0 %v1966
        %1969 = vperm.xlu0 %1968, %v1964
        %v1970 = vpop.permute.xlu0 %1969
        %v1971 = vlaneseq
        %v1972 = vshrl.u32 %v1971, 7
        %v1973 = vadd.s32 %v1972, 8
        %1974 = vset.pattern.permute.xlu0 %v1973
        %1975 = vperm.xlu0 %1974, %v1964
        %v1976 = vpop.permute.xlu0 %1975
        %v1977 = vperm.slane %v290, 3
        %v1978 = vlaneseq
        %v1979 = vshrl.u32 %v1978, 7
        %1981 = vset.pattern.permute.xlu0 %v1979
        %1982 = vperm.xlu0 %1981, %v1977
        %v1983 = vpop.permute.xlu0 %1982
        %v1984 = vlaneseq
        %v1985 = vshrl.u32 %v1984, 7
        %v1986 = vadd.s32 %v1985, 8
        %1987 = vset.pattern.permute.xlu0 %v1986
        %1988 = vperm.xlu0 %1987, %v1977
        %v1989 = vpop.permute.xlu0 %1988
        %v1990 = vperm.slane %v290, 4
        %v1991 = vlaneseq
        %v1992 = vshrl.u32 %v1991, 7
        %1994 = vset.pattern.permute.xlu0 %v1992
        %1995 = vperm.xlu0 %1994, %v1990
        %v1996 = vpop.permute.xlu0 %1995
        %v1997 = vlaneseq
        %v1998 = vshrl.u32 %v1997, 7
        %v1999 = vadd.s32 %v1998, 8
        %2000 = vset.pattern.permute.xlu0 %v1999
        %2001 = vperm.xlu0 %2000, %v1990
        %v2002 = vpop.permute.xlu0 %2001
        %v2003 = vperm.slane %v290, 5
        %v2004 = vlaneseq
        %v2005 = vshrl.u32 %v2004, 7
        %2007 = vset.pattern.permute.xlu0 %v2005
        %2008 = vperm.xlu0 %2007, %v2003
        %v2009 = vpop.permute.xlu0 %2008
        %v2010 = vlaneseq
        %v2011 = vshrl.u32 %v2010, 7
        %v2012 = vadd.s32 %v2011, 8
        %2013 = vset.pattern.permute.xlu0 %v2012
        %2014 = vperm.xlu0 %2013, %v2003
        %v2015 = vpop.permute.xlu0 %2014
        %v2016 = vperm.slane %v290, 6
        %v2017 = vlaneseq
        %v2018 = vshrl.u32 %v2017, 7
        %2020 = vset.pattern.permute.xlu0 %v2018
        %2021 = vperm.xlu0 %2020, %v2016
        %v2022 = vpop.permute.xlu0 %2021
        %v2023 = vlaneseq
        %v2024 = vshrl.u32 %v2023, 7
        %v2025 = vadd.s32 %v2024, 8
        %2026 = vset.pattern.permute.xlu0 %v2025
        %2027 = vperm.xlu0 %2026, %v2016
        %v2028 = vpop.permute.xlu0 %2027
        %v2029 = vperm.slane %v290, 7
        %v2030 = vlaneseq
        %v2031 = vshrl.u32 %v2030, 7
        %2033 = vset.pattern.permute.xlu0 %v2031
        %2034 = vperm.xlu0 %2033, %v2029
        %v2035 = vpop.permute.xlu0 %2034
        %v2036 = vlaneseq
        %v2037 = vshrl.u32 %v2036, 7
        %v2038 = vadd.s32 %v2037, 8
        %2039 = vset.pattern.permute.xlu0 %v2038
        %2040 = vperm.xlu0 %2039, %v2029
        %v2041 = vpop.permute.xlu0 %2040
        %v2042 = vperm.slane %v291, 0
        %v2043 = vlaneseq
        %v2044 = vshrl.u32 %v2043, 7
        %2046 = vset.pattern.permute.xlu0 %v2044
        %2047 = vperm.xlu0 %2046, %v2042
        %v2048 = vpop.permute.xlu0 %2047
        %v2049 = vlaneseq
        %v2050 = vshrl.u32 %v2049, 7
        %v2051 = vadd.s32 %v2050, 8
        %2052 = vset.pattern.permute.xlu0 %v2051
        %2053 = vperm.xlu0 %2052, %v2042
        %v2054 = vpop.permute.xlu0 %2053
        %v2055 = vperm.slane %v291, 1
        %v2056 = vlaneseq
        %v2057 = vshrl.u32 %v2056, 7
        %2059 = vset.pattern.permute.xlu0 %v2057
        %2060 = vperm.xlu0 %2059, %v2055
        %v2061 = vpop.permute.xlu0 %2060
        %v2062 = vlaneseq
        %v2063 = vshrl.u32 %v2062, 7
        %v2064 = vadd.s32 %v2063, 8
        %2065 = vset.pattern.permute.xlu0 %v2064
        %2066 = vperm.xlu0 %2065, %v2055
        %v2067 = vpop.permute.xlu0 %2066
        %v2068 = vperm.slane %v291, 2
        %v2069 = vlaneseq
        %v2070 = vshrl.u32 %v2069, 7
        %2072 = vset.pattern.permute.xlu0 %v2070
        %2073 = vperm.xlu0 %2072, %v2068
        %v2074 = vpop.permute.xlu0 %2073
        %v2075 = vlaneseq
        %v2076 = vshrl.u32 %v2075, 7
        %v2077 = vadd.s32 %v2076, 8
        %2078 = vset.pattern.permute.xlu0 %v2077
        %2079 = vperm.xlu0 %2078, %v2068
        %v2080 = vpop.permute.xlu0 %2079
        %v2081 = vperm.slane %v291, 3
        %v2082 = vlaneseq
        %v2083 = vshrl.u32 %v2082, 7
        %2085 = vset.pattern.permute.xlu0 %v2083
        %2086 = vperm.xlu0 %2085, %v2081
        %v2087 = vpop.permute.xlu0 %2086
        %v2088 = vlaneseq
        %v2089 = vshrl.u32 %v2088, 7
        %v2090 = vadd.s32 %v2089, 8
        %2091 = vset.pattern.permute.xlu0 %v2090
        %2092 = vperm.xlu0 %2091, %v2081
        %v2093 = vpop.permute.xlu0 %2092
        %v2094 = vperm.slane %v291, 4
        %v2095 = vlaneseq
        %v2096 = vshrl.u32 %v2095, 7
        %2098 = vset.pattern.permute.xlu0 %v2096
        %2099 = vperm.xlu0 %2098, %v2094
        %v2100 = vpop.permute.xlu0 %2099
        %v2101 = vlaneseq
        %v2102 = vshrl.u32 %v2101, 7
        %v2103 = vadd.s32 %v2102, 8
        %2104 = vset.pattern.permute.xlu0 %v2103
        %2105 = vperm.xlu0 %2104, %v2094
        %v2106 = vpop.permute.xlu0 %2105
        %v2107 = vperm.slane %v291, 5
        %v2108 = vlaneseq
        %v2109 = vshrl.u32 %v2108, 7
        %2111 = vset.pattern.permute.xlu0 %v2109
        %2112 = vperm.xlu0 %2111, %v2107
        %v2113 = vpop.permute.xlu0 %2112
        %v2114 = vlaneseq
        %v2115 = vshrl.u32 %v2114, 7
        %v2116 = vadd.s32 %v2115, 8
        %2117 = vset.pattern.permute.xlu0 %v2116
        %2118 = vperm.xlu0 %2117, %v2107
        %v2119 = vpop.permute.xlu0 %2118
        %v2120 = vperm.slane %v291, 6
        %v2121 = vlaneseq
        %v2122 = vshrl.u32 %v2121, 7
        %2124 = vset.pattern.permute.xlu0 %v2122
        %2125 = vperm.xlu0 %2124, %v2120
        %v2126 = vpop.permute.xlu0 %2125
        %v2127 = vlaneseq
        %v2128 = vshrl.u32 %v2127, 7
        %v2129 = vadd.s32 %v2128, 8
        %2130 = vset.pattern.permute.xlu0 %v2129
        %2131 = vperm.xlu0 %2130, %v2120
        %v2132 = vpop.permute.xlu0 %2131
        %v2133 = vperm.slane %v291, 7
        %v2134 = vlaneseq
        %v2135 = vshrl.u32 %v2134, 7
        %2137 = vset.pattern.permute.xlu0 %v2135
        %2138 = vperm.xlu0 %2137, %v2133
        %v2139 = vpop.permute.xlu0 %2138
        %v2140 = vlaneseq
        %v2141 = vshrl.u32 %v2140, 7
        %v2142 = vadd.s32 %v2141, 8
        %2143 = vset.pattern.permute.xlu0 %v2142
        %2144 = vperm.xlu0 %2143, %v2133
        %v2145 = vpop.permute.xlu0 %2144
        %v2146 = vperm.slane %v292, 0
        %v2147 = vlaneseq
        %v2148 = vshrl.u32 %v2147, 7
        %2150 = vset.pattern.permute.xlu0 %v2148
        %2151 = vperm.xlu0 %2150, %v2146
        %v2152 = vpop.permute.xlu0 %2151
        %v2153 = vlaneseq
        %v2154 = vshrl.u32 %v2153, 7
        %v2155 = vadd.s32 %v2154, 8
        %2156 = vset.pattern.permute.xlu0 %v2155
        %2157 = vperm.xlu0 %2156, %v2146
        %v2158 = vpop.permute.xlu0 %2157
        %v2159 = vperm.slane %v292, 1
        %v2160 = vlaneseq
        %v2161 = vshrl.u32 %v2160, 7
        %2163 = vset.pattern.permute.xlu0 %v2161
        %2164 = vperm.xlu0 %2163, %v2159
        %v2165 = vpop.permute.xlu0 %2164
        %v2166 = vlaneseq
        %v2167 = vshrl.u32 %v2166, 7
        %v2168 = vadd.s32 %v2167, 8
        %2169 = vset.pattern.permute.xlu0 %v2168
        %2170 = vperm.xlu0 %2169, %v2159
        %v2171 = vpop.permute.xlu0 %2170
        %v2172 = vperm.slane %v292, 2
        %v2173 = vlaneseq
        %v2174 = vshrl.u32 %v2173, 7
        %2176 = vset.pattern.permute.xlu0 %v2174
        %2177 = vperm.xlu0 %2176, %v2172
        %v2178 = vpop.permute.xlu0 %2177
        %v2179 = vlaneseq
        %v2180 = vshrl.u32 %v2179, 7
        %v2181 = vadd.s32 %v2180, 8
        %2182 = vset.pattern.permute.xlu0 %v2181
        %2183 = vperm.xlu0 %2182, %v2172
        %v2184 = vpop.permute.xlu0 %2183
        %v2185 = vperm.slane %v292, 3
        %v2186 = vlaneseq
        %v2187 = vshrl.u32 %v2186, 7
        %2189 = vset.pattern.permute.xlu0 %v2187
        %2190 = vperm.xlu0 %2189, %v2185
        %v2191 = vpop.permute.xlu0 %2190
        %v2192 = vlaneseq
        %v2193 = vshrl.u32 %v2192, 7
        %v2194 = vadd.s32 %v2193, 8
        %2195 = vset.pattern.permute.xlu0 %v2194
        %2196 = vperm.xlu0 %2195, %v2185
        %v2197 = vpop.permute.xlu0 %2196
        %v2198 = vperm.slane %v292, 4
        %v2199 = vlaneseq
        %v2200 = vshrl.u32 %v2199, 7
        %2202 = vset.pattern.permute.xlu0 %v2200
        %2203 = vperm.xlu0 %2202, %v2198
        %v2204 = vpop.permute.xlu0 %2203
        %v2205 = vlaneseq
        %v2206 = vshrl.u32 %v2205, 7
        %v2207 = vadd.s32 %v2206, 8
        %2208 = vset.pattern.permute.xlu0 %v2207
        %2209 = vperm.xlu0 %2208, %v2198
        %v2210 = vpop.permute.xlu0 %2209
        %v2211 = vperm.slane %v292, 5
        %v2212 = vlaneseq
        %v2213 = vshrl.u32 %v2212, 7
        %2215 = vset.pattern.permute.xlu0 %v2213
        %2216 = vperm.xlu0 %2215, %v2211
        %v2217 = vpop.permute.xlu0 %2216
        %v2218 = vlaneseq
        %v2219 = vshrl.u32 %v2218, 7
        %v2220 = vadd.s32 %v2219, 8
        %2221 = vset.pattern.permute.xlu0 %v2220
        %2222 = vperm.xlu0 %2221, %v2211
        %v2223 = vpop.permute.xlu0 %2222
        %v2224 = vperm.slane %v292, 6
        %v2225 = vlaneseq
        %v2226 = vshrl.u32 %v2225, 7
        %2228 = vset.pattern.permute.xlu0 %v2226
        %2229 = vperm.xlu0 %2228, %v2224
        %v2230 = vpop.permute.xlu0 %2229
        %v2231 = vlaneseq
        %v2232 = vshrl.u32 %v2231, 7
        %v2233 = vadd.s32 %v2232, 8
        %2234 = vset.pattern.permute.xlu0 %v2233
        %2235 = vperm.xlu0 %2234, %v2224
        %v2236 = vpop.permute.xlu0 %2235
        %v2237 = vperm.slane %v292, 7
        %v2238 = vlaneseq
        %v2239 = vshrl.u32 %v2238, 7
        %2241 = vset.pattern.permute.xlu0 %v2239
        %2242 = vperm.xlu0 %2241, %v2237
        %v2243 = vpop.permute.xlu0 %2242
        %v2244 = vlaneseq
        %v2245 = vshrl.u32 %v2244, 7
        %v2246 = vadd.s32 %v2245, 8
        %2247 = vset.pattern.permute.xlu0 %v2246
        %2248 = vperm.xlu0 %2247, %v2237
        %v2249 = vpop.permute.xlu0 %2248
        %v2250 = vperm.slane %v293, 0
        %v2251 = vlaneseq
        %v2252 = vshrl.u32 %v2251, 7
        %2254 = vset.pattern.permute.xlu0 %v2252
        %2255 = vperm.xlu0 %2254, %v2250
        %v2256 = vpop.permute.xlu0 %2255
        %v2257 = vlaneseq
        %v2258 = vshrl.u32 %v2257, 7
        %v2259 = vadd.s32 %v2258, 8
        %2260 = vset.pattern.permute.xlu0 %v2259
        %2261 = vperm.xlu0 %2260, %v2250
        %v2262 = vpop.permute.xlu0 %2261
        %v2263 = vperm.slane %v293, 1
        %v2264 = vlaneseq
        %v2265 = vshrl.u32 %v2264, 7
        %2267 = vset.pattern.permute.xlu0 %v2265
        %2268 = vperm.xlu0 %2267, %v2263
        %v2269 = vpop.permute.xlu0 %2268
        %v2270 = vlaneseq
        %v2271 = vshrl.u32 %v2270, 7
        %v2272 = vadd.s32 %v2271, 8
        %2273 = vset.pattern.permute.xlu0 %v2272
        %2274 = vperm.xlu0 %2273, %v2263
        %v2275 = vpop.permute.xlu0 %2274
        %v2276 = vperm.slane %v293, 2
        %v2277 = vlaneseq
        %v2278 = vshrl.u32 %v2277, 7
        %2280 = vset.pattern.permute.xlu0 %v2278
        %2281 = vperm.xlu0 %2280, %v2276
        %v2282 = vpop.permute.xlu0 %2281
        %v2283 = vlaneseq
        %v2284 = vshrl.u32 %v2283, 7
        %v2285 = vadd.s32 %v2284, 8
        %2286 = vset.pattern.permute.xlu0 %v2285
        %2287 = vperm.xlu0 %2286, %v2276
        %v2288 = vpop.permute.xlu0 %2287
        %v2289 = vperm.slane %v293, 3
        %v2290 = vlaneseq
        %v2291 = vshrl.u32 %v2290, 7
        %2293 = vset.pattern.permute.xlu0 %v2291
        %2294 = vperm.xlu0 %2293, %v2289
        %v2295 = vpop.permute.xlu0 %2294
        %v2296 = vlaneseq
        %v2297 = vshrl.u32 %v2296, 7
        %v2298 = vadd.s32 %v2297, 8
        %2299 = vset.pattern.permute.xlu0 %v2298
        %2300 = vperm.xlu0 %2299, %v2289
        %v2301 = vpop.permute.xlu0 %2300
        %v2302 = vperm.slane %v293, 4
        %v2303 = vlaneseq
        %v2304 = vshrl.u32 %v2303, 7
        %2306 = vset.pattern.permute.xlu0 %v2304
        %2307 = vperm.xlu0 %2306, %v2302
        %v2308 = vpop.permute.xlu0 %2307
        %v2309 = vlaneseq
        %v2310 = vshrl.u32 %v2309, 7
        %v2311 = vadd.s32 %v2310, 8
        %2312 = vset.pattern.permute.xlu0 %v2311
        %2313 = vperm.xlu0 %2312, %v2302
        %v2314 = vpop.permute.xlu0 %2313
        %v2315 = vperm.slane %v293, 5
        %v2316 = vlaneseq
        %v2317 = vshrl.u32 %v2316, 7
        %2319 = vset.pattern.permute.xlu0 %v2317
        %2320 = vperm.xlu0 %2319, %v2315
        %v2321 = vpop.permute.xlu0 %2320
        %v2322 = vlaneseq
        %v2323 = vshrl.u32 %v2322, 7
        %v2324 = vadd.s32 %v2323, 8
        %2325 = vset.pattern.permute.xlu0 %v2324
        %2326 = vperm.xlu0 %2325, %v2315
        %v2327 = vpop.permute.xlu0 %2326
        %v2328 = vperm.slane %v293, 6
        %v2329 = vlaneseq
        %v2330 = vshrl.u32 %v2329, 7
        %2332 = vset.pattern.permute.xlu0 %v2330
        %2333 = vperm.xlu0 %2332, %v2328
        %v2334 = vpop.permute.xlu0 %2333
        %v2335 = vlaneseq
        %v2336 = vshrl.u32 %v2335, 7
        %v2337 = vadd.s32 %v2336, 8
        %2338 = vset.pattern.permute.xlu0 %v2337
        %2339 = vperm.xlu0 %2338, %v2328
        %v2340 = vpop.permute.xlu0 %2339
        %v2341 = vperm.slane %v293, 7
        %v2342 = vlaneseq
        %v2343 = vshrl.u32 %v2342, 7
        %2345 = vset.pattern.permute.xlu0 %v2343
        %2346 = vperm.xlu0 %2345, %v2341
        %v2347 = vpop.permute.xlu0 %2346
        %v2348 = vlaneseq
        %v2349 = vshrl.u32 %v2348, 7
        %v2350 = vadd.s32 %v2349, 8
        %2351 = vset.pattern.permute.xlu0 %v2350
        %2352 = vperm.xlu0 %2351, %v2341
        %v2353 = vpop.permute.xlu0 %2352
        %v2354 = vperm.slane %v294, 0
        %v2355 = vlaneseq
        %v2356 = vshrl.u32 %v2355, 7
        %2358 = vset.pattern.permute.xlu0 %v2356
        %2359 = vperm.xlu0 %2358, %v2354
        %v2360 = vpop.permute.xlu0 %2359
        %v2361 = vlaneseq
        %v2362 = vshrl.u32 %v2361, 7
        %v2363 = vadd.s32 %v2362, 8
        %2364 = vset.pattern.permute.xlu0 %v2363
        %2365 = vperm.xlu0 %2364, %v2354
        %v2366 = vpop.permute.xlu0 %2365
        %v2367 = vperm.slane %v294, 1
        %v2368 = vlaneseq
        %v2369 = vshrl.u32 %v2368, 7
        %2371 = vset.pattern.permute.xlu0 %v2369
        %2372 = vperm.xlu0 %2371, %v2367
        %v2373 = vpop.permute.xlu0 %2372
        %v2374 = vlaneseq
        %v2375 = vshrl.u32 %v2374, 7
        %v2376 = vadd.s32 %v2375, 8
        %2377 = vset.pattern.permute.xlu0 %v2376
        %2378 = vperm.xlu0 %2377, %v2367
        %v2379 = vpop.permute.xlu0 %2378
        %v2380 = vperm.slane %v294, 2
        %v2381 = vlaneseq
        %v2382 = vshrl.u32 %v2381, 7
        %2384 = vset.pattern.permute.xlu0 %v2382
        %2385 = vperm.xlu0 %2384, %v2380
        %v2386 = vpop.permute.xlu0 %2385
        %v2387 = vlaneseq
        %v2388 = vshrl.u32 %v2387, 7
        %v2389 = vadd.s32 %v2388, 8
        %2390 = vset.pattern.permute.xlu0 %v2389
        %2391 = vperm.xlu0 %2390, %v2380
        %v2392 = vpop.permute.xlu0 %2391
        %v2393 = vperm.slane %v294, 3
        %v2394 = vlaneseq
        %v2395 = vshrl.u32 %v2394, 7
        %2397 = vset.pattern.permute.xlu0 %v2395
        %2398 = vperm.xlu0 %2397, %v2393
        %v2399 = vpop.permute.xlu0 %2398
        %v2400 = vlaneseq
        %v2401 = vshrl.u32 %v2400, 7
        %v2402 = vadd.s32 %v2401, 8
        %2403 = vset.pattern.permute.xlu0 %v2402
        %2404 = vperm.xlu0 %2403, %v2393
        %v2405 = vpop.permute.xlu0 %2404
        %v2406 = vperm.slane %v294, 4
        %v2407 = vlaneseq
        %v2408 = vshrl.u32 %v2407, 7
        %2410 = vset.pattern.permute.xlu0 %v2408
        %2411 = vperm.xlu0 %2410, %v2406
        %v2412 = vpop.permute.xlu0 %2411
        %v2413 = vlaneseq
        %v2414 = vshrl.u32 %v2413, 7
        %v2415 = vadd.s32 %v2414, 8
        %2416 = vset.pattern.permute.xlu0 %v2415
        %2417 = vperm.xlu0 %2416, %v2406
        %v2418 = vpop.permute.xlu0 %2417
        %v2419 = vperm.slane %v294, 5
        %v2420 = vlaneseq
        %v2421 = vshrl.u32 %v2420, 7
        %2423 = vset.pattern.permute.xlu0 %v2421
        %2424 = vperm.xlu0 %2423, %v2419
        %v2425 = vpop.permute.xlu0 %2424
        %v2426 = vlaneseq
        %v2427 = vshrl.u32 %v2426, 7
        %v2428 = vadd.s32 %v2427, 8
        %2429 = vset.pattern.permute.xlu0 %v2428
        %2430 = vperm.xlu0 %2429, %v2419
        %v2431 = vpop.permute.xlu0 %2430
        %v2432 = vperm.slane %v294, 6
        %v2433 = vlaneseq
        %v2434 = vshrl.u32 %v2433, 7
        %2436 = vset.pattern.permute.xlu0 %v2434
        %2437 = vperm.xlu0 %2436, %v2432
        %v2438 = vpop.permute.xlu0 %2437
        %v2439 = vlaneseq
        %v2440 = vshrl.u32 %v2439, 7
        %v2441 = vadd.s32 %v2440, 8
        %2442 = vset.pattern.permute.xlu0 %v2441
        %2443 = vperm.xlu0 %2442, %v2432
        %v2444 = vpop.permute.xlu0 %2443
        %v2445 = vperm.slane %v294, 7
        %v2446 = vlaneseq
        %v2447 = vshrl.u32 %v2446, 7
        %2449 = vset.pattern.permute.xlu0 %v2447
        %2450 = vperm.xlu0 %2449, %v2445
        %v2451 = vpop.permute.xlu0 %2450
        %v2452 = vlaneseq
        %v2453 = vshrl.u32 %v2452, 7
        %v2454 = vadd.s32 %v2453, 8
        %2455 = vset.pattern.permute.xlu0 %v2454
        %2456 = vperm.xlu0 %2455, %v2445
        %v2457 = vpop.permute.xlu0 %2456
        %v2458 = vperm.slane %v295, 0
        %v2459 = vlaneseq
        %v2460 = vshrl.u32 %v2459, 7
        %2462 = vset.pattern.permute.xlu0 %v2460
        %2463 = vperm.xlu0 %2462, %v2458
        %v2464 = vpop.permute.xlu0 %2463
        %v2465 = vlaneseq
        %v2466 = vshrl.u32 %v2465, 7
        %v2467 = vadd.s32 %v2466, 8
        %2468 = vset.pattern.permute.xlu0 %v2467
        %2469 = vperm.xlu0 %2468, %v2458
        %v2470 = vpop.permute.xlu0 %2469
        %v2471 = vperm.slane %v295, 1
        %v2472 = vlaneseq
        %v2473 = vshrl.u32 %v2472, 7
        %2475 = vset.pattern.permute.xlu0 %v2473
        %2476 = vperm.xlu0 %2475, %v2471
        %v2477 = vpop.permute.xlu0 %2476
        %v2478 = vlaneseq
        %v2479 = vshrl.u32 %v2478, 7
        %v2480 = vadd.s32 %v2479, 8
        %2481 = vset.pattern.permute.xlu0 %v2480
        %2482 = vperm.xlu0 %2481, %v2471
        %v2483 = vpop.permute.xlu0 %2482
        %v2484 = vperm.slane %v295, 2
        %v2485 = vlaneseq
        %v2486 = vshrl.u32 %v2485, 7
        %2488 = vset.pattern.permute.xlu0 %v2486
        %2489 = vperm.xlu0 %2488, %v2484
        %v2490 = vpop.permute.xlu0 %2489
        %v2491 = vlaneseq
        %v2492 = vshrl.u32 %v2491, 7
        %v2493 = vadd.s32 %v2492, 8
        %2494 = vset.pattern.permute.xlu0 %v2493
        %2495 = vperm.xlu0 %2494, %v2484
        %v2496 = vpop.permute.xlu0 %2495
        %v2497 = vperm.slane %v295, 3
        %v2498 = vlaneseq
        %v2499 = vshrl.u32 %v2498, 7
        %2501 = vset.pattern.permute.xlu0 %v2499
        %2502 = vperm.xlu0 %2501, %v2497
        %v2503 = vpop.permute.xlu0 %2502
        %v2504 = vlaneseq
        %v2505 = vshrl.u32 %v2504, 7
        %v2506 = vadd.s32 %v2505, 8
        %2507 = vset.pattern.permute.xlu0 %v2506
        %2508 = vperm.xlu0 %2507, %v2497
        %v2509 = vpop.permute.xlu0 %2508
        %v2510 = vperm.slane %v295, 4
        %v2511 = vlaneseq
        %v2512 = vshrl.u32 %v2511, 7
        %2514 = vset.pattern.permute.xlu0 %v2512
        %2515 = vperm.xlu0 %2514, %v2510
        %v2516 = vpop.permute.xlu0 %2515
        %v2517 = vlaneseq
        %v2518 = vshrl.u32 %v2517, 7
        %v2519 = vadd.s32 %v2518, 8
        %2520 = vset.pattern.permute.xlu0 %v2519
        %2521 = vperm.xlu0 %2520, %v2510
        %v2522 = vpop.permute.xlu0 %2521
        %v2523 = vperm.slane %v295, 5
        %v2524 = vlaneseq
        %v2525 = vshrl.u32 %v2524, 7
        %2527 = vset.pattern.permute.xlu0 %v2525
        %2528 = vperm.xlu0 %2527, %v2523
        %v2529 = vpop.permute.xlu0 %2528
        %v2530 = vlaneseq
        %v2531 = vshrl.u32 %v2530, 7
        %v2532 = vadd.s32 %v2531, 8
        %2533 = vset.pattern.permute.xlu0 %v2532
        %2534 = vperm.xlu0 %2533, %v2523
        %v2535 = vpop.permute.xlu0 %2534
        %v2536 = vperm.slane %v295, 6
        %v2537 = vlaneseq
        %v2538 = vshrl.u32 %v2537, 7
        %2540 = vset.pattern.permute.xlu0 %v2538
        %2541 = vperm.xlu0 %2540, %v2536
        %v2542 = vpop.permute.xlu0 %2541
        %v2543 = vlaneseq
        %v2544 = vshrl.u32 %v2543, 7
        %v2545 = vadd.s32 %v2544, 8
        %2546 = vset.pattern.permute.xlu0 %v2545
        %2547 = vperm.xlu0 %2546, %v2536
        %v2548 = vpop.permute.xlu0 %2547
        %v2549 = vperm.slane %v295, 7
        %v2550 = vlaneseq
        %v2551 = vshrl.u32 %v2550, 7
        %2553 = vset.pattern.permute.xlu0 %v2551
        %2554 = vperm.xlu0 %2553, %v2549
        %v2555 = vpop.permute.xlu0 %2554
        %v2556 = vlaneseq
        %v2557 = vshrl.u32 %v2556, 7
        %v2558 = vadd.s32 %v2557, 8
        %2559 = vset.pattern.permute.xlu0 %v2558
        %2560 = vperm.xlu0 %2559, %v2549
        %v2561 = vpop.permute.xlu0 %2560
        %v2562 = vperm.slane %v296, 0
        %v2563 = vlaneseq
        %v2564 = vshrl.u32 %v2563, 7
        %2566 = vset.pattern.permute.xlu0 %v2564
        %2567 = vperm.xlu0 %2566, %v2562
        %v2568 = vpop.permute.xlu0 %2567
        %v2569 = vlaneseq
        %v2570 = vshrl.u32 %v2569, 7
        %v2571 = vadd.s32 %v2570, 8
        %2572 = vset.pattern.permute.xlu0 %v2571
        %2573 = vperm.xlu0 %2572, %v2562
        %v2574 = vpop.permute.xlu0 %2573
        %v2575 = vperm.slane %v296, 1
        %v2576 = vlaneseq
        %v2577 = vshrl.u32 %v2576, 7
        %2579 = vset.pattern.permute.xlu0 %v2577
        %2580 = vperm.xlu0 %2579, %v2575
        %v2581 = vpop.permute.xlu0 %2580
        %v2582 = vlaneseq
        %v2583 = vshrl.u32 %v2582, 7
        %v2584 = vadd.s32 %v2583, 8
        %2585 = vset.pattern.permute.xlu0 %v2584
        %2586 = vperm.xlu0 %2585, %v2575
        %v2587 = vpop.permute.xlu0 %2586
        %v2588 = vperm.slane %v296, 2
        %v2589 = vlaneseq
        %v2590 = vshrl.u32 %v2589, 7
        %2592 = vset.pattern.permute.xlu0 %v2590
        %2593 = vperm.xlu0 %2592, %v2588
        %v2594 = vpop.permute.xlu0 %2593
        %v2595 = vlaneseq
        %v2596 = vshrl.u32 %v2595, 7
        %v2597 = vadd.s32 %v2596, 8
        %2598 = vset.pattern.permute.xlu0 %v2597
        %2599 = vperm.xlu0 %2598, %v2588
        %v2600 = vpop.permute.xlu0 %2599
        %v2601 = vperm.slane %v296, 3
        %v2602 = vlaneseq
        %v2603 = vshrl.u32 %v2602, 7
        %2605 = vset.pattern.permute.xlu0 %v2603
        %2606 = vperm.xlu0 %2605, %v2601
        %v2607 = vpop.permute.xlu0 %2606
        %v2608 = vlaneseq
        %v2609 = vshrl.u32 %v2608, 7
        %v2610 = vadd.s32 %v2609, 8
        %2611 = vset.pattern.permute.xlu0 %v2610
        %2612 = vperm.xlu0 %2611, %v2601
        %v2613 = vpop.permute.xlu0 %2612
        %v2614 = vperm.slane %v296, 4
        %v2615 = vlaneseq
        %v2616 = vshrl.u32 %v2615, 7
        %2618 = vset.pattern.permute.xlu0 %v2616
        %2619 = vperm.xlu0 %2618, %v2614
        %v2620 = vpop.permute.xlu0 %2619
        %v2621 = vlaneseq
        %v2622 = vshrl.u32 %v2621, 7
        %v2623 = vadd.s32 %v2622, 8
        %2624 = vset.pattern.permute.xlu0 %v2623
        %2625 = vperm.xlu0 %2624, %v2614
        %v2626 = vpop.permute.xlu0 %2625
        %v2627 = vperm.slane %v296, 5
        %v2628 = vlaneseq
        %v2629 = vshrl.u32 %v2628, 7
        %2631 = vset.pattern.permute.xlu0 %v2629
        %2632 = vperm.xlu0 %2631, %v2627
        %v2633 = vpop.permute.xlu0 %2632
        %v2634 = vlaneseq
        %v2635 = vshrl.u32 %v2634, 7
        %v2636 = vadd.s32 %v2635, 8
        %2637 = vset.pattern.permute.xlu0 %v2636
        %2638 = vperm.xlu0 %2637, %v2627
        %v2639 = vpop.permute.xlu0 %2638
        %v2640 = vperm.slane %v296, 6
        %v2641 = vlaneseq
        %v2642 = vshrl.u32 %v2641, 7
        %2644 = vset.pattern.permute.xlu0 %v2642
        %2645 = vperm.xlu0 %2644, %v2640
        %v2646 = vpop.permute.xlu0 %2645
        %v2647 = vlaneseq
        %v2648 = vshrl.u32 %v2647, 7
        %v2649 = vadd.s32 %v2648, 8
        %2650 = vset.pattern.permute.xlu0 %v2649
        %2651 = vperm.xlu0 %2650, %v2640
        %v2652 = vpop.permute.xlu0 %2651
        %v2653 = vperm.slane %v296, 7
        %v2654 = vlaneseq
        %v2655 = vshrl.u32 %v2654, 7
        %2657 = vset.pattern.permute.xlu0 %v2655
        %2658 = vperm.xlu0 %2657, %v2653
        %v2659 = vpop.permute.xlu0 %2658
        %v2660 = vlaneseq
        %v2661 = vshrl.u32 %v2660, 7
        %v2662 = vadd.s32 %v2661, 8
        %2663 = vset.pattern.permute.xlu0 %v2662
        %2664 = vperm.xlu0 %2663, %v2653
        %v2665 = vpop.permute.xlu0 %2664
        %v2666 = vperm.slane %v297, 0
        %v2667 = vlaneseq
        %v2668 = vshrl.u32 %v2667, 7
        %2670 = vset.pattern.permute.xlu0 %v2668
        %2671 = vperm.xlu0 %2670, %v2666
        %v2672 = vpop.permute.xlu0 %2671
        %v2673 = vlaneseq
        %v2674 = vshrl.u32 %v2673, 7
        %v2675 = vadd.s32 %v2674, 8
        %2676 = vset.pattern.permute.xlu0 %v2675
        %2677 = vperm.xlu0 %2676, %v2666
        %v2678 = vpop.permute.xlu0 %2677
        %v2679 = vperm.slane %v297, 1
        %v2680 = vlaneseq
        %v2681 = vshrl.u32 %v2680, 7
        %2683 = vset.pattern.permute.xlu0 %v2681
        %2684 = vperm.xlu0 %2683, %v2679
        %v2685 = vpop.permute.xlu0 %2684
        %v2686 = vlaneseq
        %v2687 = vshrl.u32 %v2686, 7
        %v2688 = vadd.s32 %v2687, 8
        %2689 = vset.pattern.permute.xlu0 %v2688
        %2690 = vperm.xlu0 %2689, %v2679
        %v2691 = vpop.permute.xlu0 %2690
        %v2692 = vperm.slane %v297, 2
        %v2693 = vlaneseq
        %v2694 = vshrl.u32 %v2693, 7
        %2696 = vset.pattern.permute.xlu0 %v2694
        %2697 = vperm.xlu0 %2696, %v2692
        %v2698 = vpop.permute.xlu0 %2697
        %v2699 = vlaneseq
        %v2700 = vshrl.u32 %v2699, 7
        %v2701 = vadd.s32 %v2700, 8
        %2702 = vset.pattern.permute.xlu0 %v2701
        %2703 = vperm.xlu0 %2702, %v2692
        %v2704 = vpop.permute.xlu0 %2703
        %v2705 = vperm.slane %v297, 3
        %v2706 = vlaneseq
        %v2707 = vshrl.u32 %v2706, 7
        %2709 = vset.pattern.permute.xlu0 %v2707
        %2710 = vperm.xlu0 %2709, %v2705
        %v2711 = vpop.permute.xlu0 %2710
        %v2712 = vlaneseq
        %v2713 = vshrl.u32 %v2712, 7
        %v2714 = vadd.s32 %v2713, 8
        %2715 = vset.pattern.permute.xlu0 %v2714
        %2716 = vperm.xlu0 %2715, %v2705
        %v2717 = vpop.permute.xlu0 %2716
        %v2718 = vperm.slane %v297, 4
        %v2719 = vlaneseq
        %v2720 = vshrl.u32 %v2719, 7
        %2722 = vset.pattern.permute.xlu0 %v2720
        %2723 = vperm.xlu0 %2722, %v2718
        %v2724 = vpop.permute.xlu0 %2723
        %v2725 = vlaneseq
        %v2726 = vshrl.u32 %v2725, 7
        %v2727 = vadd.s32 %v2726, 8
        %2728 = vset.pattern.permute.xlu0 %v2727
        %2729 = vperm.xlu0 %2728, %v2718
        %v2730 = vpop.permute.xlu0 %2729
        %v2731 = vperm.slane %v297, 5
        %v2732 = vlaneseq
        %v2733 = vshrl.u32 %v2732, 7
        %2735 = vset.pattern.permute.xlu0 %v2733
        %2736 = vperm.xlu0 %2735, %v2731
        %v2737 = vpop.permute.xlu0 %2736
        %v2738 = vlaneseq
        %v2739 = vshrl.u32 %v2738, 7
        %v2740 = vadd.s32 %v2739, 8
        %2741 = vset.pattern.permute.xlu0 %v2740
        %2742 = vperm.xlu0 %2741, %v2731
        %v2743 = vpop.permute.xlu0 %2742
        %v2744 = vperm.slane %v297, 6
        %v2745 = vlaneseq
        %v2746 = vshrl.u32 %v2745, 7
        %2748 = vset.pattern.permute.xlu0 %v2746
        %2749 = vperm.xlu0 %2748, %v2744
        %v2750 = vpop.permute.xlu0 %2749
        %v2751 = vlaneseq
        %v2752 = vshrl.u32 %v2751, 7
        %v2753 = vadd.s32 %v2752, 8
        %2754 = vset.pattern.permute.xlu0 %v2753
        %2755 = vperm.xlu0 %2754, %v2744
        %v2756 = vpop.permute.xlu0 %2755
        %v2757 = vperm.slane %v297, 7
        %v2758 = vlaneseq
        %v2759 = vshrl.u32 %v2758, 7
        %2761 = vset.pattern.permute.xlu0 %v2759
        %2762 = vperm.xlu0 %2761, %v2757
        %v2763 = vpop.permute.xlu0 %2762
        %v2764 = vlaneseq
        %v2765 = vshrl.u32 %v2764, 7
        %v2766 = vadd.s32 %v2765, 8
        %2767 = vset.pattern.permute.xlu0 %v2766
        %2768 = vperm.xlu0 %2767, %v2757
        %v2769 = vpop.permute.xlu0 %2768
        %v2770 = vperm.slane %v298, 0
        %v2771 = vlaneseq
        %v2772 = vshrl.u32 %v2771, 7
        %2774 = vset.pattern.permute.xlu0 %v2772
        %2775 = vperm.xlu0 %2774, %v2770
        %v2776 = vpop.permute.xlu0 %2775
        %v2777 = vlaneseq
        %v2778 = vshrl.u32 %v2777, 7
        %v2779 = vadd.s32 %v2778, 8
        %2780 = vset.pattern.permute.xlu0 %v2779
        %2781 = vperm.xlu0 %2780, %v2770
        %v2782 = vpop.permute.xlu0 %2781
        %v2783 = vperm.slane %v298, 1
        %v2784 = vlaneseq
        %v2785 = vshrl.u32 %v2784, 7
        %2787 = vset.pattern.permute.xlu0 %v2785
        %2788 = vperm.xlu0 %2787, %v2783
        %v2789 = vpop.permute.xlu0 %2788
        %v2790 = vlaneseq
        %v2791 = vshrl.u32 %v2790, 7
        %v2792 = vadd.s32 %v2791, 8
        %2793 = vset.pattern.permute.xlu0 %v2792
        %2794 = vperm.xlu0 %2793, %v2783
        %v2795 = vpop.permute.xlu0 %2794
        %v2796 = vperm.slane %v298, 2
        %v2797 = vlaneseq
        %v2798 = vshrl.u32 %v2797, 7
        %2800 = vset.pattern.permute.xlu0 %v2798
        %2801 = vperm.xlu0 %2800, %v2796
        %v2802 = vpop.permute.xlu0 %2801
        %v2803 = vlaneseq
        %v2804 = vshrl.u32 %v2803, 7
        %v2805 = vadd.s32 %v2804, 8
        %2806 = vset.pattern.permute.xlu0 %v2805
        %2807 = vperm.xlu0 %2806, %v2796
        %v2808 = vpop.permute.xlu0 %2807
        %v2809 = vperm.slane %v298, 3
        %v2810 = vlaneseq
        %v2811 = vshrl.u32 %v2810, 7
        %2813 = vset.pattern.permute.xlu0 %v2811
        %2814 = vperm.xlu0 %2813, %v2809
        %v2815 = vpop.permute.xlu0 %2814
        %v2816 = vlaneseq
        %v2817 = vshrl.u32 %v2816, 7
        %v2818 = vadd.s32 %v2817, 8
        %2819 = vset.pattern.permute.xlu0 %v2818
        %2820 = vperm.xlu0 %2819, %v2809
        %v2821 = vpop.permute.xlu0 %2820
        %v2822 = vperm.slane %v298, 4
        %v2823 = vlaneseq
        %v2824 = vshrl.u32 %v2823, 7
        %2826 = vset.pattern.permute.xlu0 %v2824
        %2827 = vperm.xlu0 %2826, %v2822
        %v2828 = vpop.permute.xlu0 %2827
        %v2829 = vlaneseq
        %v2830 = vshrl.u32 %v2829, 7
        %v2831 = vadd.s32 %v2830, 8
        %2832 = vset.pattern.permute.xlu0 %v2831
        %2833 = vperm.xlu0 %2832, %v2822
        %v2834 = vpop.permute.xlu0 %2833
        %v2835 = vperm.slane %v298, 5
        %v2836 = vlaneseq
        %v2837 = vshrl.u32 %v2836, 7
        %2839 = vset.pattern.permute.xlu0 %v2837
        %2840 = vperm.xlu0 %2839, %v2835
        %v2841 = vpop.permute.xlu0 %2840
        %v2842 = vlaneseq
        %v2843 = vshrl.u32 %v2842, 7
        %v2844 = vadd.s32 %v2843, 8
        %2845 = vset.pattern.permute.xlu0 %v2844
        %2846 = vperm.xlu0 %2845, %v2835
        %v2847 = vpop.permute.xlu0 %2846
        %v2848 = vperm.slane %v298, 6
        %v2849 = vlaneseq
        %v2850 = vshrl.u32 %v2849, 7
        %2852 = vset.pattern.permute.xlu0 %v2850
        %2853 = vperm.xlu0 %2852, %v2848
        %v2854 = vpop.permute.xlu0 %2853
        %v2855 = vlaneseq
        %v2856 = vshrl.u32 %v2855, 7
        %v2857 = vadd.s32 %v2856, 8
        %2858 = vset.pattern.permute.xlu0 %v2857
        %2859 = vperm.xlu0 %2858, %v2848
        %v2860 = vpop.permute.xlu0 %2859
        %v2861 = vperm.slane %v298, 7
        %v2862 = vlaneseq
        %v2863 = vshrl.u32 %v2862, 7
        %2865 = vset.pattern.permute.xlu0 %v2863
        %2866 = vperm.xlu0 %2865, %v2861
        %v2867 = vpop.permute.xlu0 %2866
        %v2868 = vlaneseq
        %v2869 = vshrl.u32 %v2868, 7
        %v2870 = vadd.s32 %v2869, 8
        %2871 = vset.pattern.permute.xlu0 %v2870
        %2872 = vperm.xlu0 %2871, %v2861
        %v2873 = vpop.permute.xlu0 %2872
        %v2874 = vperm.slane %v299, 0
        %v2875 = vlaneseq
        %v2876 = vshrl.u32 %v2875, 7
        %2878 = vset.pattern.permute.xlu0 %v2876
        %2879 = vperm.xlu0 %2878, %v2874
        %v2880 = vpop.permute.xlu0 %2879
        %v2881 = vlaneseq
        %v2882 = vshrl.u32 %v2881, 7
        %v2883 = vadd.s32 %v2882, 8
        %2884 = vset.pattern.permute.xlu0 %v2883
        %2885 = vperm.xlu0 %2884, %v2874
        %v2886 = vpop.permute.xlu0 %2885
        %v2887 = vperm.slane %v299, 1
        %v2888 = vlaneseq
        %v2889 = vshrl.u32 %v2888, 7
        %2891 = vset.pattern.permute.xlu0 %v2889
        %2892 = vperm.xlu0 %2891, %v2887
        %v2893 = vpop.permute.xlu0 %2892
        %v2894 = vlaneseq
        %v2895 = vshrl.u32 %v2894, 7
        %v2896 = vadd.s32 %v2895, 8
        %2897 = vset.pattern.permute.xlu0 %v2896
        %2898 = vperm.xlu0 %2897, %v2887
        %v2899 = vpop.permute.xlu0 %2898
        %v2900 = vperm.slane %v299, 2
        %v2901 = vlaneseq
        %v2902 = vshrl.u32 %v2901, 7
        %2904 = vset.pattern.permute.xlu0 %v2902
        %2905 = vperm.xlu0 %2904, %v2900
        %v2906 = vpop.permute.xlu0 %2905
        %v2907 = vlaneseq
        %v2908 = vshrl.u32 %v2907, 7
        %v2909 = vadd.s32 %v2908, 8
        %2910 = vset.pattern.permute.xlu0 %v2909
        %2911 = vperm.xlu0 %2910, %v2900
        %v2912 = vpop.permute.xlu0 %2911
        %v2913 = vperm.slane %v299, 3
        %v2914 = vlaneseq
        %v2915 = vshrl.u32 %v2914, 7
        %2917 = vset.pattern.permute.xlu0 %v2915
        %2918 = vperm.xlu0 %2917, %v2913
        %v2919 = vpop.permute.xlu0 %2918
        %v2920 = vlaneseq
        %v2921 = vshrl.u32 %v2920, 7
        %v2922 = vadd.s32 %v2921, 8
        %2923 = vset.pattern.permute.xlu0 %v2922
        %2924 = vperm.xlu0 %2923, %v2913
        %v2925 = vpop.permute.xlu0 %2924
        %v2926 = vperm.slane %v299, 4
        %v2927 = vlaneseq
        %v2928 = vshrl.u32 %v2927, 7
        %2930 = vset.pattern.permute.xlu0 %v2928
        %2931 = vperm.xlu0 %2930, %v2926
        %v2932 = vpop.permute.xlu0 %2931
        %v2933 = vlaneseq
        %v2934 = vshrl.u32 %v2933, 7
        %v2935 = vadd.s32 %v2934, 8
        %2936 = vset.pattern.permute.xlu0 %v2935
        %2937 = vperm.xlu0 %2936, %v2926
        %v2938 = vpop.permute.xlu0 %2937
        %v2939 = vperm.slane %v299, 5
        %v2940 = vlaneseq
        %v2941 = vshrl.u32 %v2940, 7
        %2943 = vset.pattern.permute.xlu0 %v2941
        %2944 = vperm.xlu0 %2943, %v2939
        %v2945 = vpop.permute.xlu0 %2944
        %v2946 = vlaneseq
        %v2947 = vshrl.u32 %v2946, 7
        %v2948 = vadd.s32 %v2947, 8
        %2949 = vset.pattern.permute.xlu0 %v2948
        %2950 = vperm.xlu0 %2949, %v2939
        %v2951 = vpop.permute.xlu0 %2950
        %v2952 = vperm.slane %v299, 6
        %v2953 = vlaneseq
        %v2954 = vshrl.u32 %v2953, 7
        %2956 = vset.pattern.permute.xlu0 %v2954
        %2957 = vperm.xlu0 %2956, %v2952
        %v2958 = vpop.permute.xlu0 %2957
        %v2959 = vlaneseq
        %v2960 = vshrl.u32 %v2959, 7
        %v2961 = vadd.s32 %v2960, 8
        %2962 = vset.pattern.permute.xlu0 %v2961
        %2963 = vperm.xlu0 %2962, %v2952
        %v2964 = vpop.permute.xlu0 %2963
        %v2965 = vperm.slane %v299, 7
        %v2966 = vlaneseq
        %v2967 = vshrl.u32 %v2966, 7
        %2969 = vset.pattern.permute.xlu0 %v2967
        %2970 = vperm.xlu0 %2969, %v2965
        %v2971 = vpop.permute.xlu0 %2970
        %v2972 = vlaneseq
        %v2973 = vshrl.u32 %v2972, 7
        %v2974 = vadd.s32 %v2973, 8
        %2975 = vset.pattern.permute.xlu0 %v2974
        %2976 = vperm.xlu0 %2975, %v2965
        %v2977 = vpop.permute.xlu0 %2976
        %v2978 = vperm.slane %v300, 0
        %v2979 = vlaneseq
        %v2980 = vshrl.u32 %v2979, 7
        %2982 = vset.pattern.permute.xlu0 %v2980
        %2983 = vperm.xlu0 %2982, %v2978
        %v2984 = vpop.permute.xlu0 %2983
        %v2985 = vlaneseq
        %v2986 = vshrl.u32 %v2985, 7
        %v2987 = vadd.s32 %v2986, 8
        %2988 = vset.pattern.permute.xlu0 %v2987
        %2989 = vperm.xlu0 %2988, %v2978
        %v2990 = vpop.permute.xlu0 %2989
        %v2991 = vperm.slane %v300, 1
        %v2992 = vlaneseq
        %v2993 = vshrl.u32 %v2992, 7
        %2995 = vset.pattern.permute.xlu0 %v2993
        %2996 = vperm.xlu0 %2995, %v2991
        %v2997 = vpop.permute.xlu0 %2996
        %v2998 = vlaneseq
        %v2999 = vshrl.u32 %v2998, 7
        %v3000 = vadd.s32 %v2999, 8
        %3001 = vset.pattern.permute.xlu0 %v3000
        %3002 = vperm.xlu0 %3001, %v2991
        %v3003 = vpop.permute.xlu0 %3002
        %v3004 = vperm.slane %v300, 2
        %v3005 = vlaneseq
        %v3006 = vshrl.u32 %v3005, 7
        %3008 = vset.pattern.permute.xlu0 %v3006
        %3009 = vperm.xlu0 %3008, %v3004
        %v3010 = vpop.permute.xlu0 %3009
        %v3011 = vlaneseq
        %v3012 = vshrl.u32 %v3011, 7
        %v3013 = vadd.s32 %v3012, 8
        %3014 = vset.pattern.permute.xlu0 %v3013
        %3015 = vperm.xlu0 %3014, %v3004
        %v3016 = vpop.permute.xlu0 %3015
        %v3017 = vperm.slane %v300, 3
        %v3018 = vlaneseq
        %v3019 = vshrl.u32 %v3018, 7
        %3021 = vset.pattern.permute.xlu0 %v3019
        %3022 = vperm.xlu0 %3021, %v3017
        %v3023 = vpop.permute.xlu0 %3022
        %v3024 = vlaneseq
        %v3025 = vshrl.u32 %v3024, 7
        %v3026 = vadd.s32 %v3025, 8
        %3027 = vset.pattern.permute.xlu0 %v3026
        %3028 = vperm.xlu0 %3027, %v3017
        %v3029 = vpop.permute.xlu0 %3028
        %v3030 = vperm.slane %v300, 4
        %v3031 = vlaneseq
        %v3032 = vshrl.u32 %v3031, 7
        %3034 = vset.pattern.permute.xlu0 %v3032
        %3035 = vperm.xlu0 %3034, %v3030
        %v3036 = vpop.permute.xlu0 %3035
        %v3037 = vlaneseq
        %v3038 = vshrl.u32 %v3037, 7
        %v3039 = vadd.s32 %v3038, 8
        %3040 = vset.pattern.permute.xlu0 %v3039
        %3041 = vperm.xlu0 %3040, %v3030
        %v3042 = vpop.permute.xlu0 %3041
        %v3043 = vperm.slane %v300, 5
        %v3044 = vlaneseq
        %v3045 = vshrl.u32 %v3044, 7
        %3047 = vset.pattern.permute.xlu0 %v3045
        %3048 = vperm.xlu0 %3047, %v3043
        %v3049 = vpop.permute.xlu0 %3048
        %v3050 = vlaneseq
        %v3051 = vshrl.u32 %v3050, 7
        %v3052 = vadd.s32 %v3051, 8
        %3053 = vset.pattern.permute.xlu0 %v3052
        %3054 = vperm.xlu0 %3053, %v3043
        %v3055 = vpop.permute.xlu0 %3054
        %v3056 = vperm.slane %v300, 6
        %v3057 = vlaneseq
        %v3058 = vshrl.u32 %v3057, 7
        %3060 = vset.pattern.permute.xlu0 %v3058
        %3061 = vperm.xlu0 %3060, %v3056
        %v3062 = vpop.permute.xlu0 %3061
        %v3063 = vlaneseq
        %v3064 = vshrl.u32 %v3063, 7
        %v3065 = vadd.s32 %v3064, 8
        %3066 = vset.pattern.permute.xlu0 %v3065
        %3067 = vperm.xlu0 %3066, %v3056
        %v3068 = vpop.permute.xlu0 %3067
        %v3069 = vperm.slane %v300, 7
        %v3070 = vlaneseq
        %v3071 = vshrl.u32 %v3070, 7
        %3073 = vset.pattern.permute.xlu0 %v3071
        %3074 = vperm.xlu0 %3073, %v3069
        %v3075 = vpop.permute.xlu0 %3074
        %v3076 = vlaneseq
        %v3077 = vshrl.u32 %v3076, 7
        %v3078 = vadd.s32 %v3077, 8
        %3079 = vset.pattern.permute.xlu0 %v3078
        %3080 = vperm.xlu0 %3079, %v3069
        %v3081 = vpop.permute.xlu0 %3080
        %v3082 = vperm.slane %v301, 0
        %v3083 = vlaneseq
        %v3084 = vshrl.u32 %v3083, 7
        %3086 = vset.pattern.permute.xlu0 %v3084
        %3087 = vperm.xlu0 %3086, %v3082
        %v3088 = vpop.permute.xlu0 %3087
        %v3089 = vlaneseq
        %v3090 = vshrl.u32 %v3089, 7
        %v3091 = vadd.s32 %v3090, 8
        %3092 = vset.pattern.permute.xlu0 %v3091
        %3093 = vperm.xlu0 %3092, %v3082
        %v3094 = vpop.permute.xlu0 %3093
        %v3095 = vperm.slane %v301, 1
        %v3096 = vlaneseq
        %v3097 = vshrl.u32 %v3096, 7
        %3099 = vset.pattern.permute.xlu0 %v3097
        %3100 = vperm.xlu0 %3099, %v3095
        %v3101 = vpop.permute.xlu0 %3100
        %v3102 = vlaneseq
        %v3103 = vshrl.u32 %v3102, 7
        %v3104 = vadd.s32 %v3103, 8
        %3105 = vset.pattern.permute.xlu0 %v3104
        %3106 = vperm.xlu0 %3105, %v3095
        %v3107 = vpop.permute.xlu0 %3106
        %v3108 = vperm.slane %v301, 2
        %v3109 = vlaneseq
        %v3110 = vshrl.u32 %v3109, 7
        %3112 = vset.pattern.permute.xlu0 %v3110
        %3113 = vperm.xlu0 %3112, %v3108
        %v3114 = vpop.permute.xlu0 %3113
        %v3115 = vlaneseq
        %v3116 = vshrl.u32 %v3115, 7
        %v3117 = vadd.s32 %v3116, 8
        %3118 = vset.pattern.permute.xlu0 %v3117
        %3119 = vperm.xlu0 %3118, %v3108
        %v3120 = vpop.permute.xlu0 %3119
        %v3121 = vperm.slane %v301, 3
        %v3122 = vlaneseq
        %v3123 = vshrl.u32 %v3122, 7
        %3125 = vset.pattern.permute.xlu0 %v3123
        %3126 = vperm.xlu0 %3125, %v3121
        %v3127 = vpop.permute.xlu0 %3126
        %v3128 = vlaneseq
        %v3129 = vshrl.u32 %v3128, 7
        %v3130 = vadd.s32 %v3129, 8
        %3131 = vset.pattern.permute.xlu0 %v3130
        %3132 = vperm.xlu0 %3131, %v3121
        %v3133 = vpop.permute.xlu0 %3132
        %v3134 = vperm.slane %v301, 4
        %v3135 = vlaneseq
        %v3136 = vshrl.u32 %v3135, 7
        %3138 = vset.pattern.permute.xlu0 %v3136
        %3139 = vperm.xlu0 %3138, %v3134
        %v3140 = vpop.permute.xlu0 %3139
        %v3141 = vlaneseq
        %v3142 = vshrl.u32 %v3141, 7
        %v3143 = vadd.s32 %v3142, 8
        %3144 = vset.pattern.permute.xlu0 %v3143
        %3145 = vperm.xlu0 %3144, %v3134
        %v3146 = vpop.permute.xlu0 %3145
        %v3147 = vperm.slane %v301, 5
        %v3148 = vlaneseq
        %v3149 = vshrl.u32 %v3148, 7
        %3151 = vset.pattern.permute.xlu0 %v3149
        %3152 = vperm.xlu0 %3151, %v3147
        %v3153 = vpop.permute.xlu0 %3152
        %v3154 = vlaneseq
        %v3155 = vshrl.u32 %v3154, 7
        %v3156 = vadd.s32 %v3155, 8
        %3157 = vset.pattern.permute.xlu0 %v3156
        %3158 = vperm.xlu0 %3157, %v3147
        %v3159 = vpop.permute.xlu0 %3158
        %v3160 = vperm.slane %v301, 6
        %v3161 = vlaneseq
        %v3162 = vshrl.u32 %v3161, 7
        %3164 = vset.pattern.permute.xlu0 %v3162
        %3165 = vperm.xlu0 %3164, %v3160
        %v3166 = vpop.permute.xlu0 %3165
        %v3167 = vlaneseq
        %v3168 = vshrl.u32 %v3167, 7
        %v3169 = vadd.s32 %v3168, 8
        %3170 = vset.pattern.permute.xlu0 %v3169
        %3171 = vperm.xlu0 %3170, %v3160
        %v3172 = vpop.permute.xlu0 %3171
        %v3173 = vperm.slane %v301, 7
        %v3174 = vlaneseq
        %v3175 = vshrl.u32 %v3174, 7
        %3177 = vset.pattern.permute.xlu0 %v3175
        %3178 = vperm.xlu0 %3177, %v3173
        %v3179 = vpop.permute.xlu0 %3178
        %v3180 = vlaneseq
        %v3181 = vshrl.u32 %v3180, 7
        %v3182 = vadd.s32 %v3181, 8
        %3183 = vset.pattern.permute.xlu0 %v3182
        %3184 = vperm.xlu0 %3183, %v3173
        %v3185 = vpop.permute.xlu0 %3184
        %v3186 = vperm.slane %v302, 0
        %v3187 = vlaneseq
        %v3188 = vshrl.u32 %v3187, 7
        %3190 = vset.pattern.permute.xlu0 %v3188
        %3191 = vperm.xlu0 %3190, %v3186
        %v3192 = vpop.permute.xlu0 %3191
        %v3193 = vlaneseq
        %v3194 = vshrl.u32 %v3193, 7
        %v3195 = vadd.s32 %v3194, 8
        %3196 = vset.pattern.permute.xlu0 %v3195
        %3197 = vperm.xlu0 %3196, %v3186
        %v3198 = vpop.permute.xlu0 %3197
        %v3199 = vperm.slane %v302, 1
        %v3200 = vlaneseq
        %v3201 = vshrl.u32 %v3200, 7
        %3203 = vset.pattern.permute.xlu0 %v3201
        %3204 = vperm.xlu0 %3203, %v3199
        %v3205 = vpop.permute.xlu0 %3204
        %v3206 = vlaneseq
        %v3207 = vshrl.u32 %v3206, 7
        %v3208 = vadd.s32 %v3207, 8
        %3209 = vset.pattern.permute.xlu0 %v3208
        %3210 = vperm.xlu0 %3209, %v3199
        %v3211 = vpop.permute.xlu0 %3210
        %v3212 = vperm.slane %v302, 2
        %v3213 = vlaneseq
        %v3214 = vshrl.u32 %v3213, 7
        %3216 = vset.pattern.permute.xlu0 %v3214
        %3217 = vperm.xlu0 %3216, %v3212
        %v3218 = vpop.permute.xlu0 %3217
        %v3219 = vlaneseq
        %v3220 = vshrl.u32 %v3219, 7
        %v3221 = vadd.s32 %v3220, 8
        %3222 = vset.pattern.permute.xlu0 %v3221
        %3223 = vperm.xlu0 %3222, %v3212
        %v3224 = vpop.permute.xlu0 %3223
        %v3225 = vperm.slane %v302, 3
        %v3226 = vlaneseq
        %v3227 = vshrl.u32 %v3226, 7
        %3229 = vset.pattern.permute.xlu0 %v3227
        %3230 = vperm.xlu0 %3229, %v3225
        %v3231 = vpop.permute.xlu0 %3230
        %v3232 = vlaneseq
        %v3233 = vshrl.u32 %v3232, 7
        %v3234 = vadd.s32 %v3233, 8
        %3235 = vset.pattern.permute.xlu0 %v3234
        %3236 = vperm.xlu0 %3235, %v3225
        %v3237 = vpop.permute.xlu0 %3236
        %v3238 = vperm.slane %v302, 4
        %v3239 = vlaneseq
        %v3240 = vshrl.u32 %v3239, 7
        %3242 = vset.pattern.permute.xlu0 %v3240
        %3243 = vperm.xlu0 %3242, %v3238
        %v3244 = vpop.permute.xlu0 %3243
        %v3245 = vlaneseq
        %v3246 = vshrl.u32 %v3245, 7
        %v3247 = vadd.s32 %v3246, 8
        %3248 = vset.pattern.permute.xlu0 %v3247
        %3249 = vperm.xlu0 %3248, %v3238
        %v3250 = vpop.permute.xlu0 %3249
        %v3251 = vperm.slane %v302, 5
        %v3252 = vlaneseq
        %v3253 = vshrl.u32 %v3252, 7
        %3255 = vset.pattern.permute.xlu0 %v3253
        %3256 = vperm.xlu0 %3255, %v3251
        %v3257 = vpop.permute.xlu0 %3256
        %v3258 = vlaneseq
        %v3259 = vshrl.u32 %v3258, 7
        %v3260 = vadd.s32 %v3259, 8
        %3261 = vset.pattern.permute.xlu0 %v3260
        %3262 = vperm.xlu0 %3261, %v3251
        %v3263 = vpop.permute.xlu0 %3262
        %v3264 = vperm.slane %v302, 6
        %v3265 = vlaneseq
        %v3266 = vshrl.u32 %v3265, 7
        %3268 = vset.pattern.permute.xlu0 %v3266
        %3269 = vperm.xlu0 %3268, %v3264
        %v3270 = vpop.permute.xlu0 %3269
        %v3271 = vlaneseq
        %v3272 = vshrl.u32 %v3271, 7
        %v3273 = vadd.s32 %v3272, 8
        %3274 = vset.pattern.permute.xlu0 %v3273
        %3275 = vperm.xlu0 %3274, %v3264
        %v3276 = vpop.permute.xlu0 %3275
        %v3277 = vperm.slane %v302, 7
        %v3278 = vlaneseq
        %v3279 = vshrl.u32 %v3278, 7
        %3281 = vset.pattern.permute.xlu0 %v3279
        %3282 = vperm.xlu0 %3281, %v3277
        %v3283 = vpop.permute.xlu0 %3282
        %v3284 = vlaneseq
        %v3285 = vshrl.u32 %v3284, 7
        %v3286 = vadd.s32 %v3285, 8
        %3287 = vset.pattern.permute.xlu0 %v3286
        %3288 = vperm.xlu0 %3287, %v3277
        %v3289 = vpop.permute.xlu0 %3288
        %v3290 = vperm.slane %v303, 0
        %v3291 = vlaneseq
        %v3292 = vshrl.u32 %v3291, 7
        %3294 = vset.pattern.permute.xlu0 %v3292
        %3295 = vperm.xlu0 %3294, %v3290
        %v3296 = vpop.permute.xlu0 %3295
        %v3297 = vlaneseq
        %v3298 = vshrl.u32 %v3297, 7
        %v3299 = vadd.s32 %v3298, 8
        %3300 = vset.pattern.permute.xlu0 %v3299
        %3301 = vperm.xlu0 %3300, %v3290
        %v3302 = vpop.permute.xlu0 %3301
        %v3303 = vperm.slane %v303, 1
        %v3304 = vlaneseq
        %v3305 = vshrl.u32 %v3304, 7
        %3307 = vset.pattern.permute.xlu0 %v3305
        %3308 = vperm.xlu0 %3307, %v3303
        %v3309 = vpop.permute.xlu0 %3308
        %v3310 = vlaneseq
        %v3311 = vshrl.u32 %v3310, 7
        %v3312 = vadd.s32 %v3311, 8
        %3313 = vset.pattern.permute.xlu0 %v3312
        %3314 = vperm.xlu0 %3313, %v3303
        %v3315 = vpop.permute.xlu0 %3314
        %v3316 = vperm.slane %v303, 2
        %v3317 = vlaneseq
        %v3318 = vshrl.u32 %v3317, 7
        %3320 = vset.pattern.permute.xlu0 %v3318
        %3321 = vperm.xlu0 %3320, %v3316
        %v3322 = vpop.permute.xlu0 %3321
        %v3323 = vlaneseq
        %v3324 = vshrl.u32 %v3323, 7
        %v3325 = vadd.s32 %v3324, 8
        %3326 = vset.pattern.permute.xlu0 %v3325
        %3327 = vperm.xlu0 %3326, %v3316
        %v3328 = vpop.permute.xlu0 %3327
        %v3329 = vperm.slane %v303, 3
        %v3330 = vlaneseq
        %v3331 = vshrl.u32 %v3330, 7
        %3333 = vset.pattern.permute.xlu0 %v3331
        %3334 = vperm.xlu0 %3333, %v3329
        %v3335 = vpop.permute.xlu0 %3334
        %v3336 = vlaneseq
        %v3337 = vshrl.u32 %v3336, 7
        %v3338 = vadd.s32 %v3337, 8
        %3339 = vset.pattern.permute.xlu0 %v3338
        %3340 = vperm.xlu0 %3339, %v3329
        %v3341 = vpop.permute.xlu0 %3340
        %v3342 = vperm.slane %v303, 4
        %v3343 = vlaneseq
        %v3344 = vshrl.u32 %v3343, 7
        %3346 = vset.pattern.permute.xlu0 %v3344
        %3347 = vperm.xlu0 %3346, %v3342
        %v3348 = vpop.permute.xlu0 %3347
        %v3349 = vlaneseq
        %v3350 = vshrl.u32 %v3349, 7
        %v3351 = vadd.s32 %v3350, 8
        %3352 = vset.pattern.permute.xlu0 %v3351
        %3353 = vperm.xlu0 %3352, %v3342
        %v3354 = vpop.permute.xlu0 %3353
        %v3355 = vperm.slane %v303, 5
        %v3356 = vlaneseq
        %v3357 = vshrl.u32 %v3356, 7
        %3359 = vset.pattern.permute.xlu0 %v3357
        %3360 = vperm.xlu0 %3359, %v3355
        %v3361 = vpop.permute.xlu0 %3360
        %v3362 = vlaneseq
        %v3363 = vshrl.u32 %v3362, 7
        %v3364 = vadd.s32 %v3363, 8
        %3365 = vset.pattern.permute.xlu0 %v3364
        %3366 = vperm.xlu0 %3365, %v3355
        %v3367 = vpop.permute.xlu0 %3366
        %v3368 = vperm.slane %v303, 6
        %v3369 = vlaneseq
        %v3370 = vshrl.u32 %v3369, 7
        %3372 = vset.pattern.permute.xlu0 %v3370
        %3373 = vperm.xlu0 %3372, %v3368
        %v3374 = vpop.permute.xlu0 %3373
        %v3375 = vlaneseq
        %v3376 = vshrl.u32 %v3375, 7
        %v3377 = vadd.s32 %v3376, 8
        %3378 = vset.pattern.permute.xlu0 %v3377
        %3379 = vperm.xlu0 %3378, %v3368
        %v3380 = vpop.permute.xlu0 %3379
        %v3381 = vperm.slane %v303, 7
        %v3382 = vlaneseq
        %v3383 = vshrl.u32 %v3382, 7
        %3385 = vset.pattern.permute.xlu0 %v3383
        %3386 = vperm.xlu0 %3385, %v3381
        %v3387 = vpop.permute.xlu0 %3386
        %v3388 = vlaneseq
        %v3389 = vshrl.u32 %v3388, 7
        %v3390 = vadd.s32 %v3389, 8
        %3391 = vset.pattern.permute.xlu0 %v3390
        %3392 = vperm.xlu0 %3391, %v3381
        %v3393 = vpop.permute.xlu0 %3392
        %v3394 = vperm.slane %v304, 0
        %v3395 = vlaneseq
        %v3396 = vshrl.u32 %v3395, 7
        %3398 = vset.pattern.permute.xlu0 %v3396
        %3399 = vperm.xlu0 %3398, %v3394
        %v3400 = vpop.permute.xlu0 %3399
        %v3401 = vlaneseq
        %v3402 = vshrl.u32 %v3401, 7
        %v3403 = vadd.s32 %v3402, 8
        %3404 = vset.pattern.permute.xlu0 %v3403
        %3405 = vperm.xlu0 %3404, %v3394
        %v3406 = vpop.permute.xlu0 %3405
        %v3407 = vperm.slane %v304, 1
        %v3408 = vlaneseq
        %v3409 = vshrl.u32 %v3408, 7
        %3411 = vset.pattern.permute.xlu0 %v3409
        %3412 = vperm.xlu0 %3411, %v3407
        %v3413 = vpop.permute.xlu0 %3412
        %v3414 = vlaneseq
        %v3415 = vshrl.u32 %v3414, 7
        %v3416 = vadd.s32 %v3415, 8
        %3417 = vset.pattern.permute.xlu0 %v3416
        %3418 = vperm.xlu0 %3417, %v3407
        %v3419 = vpop.permute.xlu0 %3418
        %v3420 = vperm.slane %v304, 2
        %v3421 = vlaneseq
        %v3422 = vshrl.u32 %v3421, 7
        %3424 = vset.pattern.permute.xlu0 %v3422
        %3425 = vperm.xlu0 %3424, %v3420
        %v3426 = vpop.permute.xlu0 %3425
        %v3427 = vlaneseq
        %v3428 = vshrl.u32 %v3427, 7
        %v3429 = vadd.s32 %v3428, 8
        %3430 = vset.pattern.permute.xlu0 %v3429
        %3431 = vperm.xlu0 %3430, %v3420
        %v3432 = vpop.permute.xlu0 %3431
        %v3433 = vperm.slane %v304, 3
        %v3434 = vlaneseq
        %v3435 = vshrl.u32 %v3434, 7
        %3437 = vset.pattern.permute.xlu0 %v3435
        %3438 = vperm.xlu0 %3437, %v3433
        %v3439 = vpop.permute.xlu0 %3438
        %v3440 = vlaneseq
        %v3441 = vshrl.u32 %v3440, 7
        %v3442 = vadd.s32 %v3441, 8
        %3443 = vset.pattern.permute.xlu0 %v3442
        %3444 = vperm.xlu0 %3443, %v3433
        %v3445 = vpop.permute.xlu0 %3444
        %v3446 = vperm.slane %v304, 4
        %v3447 = vlaneseq
        %v3448 = vshrl.u32 %v3447, 7
        %3450 = vset.pattern.permute.xlu0 %v3448
        %3451 = vperm.xlu0 %3450, %v3446
        %v3452 = vpop.permute.xlu0 %3451
        %v3453 = vlaneseq
        %v3454 = vshrl.u32 %v3453, 7
        %v3455 = vadd.s32 %v3454, 8
        %3456 = vset.pattern.permute.xlu0 %v3455
        %3457 = vperm.xlu0 %3456, %v3446
        %v3458 = vpop.permute.xlu0 %3457
        %v3459 = vperm.slane %v304, 5
        %v3460 = vlaneseq
        %v3461 = vshrl.u32 %v3460, 7
        %3463 = vset.pattern.permute.xlu0 %v3461
        %3464 = vperm.xlu0 %3463, %v3459
        %v3465 = vpop.permute.xlu0 %3464
        %v3466 = vlaneseq
        %v3467 = vshrl.u32 %v3466, 7
        %v3468 = vadd.s32 %v3467, 8
        %3469 = vset.pattern.permute.xlu0 %v3468
        %3470 = vperm.xlu0 %3469, %v3459
        %v3471 = vpop.permute.xlu0 %3470
        %v3472 = vperm.slane %v304, 6
        %v3473 = vlaneseq
        %v3474 = vshrl.u32 %v3473, 7
        %3476 = vset.pattern.permute.xlu0 %v3474
        %3477 = vperm.xlu0 %3476, %v3472
        %v3478 = vpop.permute.xlu0 %3477
        %v3479 = vlaneseq
        %v3480 = vshrl.u32 %v3479, 7
        %v3481 = vadd.s32 %v3480, 8
        %3482 = vset.pattern.permute.xlu0 %v3481
        %3483 = vperm.xlu0 %3482, %v3472
        %v3484 = vpop.permute.xlu0 %3483
        %v3485 = vperm.slane %v304, 7
        %v3486 = vlaneseq
        %v3487 = vshrl.u32 %v3486, 7
        %3489 = vset.pattern.permute.xlu0 %v3487
        %3490 = vperm.xlu0 %3489, %v3485
        %v3491 = vpop.permute.xlu0 %3490
        %v3492 = vlaneseq
        %v3493 = vshrl.u32 %v3492, 7
        %v3494 = vadd.s32 %v3493, 8
        %3495 = vset.pattern.permute.xlu0 %v3494
        %3496 = vperm.xlu0 %3495, %v3485
        %v3497 = vpop.permute.xlu0 %3496
        %v3498 = vperm.slane %v305, 0
        %v3499 = vlaneseq
        %v3500 = vshrl.u32 %v3499, 7
        %3502 = vset.pattern.permute.xlu0 %v3500
        %3503 = vperm.xlu0 %3502, %v3498
        %v3504 = vpop.permute.xlu0 %3503
        %v3505 = vlaneseq
        %v3506 = vshrl.u32 %v3505, 7
        %v3507 = vadd.s32 %v3506, 8
        %3508 = vset.pattern.permute.xlu0 %v3507
        %3509 = vperm.xlu0 %3508, %v3498
        %v3510 = vpop.permute.xlu0 %3509
        %v3511 = vperm.slane %v305, 1
        %v3512 = vlaneseq
        %v3513 = vshrl.u32 %v3512, 7
        %3515 = vset.pattern.permute.xlu0 %v3513
        %3516 = vperm.xlu0 %3515, %v3511
        %v3517 = vpop.permute.xlu0 %3516
        %v3518 = vlaneseq
        %v3519 = vshrl.u32 %v3518, 7
        %v3520 = vadd.s32 %v3519, 8
        %3521 = vset.pattern.permute.xlu0 %v3520
        %3522 = vperm.xlu0 %3521, %v3511
        %v3523 = vpop.permute.xlu0 %3522
        %v3524 = vperm.slane %v305, 2
        %v3525 = vlaneseq
        %v3526 = vshrl.u32 %v3525, 7
        %3528 = vset.pattern.permute.xlu0 %v3526
        %3529 = vperm.xlu0 %3528, %v3524
        %v3530 = vpop.permute.xlu0 %3529
        %v3531 = vlaneseq
        %v3532 = vshrl.u32 %v3531, 7
        %v3533 = vadd.s32 %v3532, 8
        %3534 = vset.pattern.permute.xlu0 %v3533
        %3535 = vperm.xlu0 %3534, %v3524
        %v3536 = vpop.permute.xlu0 %3535
        %v3537 = vperm.slane %v305, 3
        %v3538 = vlaneseq
        %v3539 = vshrl.u32 %v3538, 7
        %3541 = vset.pattern.permute.xlu0 %v3539
        %3542 = vperm.xlu0 %3541, %v3537
        %v3543 = vpop.permute.xlu0 %3542
        %v3544 = vlaneseq
        %v3545 = vshrl.u32 %v3544, 7
        %v3546 = vadd.s32 %v3545, 8
        %3547 = vset.pattern.permute.xlu0 %v3546
        %3548 = vperm.xlu0 %3547, %v3537
        %v3549 = vpop.permute.xlu0 %3548
        %v3550 = vperm.slane %v305, 4
        %v3551 = vlaneseq
        %v3552 = vshrl.u32 %v3551, 7
        %3554 = vset.pattern.permute.xlu0 %v3552
        %3555 = vperm.xlu0 %3554, %v3550
        %v3556 = vpop.permute.xlu0 %3555
        %v3557 = vlaneseq
        %v3558 = vshrl.u32 %v3557, 7
        %v3559 = vadd.s32 %v3558, 8
        %3560 = vset.pattern.permute.xlu0 %v3559
        %3561 = vperm.xlu0 %3560, %v3550
        %v3562 = vpop.permute.xlu0 %3561
        %v3563 = vperm.slane %v305, 5
        %v3564 = vlaneseq
        %v3565 = vshrl.u32 %v3564, 7
        %3567 = vset.pattern.permute.xlu0 %v3565
        %3568 = vperm.xlu0 %3567, %v3563
        %v3569 = vpop.permute.xlu0 %3568
        %v3570 = vlaneseq
        %v3571 = vshrl.u32 %v3570, 7
        %v3572 = vadd.s32 %v3571, 8
        %3573 = vset.pattern.permute.xlu0 %v3572
        %3574 = vperm.xlu0 %3573, %v3563
        %v3575 = vpop.permute.xlu0 %3574
        %v3576 = vperm.slane %v305, 6
        %v3577 = vlaneseq
        %v3578 = vshrl.u32 %v3577, 7
        %3580 = vset.pattern.permute.xlu0 %v3578
        %3581 = vperm.xlu0 %3580, %v3576
        %v3582 = vpop.permute.xlu0 %3581
        %v3583 = vlaneseq
        %v3584 = vshrl.u32 %v3583, 7
        %v3585 = vadd.s32 %v3584, 8
        %3586 = vset.pattern.permute.xlu0 %v3585
        %3587 = vperm.xlu0 %3586, %v3576
        %v3588 = vpop.permute.xlu0 %3587
        %v3589 = vperm.slane %v305, 7
        %v3590 = vlaneseq
        %v3591 = vshrl.u32 %v3590, 7
        %3593 = vset.pattern.permute.xlu0 %v3591
        %3594 = vperm.xlu0 %3593, %v3589
        %v3595 = vpop.permute.xlu0 %3594
        %v3596 = vlaneseq
        %v3597 = vshrl.u32 %v3596, 7
        %v3598 = vadd.s32 %v3597, 8
        %3599 = vset.pattern.permute.xlu0 %v3598
        %3600 = vperm.xlu0 %3599, %v3589
        %v3601 = vpop.permute.xlu0 %3600
        %v3602 = vperm.slane %v306, 0
        %v3603 = vlaneseq
        %v3604 = vshrl.u32 %v3603, 7
        %3606 = vset.pattern.permute.xlu0 %v3604
        %3607 = vperm.xlu0 %3606, %v3602
        %v3608 = vpop.permute.xlu0 %3607
        %v3609 = vlaneseq
        %v3610 = vshrl.u32 %v3609, 7
        %v3611 = vadd.s32 %v3610, 8
        %3612 = vset.pattern.permute.xlu0 %v3611
        %3613 = vperm.xlu0 %3612, %v3602
        %v3614 = vpop.permute.xlu0 %3613
        %v3615 = vperm.slane %v306, 1
        %v3616 = vlaneseq
        %v3617 = vshrl.u32 %v3616, 7
        %3619 = vset.pattern.permute.xlu0 %v3617
        %3620 = vperm.xlu0 %3619, %v3615
        %v3621 = vpop.permute.xlu0 %3620
        %v3622 = vlaneseq
        %v3623 = vshrl.u32 %v3622, 7
        %v3624 = vadd.s32 %v3623, 8
        %3625 = vset.pattern.permute.xlu0 %v3624
        %3626 = vperm.xlu0 %3625, %v3615
        %v3627 = vpop.permute.xlu0 %3626
        %v3628 = vperm.slane %v306, 2
        %v3629 = vlaneseq
        %v3630 = vshrl.u32 %v3629, 7
        %3632 = vset.pattern.permute.xlu0 %v3630
        %3633 = vperm.xlu0 %3632, %v3628
        %v3634 = vpop.permute.xlu0 %3633
        %v3635 = vlaneseq
        %v3636 = vshrl.u32 %v3635, 7
        %v3637 = vadd.s32 %v3636, 8
        %3638 = vset.pattern.permute.xlu0 %v3637
        %3639 = vperm.xlu0 %3638, %v3628
        %v3640 = vpop.permute.xlu0 %3639
        %v3641 = vperm.slane %v306, 3
        %v3642 = vlaneseq
        %v3643 = vshrl.u32 %v3642, 7
        %3645 = vset.pattern.permute.xlu0 %v3643
        %3646 = vperm.xlu0 %3645, %v3641
        %v3647 = vpop.permute.xlu0 %3646
        %v3648 = vlaneseq
        %v3649 = vshrl.u32 %v3648, 7
        %v3650 = vadd.s32 %v3649, 8
        %3651 = vset.pattern.permute.xlu0 %v3650
        %3652 = vperm.xlu0 %3651, %v3641
        %v3653 = vpop.permute.xlu0 %3652
        %v3654 = vperm.slane %v306, 4
        %v3655 = vlaneseq
        %v3656 = vshrl.u32 %v3655, 7
        %3658 = vset.pattern.permute.xlu0 %v3656
        %3659 = vperm.xlu0 %3658, %v3654
        %v3660 = vpop.permute.xlu0 %3659
        %v3661 = vlaneseq
        %v3662 = vshrl.u32 %v3661, 7
        %v3663 = vadd.s32 %v3662, 8
        %3664 = vset.pattern.permute.xlu0 %v3663
        %3665 = vperm.xlu0 %3664, %v3654
        %v3666 = vpop.permute.xlu0 %3665
        %v3667 = vperm.slane %v306, 5
        %v3668 = vlaneseq
        %v3669 = vshrl.u32 %v3668, 7
        %3671 = vset.pattern.permute.xlu0 %v3669
        %3672 = vperm.xlu0 %3671, %v3667
        %v3673 = vpop.permute.xlu0 %3672
        %v3674 = vlaneseq
        %v3675 = vshrl.u32 %v3674, 7
        %v3676 = vadd.s32 %v3675, 8
        %3677 = vset.pattern.permute.xlu0 %v3676
        %3678 = vperm.xlu0 %3677, %v3667
        %v3679 = vpop.permute.xlu0 %3678
        %v3680 = vperm.slane %v306, 6
        %v3681 = vlaneseq
        %v3682 = vshrl.u32 %v3681, 7
        %3684 = vset.pattern.permute.xlu0 %v3682
        %3685 = vperm.xlu0 %3684, %v3680
        %v3686 = vpop.permute.xlu0 %3685
        %v3687 = vlaneseq
        %v3688 = vshrl.u32 %v3687, 7
        %v3689 = vadd.s32 %v3688, 8
        %3690 = vset.pattern.permute.xlu0 %v3689
        %3691 = vperm.xlu0 %3690, %v3680
        %v3692 = vpop.permute.xlu0 %3691
        %v3693 = vperm.slane %v306, 7
        %v3694 = vlaneseq
        %v3695 = vshrl.u32 %v3694, 7
        %3697 = vset.pattern.permute.xlu0 %v3695
        %3698 = vperm.xlu0 %3697, %v3693
        %v3699 = vpop.permute.xlu0 %3698
        %v3700 = vlaneseq
        %v3701 = vshrl.u32 %v3700, 7
        %v3702 = vadd.s32 %v3701, 8
        %3703 = vset.pattern.permute.xlu0 %v3702
        %3704 = vperm.xlu0 %3703, %v3693
        %v3705 = vpop.permute.xlu0 %3704
        %v3706 = vperm.slane %v307, 0
        %v3707 = vlaneseq
        %v3708 = vshrl.u32 %v3707, 7
        %3710 = vset.pattern.permute.xlu0 %v3708
        %3711 = vperm.xlu0 %3710, %v3706
        %v3712 = vpop.permute.xlu0 %3711
        %v3713 = vlaneseq
        %v3714 = vshrl.u32 %v3713, 7
        %v3715 = vadd.s32 %v3714, 8
        %3716 = vset.pattern.permute.xlu0 %v3715
        %3717 = vperm.xlu0 %3716, %v3706
        %v3718 = vpop.permute.xlu0 %3717
        %v3719 = vperm.slane %v307, 1
        %v3720 = vlaneseq
        %v3721 = vshrl.u32 %v3720, 7
        %3723 = vset.pattern.permute.xlu0 %v3721
        %3724 = vperm.xlu0 %3723, %v3719
        %v3725 = vpop.permute.xlu0 %3724
        %v3726 = vlaneseq
        %v3727 = vshrl.u32 %v3726, 7
        %v3728 = vadd.s32 %v3727, 8
        %3729 = vset.pattern.permute.xlu0 %v3728
        %3730 = vperm.xlu0 %3729, %v3719
        %v3731 = vpop.permute.xlu0 %3730
        %v3732 = vperm.slane %v307, 2
        %v3733 = vlaneseq
        %v3734 = vshrl.u32 %v3733, 7
        %3736 = vset.pattern.permute.xlu0 %v3734
        %3737 = vperm.xlu0 %3736, %v3732
        %v3738 = vpop.permute.xlu0 %3737
        %v3739 = vlaneseq
        %v3740 = vshrl.u32 %v3739, 7
        %v3741 = vadd.s32 %v3740, 8
        %3742 = vset.pattern.permute.xlu0 %v3741
        %3743 = vperm.xlu0 %3742, %v3732
        %v3744 = vpop.permute.xlu0 %3743
        %v3745 = vperm.slane %v307, 3
        %v3746 = vlaneseq
        %v3747 = vshrl.u32 %v3746, 7
        %3749 = vset.pattern.permute.xlu0 %v3747
        %3750 = vperm.xlu0 %3749, %v3745
        %v3751 = vpop.permute.xlu0 %3750
        %v3752 = vlaneseq
        %v3753 = vshrl.u32 %v3752, 7
        %v3754 = vadd.s32 %v3753, 8
        %3755 = vset.pattern.permute.xlu0 %v3754
        %3756 = vperm.xlu0 %3755, %v3745
        %v3757 = vpop.permute.xlu0 %3756
        %v3758 = vperm.slane %v307, 4
        %v3759 = vlaneseq
        %v3760 = vshrl.u32 %v3759, 7
        %3762 = vset.pattern.permute.xlu0 %v3760
        %3763 = vperm.xlu0 %3762, %v3758
        %v3764 = vpop.permute.xlu0 %3763
        %v3765 = vlaneseq
        %v3766 = vshrl.u32 %v3765, 7
        %v3767 = vadd.s32 %v3766, 8
        %3768 = vset.pattern.permute.xlu0 %v3767
        %3769 = vperm.xlu0 %3768, %v3758
        %v3770 = vpop.permute.xlu0 %3769
        %v3771 = vperm.slane %v307, 5
        %v3772 = vlaneseq
        %v3773 = vshrl.u32 %v3772, 7
        %3775 = vset.pattern.permute.xlu0 %v3773
        %3776 = vperm.xlu0 %3775, %v3771
        %v3777 = vpop.permute.xlu0 %3776
        %v3778 = vlaneseq
        %v3779 = vshrl.u32 %v3778, 7
        %v3780 = vadd.s32 %v3779, 8
        %3781 = vset.pattern.permute.xlu0 %v3780
        %3782 = vperm.xlu0 %3781, %v3771
        %v3783 = vpop.permute.xlu0 %3782
        %v3784 = vperm.slane %v307, 6
        %v3785 = vlaneseq
        %v3786 = vshrl.u32 %v3785, 7
        %3788 = vset.pattern.permute.xlu0 %v3786
        %3789 = vperm.xlu0 %3788, %v3784
        %v3790 = vpop.permute.xlu0 %3789
        %v3791 = vlaneseq
        %v3792 = vshrl.u32 %v3791, 7
        %v3793 = vadd.s32 %v3792, 8
        %3794 = vset.pattern.permute.xlu0 %v3793
        %3795 = vperm.xlu0 %3794, %v3784
        %v3796 = vpop.permute.xlu0 %3795
        %v3797 = vperm.slane %v307, 7
        %v3798 = vlaneseq
        %v3799 = vshrl.u32 %v3798, 7
        %3801 = vset.pattern.permute.xlu0 %v3799
        %3802 = vperm.xlu0 %3801, %v3797
        %v3803 = vpop.permute.xlu0 %3802
        %v3804 = vlaneseq
        %v3805 = vshrl.u32 %v3804, 7
        %v3806 = vadd.s32 %v3805, 8
        %3807 = vset.pattern.permute.xlu0 %v3806
        %3808 = vperm.xlu0 %3807, %v3797
        %v3809 = vpop.permute.xlu0 %3808
        %v3810 = vperm.slane %v308, 0
        %v3811 = vlaneseq
        %v3812 = vshrl.u32 %v3811, 7
        %3814 = vset.pattern.permute.xlu0 %v3812
        %3815 = vperm.xlu0 %3814, %v3810
        %v3816 = vpop.permute.xlu0 %3815
        %v3817 = vlaneseq
        %v3818 = vshrl.u32 %v3817, 7
        %v3819 = vadd.s32 %v3818, 8
        %3820 = vset.pattern.permute.xlu0 %v3819
        %3821 = vperm.xlu0 %3820, %v3810
        %v3822 = vpop.permute.xlu0 %3821
        %v3823 = vperm.slane %v308, 1
        %v3824 = vlaneseq
        %v3825 = vshrl.u32 %v3824, 7
        %3827 = vset.pattern.permute.xlu0 %v3825
        %3828 = vperm.xlu0 %3827, %v3823
        %v3829 = vpop.permute.xlu0 %3828
        %v3830 = vlaneseq
        %v3831 = vshrl.u32 %v3830, 7
        %v3832 = vadd.s32 %v3831, 8
        %3833 = vset.pattern.permute.xlu0 %v3832
        %3834 = vperm.xlu0 %3833, %v3823
        %v3835 = vpop.permute.xlu0 %3834
        %v3836 = vperm.slane %v308, 2
        %v3837 = vlaneseq
        %v3838 = vshrl.u32 %v3837, 7
        %3840 = vset.pattern.permute.xlu0 %v3838
        %3841 = vperm.xlu0 %3840, %v3836
        %v3842 = vpop.permute.xlu0 %3841
        %v3843 = vlaneseq
        %v3844 = vshrl.u32 %v3843, 7
        %v3845 = vadd.s32 %v3844, 8
        %3846 = vset.pattern.permute.xlu0 %v3845
        %3847 = vperm.xlu0 %3846, %v3836
        %v3848 = vpop.permute.xlu0 %3847
        %v3849 = vperm.slane %v308, 3
        %v3850 = vlaneseq
        %v3851 = vshrl.u32 %v3850, 7
        %3853 = vset.pattern.permute.xlu0 %v3851
        %3854 = vperm.xlu0 %3853, %v3849
        %v3855 = vpop.permute.xlu0 %3854
        %v3856 = vlaneseq
        %v3857 = vshrl.u32 %v3856, 7
        %v3858 = vadd.s32 %v3857, 8
        %3859 = vset.pattern.permute.xlu0 %v3858
        %3860 = vperm.xlu0 %3859, %v3849
        %v3861 = vpop.permute.xlu0 %3860
        %v3862 = vperm.slane %v308, 4
        %v3863 = vlaneseq
        %v3864 = vshrl.u32 %v3863, 7
        %3866 = vset.pattern.permute.xlu0 %v3864
        %3867 = vperm.xlu0 %3866, %v3862
        %v3868 = vpop.permute.xlu0 %3867
        %v3869 = vlaneseq
        %v3870 = vshrl.u32 %v3869, 7
        %v3871 = vadd.s32 %v3870, 8
        %3872 = vset.pattern.permute.xlu0 %v3871
        %3873 = vperm.xlu0 %3872, %v3862
        %v3874 = vpop.permute.xlu0 %3873
        %v3875 = vperm.slane %v308, 5
        %v3876 = vlaneseq
        %v3877 = vshrl.u32 %v3876, 7
        %3879 = vset.pattern.permute.xlu0 %v3877
        %3880 = vperm.xlu0 %3879, %v3875
        %v3881 = vpop.permute.xlu0 %3880
        %v3882 = vlaneseq
        %v3883 = vshrl.u32 %v3882, 7
        %v3884 = vadd.s32 %v3883, 8
        %3885 = vset.pattern.permute.xlu0 %v3884
        %3886 = vperm.xlu0 %3885, %v3875
        %v3887 = vpop.permute.xlu0 %3886
        %v3888 = vperm.slane %v308, 6
        %v3889 = vlaneseq
        %v3890 = vshrl.u32 %v3889, 7
        %3892 = vset.pattern.permute.xlu0 %v3890
        %3893 = vperm.xlu0 %3892, %v3888
        %v3894 = vpop.permute.xlu0 %3893
        %v3895 = vlaneseq
        %v3896 = vshrl.u32 %v3895, 7
        %v3897 = vadd.s32 %v3896, 8
        %3898 = vset.pattern.permute.xlu0 %v3897
        %3899 = vperm.xlu0 %3898, %v3888
        %v3900 = vpop.permute.xlu0 %3899
        %v3901 = vperm.slane %v308, 7
        %v3902 = vlaneseq
        %v3903 = vshrl.u32 %v3902, 7
        %3905 = vset.pattern.permute.xlu0 %v3903
        %3906 = vperm.xlu0 %3905, %v3901
        %v3907 = vpop.permute.xlu0 %3906
        %v3908 = vlaneseq
        %v3909 = vshrl.u32 %v3908, 7
        %v3910 = vadd.s32 %v3909, 8
        %3911 = vset.pattern.permute.xlu0 %v3910
        %3912 = vperm.xlu0 %3911, %v3901
        %v3913 = vpop.permute.xlu0 %3912
        %v3914 = vperm.slane %v309, 0
        %v3915 = vlaneseq
        %v3916 = vshrl.u32 %v3915, 7
        %3918 = vset.pattern.permute.xlu0 %v3916
        %3919 = vperm.xlu0 %3918, %v3914
        %v3920 = vpop.permute.xlu0 %3919
        %v3921 = vlaneseq
        %v3922 = vshrl.u32 %v3921, 7
        %v3923 = vadd.s32 %v3922, 8
        %3924 = vset.pattern.permute.xlu0 %v3923
        %3925 = vperm.xlu0 %3924, %v3914
        %v3926 = vpop.permute.xlu0 %3925
        %v3927 = vperm.slane %v309, 1
        %v3928 = vlaneseq
        %v3929 = vshrl.u32 %v3928, 7
        %3931 = vset.pattern.permute.xlu0 %v3929
        %3932 = vperm.xlu0 %3931, %v3927
        %v3933 = vpop.permute.xlu0 %3932
        %v3934 = vlaneseq
        %v3935 = vshrl.u32 %v3934, 7
        %v3936 = vadd.s32 %v3935, 8
        %3937 = vset.pattern.permute.xlu0 %v3936
        %3938 = vperm.xlu0 %3937, %v3927
        %v3939 = vpop.permute.xlu0 %3938
        %v3940 = vperm.slane %v309, 2
        %v3941 = vlaneseq
        %v3942 = vshrl.u32 %v3941, 7
        %3944 = vset.pattern.permute.xlu0 %v3942
        %3945 = vperm.xlu0 %3944, %v3940
        %v3946 = vpop.permute.xlu0 %3945
        %v3947 = vlaneseq
        %v3948 = vshrl.u32 %v3947, 7
        %v3949 = vadd.s32 %v3948, 8
        %3950 = vset.pattern.permute.xlu0 %v3949
        %3951 = vperm.xlu0 %3950, %v3940
        %v3952 = vpop.permute.xlu0 %3951
        %v3953 = vperm.slane %v309, 3
        %v3954 = vlaneseq
        %v3955 = vshrl.u32 %v3954, 7
        %3957 = vset.pattern.permute.xlu0 %v3955
        %3958 = vperm.xlu0 %3957, %v3953
        %v3959 = vpop.permute.xlu0 %3958
        %v3960 = vlaneseq
        %v3961 = vshrl.u32 %v3960, 7
        %v3962 = vadd.s32 %v3961, 8
        %3963 = vset.pattern.permute.xlu0 %v3962
        %3964 = vperm.xlu0 %3963, %v3953
        %v3965 = vpop.permute.xlu0 %3964
        %v3966 = vperm.slane %v309, 4
        %v3967 = vlaneseq
        %v3968 = vshrl.u32 %v3967, 7
        %3970 = vset.pattern.permute.xlu0 %v3968
        %3971 = vperm.xlu0 %3970, %v3966
        %v3972 = vpop.permute.xlu0 %3971
        %v3973 = vlaneseq
        %v3974 = vshrl.u32 %v3973, 7
        %v3975 = vadd.s32 %v3974, 8
        %3976 = vset.pattern.permute.xlu0 %v3975
        %3977 = vperm.xlu0 %3976, %v3966
        %v3978 = vpop.permute.xlu0 %3977
        %v3979 = vperm.slane %v309, 5
        %v3980 = vlaneseq
        %v3981 = vshrl.u32 %v3980, 7
        %3983 = vset.pattern.permute.xlu0 %v3981
        %3984 = vperm.xlu0 %3983, %v3979
        %v3985 = vpop.permute.xlu0 %3984
        %v3986 = vlaneseq
        %v3987 = vshrl.u32 %v3986, 7
        %v3988 = vadd.s32 %v3987, 8
        %3989 = vset.pattern.permute.xlu0 %v3988
        %3990 = vperm.xlu0 %3989, %v3979
        %v3991 = vpop.permute.xlu0 %3990
        %v3992 = vperm.slane %v309, 6
        %v3993 = vlaneseq
        %v3994 = vshrl.u32 %v3993, 7
        %3996 = vset.pattern.permute.xlu0 %v3994
        %3997 = vperm.xlu0 %3996, %v3992
        %v3998 = vpop.permute.xlu0 %3997
        %v3999 = vlaneseq
        %v4000 = vshrl.u32 %v3999, 7
        %v4001 = vadd.s32 %v4000, 8
        %4002 = vset.pattern.permute.xlu0 %v4001
        %4003 = vperm.xlu0 %4002, %v3992
        %v4004 = vpop.permute.xlu0 %4003
        %v4005 = vperm.slane %v309, 7
        %v4006 = vlaneseq
        %v4007 = vshrl.u32 %v4006, 7
        %4009 = vset.pattern.permute.xlu0 %v4007
        %4010 = vperm.xlu0 %4009, %v4005
        %v4011 = vpop.permute.xlu0 %4010
        %v4012 = vlaneseq
        %v4013 = vshrl.u32 %v4012, 7
        %v4014 = vadd.s32 %v4013, 8
        %4015 = vset.pattern.permute.xlu0 %v4014
        %4016 = vperm.xlu0 %4015, %v4005
        %v4017 = vpop.permute.xlu0 %4016
        %v4018 = vperm.slane %v310, 0
        %v4019 = vlaneseq
        %v4020 = vshrl.u32 %v4019, 7
        %4022 = vset.pattern.permute.xlu0 %v4020
        %4023 = vperm.xlu0 %4022, %v4018
        %v4024 = vpop.permute.xlu0 %4023
        %v4025 = vlaneseq
        %v4026 = vshrl.u32 %v4025, 7
        %v4027 = vadd.s32 %v4026, 8
        %4028 = vset.pattern.permute.xlu0 %v4027
        %4029 = vperm.xlu0 %4028, %v4018
        %v4030 = vpop.permute.xlu0 %4029
        %v4031 = vperm.slane %v310, 1
        %v4032 = vlaneseq
        %v4033 = vshrl.u32 %v4032, 7
        %4035 = vset.pattern.permute.xlu0 %v4033
        %4036 = vperm.xlu0 %4035, %v4031
        %v4037 = vpop.permute.xlu0 %4036
        %v4038 = vlaneseq
        %v4039 = vshrl.u32 %v4038, 7
        %v4040 = vadd.s32 %v4039, 8
        %4041 = vset.pattern.permute.xlu0 %v4040
        %4042 = vperm.xlu0 %4041, %v4031
        %v4043 = vpop.permute.xlu0 %4042
        %v4044 = vperm.slane %v310, 2
        %v4045 = vlaneseq
        %v4046 = vshrl.u32 %v4045, 7
        %4048 = vset.pattern.permute.xlu0 %v4046
        %4049 = vperm.xlu0 %4048, %v4044
        %v4050 = vpop.permute.xlu0 %4049
        %v4051 = vlaneseq
        %v4052 = vshrl.u32 %v4051, 7
        %v4053 = vadd.s32 %v4052, 8
        %4054 = vset.pattern.permute.xlu0 %v4053
        %4055 = vperm.xlu0 %4054, %v4044
        %v4056 = vpop.permute.xlu0 %4055
        %v4057 = vperm.slane %v310, 3
        %v4058 = vlaneseq
        %v4059 = vshrl.u32 %v4058, 7
        %4061 = vset.pattern.permute.xlu0 %v4059
        %4062 = vperm.xlu0 %4061, %v4057
        %v4063 = vpop.permute.xlu0 %4062
        %v4064 = vlaneseq
        %v4065 = vshrl.u32 %v4064, 7
        %v4066 = vadd.s32 %v4065, 8
        %4067 = vset.pattern.permute.xlu0 %v4066
        %4068 = vperm.xlu0 %4067, %v4057
        %v4069 = vpop.permute.xlu0 %4068
        %v4070 = vperm.slane %v310, 4
        %v4071 = vlaneseq
        %v4072 = vshrl.u32 %v4071, 7
        %4074 = vset.pattern.permute.xlu0 %v4072
        %4075 = vperm.xlu0 %4074, %v4070
        %v4076 = vpop.permute.xlu0 %4075
        %v4077 = vlaneseq
        %v4078 = vshrl.u32 %v4077, 7
        %v4079 = vadd.s32 %v4078, 8
        %4080 = vset.pattern.permute.xlu0 %v4079
        %4081 = vperm.xlu0 %4080, %v4070
        %v4082 = vpop.permute.xlu0 %4081
        %v4083 = vperm.slane %v310, 5
        %v4084 = vlaneseq
        %v4085 = vshrl.u32 %v4084, 7
        %4087 = vset.pattern.permute.xlu0 %v4085
        %4088 = vperm.xlu0 %4087, %v4083
        %v4089 = vpop.permute.xlu0 %4088
        %v4090 = vlaneseq
        %v4091 = vshrl.u32 %v4090, 7
        %v4092 = vadd.s32 %v4091, 8
        %4093 = vset.pattern.permute.xlu0 %v4092
        %4094 = vperm.xlu0 %4093, %v4083
        %v4095 = vpop.permute.xlu0 %4094
        %v4096 = vperm.slane %v310, 6
        %v4097 = vlaneseq
        %v4098 = vshrl.u32 %v4097, 7
        %4100 = vset.pattern.permute.xlu0 %v4098
        %4101 = vperm.xlu0 %4100, %v4096
        %v4102 = vpop.permute.xlu0 %4101
        %v4103 = vlaneseq
        %v4104 = vshrl.u32 %v4103, 7
        %v4105 = vadd.s32 %v4104, 8
        %4106 = vset.pattern.permute.xlu0 %v4105
        %4107 = vperm.xlu0 %4106, %v4096
        %v4108 = vpop.permute.xlu0 %4107
        %v4109 = vperm.slane %v310, 7
        %v4110 = vlaneseq
        %v4111 = vshrl.u32 %v4110, 7
        %4113 = vset.pattern.permute.xlu0 %v4111
        %4114 = vperm.xlu0 %4113, %v4109
        %v4115 = vpop.permute.xlu0 %4114
        %v4116 = vlaneseq
        %v4117 = vshrl.u32 %v4116, 7
        %v4118 = vadd.s32 %v4117, 8
        %4119 = vset.pattern.permute.xlu0 %v4118
        %4120 = vperm.xlu0 %4119, %v4109
        %v4121 = vpop.permute.xlu0 %4120
        %v4122 = vperm.slane %v245, 5
        %v4123 = vmul.f32 %v800, %v4122
        %v4124 = vmul.f32 %v806, %v4122
        %v4125 = vmul.f32 %v813, %v4122
        %v4126 = vmul.f32 %v819, %v4122
        %v4127 = vmul.f32 %v826, %v4122
        %v4128 = vmul.f32 %v832, %v4122
        %v4129 = vmul.f32 %v839, %v4122
        %v4130 = vmul.f32 %v845, %v4122
        %v4131 = vmul.f32 %v852, %v4122
        %v4132 = vmul.f32 %v858, %v4122
        %v4133 = vmul.f32 %v865, %v4122
        %v4134 = vmul.f32 %v871, %v4122
        %v4135 = vmul.f32 %v878, %v4122
        %v4136 = vmul.f32 %v884, %v4122
        %v4137 = vmul.f32 %v891, %v4122
        %v4138 = vmul.f32 %v897, %v4122
        %v4139 = vmul.f32 %v904, %v4122
        %v4140 = vmul.f32 %v910, %v4122
        %v4141 = vmul.f32 %v917, %v4122
        %v4142 = vmul.f32 %v923, %v4122
        %v4143 = vmul.f32 %v930, %v4122
        %v4144 = vmul.f32 %v936, %v4122
        %v4145 = vmul.f32 %v943, %v4122
        %v4146 = vmul.f32 %v949, %v4122
        %v4147 = vmul.f32 %v956, %v4122
        %v4148 = vmul.f32 %v962, %v4122
        %v4149 = vmul.f32 %v969, %v4122
        %v4150 = vmul.f32 %v975, %v4122
        %v4151 = vmul.f32 %v982, %v4122
        %v4152 = vmul.f32 %v988, %v4122
        %v4153 = vmul.f32 %v995, %v4122
        %v4154 = vmul.f32 %v1001, %v4122
        %v4155 = vmul.f32 %v1008, %v4122
        %v4156 = vmul.f32 %v1014, %v4122
        %v4157 = vmul.f32 %v1021, %v4122
        %v4158 = vmul.f32 %v1027, %v4122
        %v4159 = vmul.f32 %v1034, %v4122
        %v4160 = vmul.f32 %v1040, %v4122
        %v4161 = vmul.f32 %v1047, %v4122
        %v4162 = vmul.f32 %v1053, %v4122
        %v4163 = vmul.f32 %v1060, %v4122
        %v4164 = vmul.f32 %v1066, %v4122
        %v4165 = vmul.f32 %v1073, %v4122
        %v4166 = vmul.f32 %v1079, %v4122
        %v4167 = vmul.f32 %v1086, %v4122
        %v4168 = vmul.f32 %v1092, %v4122
        %v4169 = vmul.f32 %v1099, %v4122
        %v4170 = vmul.f32 %v1105, %v4122
        %v4171 = vmul.f32 %v1112, %v4122
        %v4172 = vmul.f32 %v1118, %v4122
        %v4173 = vmul.f32 %v1125, %v4122
        %v4174 = vmul.f32 %v1131, %v4122
        %v4175 = vmul.f32 %v1138, %v4122
        %v4176 = vmul.f32 %v1144, %v4122
        %v4177 = vmul.f32 %v1151, %v4122
        %v4178 = vmul.f32 %v1157, %v4122
        %v4179 = vmul.f32 %v1164, %v4122
        %v4180 = vmul.f32 %v1170, %v4122
        %v4181 = vmul.f32 %v1177, %v4122
        %v4182 = vmul.f32 %v1183, %v4122
        %v4183 = vmul.f32 %v1190, %v4122
        %v4184 = vmul.f32 %v1196, %v4122
        %v4185 = vmul.f32 %v1203, %v4122
        %v4186 = vmul.f32 %v1209, %v4122
        %v4187 = vmul.f32 %v1216, %v4122
        %v4188 = vmul.f32 %v1222, %v4122
        %v4189 = vmul.f32 %v1229, %v4122
        %v4190 = vmul.f32 %v1235, %v4122
        %v4191 = vmul.f32 %v1242, %v4122
        %v4192 = vmul.f32 %v1248, %v4122
        %v4193 = vmul.f32 %v1255, %v4122
        %v4194 = vmul.f32 %v1261, %v4122
        %v4195 = vmul.f32 %v1268, %v4122
        %v4196 = vmul.f32 %v1274, %v4122
        %v4197 = vmul.f32 %v1281, %v4122
        %v4198 = vmul.f32 %v1287, %v4122
        %v4199 = vmul.f32 %v1294, %v4122
        %v4200 = vmul.f32 %v1300, %v4122
        %v4201 = vmul.f32 %v1307, %v4122
        %v4202 = vmul.f32 %v1313, %v4122
        %v4203 = vmul.f32 %v1320, %v4122
        %v4204 = vmul.f32 %v1326, %v4122
        %v4205 = vmul.f32 %v1333, %v4122
        %v4206 = vmul.f32 %v1339, %v4122
        %v4207 = vmul.f32 %v1346, %v4122
        %v4208 = vmul.f32 %v1352, %v4122
        %v4209 = vmul.f32 %v1359, %v4122
        %v4210 = vmul.f32 %v1365, %v4122
        %v4211 = vmul.f32 %v1372, %v4122
        %v4212 = vmul.f32 %v1378, %v4122
        %v4213 = vmul.f32 %v1385, %v4122
        %v4214 = vmul.f32 %v1391, %v4122
        %v4215 = vmul.f32 %v1398, %v4122
        %v4216 = vmul.f32 %v1404, %v4122
        %v4217 = vmul.f32 %v1411, %v4122
        %v4218 = vmul.f32 %v1417, %v4122
        %v4219 = vmul.f32 %v1424, %v4122
        %v4220 = vmul.f32 %v1430, %v4122
        %v4221 = vmul.f32 %v1437, %v4122
        %v4222 = vmul.f32 %v1443, %v4122
        %v4223 = vmul.f32 %v1450, %v4122
        %v4224 = vmul.f32 %v1456, %v4122
        %v4225 = vmul.f32 %v1463, %v4122
        %v4226 = vmul.f32 %v1469, %v4122
        %v4227 = vmul.f32 %v1476, %v4122
        %v4228 = vmul.f32 %v1482, %v4122
        %v4229 = vmul.f32 %v1489, %v4122
        %v4230 = vmul.f32 %v1495, %v4122
        %v4231 = vmul.f32 %v1502, %v4122
        %v4232 = vmul.f32 %v1508, %v4122
        %v4233 = vmul.f32 %v1515, %v4122
        %v4234 = vmul.f32 %v1521, %v4122
        %v4235 = vmul.f32 %v1528, %v4122
        %v4236 = vmul.f32 %v1534, %v4122
        %v4237 = vmul.f32 %v1541, %v4122
        %v4238 = vmul.f32 %v1547, %v4122
        %v4239 = vmul.f32 %v1554, %v4122
        %v4240 = vmul.f32 %v1560, %v4122
        %v4241 = vmul.f32 %v1567, %v4122
        %v4242 = vmul.f32 %v1573, %v4122
        %v4243 = vmul.f32 %v1580, %v4122
        %v4244 = vmul.f32 %v1586, %v4122
        %v4245 = vmul.f32 %v1593, %v4122
        %v4246 = vmul.f32 %v1599, %v4122
        %v4247 = vmul.f32 %v1606, %v4122
        %v4248 = vmul.f32 %v1612, %v4122
        %v4249 = vmul.f32 %v1619, %v4122
        %v4250 = vmul.f32 %v1625, %v4122
        %v4251 = vmul.f32 %v1632, %v4122
        %v4252 = vmul.f32 %v1638, %v4122
        %v4253 = vmul.f32 %v1645, %v4122
        %v4254 = vmul.f32 %v1651, %v4122
        %v4255 = vmul.f32 %v1658, %v4122
        %v4256 = vmul.f32 %v1664, %v4122
        %v4257 = vmul.f32 %v1671, %v4122
        %v4258 = vmul.f32 %v1677, %v4122
        %v4259 = vmul.f32 %v1684, %v4122
        %v4260 = vmul.f32 %v1690, %v4122
        %v4261 = vmul.f32 %v1697, %v4122
        %v4262 = vmul.f32 %v1703, %v4122
        %v4263 = vmul.f32 %v1710, %v4122
        %v4264 = vmul.f32 %v1716, %v4122
        %v4265 = vmul.f32 %v1723, %v4122
        %v4266 = vmul.f32 %v1729, %v4122
        %v4267 = vmul.f32 %v1736, %v4122
        %v4268 = vmul.f32 %v1742, %v4122
        %v4269 = vmul.f32 %v1749, %v4122
        %v4270 = vmul.f32 %v1755, %v4122
        %v4271 = vmul.f32 %v1762, %v4122
        %v4272 = vmul.f32 %v1768, %v4122
        %v4273 = vmul.f32 %v1775, %v4122
        %v4274 = vmul.f32 %v1781, %v4122
        %v4275 = vmul.f32 %v1788, %v4122
        %v4276 = vmul.f32 %v1794, %v4122
        %v4277 = vmul.f32 %v1801, %v4122
        %v4278 = vmul.f32 %v1807, %v4122
        %v4279 = vmul.f32 %v1814, %v4122
        %v4280 = vmul.f32 %v1820, %v4122
        %v4281 = vmul.f32 %v1827, %v4122
        %v4282 = vmul.f32 %v1833, %v4122
        %v4283 = vmul.f32 %v1840, %v4122
        %v4284 = vmul.f32 %v1846, %v4122
        %v4285 = vmul.f32 %v1853, %v4122
        %v4286 = vmul.f32 %v1859, %v4122
        %v4287 = vmul.f32 %v1866, %v4122
        %v4288 = vmul.f32 %v1872, %v4122
        %v4289 = vmul.f32 %v1879, %v4122
        %v4290 = vmul.f32 %v1885, %v4122
        %v4291 = vmul.f32 %v1892, %v4122
        %v4292 = vmul.f32 %v1898, %v4122
        %v4293 = vmul.f32 %v1905, %v4122
        %v4294 = vmul.f32 %v1911, %v4122
        %v4295 = vmul.f32 %v1918, %v4122
        %v4296 = vmul.f32 %v1924, %v4122
        %v4297 = vmul.f32 %v1931, %v4122
        %v4298 = vmul.f32 %v1937, %v4122
        %v4299 = vmul.f32 %v1944, %v4122
        %v4300 = vmul.f32 %v1950, %v4122
        %v4301 = vmul.f32 %v1957, %v4122
        %v4302 = vmul.f32 %v1963, %v4122
        %v4303 = vmul.f32 %v1970, %v4122
        %v4304 = vmul.f32 %v1976, %v4122
        %v4305 = vmul.f32 %v1983, %v4122
        %v4306 = vmul.f32 %v1989, %v4122
        %v4307 = vmul.f32 %v1996, %v4122
        %v4308 = vmul.f32 %v2002, %v4122
        %v4309 = vmul.f32 %v2009, %v4122
        %v4310 = vmul.f32 %v2015, %v4122
        %v4311 = vmul.f32 %v2022, %v4122
        %v4312 = vmul.f32 %v2028, %v4122
        %v4313 = vmul.f32 %v2035, %v4122
        %v4314 = vmul.f32 %v2041, %v4122
        %v4315 = vmul.f32 %v2048, %v4122
        %v4316 = vmul.f32 %v2054, %v4122
        %v4317 = vmul.f32 %v2061, %v4122
        %v4318 = vmul.f32 %v2067, %v4122
        %v4319 = vmul.f32 %v2074, %v4122
        %v4320 = vmul.f32 %v2080, %v4122
        %v4321 = vmul.f32 %v2087, %v4122
        %v4322 = vmul.f32 %v2093, %v4122
        %v4323 = vmul.f32 %v2100, %v4122
        %v4324 = vmul.f32 %v2106, %v4122
        %v4325 = vmul.f32 %v2113, %v4122
        %v4326 = vmul.f32 %v2119, %v4122
        %v4327 = vmul.f32 %v2126, %v4122
        %v4328 = vmul.f32 %v2132, %v4122
        %v4329 = vmul.f32 %v2139, %v4122
        %v4330 = vmul.f32 %v2145, %v4122
        %v4331 = vmul.f32 %v2152, %v4122
        %v4332 = vmul.f32 %v2158, %v4122
        %v4333 = vmul.f32 %v2165, %v4122
        %v4334 = vmul.f32 %v2171, %v4122
        %v4335 = vmul.f32 %v2178, %v4122
        %v4336 = vmul.f32 %v2184, %v4122
        %v4337 = vmul.f32 %v2191, %v4122
        %v4338 = vmul.f32 %v2197, %v4122
        %v4339 = vmul.f32 %v2204, %v4122
        %v4340 = vmul.f32 %v2210, %v4122
        %v4341 = vmul.f32 %v2217, %v4122
        %v4342 = vmul.f32 %v2223, %v4122
        %v4343 = vmul.f32 %v2230, %v4122
        %v4344 = vmul.f32 %v2236, %v4122
        %v4345 = vmul.f32 %v2243, %v4122
        %v4346 = vmul.f32 %v2249, %v4122
        %v4347 = vmul.f32 %v2256, %v4122
        %v4348 = vmul.f32 %v2262, %v4122
        %v4349 = vmul.f32 %v2269, %v4122
        %v4350 = vmul.f32 %v2275, %v4122
        %v4351 = vmul.f32 %v2282, %v4122
        %v4352 = vmul.f32 %v2288, %v4122
        %v4353 = vmul.f32 %v2295, %v4122
        %v4354 = vmul.f32 %v2301, %v4122
        %v4355 = vmul.f32 %v2308, %v4122
        %v4356 = vmul.f32 %v2314, %v4122
        %v4357 = vmul.f32 %v2321, %v4122
        %v4358 = vmul.f32 %v2327, %v4122
        %v4359 = vmul.f32 %v2334, %v4122
        %v4360 = vmul.f32 %v2340, %v4122
        %v4361 = vmul.f32 %v2347, %v4122
        %v4362 = vmul.f32 %v2353, %v4122
        %v4363 = vmul.f32 %v2360, %v4122
        %v4364 = vmul.f32 %v2366, %v4122
        %v4365 = vmul.f32 %v2373, %v4122
        %v4366 = vmul.f32 %v2379, %v4122
        %v4367 = vmul.f32 %v2386, %v4122
        %v4368 = vmul.f32 %v2392, %v4122
        %v4369 = vmul.f32 %v2399, %v4122
        %v4370 = vmul.f32 %v2405, %v4122
        %v4371 = vmul.f32 %v2412, %v4122
        %v4372 = vmul.f32 %v2418, %v4122
        %v4373 = vmul.f32 %v2425, %v4122
        %v4374 = vmul.f32 %v2431, %v4122
        %v4375 = vmul.f32 %v2438, %v4122
        %v4376 = vmul.f32 %v2444, %v4122
        %v4377 = vmul.f32 %v2451, %v4122
        %v4378 = vmul.f32 %v2457, %v4122
        %v4379 = vmul.f32 %v2464, %v4122
        %v4380 = vmul.f32 %v2470, %v4122
        %v4381 = vmul.f32 %v2477, %v4122
        %v4382 = vmul.f32 %v2483, %v4122
        %v4383 = vmul.f32 %v2490, %v4122
        %v4384 = vmul.f32 %v2496, %v4122
        %v4385 = vmul.f32 %v2503, %v4122
        %v4386 = vmul.f32 %v2509, %v4122
        %v4387 = vmul.f32 %v2516, %v4122
        %v4388 = vmul.f32 %v2522, %v4122
        %v4389 = vmul.f32 %v2529, %v4122
        %v4390 = vmul.f32 %v2535, %v4122
        %v4391 = vmul.f32 %v2542, %v4122
        %v4392 = vmul.f32 %v2548, %v4122
        %v4393 = vmul.f32 %v2555, %v4122
        %v4394 = vmul.f32 %v2561, %v4122
        %v4395 = vmul.f32 %v2568, %v4122
        %v4396 = vmul.f32 %v2574, %v4122
        %v4397 = vmul.f32 %v2581, %v4122
        %v4398 = vmul.f32 %v2587, %v4122
        %v4399 = vmul.f32 %v2594, %v4122
        %v4400 = vmul.f32 %v2600, %v4122
        %v4401 = vmul.f32 %v2607, %v4122
        %v4402 = vmul.f32 %v2613, %v4122
        %v4403 = vmul.f32 %v2620, %v4122
        %v4404 = vmul.f32 %v2626, %v4122
        %v4405 = vmul.f32 %v2633, %v4122
        %v4406 = vmul.f32 %v2639, %v4122
        %v4407 = vmul.f32 %v2646, %v4122
        %v4408 = vmul.f32 %v2652, %v4122
        %v4409 = vmul.f32 %v2659, %v4122
        %v4410 = vmul.f32 %v2665, %v4122
        %v4411 = vmul.f32 %v2672, %v4122
        %v4412 = vmul.f32 %v2678, %v4122
        %v4413 = vmul.f32 %v2685, %v4122
        %v4414 = vmul.f32 %v2691, %v4122
        %v4415 = vmul.f32 %v2698, %v4122
        %v4416 = vmul.f32 %v2704, %v4122
        %v4417 = vmul.f32 %v2711, %v4122
        %v4418 = vmul.f32 %v2717, %v4122
        %v4419 = vmul.f32 %v2724, %v4122
        %v4420 = vmul.f32 %v2730, %v4122
        %v4421 = vmul.f32 %v2737, %v4122
        %v4422 = vmul.f32 %v2743, %v4122
        %v4423 = vmul.f32 %v2750, %v4122
        %v4424 = vmul.f32 %v2756, %v4122
        %v4425 = vmul.f32 %v2763, %v4122
        %v4426 = vmul.f32 %v2769, %v4122
        %v4427 = vmul.f32 %v2776, %v4122
        %v4428 = vmul.f32 %v2782, %v4122
        %v4429 = vmul.f32 %v2789, %v4122
        %v4430 = vmul.f32 %v2795, %v4122
        %v4431 = vmul.f32 %v2802, %v4122
        %v4432 = vmul.f32 %v2808, %v4122
        %v4433 = vmul.f32 %v2815, %v4122
        %v4434 = vmul.f32 %v2821, %v4122
        %v4435 = vmul.f32 %v2828, %v4122
        %v4436 = vmul.f32 %v2834, %v4122
        %v4437 = vmul.f32 %v2841, %v4122
        %v4438 = vmul.f32 %v2847, %v4122
        %v4439 = vmul.f32 %v2854, %v4122
        %v4440 = vmul.f32 %v2860, %v4122
        %v4441 = vmul.f32 %v2867, %v4122
        %v4442 = vmul.f32 %v2873, %v4122
        %v4443 = vmul.f32 %v2880, %v4122
        %v4444 = vmul.f32 %v2886, %v4122
        %v4445 = vmul.f32 %v2893, %v4122
        %v4446 = vmul.f32 %v2899, %v4122
        %v4447 = vmul.f32 %v2906, %v4122
        %v4448 = vmul.f32 %v2912, %v4122
        %v4449 = vmul.f32 %v2919, %v4122
        %v4450 = vmul.f32 %v2925, %v4122
        %v4451 = vmul.f32 %v2932, %v4122
        %v4452 = vmul.f32 %v2938, %v4122
        %v4453 = vmul.f32 %v2945, %v4122
        %v4454 = vmul.f32 %v2951, %v4122
        %v4455 = vmul.f32 %v2958, %v4122
        %v4456 = vmul.f32 %v2964, %v4122
        %v4457 = vmul.f32 %v2971, %v4122
        %v4458 = vmul.f32 %v2977, %v4122
        %v4459 = vmul.f32 %v2984, %v4122
        %v4460 = vmul.f32 %v2990, %v4122
        %v4461 = vmul.f32 %v2997, %v4122
        %v4462 = vmul.f32 %v3003, %v4122
        %v4463 = vmul.f32 %v3010, %v4122
        %v4464 = vmul.f32 %v3016, %v4122
        %v4465 = vmul.f32 %v3023, %v4122
        %v4466 = vmul.f32 %v3029, %v4122
        %v4467 = vmul.f32 %v3036, %v4122
        %v4468 = vmul.f32 %v3042, %v4122
        %v4469 = vmul.f32 %v3049, %v4122
        %v4470 = vmul.f32 %v3055, %v4122
        %v4471 = vmul.f32 %v3062, %v4122
        %v4472 = vmul.f32 %v3068, %v4122
        %v4473 = vmul.f32 %v3075, %v4122
        %v4474 = vmul.f32 %v3081, %v4122
        %v4475 = vmul.f32 %v3088, %v4122
        %v4476 = vmul.f32 %v3094, %v4122
        %v4477 = vmul.f32 %v3101, %v4122
        %v4478 = vmul.f32 %v3107, %v4122
        %v4479 = vmul.f32 %v3114, %v4122
        %v4480 = vmul.f32 %v3120, %v4122
        %v4481 = vmul.f32 %v3127, %v4122
        %v4482 = vmul.f32 %v3133, %v4122
        %v4483 = vmul.f32 %v3140, %v4122
        %v4484 = vmul.f32 %v3146, %v4122
        %v4485 = vmul.f32 %v3153, %v4122
        %v4486 = vmul.f32 %v3159, %v4122
        %v4487 = vmul.f32 %v3166, %v4122
        %v4488 = vmul.f32 %v3172, %v4122
        %v4489 = vmul.f32 %v3179, %v4122
        %v4490 = vmul.f32 %v3185, %v4122
        %v4491 = vmul.f32 %v3192, %v4122
        %v4492 = vmul.f32 %v3198, %v4122
        %v4493 = vmul.f32 %v3205, %v4122
        %v4494 = vmul.f32 %v3211, %v4122
        %v4495 = vmul.f32 %v3218, %v4122
        %v4496 = vmul.f32 %v3224, %v4122
        %v4497 = vmul.f32 %v3231, %v4122
        %v4498 = vmul.f32 %v3237, %v4122
        %v4499 = vmul.f32 %v3244, %v4122
        %v4500 = vmul.f32 %v3250, %v4122
        %v4501 = vmul.f32 %v3257, %v4122
        %v4502 = vmul.f32 %v3263, %v4122
        %v4503 = vmul.f32 %v3270, %v4122
        %v4504 = vmul.f32 %v3276, %v4122
        %v4505 = vmul.f32 %v3283, %v4122
        %v4506 = vmul.f32 %v3289, %v4122
        %v4507 = vmul.f32 %v3296, %v4122
        %v4508 = vmul.f32 %v3302, %v4122
        %v4509 = vmul.f32 %v3309, %v4122
        %v4510 = vmul.f32 %v3315, %v4122
        %v4511 = vmul.f32 %v3322, %v4122
        %v4512 = vmul.f32 %v3328, %v4122
        %v4513 = vmul.f32 %v3335, %v4122
        %v4514 = vmul.f32 %v3341, %v4122
        %v4515 = vmul.f32 %v3348, %v4122
        %v4516 = vmul.f32 %v3354, %v4122
        %v4517 = vmul.f32 %v3361, %v4122
        %v4518 = vmul.f32 %v3367, %v4122
        %v4519 = vmul.f32 %v3374, %v4122
        %v4520 = vmul.f32 %v3380, %v4122
        %v4521 = vmul.f32 %v3387, %v4122
        %v4522 = vmul.f32 %v3393, %v4122
        %v4523 = vmul.f32 %v3400, %v4122
        %v4524 = vmul.f32 %v3406, %v4122
        %v4525 = vmul.f32 %v3413, %v4122
        %v4526 = vmul.f32 %v3419, %v4122
        %v4527 = vmul.f32 %v3426, %v4122
        %v4528 = vmul.f32 %v3432, %v4122
        %v4529 = vmul.f32 %v3439, %v4122
        %v4530 = vmul.f32 %v3445, %v4122
        %v4531 = vmul.f32 %v3452, %v4122
        %v4532 = vmul.f32 %v3458, %v4122
        %v4533 = vmul.f32 %v3465, %v4122
        %v4534 = vmul.f32 %v3471, %v4122
        %v4535 = vmul.f32 %v3478, %v4122
        %v4536 = vmul.f32 %v3484, %v4122
        %v4537 = vmul.f32 %v3491, %v4122
        %v4538 = vmul.f32 %v3497, %v4122
        %v4539 = vmul.f32 %v3504, %v4122
        %v4540 = vmul.f32 %v3510, %v4122
        %v4541 = vmul.f32 %v3517, %v4122
        %v4542 = vmul.f32 %v3523, %v4122
        %v4543 = vmul.f32 %v3530, %v4122
        %v4544 = vmul.f32 %v3536, %v4122
        %v4545 = vmul.f32 %v3543, %v4122
        %v4546 = vmul.f32 %v3549, %v4122
        %v4547 = vmul.f32 %v3556, %v4122
        %v4548 = vmul.f32 %v3562, %v4122
        %v4549 = vmul.f32 %v3569, %v4122
        %v4550 = vmul.f32 %v3575, %v4122
        %v4551 = vmul.f32 %v3582, %v4122
        %v4552 = vmul.f32 %v3588, %v4122
        %v4553 = vmul.f32 %v3595, %v4122
        %v4554 = vmul.f32 %v3601, %v4122
        %v4555 = vmul.f32 %v3608, %v4122
        %v4556 = vmul.f32 %v3614, %v4122
        %v4557 = vmul.f32 %v3621, %v4122
        %v4558 = vmul.f32 %v3627, %v4122
        %v4559 = vmul.f32 %v3634, %v4122
        %v4560 = vmul.f32 %v3640, %v4122
        %v4561 = vmul.f32 %v3647, %v4122
        %v4562 = vmul.f32 %v3653, %v4122
        %v4563 = vmul.f32 %v3660, %v4122
        %v4564 = vmul.f32 %v3666, %v4122
        %v4565 = vmul.f32 %v3673, %v4122
        %v4566 = vmul.f32 %v3679, %v4122
        %v4567 = vmul.f32 %v3686, %v4122
        %v4568 = vmul.f32 %v3692, %v4122
        %v4569 = vmul.f32 %v3699, %v4122
        %v4570 = vmul.f32 %v3705, %v4122
        %v4571 = vmul.f32 %v3712, %v4122
        %v4572 = vmul.f32 %v3718, %v4122
        %v4573 = vmul.f32 %v3725, %v4122
        %v4574 = vmul.f32 %v3731, %v4122
        %v4575 = vmul.f32 %v3738, %v4122
        %v4576 = vmul.f32 %v3744, %v4122
        %v4577 = vmul.f32 %v3751, %v4122
        %v4578 = vmul.f32 %v3757, %v4122
        %v4579 = vmul.f32 %v3764, %v4122
        %v4580 = vmul.f32 %v3770, %v4122
        %v4581 = vmul.f32 %v3777, %v4122
        %v4582 = vmul.f32 %v3783, %v4122
        %v4583 = vmul.f32 %v3790, %v4122
        %v4584 = vmul.f32 %v3796, %v4122
        %v4585 = vmul.f32 %v3803, %v4122
        %v4586 = vmul.f32 %v3809, %v4122
        %v4587 = vmul.f32 %v3816, %v4122
        %v4588 = vmul.f32 %v3822, %v4122
        %v4589 = vmul.f32 %v3829, %v4122
        %v4590 = vmul.f32 %v3835, %v4122
        %v4591 = vmul.f32 %v3842, %v4122
        %v4592 = vmul.f32 %v3848, %v4122
        %v4593 = vmul.f32 %v3855, %v4122
        %v4594 = vmul.f32 %v3861, %v4122
        %v4595 = vmul.f32 %v3868, %v4122
        %v4596 = vmul.f32 %v3874, %v4122
        %v4597 = vmul.f32 %v3881, %v4122
        %v4598 = vmul.f32 %v3887, %v4122
        %v4599 = vmul.f32 %v3894, %v4122
        %v4600 = vmul.f32 %v3900, %v4122
        %v4601 = vmul.f32 %v3907, %v4122
        %v4602 = vmul.f32 %v3913, %v4122
        %v4603 = vmul.f32 %v3920, %v4122
        %v4604 = vmul.f32 %v3926, %v4122
        %v4605 = vmul.f32 %v3933, %v4122
        %v4606 = vmul.f32 %v3939, %v4122
        %v4607 = vmul.f32 %v3946, %v4122
        %v4608 = vmul.f32 %v3952, %v4122
        %v4609 = vmul.f32 %v3959, %v4122
        %v4610 = vmul.f32 %v3965, %v4122
        %v4611 = vmul.f32 %v3972, %v4122
        %v4612 = vmul.f32 %v3978, %v4122
        %v4613 = vmul.f32 %v3985, %v4122
        %v4614 = vmul.f32 %v3991, %v4122
        %v4615 = vmul.f32 %v3998, %v4122
        %v4616 = vmul.f32 %v4004, %v4122
        %v4617 = vmul.f32 %v4011, %v4122
        %v4618 = vmul.f32 %v4017, %v4122
        %v4619 = vmul.f32 %v4024, %v4122
        %v4620 = vmul.f32 %v4030, %v4122
        %v4621 = vmul.f32 %v4037, %v4122
        %v4622 = vmul.f32 %v4043, %v4122
        %v4623 = vmul.f32 %v4050, %v4122
        %v4624 = vmul.f32 %v4056, %v4122
        %v4625 = vmul.f32 %v4063, %v4122
        %v4626 = vmul.f32 %v4069, %v4122
        %v4627 = vmul.f32 %v4076, %v4122
        %v4628 = vmul.f32 %v4082, %v4122
        %v4629 = vmul.f32 %v4089, %v4122
        %v4630 = vmul.f32 %v4095, %v4122
        %v4631 = vmul.f32 %v4102, %v4122
        %v4632 = vmul.f32 %v4108, %v4122
        %v4633 = vmul.f32 %v4115, %v4122
        %v4634 = vmul.f32 %v4121, %v4122
        %v4635 = vperm.slane %v245, 6
        %v4636 = vadd.f32 %v4123, %v4635
        %v4637 = vadd.f32 %v4124, %v4635
        %v4638 = vadd.f32 %v4125, %v4635
        %v4639 = vadd.f32 %v4126, %v4635
        %v4640 = vadd.f32 %v4127, %v4635
        %v4641 = vadd.f32 %v4128, %v4635
        %v4642 = vadd.f32 %v4129, %v4635
        %v4643 = vadd.f32 %v4130, %v4635
        %v4644 = vadd.f32 %v4131, %v4635
        %v4645 = vadd.f32 %v4132, %v4635
        %v4646 = vadd.f32 %v4133, %v4635
        %v4647 = vadd.f32 %v4134, %v4635
        %v4648 = vadd.f32 %v4135, %v4635
        %v4649 = vadd.f32 %v4136, %v4635
        %v4650 = vadd.f32 %v4137, %v4635
        %v4651 = vadd.f32 %v4138, %v4635
        %v4652 = vadd.f32 %v4139, %v4635
        %v4653 = vadd.f32 %v4140, %v4635
        %v4654 = vadd.f32 %v4141, %v4635
        %v4655 = vadd.f32 %v4142, %v4635
        %v4656 = vadd.f32 %v4143, %v4635
        %v4657 = vadd.f32 %v4144, %v4635
        %v4658 = vadd.f32 %v4145, %v4635
        %v4659 = vadd.f32 %v4146, %v4635
        %v4660 = vadd.f32 %v4147, %v4635
        %v4661 = vadd.f32 %v4148, %v4635
        %v4662 = vadd.f32 %v4149, %v4635
        %v4663 = vadd.f32 %v4150, %v4635
        %v4664 = vadd.f32 %v4151, %v4635
        %v4665 = vadd.f32 %v4152, %v4635
        %v4666 = vadd.f32 %v4153, %v4635
        %v4667 = vadd.f32 %v4154, %v4635
        %v4668 = vadd.f32 %v4155, %v4635
        %v4669 = vadd.f32 %v4156, %v4635
        %v4670 = vadd.f32 %v4157, %v4635
        %v4671 = vadd.f32 %v4158, %v4635
        %v4672 = vadd.f32 %v4159, %v4635
        %v4673 = vadd.f32 %v4160, %v4635
        %v4674 = vadd.f32 %v4161, %v4635
        %v4675 = vadd.f32 %v4162, %v4635
        %v4676 = vadd.f32 %v4163, %v4635
        %v4677 = vadd.f32 %v4164, %v4635
        %v4678 = vadd.f32 %v4165, %v4635
        %v4679 = vadd.f32 %v4166, %v4635
        %v4680 = vadd.f32 %v4167, %v4635
        %v4681 = vadd.f32 %v4168, %v4635
        %v4682 = vadd.f32 %v4169, %v4635
        %v4683 = vadd.f32 %v4170, %v4635
        %v4684 = vadd.f32 %v4171, %v4635
        %v4685 = vadd.f32 %v4172, %v4635
        %v4686 = vadd.f32 %v4173, %v4635
        %v4687 = vadd.f32 %v4174, %v4635
        %v4688 = vadd.f32 %v4175, %v4635
        %v4689 = vadd.f32 %v4176, %v4635
        %v4690 = vadd.f32 %v4177, %v4635
        %v4691 = vadd.f32 %v4178, %v4635
        %v4692 = vadd.f32 %v4179, %v4635
        %v4693 = vadd.f32 %v4180, %v4635
        %v4694 = vadd.f32 %v4181, %v4635
        %v4695 = vadd.f32 %v4182, %v4635
        %v4696 = vadd.f32 %v4183, %v4635
        %v4697 = vadd.f32 %v4184, %v4635
        %v4698 = vadd.f32 %v4185, %v4635
        %v4699 = vadd.f32 %v4186, %v4635
        %v4700 = vadd.f32 %v4187, %v4635
        %v4701 = vadd.f32 %v4188, %v4635
        %v4702 = vadd.f32 %v4189, %v4635
        %v4703 = vadd.f32 %v4190, %v4635
        %v4704 = vadd.f32 %v4191, %v4635
        %v4705 = vadd.f32 %v4192, %v4635
        %v4706 = vadd.f32 %v4193, %v4635
        %v4707 = vadd.f32 %v4194, %v4635
        %v4708 = vadd.f32 %v4195, %v4635
        %v4709 = vadd.f32 %v4196, %v4635
        %v4710 = vadd.f32 %v4197, %v4635
        %v4711 = vadd.f32 %v4198, %v4635
        %v4712 = vadd.f32 %v4199, %v4635
        %v4713 = vadd.f32 %v4200, %v4635
        %v4714 = vadd.f32 %v4201, %v4635
        %v4715 = vadd.f32 %v4202, %v4635
        %v4716 = vadd.f32 %v4203, %v4635
        %v4717 = vadd.f32 %v4204, %v4635
        %v4718 = vadd.f32 %v4205, %v4635
        %v4719 = vadd.f32 %v4206, %v4635
        %v4720 = vadd.f32 %v4207, %v4635
        %v4721 = vadd.f32 %v4208, %v4635
        %v4722 = vadd.f32 %v4209, %v4635
        %v4723 = vadd.f32 %v4210, %v4635
        %v4724 = vadd.f32 %v4211, %v4635
        %v4725 = vadd.f32 %v4212, %v4635
        %v4726 = vadd.f32 %v4213, %v4635
        %v4727 = vadd.f32 %v4214, %v4635
        %v4728 = vadd.f32 %v4215, %v4635
        %v4729 = vadd.f32 %v4216, %v4635
        %v4730 = vadd.f32 %v4217, %v4635
        %v4731 = vadd.f32 %v4218, %v4635
        %v4732 = vadd.f32 %v4219, %v4635
        %v4733 = vadd.f32 %v4220, %v4635
        %v4734 = vadd.f32 %v4221, %v4635
        %v4735 = vadd.f32 %v4222, %v4635
        %v4736 = vadd.f32 %v4223, %v4635
        %v4737 = vadd.f32 %v4224, %v4635
        %v4738 = vadd.f32 %v4225, %v4635
        %v4739 = vadd.f32 %v4226, %v4635
        %v4740 = vadd.f32 %v4227, %v4635
        %v4741 = vadd.f32 %v4228, %v4635
        %v4742 = vadd.f32 %v4229, %v4635
        %v4743 = vadd.f32 %v4230, %v4635
        %v4744 = vadd.f32 %v4231, %v4635
        %v4745 = vadd.f32 %v4232, %v4635
        %v4746 = vadd.f32 %v4233, %v4635
        %v4747 = vadd.f32 %v4234, %v4635
        %v4748 = vadd.f32 %v4235, %v4635
        %v4749 = vadd.f32 %v4236, %v4635
        %v4750 = vadd.f32 %v4237, %v4635
        %v4751 = vadd.f32 %v4238, %v4635
        %v4752 = vadd.f32 %v4239, %v4635
        %v4753 = vadd.f32 %v4240, %v4635
        %v4754 = vadd.f32 %v4241, %v4635
        %v4755 = vadd.f32 %v4242, %v4635
        %v4756 = vadd.f32 %v4243, %v4635
        %v4757 = vadd.f32 %v4244, %v4635
        %v4758 = vadd.f32 %v4245, %v4635
        %v4759 = vadd.f32 %v4246, %v4635
        %v4760 = vadd.f32 %v4247, %v4635
        %v4761 = vadd.f32 %v4248, %v4635
        %v4762 = vadd.f32 %v4249, %v4635
        %v4763 = vadd.f32 %v4250, %v4635
        %v4764 = vadd.f32 %v4251, %v4635
        %v4765 = vadd.f32 %v4252, %v4635
        %v4766 = vadd.f32 %v4253, %v4635
        %v4767 = vadd.f32 %v4254, %v4635
        %v4768 = vadd.f32 %v4255, %v4635
        %v4769 = vadd.f32 %v4256, %v4635
        %v4770 = vadd.f32 %v4257, %v4635
        %v4771 = vadd.f32 %v4258, %v4635
        %v4772 = vadd.f32 %v4259, %v4635
        %v4773 = vadd.f32 %v4260, %v4635
        %v4774 = vadd.f32 %v4261, %v4635
        %v4775 = vadd.f32 %v4262, %v4635
        %v4776 = vadd.f32 %v4263, %v4635
        %v4777 = vadd.f32 %v4264, %v4635
        %v4778 = vadd.f32 %v4265, %v4635
        %v4779 = vadd.f32 %v4266, %v4635
        %v4780 = vadd.f32 %v4267, %v4635
        %v4781 = vadd.f32 %v4268, %v4635
        %v4782 = vadd.f32 %v4269, %v4635
        %v4783 = vadd.f32 %v4270, %v4635
        %v4784 = vadd.f32 %v4271, %v4635
        %v4785 = vadd.f32 %v4272, %v4635
        %v4786 = vadd.f32 %v4273, %v4635
        %v4787 = vadd.f32 %v4274, %v4635
        %v4788 = vadd.f32 %v4275, %v4635
        %v4789 = vadd.f32 %v4276, %v4635
        %v4790 = vadd.f32 %v4277, %v4635
        %v4791 = vadd.f32 %v4278, %v4635
        %v4792 = vadd.f32 %v4279, %v4635
        %v4793 = vadd.f32 %v4280, %v4635
        %v4794 = vadd.f32 %v4281, %v4635
        %v4795 = vadd.f32 %v4282, %v4635
        %v4796 = vadd.f32 %v4283, %v4635
        %v4797 = vadd.f32 %v4284, %v4635
        %v4798 = vadd.f32 %v4285, %v4635
        %v4799 = vadd.f32 %v4286, %v4635
        %v4800 = vadd.f32 %v4287, %v4635
        %v4801 = vadd.f32 %v4288, %v4635
        %v4802 = vadd.f32 %v4289, %v4635
        %v4803 = vadd.f32 %v4290, %v4635
        %v4804 = vadd.f32 %v4291, %v4635
        %v4805 = vadd.f32 %v4292, %v4635
        %v4806 = vadd.f32 %v4293, %v4635
        %v4807 = vadd.f32 %v4294, %v4635
        %v4808 = vadd.f32 %v4295, %v4635
        %v4809 = vadd.f32 %v4296, %v4635
        %v4810 = vadd.f32 %v4297, %v4635
        %v4811 = vadd.f32 %v4298, %v4635
        %v4812 = vadd.f32 %v4299, %v4635
        %v4813 = vadd.f32 %v4300, %v4635
        %v4814 = vadd.f32 %v4301, %v4635
        %v4815 = vadd.f32 %v4302, %v4635
        %v4816 = vadd.f32 %v4303, %v4635
        %v4817 = vadd.f32 %v4304, %v4635
        %v4818 = vadd.f32 %v4305, %v4635
        %v4819 = vadd.f32 %v4306, %v4635
        %v4820 = vadd.f32 %v4307, %v4635
        %v4821 = vadd.f32 %v4308, %v4635
        %v4822 = vadd.f32 %v4309, %v4635
        %v4823 = vadd.f32 %v4310, %v4635
        %v4824 = vadd.f32 %v4311, %v4635
        %v4825 = vadd.f32 %v4312, %v4635
        %v4826 = vadd.f32 %v4313, %v4635
        %v4827 = vadd.f32 %v4314, %v4635
        %v4828 = vadd.f32 %v4315, %v4635
        %v4829 = vadd.f32 %v4316, %v4635
        %v4830 = vadd.f32 %v4317, %v4635
        %v4831 = vadd.f32 %v4318, %v4635
        %v4832 = vadd.f32 %v4319, %v4635
        %v4833 = vadd.f32 %v4320, %v4635
        %v4834 = vadd.f32 %v4321, %v4635
        %v4835 = vadd.f32 %v4322, %v4635
        %v4836 = vadd.f32 %v4323, %v4635
        %v4837 = vadd.f32 %v4324, %v4635
        %v4838 = vadd.f32 %v4325, %v4635
        %v4839 = vadd.f32 %v4326, %v4635
        %v4840 = vadd.f32 %v4327, %v4635
        %v4841 = vadd.f32 %v4328, %v4635
        %v4842 = vadd.f32 %v4329, %v4635
        %v4843 = vadd.f32 %v4330, %v4635
        %v4844 = vadd.f32 %v4331, %v4635
        %v4845 = vadd.f32 %v4332, %v4635
        %v4846 = vadd.f32 %v4333, %v4635
        %v4847 = vadd.f32 %v4334, %v4635
        %v4848 = vadd.f32 %v4335, %v4635
        %v4849 = vadd.f32 %v4336, %v4635
        %v4850 = vadd.f32 %v4337, %v4635
        %v4851 = vadd.f32 %v4338, %v4635
        %v4852 = vadd.f32 %v4339, %v4635
        %v4853 = vadd.f32 %v4340, %v4635
        %v4854 = vadd.f32 %v4341, %v4635
        %v4855 = vadd.f32 %v4342, %v4635
        %v4856 = vadd.f32 %v4343, %v4635
        %v4857 = vadd.f32 %v4344, %v4635
        %v4858 = vadd.f32 %v4345, %v4635
        %v4859 = vadd.f32 %v4346, %v4635
        %v4860 = vadd.f32 %v4347, %v4635
        %v4861 = vadd.f32 %v4348, %v4635
        %v4862 = vadd.f32 %v4349, %v4635
        %v4863 = vadd.f32 %v4350, %v4635
        %v4864 = vadd.f32 %v4351, %v4635
        %v4865 = vadd.f32 %v4352, %v4635
        %v4866 = vadd.f32 %v4353, %v4635
        %v4867 = vadd.f32 %v4354, %v4635
        %v4868 = vadd.f32 %v4355, %v4635
        %v4869 = vadd.f32 %v4356, %v4635
        %v4870 = vadd.f32 %v4357, %v4635
        %v4871 = vadd.f32 %v4358, %v4635
        %v4872 = vadd.f32 %v4359, %v4635
        %v4873 = vadd.f32 %v4360, %v4635
        %v4874 = vadd.f32 %v4361, %v4635
        %v4875 = vadd.f32 %v4362, %v4635
        %v4876 = vadd.f32 %v4363, %v4635
        %v4877 = vadd.f32 %v4364, %v4635
        %v4878 = vadd.f32 %v4365, %v4635
        %v4879 = vadd.f32 %v4366, %v4635
        %v4880 = vadd.f32 %v4367, %v4635
        %v4881 = vadd.f32 %v4368, %v4635
        %v4882 = vadd.f32 %v4369, %v4635
        %v4883 = vadd.f32 %v4370, %v4635
        %v4884 = vadd.f32 %v4371, %v4635
        %v4885 = vadd.f32 %v4372, %v4635
        %v4886 = vadd.f32 %v4373, %v4635
        %v4887 = vadd.f32 %v4374, %v4635
        %v4888 = vadd.f32 %v4375, %v4635
        %v4889 = vadd.f32 %v4376, %v4635
        %v4890 = vadd.f32 %v4377, %v4635
        %v4891 = vadd.f32 %v4378, %v4635
        %v4892 = vadd.f32 %v4379, %v4635
        %v4893 = vadd.f32 %v4380, %v4635
        %v4894 = vadd.f32 %v4381, %v4635
        %v4895 = vadd.f32 %v4382, %v4635
        %v4896 = vadd.f32 %v4383, %v4635
        %v4897 = vadd.f32 %v4384, %v4635
        %v4898 = vadd.f32 %v4385, %v4635
        %v4899 = vadd.f32 %v4386, %v4635
        %v4900 = vadd.f32 %v4387, %v4635
        %v4901 = vadd.f32 %v4388, %v4635
        %v4902 = vadd.f32 %v4389, %v4635
        %v4903 = vadd.f32 %v4390, %v4635
        %v4904 = vadd.f32 %v4391, %v4635
        %v4905 = vadd.f32 %v4392, %v4635
        %v4906 = vadd.f32 %v4393, %v4635
        %v4907 = vadd.f32 %v4394, %v4635
        %v4908 = vadd.f32 %v4395, %v4635
        %v4909 = vadd.f32 %v4396, %v4635
        %v4910 = vadd.f32 %v4397, %v4635
        %v4911 = vadd.f32 %v4398, %v4635
        %v4912 = vadd.f32 %v4399, %v4635
        %v4913 = vadd.f32 %v4400, %v4635
        %v4914 = vadd.f32 %v4401, %v4635
        %v4915 = vadd.f32 %v4402, %v4635
        %v4916 = vadd.f32 %v4403, %v4635
        %v4917 = vadd.f32 %v4404, %v4635
        %v4918 = vadd.f32 %v4405, %v4635
        %v4919 = vadd.f32 %v4406, %v4635
        %v4920 = vadd.f32 %v4407, %v4635
        %v4921 = vadd.f32 %v4408, %v4635
        %v4922 = vadd.f32 %v4409, %v4635
        %v4923 = vadd.f32 %v4410, %v4635
        %v4924 = vadd.f32 %v4411, %v4635
        %v4925 = vadd.f32 %v4412, %v4635
        %v4926 = vadd.f32 %v4413, %v4635
        %v4927 = vadd.f32 %v4414, %v4635
        %v4928 = vadd.f32 %v4415, %v4635
        %v4929 = vadd.f32 %v4416, %v4635
        %v4930 = vadd.f32 %v4417, %v4635
        %v4931 = vadd.f32 %v4418, %v4635
        %v4932 = vadd.f32 %v4419, %v4635
        %v4933 = vadd.f32 %v4420, %v4635
        %v4934 = vadd.f32 %v4421, %v4635
        %v4935 = vadd.f32 %v4422, %v4635
        %v4936 = vadd.f32 %v4423, %v4635
        %v4937 = vadd.f32 %v4424, %v4635
        %v4938 = vadd.f32 %v4425, %v4635
        %v4939 = vadd.f32 %v4426, %v4635
        %v4940 = vadd.f32 %v4427, %v4635
        %v4941 = vadd.f32 %v4428, %v4635
        %v4942 = vadd.f32 %v4429, %v4635
        %v4943 = vadd.f32 %v4430, %v4635
        %v4944 = vadd.f32 %v4431, %v4635
        %v4945 = vadd.f32 %v4432, %v4635
        %v4946 = vadd.f32 %v4433, %v4635
        %v4947 = vadd.f32 %v4434, %v4635
        %v4948 = vadd.f32 %v4435, %v4635
        %v4949 = vadd.f32 %v4436, %v4635
        %v4950 = vadd.f32 %v4437, %v4635
        %v4951 = vadd.f32 %v4438, %v4635
        %v4952 = vadd.f32 %v4439, %v4635
        %v4953 = vadd.f32 %v4440, %v4635
        %v4954 = vadd.f32 %v4441, %v4635
        %v4955 = vadd.f32 %v4442, %v4635
        %v4956 = vadd.f32 %v4443, %v4635
        %v4957 = vadd.f32 %v4444, %v4635
        %v4958 = vadd.f32 %v4445, %v4635
        %v4959 = vadd.f32 %v4446, %v4635
        %v4960 = vadd.f32 %v4447, %v4635
        %v4961 = vadd.f32 %v4448, %v4635
        %v4962 = vadd.f32 %v4449, %v4635
        %v4963 = vadd.f32 %v4450, %v4635
        %v4964 = vadd.f32 %v4451, %v4635
        %v4965 = vadd.f32 %v4452, %v4635
        %v4966 = vadd.f32 %v4453, %v4635
        %v4967 = vadd.f32 %v4454, %v4635
        %v4968 = vadd.f32 %v4455, %v4635
        %v4969 = vadd.f32 %v4456, %v4635
        %v4970 = vadd.f32 %v4457, %v4635
        %v4971 = vadd.f32 %v4458, %v4635
        %v4972 = vadd.f32 %v4459, %v4635
        %v4973 = vadd.f32 %v4460, %v4635
        %v4974 = vadd.f32 %v4461, %v4635
        %v4975 = vadd.f32 %v4462, %v4635
        %v4976 = vadd.f32 %v4463, %v4635
        %v4977 = vadd.f32 %v4464, %v4635
        %v4978 = vadd.f32 %v4465, %v4635
        %v4979 = vadd.f32 %v4466, %v4635
        %v4980 = vadd.f32 %v4467, %v4635
        %v4981 = vadd.f32 %v4468, %v4635
        %v4982 = vadd.f32 %v4469, %v4635
        %v4983 = vadd.f32 %v4470, %v4635
        %v4984 = vadd.f32 %v4471, %v4635
        %v4985 = vadd.f32 %v4472, %v4635
        %v4986 = vadd.f32 %v4473, %v4635
        %v4987 = vadd.f32 %v4474, %v4635
        %v4988 = vadd.f32 %v4475, %v4635
        %v4989 = vadd.f32 %v4476, %v4635
        %v4990 = vadd.f32 %v4477, %v4635
        %v4991 = vadd.f32 %v4478, %v4635
        %v4992 = vadd.f32 %v4479, %v4635
        %v4993 = vadd.f32 %v4480, %v4635
        %v4994 = vadd.f32 %v4481, %v4635
        %v4995 = vadd.f32 %v4482, %v4635
        %v4996 = vadd.f32 %v4483, %v4635
        %v4997 = vadd.f32 %v4484, %v4635
        %v4998 = vadd.f32 %v4485, %v4635
        %v4999 = vadd.f32 %v4486, %v4635
        %v5000 = vadd.f32 %v4487, %v4635
        %v5001 = vadd.f32 %v4488, %v4635
        %v5002 = vadd.f32 %v4489, %v4635
        %v5003 = vadd.f32 %v4490, %v4635
        %v5004 = vadd.f32 %v4491, %v4635
        %v5005 = vadd.f32 %v4492, %v4635
        %v5006 = vadd.f32 %v4493, %v4635
        %v5007 = vadd.f32 %v4494, %v4635
        %v5008 = vadd.f32 %v4495, %v4635
        %v5009 = vadd.f32 %v4496, %v4635
        %v5010 = vadd.f32 %v4497, %v4635
        %v5011 = vadd.f32 %v4498, %v4635
        %v5012 = vadd.f32 %v4499, %v4635
        %v5013 = vadd.f32 %v4500, %v4635
        %v5014 = vadd.f32 %v4501, %v4635
        %v5015 = vadd.f32 %v4502, %v4635
        %v5016 = vadd.f32 %v4503, %v4635
        %v5017 = vadd.f32 %v4504, %v4635
        %v5018 = vadd.f32 %v4505, %v4635
        %v5019 = vadd.f32 %v4506, %v4635
        %v5020 = vadd.f32 %v4507, %v4635
        %v5021 = vadd.f32 %v4508, %v4635
        %v5022 = vadd.f32 %v4509, %v4635
        %v5023 = vadd.f32 %v4510, %v4635
        %v5024 = vadd.f32 %v4511, %v4635
        %v5025 = vadd.f32 %v4512, %v4635
        %v5026 = vadd.f32 %v4513, %v4635
        %v5027 = vadd.f32 %v4514, %v4635
        %v5028 = vadd.f32 %v4515, %v4635
        %v5029 = vadd.f32 %v4516, %v4635
        %v5030 = vadd.f32 %v4517, %v4635
        %v5031 = vadd.f32 %v4518, %v4635
        %v5032 = vadd.f32 %v4519, %v4635
        %v5033 = vadd.f32 %v4520, %v4635
        %v5034 = vadd.f32 %v4521, %v4635
        %v5035 = vadd.f32 %v4522, %v4635
        %v5036 = vadd.f32 %v4523, %v4635
        %v5037 = vadd.f32 %v4524, %v4635
        %v5038 = vadd.f32 %v4525, %v4635
        %v5039 = vadd.f32 %v4526, %v4635
        %v5040 = vadd.f32 %v4527, %v4635
        %v5041 = vadd.f32 %v4528, %v4635
        %v5042 = vadd.f32 %v4529, %v4635
        %v5043 = vadd.f32 %v4530, %v4635
        %v5044 = vadd.f32 %v4531, %v4635
        %v5045 = vadd.f32 %v4532, %v4635
        %v5046 = vadd.f32 %v4533, %v4635
        %v5047 = vadd.f32 %v4534, %v4635
        %v5048 = vadd.f32 %v4535, %v4635
        %v5049 = vadd.f32 %v4536, %v4635
        %v5050 = vadd.f32 %v4537, %v4635
        %v5051 = vadd.f32 %v4538, %v4635
        %v5052 = vadd.f32 %v4539, %v4635
        %v5053 = vadd.f32 %v4540, %v4635
        %v5054 = vadd.f32 %v4541, %v4635
        %v5055 = vadd.f32 %v4542, %v4635
        %v5056 = vadd.f32 %v4543, %v4635
        %v5057 = vadd.f32 %v4544, %v4635
        %v5058 = vadd.f32 %v4545, %v4635
        %v5059 = vadd.f32 %v4546, %v4635
        %v5060 = vadd.f32 %v4547, %v4635
        %v5061 = vadd.f32 %v4548, %v4635
        %v5062 = vadd.f32 %v4549, %v4635
        %v5063 = vadd.f32 %v4550, %v4635
        %v5064 = vadd.f32 %v4551, %v4635
        %v5065 = vadd.f32 %v4552, %v4635
        %v5066 = vadd.f32 %v4553, %v4635
        %v5067 = vadd.f32 %v4554, %v4635
        %v5068 = vadd.f32 %v4555, %v4635
        %v5069 = vadd.f32 %v4556, %v4635
        %v5070 = vadd.f32 %v4557, %v4635
        %v5071 = vadd.f32 %v4558, %v4635
        %v5072 = vadd.f32 %v4559, %v4635
        %v5073 = vadd.f32 %v4560, %v4635
        %v5074 = vadd.f32 %v4561, %v4635
        %v5075 = vadd.f32 %v4562, %v4635
        %v5076 = vadd.f32 %v4563, %v4635
        %v5077 = vadd.f32 %v4564, %v4635
        %v5078 = vadd.f32 %v4565, %v4635
        %v5079 = vadd.f32 %v4566, %v4635
        %v5080 = vadd.f32 %v4567, %v4635
        %v5081 = vadd.f32 %v4568, %v4635
        %v5082 = vadd.f32 %v4569, %v4635
        %v5083 = vadd.f32 %v4570, %v4635
        %v5084 = vadd.f32 %v4571, %v4635
        %v5085 = vadd.f32 %v4572, %v4635
        %v5086 = vadd.f32 %v4573, %v4635
        %v5087 = vadd.f32 %v4574, %v4635
        %v5088 = vadd.f32 %v4575, %v4635
        %v5089 = vadd.f32 %v4576, %v4635
        %v5090 = vadd.f32 %v4577, %v4635
        %v5091 = vadd.f32 %v4578, %v4635
        %v5092 = vadd.f32 %v4579, %v4635
        %v5093 = vadd.f32 %v4580, %v4635
        %v5094 = vadd.f32 %v4581, %v4635
        %v5095 = vadd.f32 %v4582, %v4635
        %v5096 = vadd.f32 %v4583, %v4635
        %v5097 = vadd.f32 %v4584, %v4635
        %v5098 = vadd.f32 %v4585, %v4635
        %v5099 = vadd.f32 %v4586, %v4635
        %v5100 = vadd.f32 %v4587, %v4635
        %v5101 = vadd.f32 %v4588, %v4635
        %v5102 = vadd.f32 %v4589, %v4635
        %v5103 = vadd.f32 %v4590, %v4635
        %v5104 = vadd.f32 %v4591, %v4635
        %v5105 = vadd.f32 %v4592, %v4635
        %v5106 = vadd.f32 %v4593, %v4635
        %v5107 = vadd.f32 %v4594, %v4635
        %v5108 = vadd.f32 %v4595, %v4635
        %v5109 = vadd.f32 %v4596, %v4635
        %v5110 = vadd.f32 %v4597, %v4635
        %v5111 = vadd.f32 %v4598, %v4635
        %v5112 = vadd.f32 %v4599, %v4635
        %v5113 = vadd.f32 %v4600, %v4635
        %v5114 = vadd.f32 %v4601, %v4635
        %v5115 = vadd.f32 %v4602, %v4635
        %v5116 = vadd.f32 %v4603, %v4635
        %v5117 = vadd.f32 %v4604, %v4635
        %v5118 = vadd.f32 %v4605, %v4635
        %v5119 = vadd.f32 %v4606, %v4635
        %v5120 = vadd.f32 %v4607, %v4635
        %v5121 = vadd.f32 %v4608, %v4635
        %v5122 = vadd.f32 %v4609, %v4635
        %v5123 = vadd.f32 %v4610, %v4635
        %v5124 = vadd.f32 %v4611, %v4635
        %v5125 = vadd.f32 %v4612, %v4635
        %v5126 = vadd.f32 %v4613, %v4635
        %v5127 = vadd.f32 %v4614, %v4635
        %v5128 = vadd.f32 %v4615, %v4635
        %v5129 = vadd.f32 %v4616, %v4635
        %v5130 = vadd.f32 %v4617, %v4635
        %v5131 = vadd.f32 %v4618, %v4635
        %v5132 = vadd.f32 %v4619, %v4635
        %v5133 = vadd.f32 %v4620, %v4635
        %v5134 = vadd.f32 %v4621, %v4635
        %v5135 = vadd.f32 %v4622, %v4635
        %v5136 = vadd.f32 %v4623, %v4635
        %v5137 = vadd.f32 %v4624, %v4635
        %v5138 = vadd.f32 %v4625, %v4635
        %v5139 = vadd.f32 %v4626, %v4635
        %v5140 = vadd.f32 %v4627, %v4635
        %v5141 = vadd.f32 %v4628, %v4635
        %v5142 = vadd.f32 %v4629, %v4635
        %v5143 = vadd.f32 %v4630, %v4635
        %v5144 = vadd.f32 %v4631, %v4635
        %v5145 = vadd.f32 %v4632, %v4635
        %v5146 = vadd.f32 %v4633, %v4635
        %v5147 = vadd.f32 %v4634, %v4635
        %v5148 = vmax.f32 %v4636, 0.0
        %v5149 = vmax.f32 %v4637, 0.0
        %v5150 = vmax.f32 %v4638, 0.0
        %v5151 = vmax.f32 %v4639, 0.0
        %v5152 = vmax.f32 %v4640, 0.0
        %v5153 = vmax.f32 %v4641, 0.0
        %v5154 = vmax.f32 %v4642, 0.0
        %v5155 = vmax.f32 %v4643, 0.0
        %v5156 = vmax.f32 %v4644, 0.0
        %v5157 = vmax.f32 %v4645, 0.0
        %v5158 = vmax.f32 %v4646, 0.0
        %v5159 = vmax.f32 %v4647, 0.0
        %v5160 = vmax.f32 %v4648, 0.0
        %v5161 = vmax.f32 %v4649, 0.0
        %v5162 = vmax.f32 %v4650, 0.0
        %v5163 = vmax.f32 %v4651, 0.0
        %v5164 = vmax.f32 %v4652, 0.0
        %v5165 = vmax.f32 %v4653, 0.0
        %v5166 = vmax.f32 %v4654, 0.0
        %v5167 = vmax.f32 %v4655, 0.0
        %v5168 = vmax.f32 %v4656, 0.0
        %v5169 = vmax.f32 %v4657, 0.0
        %v5170 = vmax.f32 %v4658, 0.0
        %v5171 = vmax.f32 %v4659, 0.0
        %v5172 = vmax.f32 %v4660, 0.0
        %v5173 = vmax.f32 %v4661, 0.0
        %v5174 = vmax.f32 %v4662, 0.0
        %v5175 = vmax.f32 %v4663, 0.0
        %v5176 = vmax.f32 %v4664, 0.0
        %v5177 = vmax.f32 %v4665, 0.0
        %v5178 = vmax.f32 %v4666, 0.0
        %v5179 = vmax.f32 %v4667, 0.0
        %v5180 = vmax.f32 %v4668, 0.0
        %v5181 = vmax.f32 %v4669, 0.0
        %v5182 = vmax.f32 %v4670, 0.0
        %v5183 = vmax.f32 %v4671, 0.0
        %v5184 = vmax.f32 %v4672, 0.0
        %v5185 = vmax.f32 %v4673, 0.0
        %v5186 = vmax.f32 %v4674, 0.0
        %v5187 = vmax.f32 %v4675, 0.0
        %v5188 = vmax.f32 %v4676, 0.0
        %v5189 = vmax.f32 %v4677, 0.0
        %v5190 = vmax.f32 %v4678, 0.0
        %v5191 = vmax.f32 %v4679, 0.0
        %v5192 = vmax.f32 %v4680, 0.0
        %v5193 = vmax.f32 %v4681, 0.0
        %v5194 = vmax.f32 %v4682, 0.0
        %v5195 = vmax.f32 %v4683, 0.0
        %v5196 = vmax.f32 %v4684, 0.0
        %v5197 = vmax.f32 %v4685, 0.0
        %v5198 = vmax.f32 %v4686, 0.0
        %v5199 = vmax.f32 %v4687, 0.0
        %v5200 = vmax.f32 %v4688, 0.0
        %v5201 = vmax.f32 %v4689, 0.0
        %v5202 = vmax.f32 %v4690, 0.0
        %v5203 = vmax.f32 %v4691, 0.0
        %v5204 = vmax.f32 %v4692, 0.0
        %v5205 = vmax.f32 %v4693, 0.0
        %v5206 = vmax.f32 %v4694, 0.0
        %v5207 = vmax.f32 %v4695, 0.0
        %v5208 = vmax.f32 %v4696, 0.0
        %v5209 = vmax.f32 %v4697, 0.0
        %v5210 = vmax.f32 %v4698, 0.0
        %v5211 = vmax.f32 %v4699, 0.0
        %v5212 = vmax.f32 %v4700, 0.0
        %v5213 = vmax.f32 %v4701, 0.0
        %v5214 = vmax.f32 %v4702, 0.0
        %v5215 = vmax.f32 %v4703, 0.0
        %v5216 = vmax.f32 %v4704, 0.0
        %v5217 = vmax.f32 %v4705, 0.0
        %v5218 = vmax.f32 %v4706, 0.0
        %v5219 = vmax.f32 %v4707, 0.0
        %v5220 = vmax.f32 %v4708, 0.0
        %v5221 = vmax.f32 %v4709, 0.0
        %v5222 = vmax.f32 %v4710, 0.0
        %v5223 = vmax.f32 %v4711, 0.0
        %v5224 = vmax.f32 %v4712, 0.0
        %v5225 = vmax.f32 %v4713, 0.0
        %v5226 = vmax.f32 %v4714, 0.0
        %v5227 = vmax.f32 %v4715, 0.0
        %v5228 = vmax.f32 %v4716, 0.0
        %v5229 = vmax.f32 %v4717, 0.0
        %v5230 = vmax.f32 %v4718, 0.0
        %v5231 = vmax.f32 %v4719, 0.0
        %v5232 = vmax.f32 %v4720, 0.0
        %v5233 = vmax.f32 %v4721, 0.0
        %v5234 = vmax.f32 %v4722, 0.0
        %v5235 = vmax.f32 %v4723, 0.0
        %v5236 = vmax.f32 %v4724, 0.0
        %v5237 = vmax.f32 %v4725, 0.0
        %v5238 = vmax.f32 %v4726, 0.0
        %v5239 = vmax.f32 %v4727, 0.0
        %v5240 = vmax.f32 %v4728, 0.0
        %v5241 = vmax.f32 %v4729, 0.0
        %v5242 = vmax.f32 %v4730, 0.0
        %v5243 = vmax.f32 %v4731, 0.0
        %v5244 = vmax.f32 %v4732, 0.0
        %v5245 = vmax.f32 %v4733, 0.0
        %v5246 = vmax.f32 %v4734, 0.0
        %v5247 = vmax.f32 %v4735, 0.0
        %v5248 = vmax.f32 %v4736, 0.0
        %v5249 = vmax.f32 %v4737, 0.0
        %v5250 = vmax.f32 %v4738, 0.0
        %v5251 = vmax.f32 %v4739, 0.0
        %v5252 = vmax.f32 %v4740, 0.0
        %v5253 = vmax.f32 %v4741, 0.0
        %v5254 = vmax.f32 %v4742, 0.0
        %v5255 = vmax.f32 %v4743, 0.0
        %v5256 = vmax.f32 %v4744, 0.0
        %v5257 = vmax.f32 %v4745, 0.0
        %v5258 = vmax.f32 %v4746, 0.0
        %v5259 = vmax.f32 %v4747, 0.0
        %v5260 = vmax.f32 %v4748, 0.0
        %v5261 = vmax.f32 %v4749, 0.0
        %v5262 = vmax.f32 %v4750, 0.0
        %v5263 = vmax.f32 %v4751, 0.0
        %v5264 = vmax.f32 %v4752, 0.0
        %v5265 = vmax.f32 %v4753, 0.0
        %v5266 = vmax.f32 %v4754, 0.0
        %v5267 = vmax.f32 %v4755, 0.0
        %v5268 = vmax.f32 %v4756, 0.0
        %v5269 = vmax.f32 %v4757, 0.0
        %v5270 = vmax.f32 %v4758, 0.0
        %v5271 = vmax.f32 %v4759, 0.0
        %v5272 = vmax.f32 %v4760, 0.0
        %v5273 = vmax.f32 %v4761, 0.0
        %v5274 = vmax.f32 %v4762, 0.0
        %v5275 = vmax.f32 %v4763, 0.0
        %v5276 = vmax.f32 %v4764, 0.0
        %v5277 = vmax.f32 %v4765, 0.0
        %v5278 = vmax.f32 %v4766, 0.0
        %v5279 = vmax.f32 %v4767, 0.0
        %v5280 = vmax.f32 %v4768, 0.0
        %v5281 = vmax.f32 %v4769, 0.0
        %v5282 = vmax.f32 %v4770, 0.0
        %v5283 = vmax.f32 %v4771, 0.0
        %v5284 = vmax.f32 %v4772, 0.0
        %v5285 = vmax.f32 %v4773, 0.0
        %v5286 = vmax.f32 %v4774, 0.0
        %v5287 = vmax.f32 %v4775, 0.0
        %v5288 = vmax.f32 %v4776, 0.0
        %v5289 = vmax.f32 %v4777, 0.0
        %v5290 = vmax.f32 %v4778, 0.0
        %v5291 = vmax.f32 %v4779, 0.0
        %v5292 = vmax.f32 %v4780, 0.0
        %v5293 = vmax.f32 %v4781, 0.0
        %v5294 = vmax.f32 %v4782, 0.0
        %v5295 = vmax.f32 %v4783, 0.0
        %v5296 = vmax.f32 %v4784, 0.0
        %v5297 = vmax.f32 %v4785, 0.0
        %v5298 = vmax.f32 %v4786, 0.0
        %v5299 = vmax.f32 %v4787, 0.0
        %v5300 = vmax.f32 %v4788, 0.0
        %v5301 = vmax.f32 %v4789, 0.0
        %v5302 = vmax.f32 %v4790, 0.0
        %v5303 = vmax.f32 %v4791, 0.0
        %v5304 = vmax.f32 %v4792, 0.0
        %v5305 = vmax.f32 %v4793, 0.0
        %v5306 = vmax.f32 %v4794, 0.0
        %v5307 = vmax.f32 %v4795, 0.0
        %v5308 = vmax.f32 %v4796, 0.0
        %v5309 = vmax.f32 %v4797, 0.0
        %v5310 = vmax.f32 %v4798, 0.0
        %v5311 = vmax.f32 %v4799, 0.0
        %v5312 = vmax.f32 %v4800, 0.0
        %v5313 = vmax.f32 %v4801, 0.0
        %v5314 = vmax.f32 %v4802, 0.0
        %v5315 = vmax.f32 %v4803, 0.0
        %v5316 = vmax.f32 %v4804, 0.0
        %v5317 = vmax.f32 %v4805, 0.0
        %v5318 = vmax.f32 %v4806, 0.0
        %v5319 = vmax.f32 %v4807, 0.0
        %v5320 = vmax.f32 %v4808, 0.0
        %v5321 = vmax.f32 %v4809, 0.0
        %v5322 = vmax.f32 %v4810, 0.0
        %v5323 = vmax.f32 %v4811, 0.0
        %v5324 = vmax.f32 %v4812, 0.0
        %v5325 = vmax.f32 %v4813, 0.0
        %v5326 = vmax.f32 %v4814, 0.0
        %v5327 = vmax.f32 %v4815, 0.0
        %v5328 = vmax.f32 %v4816, 0.0
        %v5329 = vmax.f32 %v4817, 0.0
        %v5330 = vmax.f32 %v4818, 0.0
        %v5331 = vmax.f32 %v4819, 0.0
        %v5332 = vmax.f32 %v4820, 0.0
        %v5333 = vmax.f32 %v4821, 0.0
        %v5334 = vmax.f32 %v4822, 0.0
        %v5335 = vmax.f32 %v4823, 0.0
        %v5336 = vmax.f32 %v4824, 0.0
        %v5337 = vmax.f32 %v4825, 0.0
        %v5338 = vmax.f32 %v4826, 0.0
        %v5339 = vmax.f32 %v4827, 0.0
        %v5340 = vmax.f32 %v4828, 0.0
        %v5341 = vmax.f32 %v4829, 0.0
        %v5342 = vmax.f32 %v4830, 0.0
        %v5343 = vmax.f32 %v4831, 0.0
        %v5344 = vmax.f32 %v4832, 0.0
        %v5345 = vmax.f32 %v4833, 0.0
        %v5346 = vmax.f32 %v4834, 0.0
        %v5347 = vmax.f32 %v4835, 0.0
        %v5348 = vmax.f32 %v4836, 0.0
        %v5349 = vmax.f32 %v4837, 0.0
        %v5350 = vmax.f32 %v4838, 0.0
        %v5351 = vmax.f32 %v4839, 0.0
        %v5352 = vmax.f32 %v4840, 0.0
        %v5353 = vmax.f32 %v4841, 0.0
        %v5354 = vmax.f32 %v4842, 0.0
        %v5355 = vmax.f32 %v4843, 0.0
        %v5356 = vmax.f32 %v4844, 0.0
        %v5357 = vmax.f32 %v4845, 0.0
        %v5358 = vmax.f32 %v4846, 0.0
        %v5359 = vmax.f32 %v4847, 0.0
        %v5360 = vmax.f32 %v4848, 0.0
        %v5361 = vmax.f32 %v4849, 0.0
        %v5362 = vmax.f32 %v4850, 0.0
        %v5363 = vmax.f32 %v4851, 0.0
        %v5364 = vmax.f32 %v4852, 0.0
        %v5365 = vmax.f32 %v4853, 0.0
        %v5366 = vmax.f32 %v4854, 0.0
        %v5367 = vmax.f32 %v4855, 0.0
        %v5368 = vmax.f32 %v4856, 0.0
        %v5369 = vmax.f32 %v4857, 0.0
        %v5370 = vmax.f32 %v4858, 0.0
        %v5371 = vmax.f32 %v4859, 0.0
        %v5372 = vmax.f32 %v4860, 0.0
        %v5373 = vmax.f32 %v4861, 0.0
        %v5374 = vmax.f32 %v4862, 0.0
        %v5375 = vmax.f32 %v4863, 0.0
        %v5376 = vmax.f32 %v4864, 0.0
        %v5377 = vmax.f32 %v4865, 0.0
        %v5378 = vmax.f32 %v4866, 0.0
        %v5379 = vmax.f32 %v4867, 0.0
        %v5380 = vmax.f32 %v4868, 0.0
        %v5381 = vmax.f32 %v4869, 0.0
        %v5382 = vmax.f32 %v4870, 0.0
        %v5383 = vmax.f32 %v4871, 0.0
        %v5384 = vmax.f32 %v4872, 0.0
        %v5385 = vmax.f32 %v4873, 0.0
        %v5386 = vmax.f32 %v4874, 0.0
        %v5387 = vmax.f32 %v4875, 0.0
        %v5388 = vmax.f32 %v4876, 0.0
        %v5389 = vmax.f32 %v4877, 0.0
        %v5390 = vmax.f32 %v4878, 0.0
        %v5391 = vmax.f32 %v4879, 0.0
        %v5392 = vmax.f32 %v4880, 0.0
        %v5393 = vmax.f32 %v4881, 0.0
        %v5394 = vmax.f32 %v4882, 0.0
        %v5395 = vmax.f32 %v4883, 0.0
        %v5396 = vmax.f32 %v4884, 0.0
        %v5397 = vmax.f32 %v4885, 0.0
        %v5398 = vmax.f32 %v4886, 0.0
        %v5399 = vmax.f32 %v4887, 0.0
        %v5400 = vmax.f32 %v4888, 0.0
        %v5401 = vmax.f32 %v4889, 0.0
        %v5402 = vmax.f32 %v4890, 0.0
        %v5403 = vmax.f32 %v4891, 0.0
        %v5404 = vmax.f32 %v4892, 0.0
        %v5405 = vmax.f32 %v4893, 0.0
        %v5406 = vmax.f32 %v4894, 0.0
        %v5407 = vmax.f32 %v4895, 0.0
        %v5408 = vmax.f32 %v4896, 0.0
        %v5409 = vmax.f32 %v4897, 0.0
        %v5410 = vmax.f32 %v4898, 0.0
        %v5411 = vmax.f32 %v4899, 0.0
        %v5412 = vmax.f32 %v4900, 0.0
        %v5413 = vmax.f32 %v4901, 0.0
        %v5414 = vmax.f32 %v4902, 0.0
        %v5415 = vmax.f32 %v4903, 0.0
        %v5416 = vmax.f32 %v4904, 0.0
        %v5417 = vmax.f32 %v4905, 0.0
        %v5418 = vmax.f32 %v4906, 0.0
        %v5419 = vmax.f32 %v4907, 0.0
        %v5420 = vmax.f32 %v4908, 0.0
        %v5421 = vmax.f32 %v4909, 0.0
        %v5422 = vmax.f32 %v4910, 0.0
        %v5423 = vmax.f32 %v4911, 0.0
        %v5424 = vmax.f32 %v4912, 0.0
        %v5425 = vmax.f32 %v4913, 0.0
        %v5426 = vmax.f32 %v4914, 0.0
        %v5427 = vmax.f32 %v4915, 0.0
        %v5428 = vmax.f32 %v4916, 0.0
        %v5429 = vmax.f32 %v4917, 0.0
        %v5430 = vmax.f32 %v4918, 0.0
        %v5431 = vmax.f32 %v4919, 0.0
        %v5432 = vmax.f32 %v4920, 0.0
        %v5433 = vmax.f32 %v4921, 0.0
        %v5434 = vmax.f32 %v4922, 0.0
        %v5435 = vmax.f32 %v4923, 0.0
        %v5436 = vmax.f32 %v4924, 0.0
        %v5437 = vmax.f32 %v4925, 0.0
        %v5438 = vmax.f32 %v4926, 0.0
        %v5439 = vmax.f32 %v4927, 0.0
        %v5440 = vmax.f32 %v4928, 0.0
        %v5441 = vmax.f32 %v4929, 0.0
        %v5442 = vmax.f32 %v4930, 0.0
        %v5443 = vmax.f32 %v4931, 0.0
        %v5444 = vmax.f32 %v4932, 0.0
        %v5445 = vmax.f32 %v4933, 0.0
        %v5446 = vmax.f32 %v4934, 0.0
        %v5447 = vmax.f32 %v4935, 0.0
        %v5448 = vmax.f32 %v4936, 0.0
        %v5449 = vmax.f32 %v4937, 0.0
        %v5450 = vmax.f32 %v4938, 0.0
        %v5451 = vmax.f32 %v4939, 0.0
        %v5452 = vmax.f32 %v4940, 0.0
        %v5453 = vmax.f32 %v4941, 0.0
        %v5454 = vmax.f32 %v4942, 0.0
        %v5455 = vmax.f32 %v4943, 0.0
        %v5456 = vmax.f32 %v4944, 0.0
        %v5457 = vmax.f32 %v4945, 0.0
        %v5458 = vmax.f32 %v4946, 0.0
        %v5459 = vmax.f32 %v4947, 0.0
        %v5460 = vmax.f32 %v4948, 0.0
        %v5461 = vmax.f32 %v4949, 0.0
        %v5462 = vmax.f32 %v4950, 0.0
        %v5463 = vmax.f32 %v4951, 0.0
        %v5464 = vmax.f32 %v4952, 0.0
        %v5465 = vmax.f32 %v4953, 0.0
        %v5466 = vmax.f32 %v4954, 0.0
        %v5467 = vmax.f32 %v4955, 0.0
        %v5468 = vmax.f32 %v4956, 0.0
        %v5469 = vmax.f32 %v4957, 0.0
        %v5470 = vmax.f32 %v4958, 0.0
        %v5471 = vmax.f32 %v4959, 0.0
        %v5472 = vmax.f32 %v4960, 0.0
        %v5473 = vmax.f32 %v4961, 0.0
        %v5474 = vmax.f32 %v4962, 0.0
        %v5475 = vmax.f32 %v4963, 0.0
        %v5476 = vmax.f32 %v4964, 0.0
        %v5477 = vmax.f32 %v4965, 0.0
        %v5478 = vmax.f32 %v4966, 0.0
        %v5479 = vmax.f32 %v4967, 0.0
        %v5480 = vmax.f32 %v4968, 0.0
        %v5481 = vmax.f32 %v4969, 0.0
        %v5482 = vmax.f32 %v4970, 0.0
        %v5483 = vmax.f32 %v4971, 0.0
        %v5484 = vmax.f32 %v4972, 0.0
        %v5485 = vmax.f32 %v4973, 0.0
        %v5486 = vmax.f32 %v4974, 0.0
        %v5487 = vmax.f32 %v4975, 0.0
        %v5488 = vmax.f32 %v4976, 0.0
        %v5489 = vmax.f32 %v4977, 0.0
        %v5490 = vmax.f32 %v4978, 0.0
        %v5491 = vmax.f32 %v4979, 0.0
        %v5492 = vmax.f32 %v4980, 0.0
        %v5493 = vmax.f32 %v4981, 0.0
        %v5494 = vmax.f32 %v4982, 0.0
        %v5495 = vmax.f32 %v4983, 0.0
        %v5496 = vmax.f32 %v4984, 0.0
        %v5497 = vmax.f32 %v4985, 0.0
        %v5498 = vmax.f32 %v4986, 0.0
        %v5499 = vmax.f32 %v4987, 0.0
        %v5500 = vmax.f32 %v4988, 0.0
        %v5501 = vmax.f32 %v4989, 0.0
        %v5502 = vmax.f32 %v4990, 0.0
        %v5503 = vmax.f32 %v4991, 0.0
        %v5504 = vmax.f32 %v4992, 0.0
        %v5505 = vmax.f32 %v4993, 0.0
        %v5506 = vmax.f32 %v4994, 0.0
        %v5507 = vmax.f32 %v4995, 0.0
        %v5508 = vmax.f32 %v4996, 0.0
        %v5509 = vmax.f32 %v4997, 0.0
        %v5510 = vmax.f32 %v4998, 0.0
        %v5511 = vmax.f32 %v4999, 0.0
        %v5512 = vmax.f32 %v5000, 0.0
        %v5513 = vmax.f32 %v5001, 0.0
        %v5514 = vmax.f32 %v5002, 0.0
        %v5515 = vmax.f32 %v5003, 0.0
        %v5516 = vmax.f32 %v5004, 0.0
        %v5517 = vmax.f32 %v5005, 0.0
        %v5518 = vmax.f32 %v5006, 0.0
        %v5519 = vmax.f32 %v5007, 0.0
        %v5520 = vmax.f32 %v5008, 0.0
        %v5521 = vmax.f32 %v5009, 0.0
        %v5522 = vmax.f32 %v5010, 0.0
        %v5523 = vmax.f32 %v5011, 0.0
        %v5524 = vmax.f32 %v5012, 0.0
        %v5525 = vmax.f32 %v5013, 0.0
        %v5526 = vmax.f32 %v5014, 0.0
        %v5527 = vmax.f32 %v5015, 0.0
        %v5528 = vmax.f32 %v5016, 0.0
        %v5529 = vmax.f32 %v5017, 0.0
        %v5530 = vmax.f32 %v5018, 0.0
        %v5531 = vmax.f32 %v5019, 0.0
        %v5532 = vmax.f32 %v5020, 0.0
        %v5533 = vmax.f32 %v5021, 0.0
        %v5534 = vmax.f32 %v5022, 0.0
        %v5535 = vmax.f32 %v5023, 0.0
        %v5536 = vmax.f32 %v5024, 0.0
        %v5537 = vmax.f32 %v5025, 0.0
        %v5538 = vmax.f32 %v5026, 0.0
        %v5539 = vmax.f32 %v5027, 0.0
        %v5540 = vmax.f32 %v5028, 0.0
        %v5541 = vmax.f32 %v5029, 0.0
        %v5542 = vmax.f32 %v5030, 0.0
        %v5543 = vmax.f32 %v5031, 0.0
        %v5544 = vmax.f32 %v5032, 0.0
        %v5545 = vmax.f32 %v5033, 0.0
        %v5546 = vmax.f32 %v5034, 0.0
        %v5547 = vmax.f32 %v5035, 0.0
        %v5548 = vmax.f32 %v5036, 0.0
        %v5549 = vmax.f32 %v5037, 0.0
        %v5550 = vmax.f32 %v5038, 0.0
        %v5551 = vmax.f32 %v5039, 0.0
        %v5552 = vmax.f32 %v5040, 0.0
        %v5553 = vmax.f32 %v5041, 0.0
        %v5554 = vmax.f32 %v5042, 0.0
        %v5555 = vmax.f32 %v5043, 0.0
        %v5556 = vmax.f32 %v5044, 0.0
        %v5557 = vmax.f32 %v5045, 0.0
        %v5558 = vmax.f32 %v5046, 0.0
        %v5559 = vmax.f32 %v5047, 0.0
        %v5560 = vmax.f32 %v5048, 0.0
        %v5561 = vmax.f32 %v5049, 0.0
        %v5562 = vmax.f32 %v5050, 0.0
        %v5563 = vmax.f32 %v5051, 0.0
        %v5564 = vmax.f32 %v5052, 0.0
        %v5565 = vmax.f32 %v5053, 0.0
        %v5566 = vmax.f32 %v5054, 0.0
        %v5567 = vmax.f32 %v5055, 0.0
        %v5568 = vmax.f32 %v5056, 0.0
        %v5569 = vmax.f32 %v5057, 0.0
        %v5570 = vmax.f32 %v5058, 0.0
        %v5571 = vmax.f32 %v5059, 0.0
        %v5572 = vmax.f32 %v5060, 0.0
        %v5573 = vmax.f32 %v5061, 0.0
        %v5574 = vmax.f32 %v5062, 0.0
        %v5575 = vmax.f32 %v5063, 0.0
        %v5576 = vmax.f32 %v5064, 0.0
        %v5577 = vmax.f32 %v5065, 0.0
        %v5578 = vmax.f32 %v5066, 0.0
        %v5579 = vmax.f32 %v5067, 0.0
        %v5580 = vmax.f32 %v5068, 0.0
        %v5581 = vmax.f32 %v5069, 0.0
        %v5582 = vmax.f32 %v5070, 0.0
        %v5583 = vmax.f32 %v5071, 0.0
        %v5584 = vmax.f32 %v5072, 0.0
        %v5585 = vmax.f32 %v5073, 0.0
        %v5586 = vmax.f32 %v5074, 0.0
        %v5587 = vmax.f32 %v5075, 0.0
        %v5588 = vmax.f32 %v5076, 0.0
        %v5589 = vmax.f32 %v5077, 0.0
        %v5590 = vmax.f32 %v5078, 0.0
        %v5591 = vmax.f32 %v5079, 0.0
        %v5592 = vmax.f32 %v5080, 0.0
        %v5593 = vmax.f32 %v5081, 0.0
        %v5594 = vmax.f32 %v5082, 0.0
        %v5595 = vmax.f32 %v5083, 0.0
        %v5596 = vmax.f32 %v5084, 0.0
        %v5597 = vmax.f32 %v5085, 0.0
        %v5598 = vmax.f32 %v5086, 0.0
        %v5599 = vmax.f32 %v5087, 0.0
        %v5600 = vmax.f32 %v5088, 0.0
        %v5601 = vmax.f32 %v5089, 0.0
        %v5602 = vmax.f32 %v5090, 0.0
        %v5603 = vmax.f32 %v5091, 0.0
        %v5604 = vmax.f32 %v5092, 0.0
        %v5605 = vmax.f32 %v5093, 0.0
        %v5606 = vmax.f32 %v5094, 0.0
        %v5607 = vmax.f32 %v5095, 0.0
        %v5608 = vmax.f32 %v5096, 0.0
        %v5609 = vmax.f32 %v5097, 0.0
        %v5610 = vmax.f32 %v5098, 0.0
        %v5611 = vmax.f32 %v5099, 0.0
        %v5612 = vmax.f32 %v5100, 0.0
        %v5613 = vmax.f32 %v5101, 0.0
        %v5614 = vmax.f32 %v5102, 0.0
        %v5615 = vmax.f32 %v5103, 0.0
        %v5616 = vmax.f32 %v5104, 0.0
        %v5617 = vmax.f32 %v5105, 0.0
        %v5618 = vmax.f32 %v5106, 0.0
        %v5619 = vmax.f32 %v5107, 0.0
        %v5620 = vmax.f32 %v5108, 0.0
        %v5621 = vmax.f32 %v5109, 0.0
        %v5622 = vmax.f32 %v5110, 0.0
        %v5623 = vmax.f32 %v5111, 0.0
        %v5624 = vmax.f32 %v5112, 0.0
        %v5625 = vmax.f32 %v5113, 0.0
        %v5626 = vmax.f32 %v5114, 0.0
        %v5627 = vmax.f32 %v5115, 0.0
        %v5628 = vmax.f32 %v5116, 0.0
        %v5629 = vmax.f32 %v5117, 0.0
        %v5630 = vmax.f32 %v5118, 0.0
        %v5631 = vmax.f32 %v5119, 0.0
        %v5632 = vmax.f32 %v5120, 0.0
        %v5633 = vmax.f32 %v5121, 0.0
        %v5634 = vmax.f32 %v5122, 0.0
        %v5635 = vmax.f32 %v5123, 0.0
        %v5636 = vmax.f32 %v5124, 0.0
        %v5637 = vmax.f32 %v5125, 0.0
        %v5638 = vmax.f32 %v5126, 0.0
        %v5639 = vmax.f32 %v5127, 0.0
        %v5640 = vmax.f32 %v5128, 0.0
        %v5641 = vmax.f32 %v5129, 0.0
        %v5642 = vmax.f32 %v5130, 0.0
        %v5643 = vmax.f32 %v5131, 0.0
        %v5644 = vmax.f32 %v5132, 0.0
        %v5645 = vmax.f32 %v5133, 0.0
        %v5646 = vmax.f32 %v5134, 0.0
        %v5647 = vmax.f32 %v5135, 0.0
        %v5648 = vmax.f32 %v5136, 0.0
        %v5649 = vmax.f32 %v5137, 0.0
        %v5650 = vmax.f32 %v5138, 0.0
        %v5651 = vmax.f32 %v5139, 0.0
        %v5652 = vmax.f32 %v5140, 0.0
        %v5653 = vmax.f32 %v5141, 0.0
        %v5654 = vmax.f32 %v5142, 0.0
        %v5655 = vmax.f32 %v5143, 0.0
        %v5656 = vmax.f32 %v5144, 0.0
        %v5657 = vmax.f32 %v5145, 0.0
        %v5658 = vmax.f32 %v5146, 0.0
        %v5659 = vmax.f32 %v5147, 0.0
        %vm5660 = vcmask 261120
        %v5661 = vsel %vm5660, %v5148, 0.0
        %v5662 = vsel %vm5660, %v5150, 0.0
        %v5663 = vadd.f32 %v5661, %v5662
        %v5664 = vsel %vm5660, %v5152, 0.0
        %v5665 = vadd.f32 %v5663, %v5664
        %v5666 = vsel %vm5660, %v5154, 0.0
        %v5667 = vadd.f32 %v5665, %v5666
        %v5668 = vsel %vm5660, %v5156, 0.0
        %v5669 = vadd.f32 %v5667, %v5668
        %v5670 = vsel %vm5660, %v5158, 0.0
        %v5671 = vadd.f32 %v5669, %v5670
        %v5672 = vsel %vm5660, %v5160, 0.0
        %v5673 = vadd.f32 %v5671, %v5672
        %v5674 = vsel %vm5660, %v5162, 0.0
        %v5675 = vadd.f32 %v5673, %v5674
        %v5676 = vsel %vm5660, %v5164, 0.0
        %v5677 = vadd.f32 %v5675, %v5676
        %v5678 = vsel %vm5660, %v5166, 0.0
        %v5679 = vadd.f32 %v5677, %v5678
        %v5680 = vsel %vm5660, %v5168, 0.0
        %v5681 = vadd.f32 %v5679, %v5680
        %v5682 = vsel %vm5660, %v5170, 0.0
        %v5683 = vadd.f32 %v5681, %v5682
        %v5684 = vsel %vm5660, %v5172, 0.0
        %v5685 = vadd.f32 %v5683, %v5684
        %v5686 = vsel %vm5660, %v5174, 0.0
        %v5687 = vadd.f32 %v5685, %v5686
        %v5688 = vsel %vm5660, %v5176, 0.0
        %v5689 = vadd.f32 %v5687, %v5688
        %v5690 = vsel %vm5660, %v5178, 0.0
        %v5691 = vadd.f32 %v5689, %v5690
        %v5692 = vsel %vm5660, %v5149, 0.0
        %v5693 = vsel %vm5660, %v5151, 0.0
        %v5694 = vadd.f32 %v5692, %v5693
        %v5695 = vsel %vm5660, %v5153, 0.0
        %v5696 = vadd.f32 %v5694, %v5695
        %v5697 = vsel %vm5660, %v5155, 0.0
        %v5698 = vadd.f32 %v5696, %v5697
        %v5699 = vsel %vm5660, %v5157, 0.0
        %v5700 = vadd.f32 %v5698, %v5699
        %v5701 = vsel %vm5660, %v5159, 0.0
        %v5702 = vadd.f32 %v5700, %v5701
        %v5703 = vsel %vm5660, %v5161, 0.0
        %v5704 = vadd.f32 %v5702, %v5703
        %v5705 = vsel %vm5660, %v5163, 0.0
        %v5706 = vadd.f32 %v5704, %v5705
        %v5707 = vsel %vm5660, %v5165, 0.0
        %v5708 = vadd.f32 %v5706, %v5707
        %v5709 = vsel %vm5660, %v5167, 0.0
        %v5710 = vadd.f32 %v5708, %v5709
        %v5711 = vsel %vm5660, %v5169, 0.0
        %v5712 = vadd.f32 %v5710, %v5711
        %v5713 = vsel %vm5660, %v5171, 0.0
        %v5714 = vadd.f32 %v5712, %v5713
        %v5715 = vsel %vm5660, %v5173, 0.0
        %v5716 = vadd.f32 %v5714, %v5715
        %v5717 = vsel %vm5660, %v5175, 0.0
        %v5718 = vadd.f32 %v5716, %v5717
        %v5719 = vsel %vm5660, %v5177, 0.0
        %v5720 = vadd.f32 %v5718, %v5719
        %v5721 = vsel %vm5660, %v5179, 0.0
        %v5722 = vadd.f32 %v5720, %v5721
        %v5723 = vsel %vm5660, %v5180, 0.0
        %v5724 = vsel %vm5660, %v5182, 0.0
        %v5725 = vadd.f32 %v5723, %v5724
        %v5726 = vsel %vm5660, %v5184, 0.0
        %v5727 = vadd.f32 %v5725, %v5726
        %v5728 = vsel %vm5660, %v5186, 0.0
        %v5729 = vadd.f32 %v5727, %v5728
        %v5730 = vsel %vm5660, %v5188, 0.0
        %v5731 = vadd.f32 %v5729, %v5730
        %v5732 = vsel %vm5660, %v5190, 0.0
        %v5733 = vadd.f32 %v5731, %v5732
        %v5734 = vsel %vm5660, %v5192, 0.0
        %v5735 = vadd.f32 %v5733, %v5734
        %v5736 = vsel %vm5660, %v5194, 0.0
        %v5737 = vadd.f32 %v5735, %v5736
        %v5738 = vsel %vm5660, %v5196, 0.0
        %v5739 = vadd.f32 %v5737, %v5738
        %v5740 = vsel %vm5660, %v5198, 0.0
        %v5741 = vadd.f32 %v5739, %v5740
        %v5742 = vsel %vm5660, %v5200, 0.0
        %v5743 = vadd.f32 %v5741, %v5742
        %v5744 = vsel %vm5660, %v5202, 0.0
        %v5745 = vadd.f32 %v5743, %v5744
        %v5746 = vsel %vm5660, %v5204, 0.0
        %v5747 = vadd.f32 %v5745, %v5746
        %v5748 = vsel %vm5660, %v5206, 0.0
        %v5749 = vadd.f32 %v5747, %v5748
        %v5750 = vsel %vm5660, %v5208, 0.0
        %v5751 = vadd.f32 %v5749, %v5750
        %v5752 = vsel %vm5660, %v5210, 0.0
        %v5753 = vadd.f32 %v5751, %v5752
        %v5754 = vsel %vm5660, %v5181, 0.0
        %v5755 = vsel %vm5660, %v5183, 0.0
        %v5756 = vadd.f32 %v5754, %v5755
        %v5757 = vsel %vm5660, %v5185, 0.0
        %v5758 = vadd.f32 %v5756, %v5757
        %v5759 = vsel %vm5660, %v5187, 0.0
        %v5760 = vadd.f32 %v5758, %v5759
        %v5761 = vsel %vm5660, %v5189, 0.0
        %v5762 = vadd.f32 %v5760, %v5761
        %v5763 = vsel %vm5660, %v5191, 0.0
        %v5764 = vadd.f32 %v5762, %v5763
        %v5765 = vsel %vm5660, %v5193, 0.0
        %v5766 = vadd.f32 %v5764, %v5765
        %v5767 = vsel %vm5660, %v5195, 0.0
        %v5768 = vadd.f32 %v5766, %v5767
        %v5769 = vsel %vm5660, %v5197, 0.0
        %v5770 = vadd.f32 %v5768, %v5769
        %v5771 = vsel %vm5660, %v5199, 0.0
        %v5772 = vadd.f32 %v5770, %v5771
        %v5773 = vsel %vm5660, %v5201, 0.0
        %v5774 = vadd.f32 %v5772, %v5773
        %v5775 = vsel %vm5660, %v5203, 0.0
        %v5776 = vadd.f32 %v5774, %v5775
        %v5777 = vsel %vm5660, %v5205, 0.0
        %v5778 = vadd.f32 %v5776, %v5777
        %v5779 = vsel %vm5660, %v5207, 0.0
        %v5780 = vadd.f32 %v5778, %v5779
        %v5781 = vsel %vm5660, %v5209, 0.0
        %v5782 = vadd.f32 %v5780, %v5781
        %v5783 = vsel %vm5660, %v5211, 0.0
        %v5784 = vadd.f32 %v5782, %v5783
        %v5785 = vsel %vm5660, %v5212, 0.0
        %v5786 = vsel %vm5660, %v5214, 0.0
        %v5787 = vadd.f32 %v5785, %v5786
        %v5788 = vsel %vm5660, %v5216, 0.0
        %v5789 = vadd.f32 %v5787, %v5788
        %v5790 = vsel %vm5660, %v5218, 0.0
        %v5791 = vadd.f32 %v5789, %v5790
        %v5792 = vsel %vm5660, %v5220, 0.0
        %v5793 = vadd.f32 %v5791, %v5792
        %v5794 = vsel %vm5660, %v5222, 0.0
        %v5795 = vadd.f32 %v5793, %v5794
        %v5796 = vsel %vm5660, %v5224, 0.0
        %v5797 = vadd.f32 %v5795, %v5796
        %v5798 = vsel %vm5660, %v5226, 0.0
        %v5799 = vadd.f32 %v5797, %v5798
        %v5800 = vsel %vm5660, %v5228, 0.0
        %v5801 = vadd.f32 %v5799, %v5800
        %v5802 = vsel %vm5660, %v5230, 0.0
        %v5803 = vadd.f32 %v5801, %v5802
        %v5804 = vsel %vm5660, %v5232, 0.0
        %v5805 = vadd.f32 %v5803, %v5804
        %v5806 = vsel %vm5660, %v5234, 0.0
        %v5807 = vadd.f32 %v5805, %v5806
        %v5808 = vsel %vm5660, %v5236, 0.0
        %v5809 = vadd.f32 %v5807, %v5808
        %v5810 = vsel %vm5660, %v5238, 0.0
        %v5811 = vadd.f32 %v5809, %v5810
        %v5812 = vsel %vm5660, %v5240, 0.0
        %v5813 = vadd.f32 %v5811, %v5812
        %v5814 = vsel %vm5660, %v5242, 0.0
        %v5815 = vadd.f32 %v5813, %v5814
        %v5816 = vsel %vm5660, %v5213, 0.0
        %v5817 = vsel %vm5660, %v5215, 0.0
        %v5818 = vadd.f32 %v5816, %v5817
        %v5819 = vsel %vm5660, %v5217, 0.0
        %v5820 = vadd.f32 %v5818, %v5819
        %v5821 = vsel %vm5660, %v5219, 0.0
        %v5822 = vadd.f32 %v5820, %v5821
        %v5823 = vsel %vm5660, %v5221, 0.0
        %v5824 = vadd.f32 %v5822, %v5823
        %v5825 = vsel %vm5660, %v5223, 0.0
        %v5826 = vadd.f32 %v5824, %v5825
        %v5827 = vsel %vm5660, %v5225, 0.0
        %v5828 = vadd.f32 %v5826, %v5827
        %v5829 = vsel %vm5660, %v5227, 0.0
        %v5830 = vadd.f32 %v5828, %v5829
        %v5831 = vsel %vm5660, %v5229, 0.0
        %v5832 = vadd.f32 %v5830, %v5831
        %v5833 = vsel %vm5660, %v5231, 0.0
        %v5834 = vadd.f32 %v5832, %v5833
        %v5835 = vsel %vm5660, %v5233, 0.0
        %v5836 = vadd.f32 %v5834, %v5835
        %v5837 = vsel %vm5660, %v5235, 0.0
        %v5838 = vadd.f32 %v5836, %v5837
        %v5839 = vsel %vm5660, %v5237, 0.0
        %v5840 = vadd.f32 %v5838, %v5839
        %v5841 = vsel %vm5660, %v5239, 0.0
        %v5842 = vadd.f32 %v5840, %v5841
        %v5843 = vsel %vm5660, %v5241, 0.0
        %v5844 = vadd.f32 %v5842, %v5843
        %v5845 = vsel %vm5660, %v5243, 0.0
        %v5846 = vadd.f32 %v5844, %v5845
        %v5847 = vsel %vm5660, %v5244, 0.0
        %v5848 = vsel %vm5660, %v5246, 0.0
        %v5849 = vadd.f32 %v5847, %v5848
        %v5850 = vsel %vm5660, %v5248, 0.0
        %v5851 = vadd.f32 %v5849, %v5850
        %v5852 = vsel %vm5660, %v5250, 0.0
        %v5853 = vadd.f32 %v5851, %v5852
        %v5854 = vsel %vm5660, %v5252, 0.0
        %v5855 = vadd.f32 %v5853, %v5854
        %v5856 = vsel %vm5660, %v5254, 0.0
        %v5857 = vadd.f32 %v5855, %v5856
        %v5858 = vsel %vm5660, %v5256, 0.0
        %v5859 = vadd.f32 %v5857, %v5858
        %v5860 = vsel %vm5660, %v5258, 0.0
        %v5861 = vadd.f32 %v5859, %v5860
        %v5862 = vsel %vm5660, %v5260, 0.0
        %v5863 = vadd.f32 %v5861, %v5862
        %v5864 = vsel %vm5660, %v5262, 0.0
        %v5865 = vadd.f32 %v5863, %v5864
        %v5866 = vsel %vm5660, %v5264, 0.0
        %v5867 = vadd.f32 %v5865, %v5866
        %v5868 = vsel %vm5660, %v5266, 0.0
        %v5869 = vadd.f32 %v5867, %v5868
        %v5870 = vsel %vm5660, %v5268, 0.0
        %v5871 = vadd.f32 %v5869, %v5870
        %v5872 = vsel %vm5660, %v5270, 0.0
        %v5873 = vadd.f32 %v5871, %v5872
        %v5874 = vsel %vm5660, %v5272, 0.0
        %v5875 = vadd.f32 %v5873, %v5874
        %v5876 = vsel %vm5660, %v5274, 0.0
        %v5877 = vadd.f32 %v5875, %v5876
        %v5878 = vsel %vm5660, %v5245, 0.0
        %v5879 = vsel %vm5660, %v5247, 0.0
        %v5880 = vadd.f32 %v5878, %v5879
        %v5881 = vsel %vm5660, %v5249, 0.0
        %v5882 = vadd.f32 %v5880, %v5881
        %v5883 = vsel %vm5660, %v5251, 0.0
        %v5884 = vadd.f32 %v5882, %v5883
        %v5885 = vsel %vm5660, %v5253, 0.0
        %v5886 = vadd.f32 %v5884, %v5885
        %v5887 = vsel %vm5660, %v5255, 0.0
        %v5888 = vadd.f32 %v5886, %v5887
        %v5889 = vsel %vm5660, %v5257, 0.0
        %v5890 = vadd.f32 %v5888, %v5889
        %v5891 = vsel %vm5660, %v5259, 0.0
        %v5892 = vadd.f32 %v5890, %v5891
        %v5893 = vsel %vm5660, %v5261, 0.0
        %v5894 = vadd.f32 %v5892, %v5893
        %v5895 = vsel %vm5660, %v5263, 0.0
        %v5896 = vadd.f32 %v5894, %v5895
        %v5897 = vsel %vm5660, %v5265, 0.0
        %v5898 = vadd.f32 %v5896, %v5897
        %v5899 = vsel %vm5660, %v5267, 0.0
        %v5900 = vadd.f32 %v5898, %v5899
        %v5901 = vsel %vm5660, %v5269, 0.0
        %v5902 = vadd.f32 %v5900, %v5901
        %v5903 = vsel %vm5660, %v5271, 0.0
        %v5904 = vadd.f32 %v5902, %v5903
        %v5905 = vsel %vm5660, %v5273, 0.0
        %v5906 = vadd.f32 %v5904, %v5905
        %v5907 = vsel %vm5660, %v5275, 0.0
        %v5908 = vadd.f32 %v5906, %v5907
        %v5909 = vsel %vm5660, %v5276, 0.0
        %v5910 = vsel %vm5660, %v5278, 0.0
        %v5911 = vadd.f32 %v5909, %v5910
        %v5912 = vsel %vm5660, %v5280, 0.0
        %v5913 = vadd.f32 %v5911, %v5912
        %v5914 = vsel %vm5660, %v5282, 0.0
        %v5915 = vadd.f32 %v5913, %v5914
        %v5916 = vsel %vm5660, %v5284, 0.0
        %v5917 = vadd.f32 %v5915, %v5916
        %v5918 = vsel %vm5660, %v5286, 0.0
        %v5919 = vadd.f32 %v5917, %v5918
        %v5920 = vsel %vm5660, %v5288, 0.0
        %v5921 = vadd.f32 %v5919, %v5920
        %v5922 = vsel %vm5660, %v5290, 0.0
        %v5923 = vadd.f32 %v5921, %v5922
        %v5924 = vsel %vm5660, %v5292, 0.0
        %v5925 = vadd.f32 %v5923, %v5924
        %v5926 = vsel %vm5660, %v5294, 0.0
        %v5927 = vadd.f32 %v5925, %v5926
        %v5928 = vsel %vm5660, %v5296, 0.0
        %v5929 = vadd.f32 %v5927, %v5928
        %v5930 = vsel %vm5660, %v5298, 0.0
        %v5931 = vadd.f32 %v5929, %v5930
        %v5932 = vsel %vm5660, %v5300, 0.0
        %v5933 = vadd.f32 %v5931, %v5932
        %v5934 = vsel %vm5660, %v5302, 0.0
        %v5935 = vadd.f32 %v5933, %v5934
        %v5936 = vsel %vm5660, %v5304, 0.0
        %v5937 = vadd.f32 %v5935, %v5936
        %v5938 = vsel %vm5660, %v5306, 0.0
        %v5939 = vadd.f32 %v5937, %v5938
        %v5940 = vsel %vm5660, %v5277, 0.0
        %v5941 = vsel %vm5660, %v5279, 0.0
        %v5942 = vadd.f32 %v5940, %v5941
        %v5943 = vsel %vm5660, %v5281, 0.0
        %v5944 = vadd.f32 %v5942, %v5943
        %v5945 = vsel %vm5660, %v5283, 0.0
        %v5946 = vadd.f32 %v5944, %v5945
        %v5947 = vsel %vm5660, %v5285, 0.0
        %v5948 = vadd.f32 %v5946, %v5947
        %v5949 = vsel %vm5660, %v5287, 0.0
        %v5950 = vadd.f32 %v5948, %v5949
        %v5951 = vsel %vm5660, %v5289, 0.0
        %v5952 = vadd.f32 %v5950, %v5951
        %v5953 = vsel %vm5660, %v5291, 0.0
        %v5954 = vadd.f32 %v5952, %v5953
        %v5955 = vsel %vm5660, %v5293, 0.0
        %v5956 = vadd.f32 %v5954, %v5955
        %v5957 = vsel %vm5660, %v5295, 0.0
        %v5958 = vadd.f32 %v5956, %v5957
        %v5959 = vsel %vm5660, %v5297, 0.0
        %v5960 = vadd.f32 %v5958, %v5959
        %v5961 = vsel %vm5660, %v5299, 0.0
        %v5962 = vadd.f32 %v5960, %v5961
        %v5963 = vsel %vm5660, %v5301, 0.0
        %v5964 = vadd.f32 %v5962, %v5963
        %v5965 = vsel %vm5660, %v5303, 0.0
        %v5966 = vadd.f32 %v5964, %v5965
        %v5967 = vsel %vm5660, %v5305, 0.0
        %v5968 = vadd.f32 %v5966, %v5967
        %v5969 = vsel %vm5660, %v5307, 0.0
        %v5970 = vadd.f32 %v5968, %v5969
        %v5971 = vsel %vm5660, %v5308, 0.0
        %v5972 = vsel %vm5660, %v5310, 0.0
        %v5973 = vadd.f32 %v5971, %v5972
        %v5974 = vsel %vm5660, %v5312, 0.0
        %v5975 = vadd.f32 %v5973, %v5974
        %v5976 = vsel %vm5660, %v5314, 0.0
        %v5977 = vadd.f32 %v5975, %v5976
        %v5978 = vsel %vm5660, %v5316, 0.0
        %v5979 = vadd.f32 %v5977, %v5978
        %v5980 = vsel %vm5660, %v5318, 0.0
        %v5981 = vadd.f32 %v5979, %v5980
        %v5982 = vsel %vm5660, %v5320, 0.0
        %v5983 = vadd.f32 %v5981, %v5982
        %v5984 = vsel %vm5660, %v5322, 0.0
        %v5985 = vadd.f32 %v5983, %v5984
        %v5986 = vsel %vm5660, %v5324, 0.0
        %v5987 = vadd.f32 %v5985, %v5986
        %v5988 = vsel %vm5660, %v5326, 0.0
        %v5989 = vadd.f32 %v5987, %v5988
        %v5990 = vsel %vm5660, %v5328, 0.0
        %v5991 = vadd.f32 %v5989, %v5990
        %v5992 = vsel %vm5660, %v5330, 0.0
        %v5993 = vadd.f32 %v5991, %v5992
        %v5994 = vsel %vm5660, %v5332, 0.0
        %v5995 = vadd.f32 %v5993, %v5994
        %v5996 = vsel %vm5660, %v5334, 0.0
        %v5997 = vadd.f32 %v5995, %v5996
        %v5998 = vsel %vm5660, %v5336, 0.0
        %v5999 = vadd.f32 %v5997, %v5998
        %v6000 = vsel %vm5660, %v5338, 0.0
        %v6001 = vadd.f32 %v5999, %v6000
        %v6002 = vsel %vm5660, %v5309, 0.0
        %v6003 = vsel %vm5660, %v5311, 0.0
        %v6004 = vadd.f32 %v6002, %v6003
        %v6005 = vsel %vm5660, %v5313, 0.0
        %v6006 = vadd.f32 %v6004, %v6005
        %v6007 = vsel %vm5660, %v5315, 0.0
        %v6008 = vadd.f32 %v6006, %v6007
        %v6009 = vsel %vm5660, %v5317, 0.0
        %v6010 = vadd.f32 %v6008, %v6009
        %v6011 = vsel %vm5660, %v5319, 0.0
        %v6012 = vadd.f32 %v6010, %v6011
        %v6013 = vsel %vm5660, %v5321, 0.0
        %v6014 = vadd.f32 %v6012, %v6013
        %v6015 = vsel %vm5660, %v5323, 0.0
        %v6016 = vadd.f32 %v6014, %v6015
        %v6017 = vsel %vm5660, %v5325, 0.0
        %v6018 = vadd.f32 %v6016, %v6017
        %v6019 = vsel %vm5660, %v5327, 0.0
        %v6020 = vadd.f32 %v6018, %v6019
        %v6021 = vsel %vm5660, %v5329, 0.0
        %v6022 = vadd.f32 %v6020, %v6021
        %v6023 = vsel %vm5660, %v5331, 0.0
        %v6024 = vadd.f32 %v6022, %v6023
        %v6025 = vsel %vm5660, %v5333, 0.0
        %v6026 = vadd.f32 %v6024, %v6025
        %v6027 = vsel %vm5660, %v5335, 0.0
        %v6028 = vadd.f32 %v6026, %v6027
        %v6029 = vsel %vm5660, %v5337, 0.0
        %v6030 = vadd.f32 %v6028, %v6029
        %v6031 = vsel %vm5660, %v5339, 0.0
        %v6032 = vadd.f32 %v6030, %v6031
        %v6033 = vsel %vm5660, %v5340, 0.0
        %v6034 = vsel %vm5660, %v5342, 0.0
        %v6035 = vadd.f32 %v6033, %v6034
        %v6036 = vsel %vm5660, %v5344, 0.0
        %v6037 = vadd.f32 %v6035, %v6036
        %v6038 = vsel %vm5660, %v5346, 0.0
        %v6039 = vadd.f32 %v6037, %v6038
        %v6040 = vsel %vm5660, %v5348, 0.0
        %v6041 = vadd.f32 %v6039, %v6040
        %v6042 = vsel %vm5660, %v5350, 0.0
        %v6043 = vadd.f32 %v6041, %v6042
        %v6044 = vsel %vm5660, %v5352, 0.0
        %v6045 = vadd.f32 %v6043, %v6044
        %v6046 = vsel %vm5660, %v5354, 0.0
        %v6047 = vadd.f32 %v6045, %v6046
        %v6048 = vsel %vm5660, %v5356, 0.0
        %v6049 = vadd.f32 %v6047, %v6048
        %v6050 = vsel %vm5660, %v5358, 0.0
        %v6051 = vadd.f32 %v6049, %v6050
        %v6052 = vsel %vm5660, %v5360, 0.0
        %v6053 = vadd.f32 %v6051, %v6052
        %v6054 = vsel %vm5660, %v5362, 0.0
        %v6055 = vadd.f32 %v6053, %v6054
        %v6056 = vsel %vm5660, %v5364, 0.0
        %v6057 = vadd.f32 %v6055, %v6056
        %v6058 = vsel %vm5660, %v5366, 0.0
        %v6059 = vadd.f32 %v6057, %v6058
        %v6060 = vsel %vm5660, %v5368, 0.0
        %v6061 = vadd.f32 %v6059, %v6060
        %v6062 = vsel %vm5660, %v5370, 0.0
        %v6063 = vadd.f32 %v6061, %v6062
        %v6064 = vsel %vm5660, %v5341, 0.0
        %v6065 = vsel %vm5660, %v5343, 0.0
        %v6066 = vadd.f32 %v6064, %v6065
        %v6067 = vsel %vm5660, %v5345, 0.0
        %v6068 = vadd.f32 %v6066, %v6067
        %v6069 = vsel %vm5660, %v5347, 0.0
        %v6070 = vadd.f32 %v6068, %v6069
        %v6071 = vsel %vm5660, %v5349, 0.0
        %v6072 = vadd.f32 %v6070, %v6071
        %v6073 = vsel %vm5660, %v5351, 0.0
        %v6074 = vadd.f32 %v6072, %v6073
        %v6075 = vsel %vm5660, %v5353, 0.0
        %v6076 = vadd.f32 %v6074, %v6075
        %v6077 = vsel %vm5660, %v5355, 0.0
        %v6078 = vadd.f32 %v6076, %v6077
        %v6079 = vsel %vm5660, %v5357, 0.0
        %v6080 = vadd.f32 %v6078, %v6079
        %v6081 = vsel %vm5660, %v5359, 0.0
        %v6082 = vadd.f32 %v6080, %v6081
        %v6083 = vsel %vm5660, %v5361, 0.0
        %v6084 = vadd.f32 %v6082, %v6083
        %v6085 = vsel %vm5660, %v5363, 0.0
        %v6086 = vadd.f32 %v6084, %v6085
        %v6087 = vsel %vm5660, %v5365, 0.0
        %v6088 = vadd.f32 %v6086, %v6087
        %v6089 = vsel %vm5660, %v5367, 0.0
        %v6090 = vadd.f32 %v6088, %v6089
        %v6091 = vsel %vm5660, %v5369, 0.0
        %v6092 = vadd.f32 %v6090, %v6091
        %v6093 = vsel %vm5660, %v5371, 0.0
        %v6094 = vadd.f32 %v6092, %v6093
        %v6095 = vsel %vm5660, %v5372, 0.0
        %v6096 = vsel %vm5660, %v5374, 0.0
        %v6097 = vadd.f32 %v6095, %v6096
        %v6098 = vsel %vm5660, %v5376, 0.0
        %v6099 = vadd.f32 %v6097, %v6098
        %v6100 = vsel %vm5660, %v5378, 0.0
        %v6101 = vadd.f32 %v6099, %v6100
        %v6102 = vsel %vm5660, %v5380, 0.0
        %v6103 = vadd.f32 %v6101, %v6102
        %v6104 = vsel %vm5660, %v5382, 0.0
        %v6105 = vadd.f32 %v6103, %v6104
        %v6106 = vsel %vm5660, %v5384, 0.0
        %v6107 = vadd.f32 %v6105, %v6106
        %v6108 = vsel %vm5660, %v5386, 0.0
        %v6109 = vadd.f32 %v6107, %v6108
        %v6110 = vsel %vm5660, %v5388, 0.0
        %v6111 = vadd.f32 %v6109, %v6110
        %v6112 = vsel %vm5660, %v5390, 0.0
        %v6113 = vadd.f32 %v6111, %v6112
        %v6114 = vsel %vm5660, %v5392, 0.0
        %v6115 = vadd.f32 %v6113, %v6114
        %v6116 = vsel %vm5660, %v5394, 0.0
        %v6117 = vadd.f32 %v6115, %v6116
        %v6118 = vsel %vm5660, %v5396, 0.0
        %v6119 = vadd.f32 %v6117, %v6118
        %v6120 = vsel %vm5660, %v5398, 0.0
        %v6121 = vadd.f32 %v6119, %v6120
        %v6122 = vsel %vm5660, %v5400, 0.0
        %v6123 = vadd.f32 %v6121, %v6122
        %v6124 = vsel %vm5660, %v5402, 0.0
        %v6125 = vadd.f32 %v6123, %v6124
        %v6126 = vsel %vm5660, %v5373, 0.0
        %v6127 = vsel %vm5660, %v5375, 0.0
        %v6128 = vadd.f32 %v6126, %v6127
        %v6129 = vsel %vm5660, %v5377, 0.0
        %v6130 = vadd.f32 %v6128, %v6129
        %v6131 = vsel %vm5660, %v5379, 0.0
        %v6132 = vadd.f32 %v6130, %v6131
        %v6133 = vsel %vm5660, %v5381, 0.0
        %v6134 = vadd.f32 %v6132, %v6133
        %v6135 = vsel %vm5660, %v5383, 0.0
        %v6136 = vadd.f32 %v6134, %v6135
        %v6137 = vsel %vm5660, %v5385, 0.0
        %v6138 = vadd.f32 %v6136, %v6137
        %v6139 = vsel %vm5660, %v5387, 0.0
        %v6140 = vadd.f32 %v6138, %v6139
        %v6141 = vsel %vm5660, %v5389, 0.0
        %v6142 = vadd.f32 %v6140, %v6141
        %v6143 = vsel %vm5660, %v5391, 0.0
        %v6144 = vadd.f32 %v6142, %v6143
        %v6145 = vsel %vm5660, %v5393, 0.0
        %v6146 = vadd.f32 %v6144, %v6145
        %v6147 = vsel %vm5660, %v5395, 0.0
        %v6148 = vadd.f32 %v6146, %v6147
        %v6149 = vsel %vm5660, %v5397, 0.0
        %v6150 = vadd.f32 %v6148, %v6149
        %v6151 = vsel %vm5660, %v5399, 0.0
        %v6152 = vadd.f32 %v6150, %v6151
        %v6153 = vsel %vm5660, %v5401, 0.0
        %v6154 = vadd.f32 %v6152, %v6153
        %v6155 = vsel %vm5660, %v5403, 0.0
        %v6156 = vadd.f32 %v6154, %v6155
        %v6157 = vsel %vm5660, %v5404, 0.0
        %v6158 = vsel %vm5660, %v5406, 0.0
        %v6159 = vadd.f32 %v6157, %v6158
        %v6160 = vsel %vm5660, %v5408, 0.0
        %v6161 = vadd.f32 %v6159, %v6160
        %v6162 = vsel %vm5660, %v5410, 0.0
        %v6163 = vadd.f32 %v6161, %v6162
        %v6164 = vsel %vm5660, %v5412, 0.0
        %v6165 = vadd.f32 %v6163, %v6164
        %v6166 = vsel %vm5660, %v5414, 0.0
        %v6167 = vadd.f32 %v6165, %v6166
        %v6168 = vsel %vm5660, %v5416, 0.0
        %v6169 = vadd.f32 %v6167, %v6168
        %v6170 = vsel %vm5660, %v5418, 0.0
        %v6171 = vadd.f32 %v6169, %v6170
        %v6172 = vsel %vm5660, %v5420, 0.0
        %v6173 = vadd.f32 %v6171, %v6172
        %v6174 = vsel %vm5660, %v5422, 0.0
        %v6175 = vadd.f32 %v6173, %v6174
        %v6176 = vsel %vm5660, %v5424, 0.0
        %v6177 = vadd.f32 %v6175, %v6176
        %v6178 = vsel %vm5660, %v5426, 0.0
        %v6179 = vadd.f32 %v6177, %v6178
        %v6180 = vsel %vm5660, %v5428, 0.0
        %v6181 = vadd.f32 %v6179, %v6180
        %v6182 = vsel %vm5660, %v5430, 0.0
        %v6183 = vadd.f32 %v6181, %v6182
        %v6184 = vsel %vm5660, %v5432, 0.0
        %v6185 = vadd.f32 %v6183, %v6184
        %v6186 = vsel %vm5660, %v5434, 0.0
        %v6187 = vadd.f32 %v6185, %v6186
        %v6188 = vsel %vm5660, %v5405, 0.0
        %v6189 = vsel %vm5660, %v5407, 0.0
        %v6190 = vadd.f32 %v6188, %v6189
        %v6191 = vsel %vm5660, %v5409, 0.0
        %v6192 = vadd.f32 %v6190, %v6191
        %v6193 = vsel %vm5660, %v5411, 0.0
        %v6194 = vadd.f32 %v6192, %v6193
        %v6195 = vsel %vm5660, %v5413, 0.0
        %v6196 = vadd.f32 %v6194, %v6195
        %v6197 = vsel %vm5660, %v5415, 0.0
        %v6198 = vadd.f32 %v6196, %v6197
        %v6199 = vsel %vm5660, %v5417, 0.0
        %v6200 = vadd.f32 %v6198, %v6199
        %v6201 = vsel %vm5660, %v5419, 0.0
        %v6202 = vadd.f32 %v6200, %v6201
        %v6203 = vsel %vm5660, %v5421, 0.0
        %v6204 = vadd.f32 %v6202, %v6203
        %v6205 = vsel %vm5660, %v5423, 0.0
        %v6206 = vadd.f32 %v6204, %v6205
        %v6207 = vsel %vm5660, %v5425, 0.0
        %v6208 = vadd.f32 %v6206, %v6207
        %v6209 = vsel %vm5660, %v5427, 0.0
        %v6210 = vadd.f32 %v6208, %v6209
        %v6211 = vsel %vm5660, %v5429, 0.0
        %v6212 = vadd.f32 %v6210, %v6211
        %v6213 = vsel %vm5660, %v5431, 0.0
        %v6214 = vadd.f32 %v6212, %v6213
        %v6215 = vsel %vm5660, %v5433, 0.0
        %v6216 = vadd.f32 %v6214, %v6215
        %v6217 = vsel %vm5660, %v5435, 0.0
        %v6218 = vadd.f32 %v6216, %v6217
        %v6219 = vsel %vm5660, %v5436, 0.0
        %v6220 = vsel %vm5660, %v5438, 0.0
        %v6221 = vadd.f32 %v6219, %v6220
        %v6222 = vsel %vm5660, %v5440, 0.0
        %v6223 = vadd.f32 %v6221, %v6222
        %v6224 = vsel %vm5660, %v5442, 0.0
        %v6225 = vadd.f32 %v6223, %v6224
        %v6226 = vsel %vm5660, %v5444, 0.0
        %v6227 = vadd.f32 %v6225, %v6226
        %v6228 = vsel %vm5660, %v5446, 0.0
        %v6229 = vadd.f32 %v6227, %v6228
        %v6230 = vsel %vm5660, %v5448, 0.0
        %v6231 = vadd.f32 %v6229, %v6230
        %v6232 = vsel %vm5660, %v5450, 0.0
        %v6233 = vadd.f32 %v6231, %v6232
        %v6234 = vsel %vm5660, %v5452, 0.0
        %v6235 = vadd.f32 %v6233, %v6234
        %v6236 = vsel %vm5660, %v5454, 0.0
        %v6237 = vadd.f32 %v6235, %v6236
        %v6238 = vsel %vm5660, %v5456, 0.0
        %v6239 = vadd.f32 %v6237, %v6238
        %v6240 = vsel %vm5660, %v5458, 0.0
        %v6241 = vadd.f32 %v6239, %v6240
        %v6242 = vsel %vm5660, %v5460, 0.0
        %v6243 = vadd.f32 %v6241, %v6242
        %v6244 = vsel %vm5660, %v5462, 0.0
        %v6245 = vadd.f32 %v6243, %v6244
        %v6246 = vsel %vm5660, %v5464, 0.0
        %v6247 = vadd.f32 %v6245, %v6246
        %v6248 = vsel %vm5660, %v5466, 0.0
        %v6249 = vadd.f32 %v6247, %v6248
        %v6250 = vsel %vm5660, %v5437, 0.0
        %v6251 = vsel %vm5660, %v5439, 0.0
        %v6252 = vadd.f32 %v6250, %v6251
        %v6253 = vsel %vm5660, %v5441, 0.0
        %v6254 = vadd.f32 %v6252, %v6253
        %v6255 = vsel %vm5660, %v5443, 0.0
        %v6256 = vadd.f32 %v6254, %v6255
        %v6257 = vsel %vm5660, %v5445, 0.0
        %v6258 = vadd.f32 %v6256, %v6257
        %v6259 = vsel %vm5660, %v5447, 0.0
        %v6260 = vadd.f32 %v6258, %v6259
        %v6261 = vsel %vm5660, %v5449, 0.0
        %v6262 = vadd.f32 %v6260, %v6261
        %v6263 = vsel %vm5660, %v5451, 0.0
        %v6264 = vadd.f32 %v6262, %v6263
        %v6265 = vsel %vm5660, %v5453, 0.0
        %v6266 = vadd.f32 %v6264, %v6265
        %v6267 = vsel %vm5660, %v5455, 0.0
        %v6268 = vadd.f32 %v6266, %v6267
        %v6269 = vsel %vm5660, %v5457, 0.0
        %v6270 = vadd.f32 %v6268, %v6269
        %v6271 = vsel %vm5660, %v5459, 0.0
        %v6272 = vadd.f32 %v6270, %v6271
        %v6273 = vsel %vm5660, %v5461, 0.0
        %v6274 = vadd.f32 %v6272, %v6273
        %v6275 = vsel %vm5660, %v5463, 0.0
        %v6276 = vadd.f32 %v6274, %v6275
        %v6277 = vsel %vm5660, %v5465, 0.0
        %v6278 = vadd.f32 %v6276, %v6277
        %v6279 = vsel %vm5660, %v5467, 0.0
        %v6280 = vadd.f32 %v6278, %v6279
        %v6281 = vsel %vm5660, %v5468, 0.0
        %v6282 = vsel %vm5660, %v5470, 0.0
        %v6283 = vadd.f32 %v6281, %v6282
        %v6284 = vsel %vm5660, %v5472, 0.0
        %v6285 = vadd.f32 %v6283, %v6284
        %v6286 = vsel %vm5660, %v5474, 0.0
        %v6287 = vadd.f32 %v6285, %v6286
        %v6288 = vsel %vm5660, %v5476, 0.0
        %v6289 = vadd.f32 %v6287, %v6288
        %v6290 = vsel %vm5660, %v5478, 0.0
        %v6291 = vadd.f32 %v6289, %v6290
        %v6292 = vsel %vm5660, %v5480, 0.0
        %v6293 = vadd.f32 %v6291, %v6292
        %v6294 = vsel %vm5660, %v5482, 0.0
        %v6295 = vadd.f32 %v6293, %v6294
        %v6296 = vsel %vm5660, %v5484, 0.0
        %v6297 = vadd.f32 %v6295, %v6296
        %v6298 = vsel %vm5660, %v5486, 0.0
        %v6299 = vadd.f32 %v6297, %v6298
        %v6300 = vsel %vm5660, %v5488, 0.0
        %v6301 = vadd.f32 %v6299, %v6300
        %v6302 = vsel %vm5660, %v5490, 0.0
        %v6303 = vadd.f32 %v6301, %v6302
        %v6304 = vsel %vm5660, %v5492, 0.0
        %v6305 = vadd.f32 %v6303, %v6304
        %v6306 = vsel %vm5660, %v5494, 0.0
        %v6307 = vadd.f32 %v6305, %v6306
        %v6308 = vsel %vm5660, %v5496, 0.0
        %v6309 = vadd.f32 %v6307, %v6308
        %v6310 = vsel %vm5660, %v5498, 0.0
        %v6311 = vadd.f32 %v6309, %v6310
        %v6312 = vsel %vm5660, %v5469, 0.0
        %v6313 = vsel %vm5660, %v5471, 0.0
        %v6314 = vadd.f32 %v6312, %v6313
        %v6315 = vsel %vm5660, %v5473, 0.0
        %v6316 = vadd.f32 %v6314, %v6315
        %v6317 = vsel %vm5660, %v5475, 0.0
        %v6318 = vadd.f32 %v6316, %v6317
        %v6319 = vsel %vm5660, %v5477, 0.0
        %v6320 = vadd.f32 %v6318, %v6319
        %v6321 = vsel %vm5660, %v5479, 0.0
        %v6322 = vadd.f32 %v6320, %v6321
        %v6323 = vsel %vm5660, %v5481, 0.0
        %v6324 = vadd.f32 %v6322, %v6323
        %v6325 = vsel %vm5660, %v5483, 0.0
        %v6326 = vadd.f32 %v6324, %v6325
        %v6327 = vsel %vm5660, %v5485, 0.0
        %v6328 = vadd.f32 %v6326, %v6327
        %v6329 = vsel %vm5660, %v5487, 0.0
        %v6330 = vadd.f32 %v6328, %v6329
        %v6331 = vsel %vm5660, %v5489, 0.0
        %v6332 = vadd.f32 %v6330, %v6331
        %v6333 = vsel %vm5660, %v5491, 0.0
        %v6334 = vadd.f32 %v6332, %v6333
        %v6335 = vsel %vm5660, %v5493, 0.0
        %v6336 = vadd.f32 %v6334, %v6335
        %v6337 = vsel %vm5660, %v5495, 0.0
        %v6338 = vadd.f32 %v6336, %v6337
        %v6339 = vsel %vm5660, %v5497, 0.0
        %v6340 = vadd.f32 %v6338, %v6339
        %v6341 = vsel %vm5660, %v5499, 0.0
        %v6342 = vadd.f32 %v6340, %v6341
        %v6343 = vsel %vm5660, %v5500, 0.0
        %v6344 = vsel %vm5660, %v5502, 0.0
        %v6345 = vadd.f32 %v6343, %v6344
        %v6346 = vsel %vm5660, %v5504, 0.0
        %v6347 = vadd.f32 %v6345, %v6346
        %v6348 = vsel %vm5660, %v5506, 0.0
        %v6349 = vadd.f32 %v6347, %v6348
        %v6350 = vsel %vm5660, %v5508, 0.0
        %v6351 = vadd.f32 %v6349, %v6350
        %v6352 = vsel %vm5660, %v5510, 0.0
        %v6353 = vadd.f32 %v6351, %v6352
        %v6354 = vsel %vm5660, %v5512, 0.0
        %v6355 = vadd.f32 %v6353, %v6354
        %v6356 = vsel %vm5660, %v5514, 0.0
        %v6357 = vadd.f32 %v6355, %v6356
        %v6358 = vsel %vm5660, %v5516, 0.0
        %v6359 = vadd.f32 %v6357, %v6358
        %v6360 = vsel %vm5660, %v5518, 0.0
        %v6361 = vadd.f32 %v6359, %v6360
        %v6362 = vsel %vm5660, %v5520, 0.0
        %v6363 = vadd.f32 %v6361, %v6362
        %v6364 = vsel %vm5660, %v5522, 0.0
        %v6365 = vadd.f32 %v6363, %v6364
        %v6366 = vsel %vm5660, %v5524, 0.0
        %v6367 = vadd.f32 %v6365, %v6366
        %v6368 = vsel %vm5660, %v5526, 0.0
        %v6369 = vadd.f32 %v6367, %v6368
        %v6370 = vsel %vm5660, %v5528, 0.0
        %v6371 = vadd.f32 %v6369, %v6370
        %v6372 = vsel %vm5660, %v5530, 0.0
        %v6373 = vadd.f32 %v6371, %v6372
        %v6374 = vsel %vm5660, %v5501, 0.0
        %v6375 = vsel %vm5660, %v5503, 0.0
        %v6376 = vadd.f32 %v6374, %v6375
        %v6377 = vsel %vm5660, %v5505, 0.0
        %v6378 = vadd.f32 %v6376, %v6377
        %v6379 = vsel %vm5660, %v5507, 0.0
        %v6380 = vadd.f32 %v6378, %v6379
        %v6381 = vsel %vm5660, %v5509, 0.0
        %v6382 = vadd.f32 %v6380, %v6381
        %v6383 = vsel %vm5660, %v5511, 0.0
        %v6384 = vadd.f32 %v6382, %v6383
        %v6385 = vsel %vm5660, %v5513, 0.0
        %v6386 = vadd.f32 %v6384, %v6385
        %v6387 = vsel %vm5660, %v5515, 0.0
        %v6388 = vadd.f32 %v6386, %v6387
        %v6389 = vsel %vm5660, %v5517, 0.0
        %v6390 = vadd.f32 %v6388, %v6389
        %v6391 = vsel %vm5660, %v5519, 0.0
        %v6392 = vadd.f32 %v6390, %v6391
        %v6393 = vsel %vm5660, %v5521, 0.0
        %v6394 = vadd.f32 %v6392, %v6393
        %v6395 = vsel %vm5660, %v5523, 0.0
        %v6396 = vadd.f32 %v6394, %v6395
        %v6397 = vsel %vm5660, %v5525, 0.0
        %v6398 = vadd.f32 %v6396, %v6397
        %v6399 = vsel %vm5660, %v5527, 0.0
        %v6400 = vadd.f32 %v6398, %v6399
        %v6401 = vsel %vm5660, %v5529, 0.0
        %v6402 = vadd.f32 %v6400, %v6401
        %v6403 = vsel %vm5660, %v5531, 0.0
        %v6404 = vadd.f32 %v6402, %v6403
        %v6405 = vsel %vm5660, %v5532, 0.0
        %v6406 = vsel %vm5660, %v5534, 0.0
        %v6407 = vadd.f32 %v6405, %v6406
        %v6408 = vsel %vm5660, %v5536, 0.0
        %v6409 = vadd.f32 %v6407, %v6408
        %v6410 = vsel %vm5660, %v5538, 0.0
        %v6411 = vadd.f32 %v6409, %v6410
        %v6412 = vsel %vm5660, %v5540, 0.0
        %v6413 = vadd.f32 %v6411, %v6412
        %v6414 = vsel %vm5660, %v5542, 0.0
        %v6415 = vadd.f32 %v6413, %v6414
        %v6416 = vsel %vm5660, %v5544, 0.0
        %v6417 = vadd.f32 %v6415, %v6416
        %v6418 = vsel %vm5660, %v5546, 0.0
        %v6419 = vadd.f32 %v6417, %v6418
        %v6420 = vsel %vm5660, %v5548, 0.0
        %v6421 = vadd.f32 %v6419, %v6420
        %v6422 = vsel %vm5660, %v5550, 0.0
        %v6423 = vadd.f32 %v6421, %v6422
        %v6424 = vsel %vm5660, %v5552, 0.0
        %v6425 = vadd.f32 %v6423, %v6424
        %v6426 = vsel %vm5660, %v5554, 0.0
        %v6427 = vadd.f32 %v6425, %v6426
        %v6428 = vsel %vm5660, %v5556, 0.0
        %v6429 = vadd.f32 %v6427, %v6428
        %v6430 = vsel %vm5660, %v5558, 0.0
        %v6431 = vadd.f32 %v6429, %v6430
        %v6432 = vsel %vm5660, %v5560, 0.0
        %v6433 = vadd.f32 %v6431, %v6432
        %v6434 = vsel %vm5660, %v5562, 0.0
        %v6435 = vadd.f32 %v6433, %v6434
        %v6436 = vsel %vm5660, %v5533, 0.0
        %v6437 = vsel %vm5660, %v5535, 0.0
        %v6438 = vadd.f32 %v6436, %v6437
        %v6439 = vsel %vm5660, %v5537, 0.0
        %v6440 = vadd.f32 %v6438, %v6439
        %v6441 = vsel %vm5660, %v5539, 0.0
        %v6442 = vadd.f32 %v6440, %v6441
        %v6443 = vsel %vm5660, %v5541, 0.0
        %v6444 = vadd.f32 %v6442, %v6443
        %v6445 = vsel %vm5660, %v5543, 0.0
        %v6446 = vadd.f32 %v6444, %v6445
        %v6447 = vsel %vm5660, %v5545, 0.0
        %v6448 = vadd.f32 %v6446, %v6447
        %v6449 = vsel %vm5660, %v5547, 0.0
        %v6450 = vadd.f32 %v6448, %v6449
        %v6451 = vsel %vm5660, %v5549, 0.0
        %v6452 = vadd.f32 %v6450, %v6451
        %v6453 = vsel %vm5660, %v5551, 0.0
        %v6454 = vadd.f32 %v6452, %v6453
        %v6455 = vsel %vm5660, %v5553, 0.0
        %v6456 = vadd.f32 %v6454, %v6455
        %v6457 = vsel %vm5660, %v5555, 0.0
        %v6458 = vadd.f32 %v6456, %v6457
        %v6459 = vsel %vm5660, %v5557, 0.0
        %v6460 = vadd.f32 %v6458, %v6459
        %v6461 = vsel %vm5660, %v5559, 0.0
        %v6462 = vadd.f32 %v6460, %v6461
        %v6463 = vsel %vm5660, %v5561, 0.0
        %v6464 = vadd.f32 %v6462, %v6463
        %v6465 = vsel %vm5660, %v5563, 0.0
        %v6466 = vadd.f32 %v6464, %v6465
        %v6467 = vsel %vm5660, %v5564, 0.0
        %v6468 = vsel %vm5660, %v5566, 0.0
        %v6469 = vadd.f32 %v6467, %v6468
        %v6470 = vsel %vm5660, %v5568, 0.0
        %v6471 = vadd.f32 %v6469, %v6470
        %v6472 = vsel %vm5660, %v5570, 0.0
        %v6473 = vadd.f32 %v6471, %v6472
        %v6474 = vsel %vm5660, %v5572, 0.0
        %v6475 = vadd.f32 %v6473, %v6474
        %v6476 = vsel %vm5660, %v5574, 0.0
        %v6477 = vadd.f32 %v6475, %v6476
        %v6478 = vsel %vm5660, %v5576, 0.0
        %v6479 = vadd.f32 %v6477, %v6478
        %v6480 = vsel %vm5660, %v5578, 0.0
        %v6481 = vadd.f32 %v6479, %v6480
        %v6482 = vsel %vm5660, %v5580, 0.0
        %v6483 = vadd.f32 %v6481, %v6482
        %v6484 = vsel %vm5660, %v5582, 0.0
        %v6485 = vadd.f32 %v6483, %v6484
        %v6486 = vsel %vm5660, %v5584, 0.0
        %v6487 = vadd.f32 %v6485, %v6486
        %v6488 = vsel %vm5660, %v5586, 0.0
        %v6489 = vadd.f32 %v6487, %v6488
        %v6490 = vsel %vm5660, %v5588, 0.0
        %v6491 = vadd.f32 %v6489, %v6490
        %v6492 = vsel %vm5660, %v5590, 0.0
        %v6493 = vadd.f32 %v6491, %v6492
        %v6494 = vsel %vm5660, %v5592, 0.0
        %v6495 = vadd.f32 %v6493, %v6494
        %v6496 = vsel %vm5660, %v5594, 0.0
        %v6497 = vadd.f32 %v6495, %v6496
        %v6498 = vsel %vm5660, %v5565, 0.0
        %v6499 = vsel %vm5660, %v5567, 0.0
        %v6500 = vadd.f32 %v6498, %v6499
        %v6501 = vsel %vm5660, %v5569, 0.0
        %v6502 = vadd.f32 %v6500, %v6501
        %v6503 = vsel %vm5660, %v5571, 0.0
        %v6504 = vadd.f32 %v6502, %v6503
        %v6505 = vsel %vm5660, %v5573, 0.0
        %v6506 = vadd.f32 %v6504, %v6505
        %v6507 = vsel %vm5660, %v5575, 0.0
        %v6508 = vadd.f32 %v6506, %v6507
        %v6509 = vsel %vm5660, %v5577, 0.0
        %v6510 = vadd.f32 %v6508, %v6509
        %v6511 = vsel %vm5660, %v5579, 0.0
        %v6512 = vadd.f32 %v6510, %v6511
        %v6513 = vsel %vm5660, %v5581, 0.0
        %v6514 = vadd.f32 %v6512, %v6513
        %v6515 = vsel %vm5660, %v5583, 0.0
        %v6516 = vadd.f32 %v6514, %v6515
        %v6517 = vsel %vm5660, %v5585, 0.0
        %v6518 = vadd.f32 %v6516, %v6517
        %v6519 = vsel %vm5660, %v5587, 0.0
        %v6520 = vadd.f32 %v6518, %v6519
        %v6521 = vsel %vm5660, %v5589, 0.0
        %v6522 = vadd.f32 %v6520, %v6521
        %v6523 = vsel %vm5660, %v5591, 0.0
        %v6524 = vadd.f32 %v6522, %v6523
        %v6525 = vsel %vm5660, %v5593, 0.0
        %v6526 = vadd.f32 %v6524, %v6525
        %v6527 = vsel %vm5660, %v5595, 0.0
        %v6528 = vadd.f32 %v6526, %v6527
        %v6529 = vsel %vm5660, %v5596, 0.0
        %v6530 = vsel %vm5660, %v5598, 0.0
        %v6531 = vadd.f32 %v6529, %v6530
        %v6532 = vsel %vm5660, %v5600, 0.0
        %v6533 = vadd.f32 %v6531, %v6532
        %v6534 = vsel %vm5660, %v5602, 0.0
        %v6535 = vadd.f32 %v6533, %v6534
        %v6536 = vsel %vm5660, %v5604, 0.0
        %v6537 = vadd.f32 %v6535, %v6536
        %v6538 = vsel %vm5660, %v5606, 0.0
        %v6539 = vadd.f32 %v6537, %v6538
        %v6540 = vsel %vm5660, %v5608, 0.0
        %v6541 = vadd.f32 %v6539, %v6540
        %v6542 = vsel %vm5660, %v5610, 0.0
        %v6543 = vadd.f32 %v6541, %v6542
        %v6544 = vsel %vm5660, %v5612, 0.0
        %v6545 = vadd.f32 %v6543, %v6544
        %v6546 = vsel %vm5660, %v5614, 0.0
        %v6547 = vadd.f32 %v6545, %v6546
        %v6548 = vsel %vm5660, %v5616, 0.0
        %v6549 = vadd.f32 %v6547, %v6548
        %v6550 = vsel %vm5660, %v5618, 0.0
        %v6551 = vadd.f32 %v6549, %v6550
        %v6552 = vsel %vm5660, %v5620, 0.0
        %v6553 = vadd.f32 %v6551, %v6552
        %v6554 = vsel %vm5660, %v5622, 0.0
        %v6555 = vadd.f32 %v6553, %v6554
        %v6556 = vsel %vm5660, %v5624, 0.0
        %v6557 = vadd.f32 %v6555, %v6556
        %v6558 = vsel %vm5660, %v5626, 0.0
        %v6559 = vadd.f32 %v6557, %v6558
        %v6560 = vsel %vm5660, %v5597, 0.0
        %v6561 = vsel %vm5660, %v5599, 0.0
        %v6562 = vadd.f32 %v6560, %v6561
        %v6563 = vsel %vm5660, %v5601, 0.0
        %v6564 = vadd.f32 %v6562, %v6563
        %v6565 = vsel %vm5660, %v5603, 0.0
        %v6566 = vadd.f32 %v6564, %v6565
        %v6567 = vsel %vm5660, %v5605, 0.0
        %v6568 = vadd.f32 %v6566, %v6567
        %v6569 = vsel %vm5660, %v5607, 0.0
        %v6570 = vadd.f32 %v6568, %v6569
        %v6571 = vsel %vm5660, %v5609, 0.0
        %v6572 = vadd.f32 %v6570, %v6571
        %v6573 = vsel %vm5660, %v5611, 0.0
        %v6574 = vadd.f32 %v6572, %v6573
        %v6575 = vsel %vm5660, %v5613, 0.0
        %v6576 = vadd.f32 %v6574, %v6575
        %v6577 = vsel %vm5660, %v5615, 0.0
        %v6578 = vadd.f32 %v6576, %v6577
        %v6579 = vsel %vm5660, %v5617, 0.0
        %v6580 = vadd.f32 %v6578, %v6579
        %v6581 = vsel %vm5660, %v5619, 0.0
        %v6582 = vadd.f32 %v6580, %v6581
        %v6583 = vsel %vm5660, %v5621, 0.0
        %v6584 = vadd.f32 %v6582, %v6583
        %v6585 = vsel %vm5660, %v5623, 0.0
        %v6586 = vadd.f32 %v6584, %v6585
        %v6587 = vsel %vm5660, %v5625, 0.0
        %v6588 = vadd.f32 %v6586, %v6587
        %v6589 = vsel %vm5660, %v5627, 0.0
        %v6590 = vadd.f32 %v6588, %v6589
        %v6591 = vsel %vm5660, %v5628, 0.0
        %v6592 = vsel %vm5660, %v5630, 0.0
        %v6593 = vadd.f32 %v6591, %v6592
        %v6594 = vsel %vm5660, %v5632, 0.0
        %v6595 = vadd.f32 %v6593, %v6594
        %v6596 = vsel %vm5660, %v5634, 0.0
        %v6597 = vadd.f32 %v6595, %v6596
        %v6598 = vsel %vm5660, %v5636, 0.0
        %v6599 = vadd.f32 %v6597, %v6598
        %v6600 = vsel %vm5660, %v5638, 0.0
        %v6601 = vadd.f32 %v6599, %v6600
        %v6602 = vsel %vm5660, %v5640, 0.0
        %v6603 = vadd.f32 %v6601, %v6602
        %v6604 = vsel %vm5660, %v5642, 0.0
        %v6605 = vadd.f32 %v6603, %v6604
        %v6606 = vsel %vm5660, %v5644, 0.0
        %v6607 = vadd.f32 %v6605, %v6606
        %v6608 = vsel %vm5660, %v5646, 0.0
        %v6609 = vadd.f32 %v6607, %v6608
        %v6610 = vsel %vm5660, %v5648, 0.0
        %v6611 = vadd.f32 %v6609, %v6610
        %v6612 = vsel %vm5660, %v5650, 0.0
        %v6613 = vadd.f32 %v6611, %v6612
        %v6614 = vsel %vm5660, %v5652, 0.0
        %v6615 = vadd.f32 %v6613, %v6614
        %v6616 = vsel %vm5660, %v5654, 0.0
        %v6617 = vadd.f32 %v6615, %v6616
        %v6618 = vsel %vm5660, %v5656, 0.0
        %v6619 = vadd.f32 %v6617, %v6618
        %v6620 = vsel %vm5660, %v5658, 0.0
        %v6621 = vadd.f32 %v6619, %v6620
        %v6622 = vsel %vm5660, %v5629, 0.0
        %v6623 = vsel %vm5660, %v5631, 0.0
        %v6624 = vadd.f32 %v6622, %v6623
        %v6625 = vsel %vm5660, %v5633, 0.0
        %v6626 = vadd.f32 %v6624, %v6625
        %v6627 = vsel %vm5660, %v5635, 0.0
        %v6628 = vadd.f32 %v6626, %v6627
        %v6629 = vsel %vm5660, %v5637, 0.0
        %v6630 = vadd.f32 %v6628, %v6629
        %v6631 = vsel %vm5660, %v5639, 0.0
        %v6632 = vadd.f32 %v6630, %v6631
        %v6633 = vsel %vm5660, %v5641, 0.0
        %v6634 = vadd.f32 %v6632, %v6633
        %v6635 = vsel %vm5660, %v5643, 0.0
        %v6636 = vadd.f32 %v6634, %v6635
        %v6637 = vsel %vm5660, %v5645, 0.0
        %v6638 = vadd.f32 %v6636, %v6637
        %v6639 = vsel %vm5660, %v5647, 0.0
        %v6640 = vadd.f32 %v6638, %v6639
        %v6641 = vsel %vm5660, %v5649, 0.0
        %v6642 = vadd.f32 %v6640, %v6641
        %v6643 = vsel %vm5660, %v5651, 0.0
        %v6644 = vadd.f32 %v6642, %v6643
        %v6645 = vsel %vm5660, %v5653, 0.0
        %v6646 = vadd.f32 %v6644, %v6645
        %v6647 = vsel %vm5660, %v5655, 0.0
        %v6648 = vadd.f32 %v6646, %v6647
        %v6649 = vsel %vm5660, %v5657, 0.0
        %v6650 = vadd.f32 %v6648, %v6649
        %v6651 = vsel %vm5660, %v5659, 0.0
        %v6652 = vadd.f32 %v6650, %v6651
        %v6653 = vperm.slane %v245, 4
        %v6655 = vsel %vm5660, %v5691, 0
        %v6658 = vsel %vm5660, %v5722, 0
        %v6661 = vsel %vm5660, %v5753, 0
        %v6664 = vsel %vm5660, %v5784, 0
        %v6667 = vsel %vm5660, %v5815, 0
        %v6670 = vsel %vm5660, %v5846, 0
        %v6673 = vsel %vm5660, %v5877, 0
        %v6676 = vsel %vm5660, %v5908, 0
        %v6679 = vsel %vm5660, %v5939, 0
        %v6682 = vsel %vm5660, %v5970, 0
        %v6685 = vsel %vm5660, %v6001, 0
        %v6688 = vsel %vm5660, %v6032, 0
        %v6691 = vsel %vm5660, %v6063, 0
        %v6694 = vsel %vm5660, %v6094, 0
        %v6697 = vsel %vm5660, %v6125, 0
        %v6700 = vsel %vm5660, %v6156, 0
        %v6703 = vsel %vm5660, %v6187, 0
        %v6706 = vsel %vm5660, %v6218, 0
        %v6709 = vsel %vm5660, %v6249, 0
        %v6712 = vsel %vm5660, %v6280, 0
        %v6715 = vsel %vm5660, %v6311, 0
        %v6718 = vsel %vm5660, %v6342, 0
        %v6721 = vsel %vm5660, %v6373, 0
        %v6724 = vsel %vm5660, %v6404, 0
        %v6727 = vsel %vm5660, %v6435, 0
        %v6730 = vsel %vm5660, %v6466, 0
        %v6733 = vsel %vm5660, %v6497, 0
        %v6736 = vsel %vm5660, %v6528, 0
        %v6739 = vsel %vm5660, %v6559, 0
        %v6742 = vsel %vm5660, %v6590, 0
        %v6745 = vsel %vm5660, %v6621, 0
        %v6748 = vsel %vm5660, %v6652, 0
        %6750 = vmatpush.msra.mxu0 0.0
        %6751 = vmatpush.msra.mxu0 0.0
        %6752 = vmatpush.msra.mxu0 0.0
        %6753 = vmatpush.msra.mxu0 0.0
        %6754 = vmatpush.msra.mxu0 0.0
        %6755 = vmatpush.msra.mxu0 0.0
        %6756 = vmatpush.msra.mxu0 0.0
        %6757 = vmatpush.msra.mxu0 0.0
        %6758 = vmatpush.msra.mxu0 0.0
        %6759 = vmatpush.msra.mxu0 0.0
        %6760 = vmatpush.msra.mxu0 0.0
        %6761 = vmatpush.msra.mxu0 0.0
        %6762 = vmatpush.msra.mxu0 %v234
        %6763 = vmatpush.msra.mxu0 %v233
        %6764 = vmatpush.msra.mxu0 %v232
        %6765 = vmatpush.msra.mxu0 %v231
        %6766 = vmatmul.f32.gmra.mxu0 %v6655
        %v6767 = vpop.f32.mrf.mxu0
        %v6768 = vadd.f32 %v6653, %v6767
        %6769 = vmatmul.f32.gmra.mxu0 %v6658
        %v6770 = vpop.f32.mrf.mxu0
        %v6771 = vadd.f32 %v6653, %v6770
        %6772 = vmatmul.f32.gmra.mxu0 %v6661
        %v6773 = vpop.f32.mrf.mxu0
        %v6774 = vadd.f32 %v6653, %v6773
        %6775 = vmatmul.f32.gmra.mxu0 %v6664
        %v6776 = vpop.f32.mrf.mxu0
        %v6777 = vadd.f32 %v6653, %v6776
        %6778 = vmatmul.f32.gmra.mxu0 %v6667
        %v6779 = vpop.f32.mrf.mxu0
        %v6780 = vadd.f32 %v6653, %v6779
        %6781 = vmatmul.f32.gmra.mxu0 %v6670
        %v6782 = vpop.f32.mrf.mxu0
        %v6783 = vadd.f32 %v6653, %v6782
        %6784 = vmatmul.f32.gmra.mxu0 %v6673
        %v6785 = vpop.f32.mrf.mxu0
        %v6786 = vadd.f32 %v6653, %v6785
        %6787 = vmatmul.f32.gmra.mxu0 %v6676
        %v6788 = vpop.f32.mrf.mxu0
        %v6789 = vadd.f32 %v6653, %v6788
        %6790 = vmatmul.f32.gmra.mxu0 %v6679
        %v6791 = vpop.f32.mrf.mxu0
        %v6792 = vadd.f32 %v6653, %v6791
        %6793 = vmatmul.f32.gmra.mxu0 %v6682
        %v6794 = vpop.f32.mrf.mxu0
        %v6795 = vadd.f32 %v6653, %v6794
        %6796 = vmatmul.f32.gmra.mxu0 %v6685
        %v6797 = vpop.f32.mrf.mxu0
        %v6798 = vadd.f32 %v6653, %v6797
        %6799 = vmatmul.f32.gmra.mxu0 %v6688
        %v6800 = vpop.f32.mrf.mxu0
        %v6801 = vadd.f32 %v6653, %v6800
        %6802 = vmatmul.f32.gmra.mxu0 %v6691
        %v6803 = vpop.f32.mrf.mxu0
        %v6804 = vadd.f32 %v6653, %v6803
        %6805 = vmatmul.f32.gmra.mxu0 %v6694
        %v6806 = vpop.f32.mrf.mxu0
        %v6807 = vadd.f32 %v6653, %v6806
        %6808 = vmatmul.f32.gmra.mxu0 %v6697
        %v6809 = vpop.f32.mrf.mxu0
        %v6810 = vadd.f32 %v6653, %v6809
        %6811 = vmatmul.f32.gmra.mxu0 %v6700
        %v6812 = vpop.f32.mrf.mxu0
        %v6813 = vadd.f32 %v6653, %v6812
        %6814 = vmatmul.f32.gmra.mxu0 %v6703
        %v6815 = vpop.f32.mrf.mxu0
        %v6816 = vadd.f32 %v6653, %v6815
        %6817 = vmatmul.f32.gmra.mxu0 %v6706
        %v6818 = vpop.f32.mrf.mxu0
        %v6819 = vadd.f32 %v6653, %v6818
        %6820 = vmatmul.f32.gmra.mxu0 %v6709
        %v6821 = vpop.f32.mrf.mxu0
        %v6822 = vadd.f32 %v6653, %v6821
        %6823 = vmatmul.f32.gmra.mxu0 %v6712
        %v6824 = vpop.f32.mrf.mxu0
        %v6825 = vadd.f32 %v6653, %v6824
        %6826 = vmatmul.f32.gmra.mxu0 %v6715
        %v6827 = vpop.f32.mrf.mxu0
        %v6828 = vadd.f32 %v6653, %v6827
        %6829 = vmatmul.f32.gmra.mxu0 %v6718
        %v6830 = vpop.f32.mrf.mxu0
        %v6831 = vadd.f32 %v6653, %v6830
        %6832 = vmatmul.f32.gmra.mxu0 %v6721
        %v6833 = vpop.f32.mrf.mxu0
        %v6834 = vadd.f32 %v6653, %v6833
        %6835 = vmatmul.f32.gmra.mxu0 %v6724
        %v6836 = vpop.f32.mrf.mxu0
        %v6837 = vadd.f32 %v6653, %v6836
        %6838 = vmatmul.f32.gmra.mxu0 %v6727
        %v6839 = vpop.f32.mrf.mxu0
        %v6840 = vadd.f32 %v6653, %v6839
        %6841 = vmatmul.f32.gmra.mxu0 %v6730
        %v6842 = vpop.f32.mrf.mxu0
        %v6843 = vadd.f32 %v6653, %v6842
        %6844 = vmatmul.f32.gmra.mxu0 %v6733
        %v6845 = vpop.f32.mrf.mxu0
        %v6846 = vadd.f32 %v6653, %v6845
        %6847 = vmatmul.f32.gmra.mxu0 %v6736
        %v6848 = vpop.f32.mrf.mxu0
        %v6849 = vadd.f32 %v6653, %v6848
        %6850 = vmatmul.f32.gmra.mxu0 %v6739
        %v6851 = vpop.f32.mrf.mxu0
        %v6852 = vadd.f32 %v6653, %v6851
        %6853 = vmatmul.f32.gmra.mxu0 %v6742
        %v6854 = vpop.f32.mrf.mxu0
        %v6855 = vadd.f32 %v6653, %v6854
        %6856 = vmatmul.f32.gmra.mxu0 %v6745
        %v6857 = vpop.f32.mrf.mxu0
        %v6858 = vadd.f32 %v6653, %v6857
        %6859 = vmatmul.f32.gmra.mxu0 %v6748
        %v6860 = vpop.f32.mrf.mxu0
        %v6861 = vadd.f32 %v6653, %v6860
        %6862 = vdwg.mxu0
        %v6863 = vadd.f32 %v762, %v6768
        %v6864 = vadd.f32 %v763, %v6771
        %v6865 = vadd.f32 %v764, %v6774
        %v6866 = vadd.f32 %v765, %v6777
        %v6867 = vadd.f32 %v766, %v6780
        %v6868 = vadd.f32 %v767, %v6783
        %v6869 = vadd.f32 %v768, %v6786
        %v6870 = vadd.f32 %v769, %v6789
        %v6871 = vadd.f32 %v770, %v6792
        %v6872 = vadd.f32 %v771, %v6795
        %v6873 = vadd.f32 %v772, %v6798
        %v6874 = vadd.f32 %v773, %v6801
        %v6875 = vadd.f32 %v774, %v6804
        %v6876 = vadd.f32 %v775, %v6807
        %v6877 = vadd.f32 %v776, %v6810
        %v6878 = vadd.f32 %v777, %v6813
        %v6879 = vadd.f32 %v778, %v6816
        %v6880 = vadd.f32 %v779, %v6819
        %v6881 = vadd.f32 %v780, %v6822
        %v6882 = vadd.f32 %v781, %v6825
        %v6883 = vadd.f32 %v782, %v6828
        %v6884 = vadd.f32 %v783, %v6831
        %v6885 = vadd.f32 %v784, %v6834
        %v6886 = vadd.f32 %v785, %v6837
        %v6887 = vadd.f32 %v786, %v6840
        %v6888 = vadd.f32 %v787, %v6843
        %v6889 = vadd.f32 %v788, %v6846
        %v6890 = vadd.f32 %v789, %v6849
        %v6891 = vadd.f32 %v790, %v6852
        %v6892 = vadd.f32 %v791, %v6855
        %v6893 = vadd.f32 %v792, %v6858
        %v6894 = vadd.f32 %v793, %v6861
        %v6895 = vperm.slane %v245, 3
        %v6896 = vadd.f32 %v6863, %v6895
        %v6897 = vadd.f32 %v6864, %v6895
        %v6898 = vadd.f32 %v6865, %v6895
        %v6899 = vadd.f32 %v6866, %v6895
        %v6900 = vadd.f32 %v6867, %v6895
        %v6901 = vadd.f32 %v6868, %v6895
        %v6902 = vadd.f32 %v6869, %v6895
        %v6903 = vadd.f32 %v6870, %v6895
        %v6904 = vadd.f32 %v6871, %v6895
        %v6905 = vadd.f32 %v6872, %v6895
        %v6906 = vadd.f32 %v6873, %v6895
        %v6907 = vadd.f32 %v6874, %v6895
        %v6908 = vadd.f32 %v6875, %v6895
        %v6909 = vadd.f32 %v6876, %v6895
        %v6910 = vadd.f32 %v6877, %v6895
        %v6911 = vadd.f32 %v6878, %v6895
        %v6912 = vadd.f32 %v6879, %v6895
        %v6913 = vadd.f32 %v6880, %v6895
        %v6914 = vadd.f32 %v6881, %v6895
        %v6915 = vadd.f32 %v6882, %v6895
        %v6916 = vadd.f32 %v6883, %v6895
        %v6917 = vadd.f32 %v6884, %v6895
        %v6918 = vadd.f32 %v6885, %v6895
        %v6919 = vadd.f32 %v6886, %v6895
        %v6920 = vadd.f32 %v6887, %v6895
        %v6921 = vadd.f32 %v6888, %v6895
        %v6922 = vadd.f32 %v6889, %v6895
        %v6923 = vadd.f32 %v6890, %v6895
        %v6924 = vadd.f32 %v6891, %v6895
        %v6925 = vadd.f32 %v6892, %v6895
        %v6926 = vadd.f32 %v6893, %v6895
        %v6927 = vadd.f32 %v6894, %v6895
        %v6928 = vmax.f32 %v6896, 0.0
        %v6929 = vmax.f32 %v6897, 0.0
        %v6930 = vmax.f32 %v6898, 0.0
        %v6931 = vmax.f32 %v6899, 0.0
        %v6932 = vmax.f32 %v6900, 0.0
        %v6933 = vmax.f32 %v6901, 0.0
        %v6934 = vmax.f32 %v6902, 0.0
        %v6935 = vmax.f32 %v6903, 0.0
        %v6936 = vmax.f32 %v6904, 0.0
        %v6937 = vmax.f32 %v6905, 0.0
        %v6938 = vmax.f32 %v6906, 0.0
        %v6939 = vmax.f32 %v6907, 0.0
        %v6940 = vmax.f32 %v6908, 0.0
        %v6941 = vmax.f32 %v6909, 0.0
        %v6942 = vmax.f32 %v6910, 0.0
        %v6943 = vmax.f32 %v6911, 0.0
        %v6944 = vmax.f32 %v6912, 0.0
        %v6945 = vmax.f32 %v6913, 0.0
        %v6946 = vmax.f32 %v6914, 0.0
        %v6947 = vmax.f32 %v6915, 0.0
        %v6948 = vmax.f32 %v6916, 0.0
        %v6949 = vmax.f32 %v6917, 0.0
        %v6950 = vmax.f32 %v6918, 0.0
        %v6951 = vmax.f32 %v6919, 0.0
        %v6952 = vmax.f32 %v6920, 0.0
        %v6953 = vmax.f32 %v6921, 0.0
        %v6954 = vmax.f32 %v6922, 0.0
        %v6955 = vmax.f32 %v6923, 0.0
        %v6956 = vmax.f32 %v6924, 0.0
        %v6957 = vmax.f32 %v6925, 0.0
        %v6958 = vmax.f32 %v6926, 0.0
        %v6959 = vmax.f32 %v6927, 0.0
        %vm6960 = vcmask 130048
        %v6962 = vsel %vm6960, %v343, 0
        %v6965 = vsel %vm6960, %v344, 0
        %6967 = vmatpush.msra.mxu0 0.0
        %6968 = vmatpush.msra.mxu0 0.0
        %6969 = vmatpush.msra.mxu0 0.0
        %6970 = vmatpush.msra.mxu0 0.0
        %6971 = vmatpush.msra.mxu0 0.0
        %6972 = vmatpush.msra.mxu0 0.0
        %6973 = vmatpush.msra.mxu0 0.0
        %6974 = vmatpush.msra.mxu0 0.0
        %6975 = vmatpush.msra.mxu0 0.0
        %6976 = vmatpush.msra.mxu0 0.0
        %6977 = vmatpush.msra.mxu0 0.0
        %6978 = vmatpush.msra.mxu0 0.0
        %6979 = vmatpush.msra.mxu0 0.0
        %6980 = vmatpush.msra.mxu0 0.0
        %6981 = vmatpush.msra.mxu0 %v6929
        %6982 = vmatpush.msra.mxu0 %v6928
        %6983 = vmatmul.f32.gmra.mxu0 %v6962
        %v6984 = vpop.f32.mrf.mxu0
        %v6985 = vadd.f32 0.0, %v6984
        %6986 = vmatmul.f32.gmra.mxu0 %v6965
        %v6987 = vpop.f32.mrf.mxu0
        %v6988 = vadd.f32 0.0, %v6987
        %6989 = vdwg.mxu0
        %v6991 = vsel %vm6960, %v345, 0
        %v6994 = vsel %vm6960, %v346, 0
        %6996 = vmatpush.msra.mxu0 0.0
        %6997 = vmatpush.msra.mxu0 0.0
        %6998 = vmatpush.msra.mxu0 0.0
        %6999 = vmatpush.msra.mxu0 0.0
        %7000 = vmatpush.msra.mxu0 0.0
        %7001 = vmatpush.msra.mxu0 0.0
        %7002 = vmatpush.msra.mxu0 0.0
        %7003 = vmatpush.msra.mxu0 0.0
        %7004 = vmatpush.msra.mxu0 0.0
        %7005 = vmatpush.msra.mxu0 0.0
        %7006 = vmatpush.msra.mxu0 0.0
        %7007 = vmatpush.msra.mxu0 0.0
        %7008 = vmatpush.msra.mxu0 0.0
        %7009 = vmatpush.msra.mxu0 0.0
        %7010 = vmatpush.msra.mxu0 %v6931
        %7011 = vmatpush.msra.mxu0 %v6930
        %7012 = vmatmul.f32.gmra.mxu0 %v6991
        %v7013 = vpop.f32.mrf.mxu0
        %v7014 = vadd.f32 0.0, %v7013
        %7015 = vmatmul.f32.gmra.mxu0 %v6994
        %v7016 = vpop.f32.mrf.mxu0
        %v7017 = vadd.f32 0.0, %v7016
        %7018 = vdwg.mxu0
        %v7020 = vsel %vm6960, %v347, 0
        %v7023 = vsel %vm6960, %v348, 0
        %7025 = vmatpush.msra.mxu0 0.0
        %7026 = vmatpush.msra.mxu0 0.0
        %7027 = vmatpush.msra.mxu0 0.0
        %7028 = vmatpush.msra.mxu0 0.0
        %7029 = vmatpush.msra.mxu0 0.0
        %7030 = vmatpush.msra.mxu0 0.0
        %7031 = vmatpush.msra.mxu0 0.0
        %7032 = vmatpush.msra.mxu0 0.0
        %7033 = vmatpush.msra.mxu0 0.0
        %7034 = vmatpush.msra.mxu0 0.0
        %7035 = vmatpush.msra.mxu0 0.0
        %7036 = vmatpush.msra.mxu0 0.0
        %7037 = vmatpush.msra.mxu0 0.0
        %7038 = vmatpush.msra.mxu0 0.0
        %7039 = vmatpush.msra.mxu0 %v6933
        %7040 = vmatpush.msra.mxu0 %v6932
        %7041 = vmatmul.f32.gmra.mxu0 %v7020
        %v7042 = vpop.f32.mrf.mxu0
        %v7043 = vadd.f32 0.0, %v7042
        %7044 = vmatmul.f32.gmra.mxu0 %v7023
        %v7045 = vpop.f32.mrf.mxu0
        %v7046 = vadd.f32 0.0, %v7045
        %7047 = vdwg.mxu0
        %v7049 = vsel %vm6960, %v349, 0
        %v7052 = vsel %vm6960, %v350, 0
        %7054 = vmatpush.msra.mxu0 0.0
        %7055 = vmatpush.msra.mxu0 0.0
        %7056 = vmatpush.msra.mxu0 0.0
        %7057 = vmatpush.msra.mxu0 0.0
        %7058 = vmatpush.msra.mxu0 0.0
        %7059 = vmatpush.msra.mxu0 0.0
        %7060 = vmatpush.msra.mxu0 0.0
        %7061 = vmatpush.msra.mxu0 0.0
        %7062 = vmatpush.msra.mxu0 0.0
        %7063 = vmatpush.msra.mxu0 0.0
        %7064 = vmatpush.msra.mxu0 0.0
        %7065 = vmatpush.msra.mxu0 0.0
        %7066 = vmatpush.msra.mxu0 0.0
        %7067 = vmatpush.msra.mxu0 0.0
        %7068 = vmatpush.msra.mxu0 %v6935
        %7069 = vmatpush.msra.mxu0 %v6934
        %7070 = vmatmul.f32.gmra.mxu0 %v7049
        %v7071 = vpop.f32.mrf.mxu0
        %v7072 = vadd.f32 0.0, %v7071
        %7073 = vmatmul.f32.gmra.mxu0 %v7052
        %v7074 = vpop.f32.mrf.mxu0
        %v7075 = vadd.f32 0.0, %v7074
        %7076 = vdwg.mxu0
        %v7078 = vsel %vm6960, %v351, 0
        %v7081 = vsel %vm6960, %v352, 0
        %7083 = vmatpush.msra.mxu0 0.0
        %7084 = vmatpush.msra.mxu0 0.0
        %7085 = vmatpush.msra.mxu0 0.0
        %7086 = vmatpush.msra.mxu0 0.0
        %7087 = vmatpush.msra.mxu0 0.0
        %7088 = vmatpush.msra.mxu0 0.0
        %7089 = vmatpush.msra.mxu0 0.0
        %7090 = vmatpush.msra.mxu0 0.0
        %7091 = vmatpush.msra.mxu0 0.0
        %7092 = vmatpush.msra.mxu0 0.0
        %7093 = vmatpush.msra.mxu0 0.0
        %7094 = vmatpush.msra.mxu0 0.0
        %7095 = vmatpush.msra.mxu0 0.0
        %7096 = vmatpush.msra.mxu0 0.0
        %7097 = vmatpush.msra.mxu0 %v6937
        %7098 = vmatpush.msra.mxu0 %v6936
        %7099 = vmatmul.f32.gmra.mxu0 %v7078
        %v7100 = vpop.f32.mrf.mxu0
        %v7101 = vadd.f32 0.0, %v7100
        %7102 = vmatmul.f32.gmra.mxu0 %v7081
        %v7103 = vpop.f32.mrf.mxu0
        %v7104 = vadd.f32 0.0, %v7103
        %7105 = vdwg.mxu0
        %v7107 = vsel %vm6960, %v353, 0
        %v7110 = vsel %vm6960, %v354, 0
        %7112 = vmatpush.msra.mxu0 0.0
        %7113 = vmatpush.msra.mxu0 0.0
        %7114 = vmatpush.msra.mxu0 0.0
        %7115 = vmatpush.msra.mxu0 0.0
        %7116 = vmatpush.msra.mxu0 0.0
        %7117 = vmatpush.msra.mxu0 0.0
        %7118 = vmatpush.msra.mxu0 0.0
        %7119 = vmatpush.msra.mxu0 0.0
        %7120 = vmatpush.msra.mxu0 0.0
        %7121 = vmatpush.msra.mxu0 0.0
        %7122 = vmatpush.msra.mxu0 0.0
        %7123 = vmatpush.msra.mxu0 0.0
        %7124 = vmatpush.msra.mxu0 0.0
        %7125 = vmatpush.msra.mxu0 0.0
        %7126 = vmatpush.msra.mxu0 %v6939
        %7127 = vmatpush.msra.mxu0 %v6938
        %7128 = vmatmul.f32.gmra.mxu0 %v7107
        %v7129 = vpop.f32.mrf.mxu0
        %v7130 = vadd.f32 0.0, %v7129
        %7131 = vmatmul.f32.gmra.mxu0 %v7110
        %v7132 = vpop.f32.mrf.mxu0
        %v7133 = vadd.f32 0.0, %v7132
        %7134 = vdwg.mxu0
        %v7136 = vsel %vm6960, %v355, 0
        %v7139 = vsel %vm6960, %v356, 0
        %7141 = vmatpush.msra.mxu0 0.0
        %7142 = vmatpush.msra.mxu0 0.0
        %7143 = vmatpush.msra.mxu0 0.0
        %7144 = vmatpush.msra.mxu0 0.0
        %7145 = vmatpush.msra.mxu0 0.0
        %7146 = vmatpush.msra.mxu0 0.0
        %7147 = vmatpush.msra.mxu0 0.0
        %7148 = vmatpush.msra.mxu0 0.0
        %7149 = vmatpush.msra.mxu0 0.0
        %7150 = vmatpush.msra.mxu0 0.0
        %7151 = vmatpush.msra.mxu0 0.0
        %7152 = vmatpush.msra.mxu0 0.0
        %7153 = vmatpush.msra.mxu0 0.0
        %7154 = vmatpush.msra.mxu0 0.0
        %7155 = vmatpush.msra.mxu0 %v6941
        %7156 = vmatpush.msra.mxu0 %v6940
        %7157 = vmatmul.f32.gmra.mxu0 %v7136
        %v7158 = vpop.f32.mrf.mxu0
        %v7159 = vadd.f32 0.0, %v7158
        %7160 = vmatmul.f32.gmra.mxu0 %v7139
        %v7161 = vpop.f32.mrf.mxu0
        %v7162 = vadd.f32 0.0, %v7161
        %7163 = vdwg.mxu0
        %v7165 = vsel %vm6960, %v357, 0
        %v7168 = vsel %vm6960, %v358, 0
        %7170 = vmatpush.msra.mxu0 0.0
        %7171 = vmatpush.msra.mxu0 0.0
        %7172 = vmatpush.msra.mxu0 0.0
        %7173 = vmatpush.msra.mxu0 0.0
        %7174 = vmatpush.msra.mxu0 0.0
        %7175 = vmatpush.msra.mxu0 0.0
        %7176 = vmatpush.msra.mxu0 0.0
        %7177 = vmatpush.msra.mxu0 0.0
        %7178 = vmatpush.msra.mxu0 0.0
        %7179 = vmatpush.msra.mxu0 0.0
        %7180 = vmatpush.msra.mxu0 0.0
        %7181 = vmatpush.msra.mxu0 0.0
        %7182 = vmatpush.msra.mxu0 0.0
        %7183 = vmatpush.msra.mxu0 0.0
        %7184 = vmatpush.msra.mxu0 %v6943
        %7185 = vmatpush.msra.mxu0 %v6942
        %7186 = vmatmul.f32.gmra.mxu0 %v7165
        %v7187 = vpop.f32.mrf.mxu0
        %v7188 = vadd.f32 0.0, %v7187
        %7189 = vmatmul.f32.gmra.mxu0 %v7168
        %v7190 = vpop.f32.mrf.mxu0
        %v7191 = vadd.f32 0.0, %v7190
        %7192 = vdwg.mxu0
        %v7194 = vsel %vm6960, %v359, 0
        %v7197 = vsel %vm6960, %v360, 0
        %7199 = vmatpush.msra.mxu0 0.0
        %7200 = vmatpush.msra.mxu0 0.0
        %7201 = vmatpush.msra.mxu0 0.0
        %7202 = vmatpush.msra.mxu0 0.0
        %7203 = vmatpush.msra.mxu0 0.0
        %7204 = vmatpush.msra.mxu0 0.0
        %7205 = vmatpush.msra.mxu0 0.0
        %7206 = vmatpush.msra.mxu0 0.0
        %7207 = vmatpush.msra.mxu0 0.0
        %7208 = vmatpush.msra.mxu0 0.0
        %7209 = vmatpush.msra.mxu0 0.0
        %7210 = vmatpush.msra.mxu0 0.0
        %7211 = vmatpush.msra.mxu0 0.0
        %7212 = vmatpush.msra.mxu0 0.0
        %7213 = vmatpush.msra.mxu0 %v6945
        %7214 = vmatpush.msra.mxu0 %v6944
        %7215 = vmatmul.f32.gmra.mxu0 %v7194
        %v7216 = vpop.f32.mrf.mxu0
        %v7217 = vadd.f32 0.0, %v7216
        %7218 = vmatmul.f32.gmra.mxu0 %v7197
        %v7219 = vpop.f32.mrf.mxu0
        %v7220 = vadd.f32 0.0, %v7219
        %7221 = vdwg.mxu0
        %v7223 = vsel %vm6960, %v361, 0
        %v7226 = vsel %vm6960, %v362, 0
        %7228 = vmatpush.msra.mxu0 0.0
        %7229 = vmatpush.msra.mxu0 0.0
        %7230 = vmatpush.msra.mxu0 0.0
        %7231 = vmatpush.msra.mxu0 0.0
        %7232 = vmatpush.msra.mxu0 0.0
        %7233 = vmatpush.msra.mxu0 0.0
        %7234 = vmatpush.msra.mxu0 0.0
        %7235 = vmatpush.msra.mxu0 0.0
        %7236 = vmatpush.msra.mxu0 0.0
        %7237 = vmatpush.msra.mxu0 0.0
        %7238 = vmatpush.msra.mxu0 0.0
        %7239 = vmatpush.msra.mxu0 0.0
        %7240 = vmatpush.msra.mxu0 0.0
        %7241 = vmatpush.msra.mxu0 0.0
        %7242 = vmatpush.msra.mxu0 %v6947
        %7243 = vmatpush.msra.mxu0 %v6946
        %7244 = vmatmul.f32.gmra.mxu0 %v7223
        %v7245 = vpop.f32.mrf.mxu0
        %v7246 = vadd.f32 0.0, %v7245
        %7247 = vmatmul.f32.gmra.mxu0 %v7226
        %v7248 = vpop.f32.mrf.mxu0
        %v7249 = vadd.f32 0.0, %v7248
        %7250 = vdwg.mxu0
        %v7252 = vsel %vm6960, %v363, 0
        %v7255 = vsel %vm6960, %v364, 0
        %7257 = vmatpush.msra.mxu0 0.0
        %7258 = vmatpush.msra.mxu0 0.0
        %7259 = vmatpush.msra.mxu0 0.0
        %7260 = vmatpush.msra.mxu0 0.0
        %7261 = vmatpush.msra.mxu0 0.0
        %7262 = vmatpush.msra.mxu0 0.0
        %7263 = vmatpush.msra.mxu0 0.0
        %7264 = vmatpush.msra.mxu0 0.0
        %7265 = vmatpush.msra.mxu0 0.0
        %7266 = vmatpush.msra.mxu0 0.0
        %7267 = vmatpush.msra.mxu0 0.0
        %7268 = vmatpush.msra.mxu0 0.0
        %7269 = vmatpush.msra.mxu0 0.0
        %7270 = vmatpush.msra.mxu0 0.0
        %7271 = vmatpush.msra.mxu0 %v6949
        %7272 = vmatpush.msra.mxu0 %v6948
        %7273 = vmatmul.f32.gmra.mxu0 %v7252
        %v7274 = vpop.f32.mrf.mxu0
        %v7275 = vadd.f32 0.0, %v7274
        %7276 = vmatmul.f32.gmra.mxu0 %v7255
        %v7277 = vpop.f32.mrf.mxu0
        %v7278 = vadd.f32 0.0, %v7277
        %7279 = vdwg.mxu0
        %v7281 = vsel %vm6960, %v365, 0
        %v7284 = vsel %vm6960, %v366, 0
        %7286 = vmatpush.msra.mxu0 0.0
        %7287 = vmatpush.msra.mxu0 0.0
        %7288 = vmatpush.msra.mxu0 0.0
        %7289 = vmatpush.msra.mxu0 0.0
        %7290 = vmatpush.msra.mxu0 0.0
        %7291 = vmatpush.msra.mxu0 0.0
        %7292 = vmatpush.msra.mxu0 0.0
        %7293 = vmatpush.msra.mxu0 0.0
        %7294 = vmatpush.msra.mxu0 0.0
        %7295 = vmatpush.msra.mxu0 0.0
        %7296 = vmatpush.msra.mxu0 0.0
        %7297 = vmatpush.msra.mxu0 0.0
        %7298 = vmatpush.msra.mxu0 0.0
        %7299 = vmatpush.msra.mxu0 0.0
        %7300 = vmatpush.msra.mxu0 %v6951
        %7301 = vmatpush.msra.mxu0 %v6950
        %7302 = vmatmul.f32.gmra.mxu0 %v7281
        %v7303 = vpop.f32.mrf.mxu0
        %v7304 = vadd.f32 0.0, %v7303
        %7305 = vmatmul.f32.gmra.mxu0 %v7284
        %v7306 = vpop.f32.mrf.mxu0
        %v7307 = vadd.f32 0.0, %v7306
        %7308 = vdwg.mxu0
        %v7310 = vsel %vm6960, %v367, 0
        %v7313 = vsel %vm6960, %v368, 0
        %7315 = vmatpush.msra.mxu0 0.0
        %7316 = vmatpush.msra.mxu0 0.0
        %7317 = vmatpush.msra.mxu0 0.0
        %7318 = vmatpush.msra.mxu0 0.0
        %7319 = vmatpush.msra.mxu0 0.0
        %7320 = vmatpush.msra.mxu0 0.0
        %7321 = vmatpush.msra.mxu0 0.0
        %7322 = vmatpush.msra.mxu0 0.0
        %7323 = vmatpush.msra.mxu0 0.0
        %7324 = vmatpush.msra.mxu0 0.0
        %7325 = vmatpush.msra.mxu0 0.0
        %7326 = vmatpush.msra.mxu0 0.0
        %7327 = vmatpush.msra.mxu0 0.0
        %7328 = vmatpush.msra.mxu0 0.0
        %7329 = vmatpush.msra.mxu0 %v6953
        %7330 = vmatpush.msra.mxu0 %v6952
        %7331 = vmatmul.f32.gmra.mxu0 %v7310
        %v7332 = vpop.f32.mrf.mxu0
        %v7333 = vadd.f32 0.0, %v7332
        %7334 = vmatmul.f32.gmra.mxu0 %v7313
        %v7335 = vpop.f32.mrf.mxu0
        %v7336 = vadd.f32 0.0, %v7335
        %7337 = vdwg.mxu0
        %v7339 = vsel %vm6960, %v369, 0
        %v7342 = vsel %vm6960, %v370, 0
        %7344 = vmatpush.msra.mxu0 0.0
        %7345 = vmatpush.msra.mxu0 0.0
        %7346 = vmatpush.msra.mxu0 0.0
        %7347 = vmatpush.msra.mxu0 0.0
        %7348 = vmatpush.msra.mxu0 0.0
        %7349 = vmatpush.msra.mxu0 0.0
        %7350 = vmatpush.msra.mxu0 0.0
        %7351 = vmatpush.msra.mxu0 0.0
        %7352 = vmatpush.msra.mxu0 0.0
        %7353 = vmatpush.msra.mxu0 0.0
        %7354 = vmatpush.msra.mxu0 0.0
        %7355 = vmatpush.msra.mxu0 0.0
        %7356 = vmatpush.msra.mxu0 0.0
        %7357 = vmatpush.msra.mxu0 0.0
        %7358 = vmatpush.msra.mxu0 %v6955
        %7359 = vmatpush.msra.mxu0 %v6954
        %7360 = vmatmul.f32.gmra.mxu0 %v7339
        %v7361 = vpop.f32.mrf.mxu0
        %v7362 = vadd.f32 0.0, %v7361
        %7363 = vmatmul.f32.gmra.mxu0 %v7342
        %v7364 = vpop.f32.mrf.mxu0
        %v7365 = vadd.f32 0.0, %v7364
        %7366 = vdwg.mxu0
        %v7368 = vsel %vm6960, %v371, 0
        %v7371 = vsel %vm6960, %v372, 0
        %7373 = vmatpush.msra.mxu0 0.0
        %7374 = vmatpush.msra.mxu0 0.0
        %7375 = vmatpush.msra.mxu0 0.0
        %7376 = vmatpush.msra.mxu0 0.0
        %7377 = vmatpush.msra.mxu0 0.0
        %7378 = vmatpush.msra.mxu0 0.0
        %7379 = vmatpush.msra.mxu0 0.0
        %7380 = vmatpush.msra.mxu0 0.0
        %7381 = vmatpush.msra.mxu0 0.0
        %7382 = vmatpush.msra.mxu0 0.0
        %7383 = vmatpush.msra.mxu0 0.0
        %7384 = vmatpush.msra.mxu0 0.0
        %7385 = vmatpush.msra.mxu0 0.0
        %7386 = vmatpush.msra.mxu0 0.0
        %7387 = vmatpush.msra.mxu0 %v6957
        %7388 = vmatpush.msra.mxu0 %v6956
        %7389 = vmatmul.f32.gmra.mxu0 %v7368
        %v7390 = vpop.f32.mrf.mxu0
        %v7391 = vadd.f32 0.0, %v7390
        %7392 = vmatmul.f32.gmra.mxu0 %v7371
        %v7393 = vpop.f32.mrf.mxu0
        %v7394 = vadd.f32 0.0, %v7393
        %7395 = vdwg.mxu0
        %v7397 = vsel %vm6960, %v373, 0
        %v7400 = vsel %vm6960, %v374, 0
        %7402 = vmatpush.msra.mxu0 0.0
        %7403 = vmatpush.msra.mxu0 0.0
        %7404 = vmatpush.msra.mxu0 0.0
        %7405 = vmatpush.msra.mxu0 0.0
        %7406 = vmatpush.msra.mxu0 0.0
        %7407 = vmatpush.msra.mxu0 0.0
        %7408 = vmatpush.msra.mxu0 0.0
        %7409 = vmatpush.msra.mxu0 0.0
        %7410 = vmatpush.msra.mxu0 0.0
        %7411 = vmatpush.msra.mxu0 0.0
        %7412 = vmatpush.msra.mxu0 0.0
        %7413 = vmatpush.msra.mxu0 0.0
        %7414 = vmatpush.msra.mxu0 0.0
        %7415 = vmatpush.msra.mxu0 0.0
        %7416 = vmatpush.msra.mxu0 %v6959
        %7417 = vmatpush.msra.mxu0 %v6958
        %7418 = vmatmul.f32.gmra.mxu0 %v7397
        %v7419 = vpop.f32.mrf.mxu0
        %v7420 = vadd.f32 0.0, %v7419
        %7421 = vmatmul.f32.gmra.mxu0 %v7400
        %v7422 = vpop.f32.mrf.mxu0
        %v7423 = vadd.f32 0.0, %v7422
        %7424 = vdwg.mxu0
        %v7426 = vsel %vm5660, %v6985, 0
        %v7429 = vsel %vm5660, %v6988, 0
        %v7432 = vsel %vm5660, %v7014, 0
        %v7435 = vsel %vm5660, %v7017, 0
        %v7438 = vsel %vm5660, %v7043, 0
        %v7441 = vsel %vm5660, %v7046, 0
        %v7444 = vsel %vm5660, %v7072, 0
        %v7447 = vsel %vm5660, %v7075, 0
        %v7450 = vsel %vm5660, %v7101, 0
        %v7453 = vsel %vm5660, %v7104, 0
        %v7456 = vsel %vm5660, %v7130, 0
        %v7459 = vsel %vm5660, %v7133, 0
        %v7462 = vsel %vm5660, %v7159, 0
        %v7465 = vsel %vm5660, %v7162, 0
        %v7468 = vsel %vm5660, %v7188, 0
        %v7471 = vsel %vm5660, %v7191, 0
        %v7474 = vsel %vm5660, %v7217, 0
        %v7477 = vsel %vm5660, %v7220, 0
        %v7480 = vsel %vm5660, %v7246, 0
        %v7483 = vsel %vm5660, %v7249, 0
        %v7486 = vsel %vm5660, %v7275, 0
        %v7489 = vsel %vm5660, %v7278, 0
        %v7492 = vsel %vm5660, %v7304, 0
        %v7495 = vsel %vm5660, %v7307, 0
        %v7498 = vsel %vm5660, %v7333, 0
        %v7501 = vsel %vm5660, %v7336, 0
        %v7504 = vsel %vm5660, %v7362, 0
        %v7507 = vsel %vm5660, %v7365, 0
        %v7510 = vsel %vm5660, %v7391, 0
        %v7513 = vsel %vm5660, %v7394, 0
        %v7516 = vsel %vm5660, %v7420, 0
        %v7519 = vsel %vm5660, %v7423, 0
        %7521 = vmatpush.msra.mxu0 0.0
        %7522 = vmatpush.msra.mxu0 0.0
        %7523 = vmatpush.msra.mxu0 0.0
        %7524 = vmatpush.msra.mxu0 0.0
        %7525 = vmatpush.msra.mxu0 0.0
        %7526 = vmatpush.msra.mxu0 0.0
        %7527 = vmatpush.msra.mxu0 0.0
        %7528 = vmatpush.msra.mxu0 0.0
        %7529 = vmatpush.msra.mxu0 0.0
        %7530 = vmatpush.msra.mxu0 0.0
        %7531 = vmatpush.msra.mxu0 0.0
        %7532 = vmatpush.msra.mxu0 0.0
        %7533 = vmatpush.msra.mxu0 %v229
        %7534 = vmatpush.msra.mxu0 %v228
        %7535 = vmatpush.msra.mxu0 %v227
        %7536 = vmatpush.msra.mxu0 %v226
        %7537 = vmatmul.f32.gmra.mxu0 %v7426
        %v7538 = vpop.f32.mrf.mxu0
        %v7539 = vadd.f32 %v6895, %v7538
        %7540 = vmatmul.f32.gmra.mxu0 %v7429
        %v7541 = vpop.f32.mrf.mxu0
        %v7542 = vadd.f32 %v6895, %v7541
        %7543 = vmatmul.f32.gmra.mxu0 %v7432
        %v7544 = vpop.f32.mrf.mxu0
        %v7545 = vadd.f32 %v6895, %v7544
        %7546 = vmatmul.f32.gmra.mxu0 %v7435
        %v7547 = vpop.f32.mrf.mxu0
        %v7548 = vadd.f32 %v6895, %v7547
        %7549 = vmatmul.f32.gmra.mxu0 %v7438
        %v7550 = vpop.f32.mrf.mxu0
        %v7551 = vadd.f32 %v6895, %v7550
        %7552 = vmatmul.f32.gmra.mxu0 %v7441
        %v7553 = vpop.f32.mrf.mxu0
        %v7554 = vadd.f32 %v6895, %v7553
        %7555 = vmatmul.f32.gmra.mxu0 %v7444
        %v7556 = vpop.f32.mrf.mxu0
        %v7557 = vadd.f32 %v6895, %v7556
        %7558 = vmatmul.f32.gmra.mxu0 %v7447
        %v7559 = vpop.f32.mrf.mxu0
        %v7560 = vadd.f32 %v6895, %v7559
        %7561 = vmatmul.f32.gmra.mxu0 %v7450
        %v7562 = vpop.f32.mrf.mxu0
        %v7563 = vadd.f32 %v6895, %v7562
        %7564 = vmatmul.f32.gmra.mxu0 %v7453
        %v7565 = vpop.f32.mrf.mxu0
        %v7566 = vadd.f32 %v6895, %v7565
        %7567 = vmatmul.f32.gmra.mxu0 %v7456
        %v7568 = vpop.f32.mrf.mxu0
        %v7569 = vadd.f32 %v6895, %v7568
        %7570 = vmatmul.f32.gmra.mxu0 %v7459
        %v7571 = vpop.f32.mrf.mxu0
        %v7572 = vadd.f32 %v6895, %v7571
        %7573 = vmatmul.f32.gmra.mxu0 %v7462
        %v7574 = vpop.f32.mrf.mxu0
        %v7575 = vadd.f32 %v6895, %v7574
        %7576 = vmatmul.f32.gmra.mxu0 %v7465
        %v7577 = vpop.f32.mrf.mxu0
        %v7578 = vadd.f32 %v6895, %v7577
        %7579 = vmatmul.f32.gmra.mxu0 %v7468
        %v7580 = vpop.f32.mrf.mxu0
        %v7581 = vadd.f32 %v6895, %v7580
        %7582 = vmatmul.f32.gmra.mxu0 %v7471
        %v7583 = vpop.f32.mrf.mxu0
        %v7584 = vadd.f32 %v6895, %v7583
        %7585 = vmatmul.f32.gmra.mxu0 %v7474
        %v7586 = vpop.f32.mrf.mxu0
        %v7587 = vadd.f32 %v6895, %v7586
        %7588 = vmatmul.f32.gmra.mxu0 %v7477
        %v7589 = vpop.f32.mrf.mxu0
        %v7590 = vadd.f32 %v6895, %v7589
        %7591 = vmatmul.f32.gmra.mxu0 %v7480
        %v7592 = vpop.f32.mrf.mxu0
        %v7593 = vadd.f32 %v6895, %v7592
        %7594 = vmatmul.f32.gmra.mxu0 %v7483
        %v7595 = vpop.f32.mrf.mxu0
        %v7596 = vadd.f32 %v6895, %v7595
        %7597 = vmatmul.f32.gmra.mxu0 %v7486
        %v7598 = vpop.f32.mrf.mxu0
        %v7599 = vadd.f32 %v6895, %v7598
        %7600 = vmatmul.f32.gmra.mxu0 %v7489
        %v7601 = vpop.f32.mrf.mxu0
        %v7602 = vadd.f32 %v6895, %v7601
        %7603 = vmatmul.f32.gmra.mxu0 %v7492
        %v7604 = vpop.f32.mrf.mxu0
        %v7605 = vadd.f32 %v6895, %v7604
        %7606 = vmatmul.f32.gmra.mxu0 %v7495
        %v7607 = vpop.f32.mrf.mxu0
        %v7608 = vadd.f32 %v6895, %v7607
        %7609 = vmatmul.f32.gmra.mxu0 %v7498
        %v7610 = vpop.f32.mrf.mxu0
        %v7611 = vadd.f32 %v6895, %v7610
        %7612 = vmatmul.f32.gmra.mxu0 %v7501
        %v7613 = vpop.f32.mrf.mxu0
        %v7614 = vadd.f32 %v6895, %v7613
        %7615 = vmatmul.f32.gmra.mxu0 %v7504
        %v7616 = vpop.f32.mrf.mxu0
        %v7617 = vadd.f32 %v6895, %v7616
        %7618 = vmatmul.f32.gmra.mxu0 %v7507
        %v7619 = vpop.f32.mrf.mxu0
        %v7620 = vadd.f32 %v6895, %v7619
        %7621 = vmatmul.f32.gmra.mxu0 %v7510
        %v7622 = vpop.f32.mrf.mxu0
        %v7623 = vadd.f32 %v6895, %v7622
        %7624 = vmatmul.f32.gmra.mxu0 %v7513
        %v7625 = vpop.f32.mrf.mxu0
        %v7626 = vadd.f32 %v6895, %v7625
        %7627 = vmatmul.f32.gmra.mxu0 %v7516
        %v7628 = vpop.f32.mrf.mxu0
        %v7629 = vadd.f32 %v6895, %v7628
        %7630 = vmatmul.f32.gmra.mxu0 %v7519
        %v7631 = vpop.f32.mrf.mxu0
        %v7632 = vadd.f32 %v6895, %v7631
        %7633 = vdwg.mxu0
        %v7634 = vadd.f32 %v6863, %v7539
        %v7635 = vadd.f32 %v6864, %v7542
        %v7636 = vadd.f32 %v6865, %v7545
        %v7637 = vadd.f32 %v6866, %v7548
        %v7638 = vadd.f32 %v6867, %v7551
        %v7639 = vadd.f32 %v6868, %v7554
        %v7640 = vadd.f32 %v6869, %v7557
        %v7641 = vadd.f32 %v6870, %v7560
        %v7642 = vadd.f32 %v6871, %v7563
        %v7643 = vadd.f32 %v6872, %v7566
        %v7644 = vadd.f32 %v6873, %v7569
        %v7645 = vadd.f32 %v6874, %v7572
        %v7646 = vadd.f32 %v6875, %v7575
        %v7647 = vadd.f32 %v6876, %v7578
        %v7648 = vadd.f32 %v6877, %v7581
        %v7649 = vadd.f32 %v6878, %v7584
        %v7650 = vadd.f32 %v6879, %v7587
        %v7651 = vadd.f32 %v6880, %v7590
        %v7652 = vadd.f32 %v6881, %v7593
        %v7653 = vadd.f32 %v6882, %v7596
        %v7654 = vadd.f32 %v6883, %v7599
        %v7655 = vadd.f32 %v6884, %v7602
        %v7656 = vadd.f32 %v6885, %v7605
        %v7657 = vadd.f32 %v6886, %v7608
        %v7658 = vadd.f32 %v6887, %v7611
        %v7659 = vadd.f32 %v6888, %v7614
        %v7660 = vadd.f32 %v6889, %v7617
        %v7661 = vadd.f32 %v6890, %v7620
        %v7662 = vadd.f32 %v6891, %v7623
        %v7663 = vadd.f32 %v6892, %v7626
        %v7664 = vadd.f32 %v6893, %v7629
        %v7665 = vadd.f32 %v6894, %v7632
        %v7666 = vmax.f32 %v7634, 0.0
        %v7667 = vmax.f32 %v7635, 0.0
        %v7668 = vmax.f32 %v7636, 0.0
        %v7669 = vmax.f32 %v7637, 0.0
        %v7670 = vmax.f32 %v7638, 0.0
        %v7671 = vmax.f32 %v7639, 0.0
        %v7672 = vmax.f32 %v7640, 0.0
        %v7673 = vmax.f32 %v7641, 0.0
        %v7674 = vmax.f32 %v7642, 0.0
        %v7675 = vmax.f32 %v7643, 0.0
        %v7676 = vmax.f32 %v7644, 0.0
        %v7677 = vmax.f32 %v7645, 0.0
        %v7678 = vmax.f32 %v7646, 0.0
        %v7679 = vmax.f32 %v7647, 0.0
        %v7680 = vmax.f32 %v7648, 0.0
        %v7681 = vmax.f32 %v7649, 0.0
        %v7682 = vmax.f32 %v7650, 0.0
        %v7683 = vmax.f32 %v7651, 0.0
        %v7684 = vmax.f32 %v7652, 0.0
        %v7685 = vmax.f32 %v7653, 0.0
        %v7686 = vmax.f32 %v7654, 0.0
        %v7687 = vmax.f32 %v7655, 0.0
        %v7688 = vmax.f32 %v7656, 0.0
        %v7689 = vmax.f32 %v7657, 0.0
        %v7690 = vmax.f32 %v7658, 0.0
        %v7691 = vmax.f32 %v7659, 0.0
        %v7692 = vmax.f32 %v7660, 0.0
        %v7693 = vmax.f32 %v7661, 0.0
        %v7694 = vmax.f32 %v7662, 0.0
        %v7695 = vmax.f32 %v7663, 0.0
        %v7696 = vmax.f32 %v7664, 0.0
        %v7697 = vmax.f32 %v7665, 0.0
        %7698 = vmatpush.msra.mxu0 0.0
        %7699 = vmatpush.msra.mxu0 0.0
        %7700 = vmatpush.msra.mxu0 0.0
        %7701 = vmatpush.msra.mxu0 0.0
        %7702 = vmatpush.msra.mxu0 0.0
        %7703 = vmatpush.msra.mxu0 0.0
        %7704 = vmatpush.msra.mxu0 0.0
        %7705 = vmatpush.msra.mxu0 0.0
        %7706 = vmatpush.msra.mxu0 0.0
        %7707 = vmatpush.msra.mxu0 0.0
        %7708 = vmatpush.msra.mxu0 0.0
        %7709 = vmatpush.msra.mxu0 0.0
        %7710 = vmatpush.msra.mxu0 0.0
        %7711 = vmatpush.msra.mxu0 0.0
        %7712 = vmatpush.msra.mxu0 %v7667
        %7713 = vmatpush.msra.mxu0 %v7666
        %7714 = vmatmul.f32.gmra.mxu0 %v6962
        %v7715 = vpop.f32.mrf.mxu0
        %v7716 = vadd.f32 0.0, %v7715
        %7717 = vmatmul.f32.gmra.mxu0 %v6965
        %v7718 = vpop.f32.mrf.mxu0
        %v7719 = vadd.f32 0.0, %v7718
        %7720 = vdwg.mxu0
        %7721 = vmatpush.msra.mxu0 0.0
        %7722 = vmatpush.msra.mxu0 0.0
        %7723 = vmatpush.msra.mxu0 0.0
        %7724 = vmatpush.msra.mxu0 0.0
        %7725 = vmatpush.msra.mxu0 0.0
        %7726 = vmatpush.msra.mxu0 0.0
        %7727 = vmatpush.msra.mxu0 0.0
        %7728 = vmatpush.msra.mxu0 0.0
        %7729 = vmatpush.msra.mxu0 0.0
        %7730 = vmatpush.msra.mxu0 0.0
        %7731 = vmatpush.msra.mxu0 0.0
        %7732 = vmatpush.msra.mxu0 0.0
        %7733 = vmatpush.msra.mxu0 0.0
        %7734 = vmatpush.msra.mxu0 0.0
        %7735 = vmatpush.msra.mxu0 %v7669
        %7736 = vmatpush.msra.mxu0 %v7668
        %7737 = vmatmul.f32.gmra.mxu0 %v6991
        %v7738 = vpop.f32.mrf.mxu0
        %v7739 = vadd.f32 0.0, %v7738
        %7740 = vmatmul.f32.gmra.mxu0 %v6994
        %v7741 = vpop.f32.mrf.mxu0
        %v7742 = vadd.f32 0.0, %v7741
        %7743 = vdwg.mxu0
        %7744 = vmatpush.msra.mxu0 0.0
        %7745 = vmatpush.msra.mxu0 0.0
        %7746 = vmatpush.msra.mxu0 0.0
        %7747 = vmatpush.msra.mxu0 0.0
        %7748 = vmatpush.msra.mxu0 0.0
        %7749 = vmatpush.msra.mxu0 0.0
        %7750 = vmatpush.msra.mxu0 0.0
        %7751 = vmatpush.msra.mxu0 0.0
        %7752 = vmatpush.msra.mxu0 0.0
        %7753 = vmatpush.msra.mxu0 0.0
        %7754 = vmatpush.msra.mxu0 0.0
        %7755 = vmatpush.msra.mxu0 0.0
        %7756 = vmatpush.msra.mxu0 0.0
        %7757 = vmatpush.msra.mxu0 0.0
        %7758 = vmatpush.msra.mxu0 %v7671
        %7759 = vmatpush.msra.mxu0 %v7670
        %7760 = vmatmul.f32.gmra.mxu0 %v7020
        %v7761 = vpop.f32.mrf.mxu0
        %v7762 = vadd.f32 0.0, %v7761
        %7763 = vmatmul.f32.gmra.mxu0 %v7023
        %v7764 = vpop.f32.mrf.mxu0
        %v7765 = vadd.f32 0.0, %v7764
        %7766 = vdwg.mxu0
        %7767 = vmatpush.msra.mxu0 0.0
        %7768 = vmatpush.msra.mxu0 0.0
        %7769 = vmatpush.msra.mxu0 0.0
        %7770 = vmatpush.msra.mxu0 0.0
        %7771 = vmatpush.msra.mxu0 0.0
        %7772 = vmatpush.msra.mxu0 0.0
        %7773 = vmatpush.msra.mxu0 0.0
        %7774 = vmatpush.msra.mxu0 0.0
        %7775 = vmatpush.msra.mxu0 0.0
        %7776 = vmatpush.msra.mxu0 0.0
        %7777 = vmatpush.msra.mxu0 0.0
        %7778 = vmatpush.msra.mxu0 0.0
        %7779 = vmatpush.msra.mxu0 0.0
        %7780 = vmatpush.msra.mxu0 0.0
        %7781 = vmatpush.msra.mxu0 %v7673
        %7782 = vmatpush.msra.mxu0 %v7672
        %7783 = vmatmul.f32.gmra.mxu0 %v7049
        %v7784 = vpop.f32.mrf.mxu0
        %v7785 = vadd.f32 0.0, %v7784
        %7786 = vmatmul.f32.gmra.mxu0 %v7052
        %v7787 = vpop.f32.mrf.mxu0
        %v7788 = vadd.f32 0.0, %v7787
        %7789 = vdwg.mxu0
        %7790 = vmatpush.msra.mxu0 0.0
        %7791 = vmatpush.msra.mxu0 0.0
        %7792 = vmatpush.msra.mxu0 0.0
        %7793 = vmatpush.msra.mxu0 0.0
        %7794 = vmatpush.msra.mxu0 0.0
        %7795 = vmatpush.msra.mxu0 0.0
        %7796 = vmatpush.msra.mxu0 0.0
        %7797 = vmatpush.msra.mxu0 0.0
        %7798 = vmatpush.msra.mxu0 0.0
        %7799 = vmatpush.msra.mxu0 0.0
        %7800 = vmatpush.msra.mxu0 0.0
        %7801 = vmatpush.msra.mxu0 0.0
        %7802 = vmatpush.msra.mxu0 0.0
        %7803 = vmatpush.msra.mxu0 0.0
        %7804 = vmatpush.msra.mxu0 %v7675
        %7805 = vmatpush.msra.mxu0 %v7674
        %7806 = vmatmul.f32.gmra.mxu0 %v7078
        %v7807 = vpop.f32.mrf.mxu0
        %v7808 = vadd.f32 0.0, %v7807
        %7809 = vmatmul.f32.gmra.mxu0 %v7081
        %v7810 = vpop.f32.mrf.mxu0
        %v7811 = vadd.f32 0.0, %v7810
        %7812 = vdwg.mxu0
        %7813 = vmatpush.msra.mxu0 0.0
        %7814 = vmatpush.msra.mxu0 0.0
        %7815 = vmatpush.msra.mxu0 0.0
        %7816 = vmatpush.msra.mxu0 0.0
        %7817 = vmatpush.msra.mxu0 0.0
        %7818 = vmatpush.msra.mxu0 0.0
        %7819 = vmatpush.msra.mxu0 0.0
        %7820 = vmatpush.msra.mxu0 0.0
        %7821 = vmatpush.msra.mxu0 0.0
        %7822 = vmatpush.msra.mxu0 0.0
        %7823 = vmatpush.msra.mxu0 0.0
        %7824 = vmatpush.msra.mxu0 0.0
        %7825 = vmatpush.msra.mxu0 0.0
        %7826 = vmatpush.msra.mxu0 0.0
        %7827 = vmatpush.msra.mxu0 %v7677
        %7828 = vmatpush.msra.mxu0 %v7676
        %7829 = vmatmul.f32.gmra.mxu0 %v7107
        %v7830 = vpop.f32.mrf.mxu0
        %v7831 = vadd.f32 0.0, %v7830
        %7832 = vmatmul.f32.gmra.mxu0 %v7110
        %v7833 = vpop.f32.mrf.mxu0
        %v7834 = vadd.f32 0.0, %v7833
        %7835 = vdwg.mxu0
        %7836 = vmatpush.msra.mxu0 0.0
        %7837 = vmatpush.msra.mxu0 0.0
        %7838 = vmatpush.msra.mxu0 0.0
        %7839 = vmatpush.msra.mxu0 0.0
        %7840 = vmatpush.msra.mxu0 0.0
        %7841 = vmatpush.msra.mxu0 0.0
        %7842 = vmatpush.msra.mxu0 0.0
        %7843 = vmatpush.msra.mxu0 0.0
        %7844 = vmatpush.msra.mxu0 0.0
        %7845 = vmatpush.msra.mxu0 0.0
        %7846 = vmatpush.msra.mxu0 0.0
        %7847 = vmatpush.msra.mxu0 0.0
        %7848 = vmatpush.msra.mxu0 0.0
        %7849 = vmatpush.msra.mxu0 0.0
        %7850 = vmatpush.msra.mxu0 %v7679
        %7851 = vmatpush.msra.mxu0 %v7678
        %7852 = vmatmul.f32.gmra.mxu0 %v7136
        %v7853 = vpop.f32.mrf.mxu0
        %v7854 = vadd.f32 0.0, %v7853
        %7855 = vmatmul.f32.gmra.mxu0 %v7139
        %v7856 = vpop.f32.mrf.mxu0
        %v7857 = vadd.f32 0.0, %v7856
        %7858 = vdwg.mxu0
        %7859 = vmatpush.msra.mxu0 0.0
        %7860 = vmatpush.msra.mxu0 0.0
        %7861 = vmatpush.msra.mxu0 0.0
        %7862 = vmatpush.msra.mxu0 0.0
        %7863 = vmatpush.msra.mxu0 0.0
        %7864 = vmatpush.msra.mxu0 0.0
        %7865 = vmatpush.msra.mxu0 0.0
        %7866 = vmatpush.msra.mxu0 0.0
        %7867 = vmatpush.msra.mxu0 0.0
        %7868 = vmatpush.msra.mxu0 0.0
        %7869 = vmatpush.msra.mxu0 0.0
        %7870 = vmatpush.msra.mxu0 0.0
        %7871 = vmatpush.msra.mxu0 0.0
        %7872 = vmatpush.msra.mxu0 0.0
        %7873 = vmatpush.msra.mxu0 %v7681
        %7874 = vmatpush.msra.mxu0 %v7680
        %7875 = vmatmul.f32.gmra.mxu0 %v7165
        %v7876 = vpop.f32.mrf.mxu0
        %v7877 = vadd.f32 0.0, %v7876
        %7878 = vmatmul.f32.gmra.mxu0 %v7168
        %v7879 = vpop.f32.mrf.mxu0
        %v7880 = vadd.f32 0.0, %v7879
        %7881 = vdwg.mxu0
        %7882 = vmatpush.msra.mxu0 0.0
        %7883 = vmatpush.msra.mxu0 0.0
        %7884 = vmatpush.msra.mxu0 0.0
        %7885 = vmatpush.msra.mxu0 0.0
        %7886 = vmatpush.msra.mxu0 0.0
        %7887 = vmatpush.msra.mxu0 0.0
        %7888 = vmatpush.msra.mxu0 0.0
        %7889 = vmatpush.msra.mxu0 0.0
        %7890 = vmatpush.msra.mxu0 0.0
        %7891 = vmatpush.msra.mxu0 0.0
        %7892 = vmatpush.msra.mxu0 0.0
        %7893 = vmatpush.msra.mxu0 0.0
        %7894 = vmatpush.msra.mxu0 0.0
        %7895 = vmatpush.msra.mxu0 0.0
        %7896 = vmatpush.msra.mxu0 %v7683
        %7897 = vmatpush.msra.mxu0 %v7682
        %7898 = vmatmul.f32.gmra.mxu0 %v7194
        %v7899 = vpop.f32.mrf.mxu0
        %v7900 = vadd.f32 0.0, %v7899
        %7901 = vmatmul.f32.gmra.mxu0 %v7197
        %v7902 = vpop.f32.mrf.mxu0
        %v7903 = vadd.f32 0.0, %v7902
        %7904 = vdwg.mxu0
        %7905 = vmatpush.msra.mxu0 0.0
        %7906 = vmatpush.msra.mxu0 0.0
        %7907 = vmatpush.msra.mxu0 0.0
        %7908 = vmatpush.msra.mxu0 0.0
        %7909 = vmatpush.msra.mxu0 0.0
        %7910 = vmatpush.msra.mxu0 0.0
        %7911 = vmatpush.msra.mxu0 0.0
        %7912 = vmatpush.msra.mxu0 0.0
        %7913 = vmatpush.msra.mxu0 0.0
        %7914 = vmatpush.msra.mxu0 0.0
        %7915 = vmatpush.msra.mxu0 0.0
        %7916 = vmatpush.msra.mxu0 0.0
        %7917 = vmatpush.msra.mxu0 0.0
        %7918 = vmatpush.msra.mxu0 0.0
        %7919 = vmatpush.msra.mxu0 %v7685
        %7920 = vmatpush.msra.mxu0 %v7684
        %7921 = vmatmul.f32.gmra.mxu0 %v7223
        %v7922 = vpop.f32.mrf.mxu0
        %v7923 = vadd.f32 0.0, %v7922
        %7924 = vmatmul.f32.gmra.mxu0 %v7226
        %v7925 = vpop.f32.mrf.mxu0
        %v7926 = vadd.f32 0.0, %v7925
        %7927 = vdwg.mxu0
        %7928 = vmatpush.msra.mxu0 0.0
        %7929 = vmatpush.msra.mxu0 0.0
        %7930 = vmatpush.msra.mxu0 0.0
        %7931 = vmatpush.msra.mxu0 0.0
        %7932 = vmatpush.msra.mxu0 0.0
        %7933 = vmatpush.msra.mxu0 0.0
        %7934 = vmatpush.msra.mxu0 0.0
        %7935 = vmatpush.msra.mxu0 0.0
        %7936 = vmatpush.msra.mxu0 0.0
        %7937 = vmatpush.msra.mxu0 0.0
        %7938 = vmatpush.msra.mxu0 0.0
        %7939 = vmatpush.msra.mxu0 0.0
        %7940 = vmatpush.msra.mxu0 0.0
        %7941 = vmatpush.msra.mxu0 0.0
        %7942 = vmatpush.msra.mxu0 %v7687
        %7943 = vmatpush.msra.mxu0 %v7686
        %7944 = vmatmul.f32.gmra.mxu0 %v7252
        %v7945 = vpop.f32.mrf.mxu0
        %v7946 = vadd.f32 0.0, %v7945
        %7947 = vmatmul.f32.gmra.mxu0 %v7255
        %v7948 = vpop.f32.mrf.mxu0
        %v7949 = vadd.f32 0.0, %v7948
        %7950 = vdwg.mxu0
        %7951 = vmatpush.msra.mxu0 0.0
        %7952 = vmatpush.msra.mxu0 0.0
        %7953 = vmatpush.msra.mxu0 0.0
        %7954 = vmatpush.msra.mxu0 0.0
        %7955 = vmatpush.msra.mxu0 0.0
        %7956 = vmatpush.msra.mxu0 0.0
        %7957 = vmatpush.msra.mxu0 0.0
        %7958 = vmatpush.msra.mxu0 0.0
        %7959 = vmatpush.msra.mxu0 0.0
        %7960 = vmatpush.msra.mxu0 0.0
        %7961 = vmatpush.msra.mxu0 0.0
        %7962 = vmatpush.msra.mxu0 0.0
        %7963 = vmatpush.msra.mxu0 0.0
        %7964 = vmatpush.msra.mxu0 0.0
        %7965 = vmatpush.msra.mxu0 %v7689
        %7966 = vmatpush.msra.mxu0 %v7688
        %7967 = vmatmul.f32.gmra.mxu0 %v7281
        %v7968 = vpop.f32.mrf.mxu0
        %v7969 = vadd.f32 0.0, %v7968
        %7970 = vmatmul.f32.gmra.mxu0 %v7284
        %v7971 = vpop.f32.mrf.mxu0
        %v7972 = vadd.f32 0.0, %v7971
        %7973 = vdwg.mxu0
        %7974 = vmatpush.msra.mxu0 0.0
        %7975 = vmatpush.msra.mxu0 0.0
        %7976 = vmatpush.msra.mxu0 0.0
        %7977 = vmatpush.msra.mxu0 0.0
        %7978 = vmatpush.msra.mxu0 0.0
        %7979 = vmatpush.msra.mxu0 0.0
        %7980 = vmatpush.msra.mxu0 0.0
        %7981 = vmatpush.msra.mxu0 0.0
        %7982 = vmatpush.msra.mxu0 0.0
        %7983 = vmatpush.msra.mxu0 0.0
        %7984 = vmatpush.msra.mxu0 0.0
        %7985 = vmatpush.msra.mxu0 0.0
        %7986 = vmatpush.msra.mxu0 0.0
        %7987 = vmatpush.msra.mxu0 0.0
        %7988 = vmatpush.msra.mxu0 %v7691
        %7989 = vmatpush.msra.mxu0 %v7690
        %7990 = vmatmul.f32.gmra.mxu0 %v7310
        %v7991 = vpop.f32.mrf.mxu0
        %v7992 = vadd.f32 0.0, %v7991
        %7993 = vmatmul.f32.gmra.mxu0 %v7313
        %v7994 = vpop.f32.mrf.mxu0
        %v7995 = vadd.f32 0.0, %v7994
        %7996 = vdwg.mxu0
        %7997 = vmatpush.msra.mxu0 0.0
        %7998 = vmatpush.msra.mxu0 0.0
        %7999 = vmatpush.msra.mxu0 0.0
        %8000 = vmatpush.msra.mxu0 0.0
        %8001 = vmatpush.msra.mxu0 0.0
        %8002 = vmatpush.msra.mxu0 0.0
        %8003 = vmatpush.msra.mxu0 0.0
        %8004 = vmatpush.msra.mxu0 0.0
        %8005 = vmatpush.msra.mxu0 0.0
        %8006 = vmatpush.msra.mxu0 0.0
        %8007 = vmatpush.msra.mxu0 0.0
        %8008 = vmatpush.msra.mxu0 0.0
        %8009 = vmatpush.msra.mxu0 0.0
        %8010 = vmatpush.msra.mxu0 0.0
        %8011 = vmatpush.msra.mxu0 %v7693
        %8012 = vmatpush.msra.mxu0 %v7692
        %8013 = vmatmul.f32.gmra.mxu0 %v7339
        %v8014 = vpop.f32.mrf.mxu0
        %v8015 = vadd.f32 0.0, %v8014
        %8016 = vmatmul.f32.gmra.mxu0 %v7342
        %v8017 = vpop.f32.mrf.mxu0
        %v8018 = vadd.f32 0.0, %v8017
        %8019 = vdwg.mxu0
        %8020 = vmatpush.msra.mxu0 0.0
        %8021 = vmatpush.msra.mxu0 0.0
        %8022 = vmatpush.msra.mxu0 0.0
        %8023 = vmatpush.msra.mxu0 0.0
        %8024 = vmatpush.msra.mxu0 0.0
        %8025 = vmatpush.msra.mxu0 0.0
        %8026 = vmatpush.msra.mxu0 0.0
        %8027 = vmatpush.msra.mxu0 0.0
        %8028 = vmatpush.msra.mxu0 0.0
        %8029 = vmatpush.msra.mxu0 0.0
        %8030 = vmatpush.msra.mxu0 0.0
        %8031 = vmatpush.msra.mxu0 0.0
        %8032 = vmatpush.msra.mxu0 0.0
        %8033 = vmatpush.msra.mxu0 0.0
        %8034 = vmatpush.msra.mxu0 %v7695
        %8035 = vmatpush.msra.mxu0 %v7694
        %8036 = vmatmul.f32.gmra.mxu0 %v7368
        %v8037 = vpop.f32.mrf.mxu0
        %v8038 = vadd.f32 0.0, %v8037
        %8039 = vmatmul.f32.gmra.mxu0 %v7371
        %v8040 = vpop.f32.mrf.mxu0
        %v8041 = vadd.f32 0.0, %v8040
        %8042 = vdwg.mxu0
        %8043 = vmatpush.msra.mxu0 0.0
        %8044 = vmatpush.msra.mxu0 0.0
        %8045 = vmatpush.msra.mxu0 0.0
        %8046 = vmatpush.msra.mxu0 0.0
        %8047 = vmatpush.msra.mxu0 0.0
        %8048 = vmatpush.msra.mxu0 0.0
        %8049 = vmatpush.msra.mxu0 0.0
        %8050 = vmatpush.msra.mxu0 0.0
        %8051 = vmatpush.msra.mxu0 0.0
        %8052 = vmatpush.msra.mxu0 0.0
        %8053 = vmatpush.msra.mxu0 0.0
        %8054 = vmatpush.msra.mxu0 0.0
        %8055 = vmatpush.msra.mxu0 0.0
        %8056 = vmatpush.msra.mxu0 0.0
        %8057 = vmatpush.msra.mxu0 %v7697
        %8058 = vmatpush.msra.mxu0 %v7696
        %8059 = vmatmul.f32.gmra.mxu0 %v7397
        %v8060 = vpop.f32.mrf.mxu0
        %v8061 = vadd.f32 0.0, %v8060
        %8062 = vmatmul.f32.gmra.mxu0 %v7400
        %v8063 = vpop.f32.mrf.mxu0
        %v8064 = vadd.f32 0.0, %v8063
        %8065 = vdwg.mxu0
        %v8067 = vsel %vm5660, %v7716, 0
        %v8070 = vsel %vm5660, %v7719, 0
        %v8073 = vsel %vm5660, %v7739, 0
        %v8076 = vsel %vm5660, %v7742, 0
        %v8079 = vsel %vm5660, %v7762, 0
        %v8082 = vsel %vm5660, %v7765, 0
        %v8085 = vsel %vm5660, %v7785, 0
        %v8088 = vsel %vm5660, %v7788, 0
        %v8091 = vsel %vm5660, %v7808, 0
        %v8094 = vsel %vm5660, %v7811, 0
        %v8097 = vsel %vm5660, %v7831, 0
        %v8100 = vsel %vm5660, %v7834, 0
        %v8103 = vsel %vm5660, %v7854, 0
        %v8106 = vsel %vm5660, %v7857, 0
        %v8109 = vsel %vm5660, %v7877, 0
        %v8112 = vsel %vm5660, %v7880, 0
        %v8115 = vsel %vm5660, %v7900, 0
        %v8118 = vsel %vm5660, %v7903, 0
        %v8121 = vsel %vm5660, %v7923, 0
        %v8124 = vsel %vm5660, %v7926, 0
        %v8127 = vsel %vm5660, %v7946, 0
        %v8130 = vsel %vm5660, %v7949, 0
        %v8133 = vsel %vm5660, %v7969, 0
        %v8136 = vsel %vm5660, %v7972, 0
        %v8139 = vsel %vm5660, %v7992, 0
        %v8142 = vsel %vm5660, %v7995, 0
        %v8145 = vsel %vm5660, %v8015, 0
        %v8148 = vsel %vm5660, %v8018, 0
        %v8151 = vsel %vm5660, %v8038, 0
        %v8154 = vsel %vm5660, %v8041, 0
        %v8157 = vsel %vm5660, %v8061, 0
        %v8160 = vsel %vm5660, %v8064, 0
        %8162 = vmatpush.msra.mxu0 0.0
        %8163 = vmatpush.msra.mxu0 0.0
        %8164 = vmatpush.msra.mxu0 0.0
        %8165 = vmatpush.msra.mxu0 0.0
        %8166 = vmatpush.msra.mxu0 0.0
        %8167 = vmatpush.msra.mxu0 0.0
        %8168 = vmatpush.msra.mxu0 0.0
        %8169 = vmatpush.msra.mxu0 0.0
        %8170 = vmatpush.msra.mxu0 0.0
        %8171 = vmatpush.msra.mxu0 0.0
        %8172 = vmatpush.msra.mxu0 0.0
        %8173 = vmatpush.msra.mxu0 0.0
        %8174 = vmatpush.msra.mxu0 %v229
        %8175 = vmatpush.msra.mxu0 %v228
        %8176 = vmatpush.msra.mxu0 %v227
        %8177 = vmatpush.msra.mxu0 %v226
        %8178 = vmatmul.f32.gmra.mxu0 %v8067
        %v8179 = vpop.f32.mrf.mxu0
        %v8180 = vadd.f32 %v6895, %v8179
        %8181 = vmatmul.f32.gmra.mxu0 %v8070
        %v8182 = vpop.f32.mrf.mxu0
        %v8183 = vadd.f32 %v6895, %v8182
        %8184 = vmatmul.f32.gmra.mxu0 %v8073
        %v8185 = vpop.f32.mrf.mxu0
        %v8186 = vadd.f32 %v6895, %v8185
        %8187 = vmatmul.f32.gmra.mxu0 %v8076
        %v8188 = vpop.f32.mrf.mxu0
        %v8189 = vadd.f32 %v6895, %v8188
        %8190 = vmatmul.f32.gmra.mxu0 %v8079
        %v8191 = vpop.f32.mrf.mxu0
        %v8192 = vadd.f32 %v6895, %v8191
        %8193 = vmatmul.f32.gmra.mxu0 %v8082
        %v8194 = vpop.f32.mrf.mxu0
        %v8195 = vadd.f32 %v6895, %v8194
        %8196 = vmatmul.f32.gmra.mxu0 %v8085
        %v8197 = vpop.f32.mrf.mxu0
        %v8198 = vadd.f32 %v6895, %v8197
        %8199 = vmatmul.f32.gmra.mxu0 %v8088
        %v8200 = vpop.f32.mrf.mxu0
        %v8201 = vadd.f32 %v6895, %v8200
        %8202 = vmatmul.f32.gmra.mxu0 %v8091
        %v8203 = vpop.f32.mrf.mxu0
        %v8204 = vadd.f32 %v6895, %v8203
        %8205 = vmatmul.f32.gmra.mxu0 %v8094
        %v8206 = vpop.f32.mrf.mxu0
        %v8207 = vadd.f32 %v6895, %v8206
        %8208 = vmatmul.f32.gmra.mxu0 %v8097
        %v8209 = vpop.f32.mrf.mxu0
        %v8210 = vadd.f32 %v6895, %v8209
        %8211 = vmatmul.f32.gmra.mxu0 %v8100
        %v8212 = vpop.f32.mrf.mxu0
        %v8213 = vadd.f32 %v6895, %v8212
        %8214 = vmatmul.f32.gmra.mxu0 %v8103
        %v8215 = vpop.f32.mrf.mxu0
        %v8216 = vadd.f32 %v6895, %v8215
        %8217 = vmatmul.f32.gmra.mxu0 %v8106
        %v8218 = vpop.f32.mrf.mxu0
        %v8219 = vadd.f32 %v6895, %v8218
        %8220 = vmatmul.f32.gmra.mxu0 %v8109
        %v8221 = vpop.f32.mrf.mxu0
        %v8222 = vadd.f32 %v6895, %v8221
        %8223 = vmatmul.f32.gmra.mxu0 %v8112
        %v8224 = vpop.f32.mrf.mxu0
        %v8225 = vadd.f32 %v6895, %v8224
        %8226 = vmatmul.f32.gmra.mxu0 %v8115
        %v8227 = vpop.f32.mrf.mxu0
        %v8228 = vadd.f32 %v6895, %v8227
        %8229 = vmatmul.f32.gmra.mxu0 %v8118
        %v8230 = vpop.f32.mrf.mxu0
        %v8231 = vadd.f32 %v6895, %v8230
        %8232 = vmatmul.f32.gmra.mxu0 %v8121
        %v8233 = vpop.f32.mrf.mxu0
        %v8234 = vadd.f32 %v6895, %v8233
        %8235 = vmatmul.f32.gmra.mxu0 %v8124
        %v8236 = vpop.f32.mrf.mxu0
        %v8237 = vadd.f32 %v6895, %v8236
        %8238 = vmatmul.f32.gmra.mxu0 %v8127
        %v8239 = vpop.f32.mrf.mxu0
        %v8240 = vadd.f32 %v6895, %v8239
        %8241 = vmatmul.f32.gmra.mxu0 %v8130
        %v8242 = vpop.f32.mrf.mxu0
        %v8243 = vadd.f32 %v6895, %v8242
        %8244 = vmatmul.f32.gmra.mxu0 %v8133
        %v8245 = vpop.f32.mrf.mxu0
        %v8246 = vadd.f32 %v6895, %v8245
        %8247 = vmatmul.f32.gmra.mxu0 %v8136
        %v8248 = vpop.f32.mrf.mxu0
        %v8249 = vadd.f32 %v6895, %v8248
        %8250 = vmatmul.f32.gmra.mxu0 %v8139
        %v8251 = vpop.f32.mrf.mxu0
        %v8252 = vadd.f32 %v6895, %v8251
        %8253 = vmatmul.f32.gmra.mxu0 %v8142
        %v8254 = vpop.f32.mrf.mxu0
        %v8255 = vadd.f32 %v6895, %v8254
        %8256 = vmatmul.f32.gmra.mxu0 %v8145
        %v8257 = vpop.f32.mrf.mxu0
        %v8258 = vadd.f32 %v6895, %v8257
        %8259 = vmatmul.f32.gmra.mxu0 %v8148
        %v8260 = vpop.f32.mrf.mxu0
        %v8261 = vadd.f32 %v6895, %v8260
        %8262 = vmatmul.f32.gmra.mxu0 %v8151
        %v8263 = vpop.f32.mrf.mxu0
        %v8264 = vadd.f32 %v6895, %v8263
        %8265 = vmatmul.f32.gmra.mxu0 %v8154
        %v8266 = vpop.f32.mrf.mxu0
        %v8267 = vadd.f32 %v6895, %v8266
        %8268 = vmatmul.f32.gmra.mxu0 %v8157
        %v8269 = vpop.f32.mrf.mxu0
        %v8270 = vadd.f32 %v6895, %v8269
        %8271 = vmatmul.f32.gmra.mxu0 %v8160
        %v8272 = vpop.f32.mrf.mxu0
        %v8273 = vadd.f32 %v6895, %v8272
        %8274 = vdwg.mxu0
        %v8275 = vadd.f32 %v6863, %v8180
        %v8276 = vadd.f32 %v6864, %v8183
        %v8277 = vadd.f32 %v6865, %v8186
        %v8278 = vadd.f32 %v6866, %v8189
        %v8279 = vadd.f32 %v6867, %v8192
        %v8280 = vadd.f32 %v6868, %v8195
        %v8281 = vadd.f32 %v6869, %v8198
        %v8282 = vadd.f32 %v6870, %v8201
        %v8283 = vadd.f32 %v6871, %v8204
        %v8284 = vadd.f32 %v6872, %v8207
        %v8285 = vadd.f32 %v6873, %v8210
        %v8286 = vadd.f32 %v6874, %v8213
        %v8287 = vadd.f32 %v6875, %v8216
        %v8288 = vadd.f32 %v6876, %v8219
        %v8289 = vadd.f32 %v6877, %v8222
        %v8290 = vadd.f32 %v6878, %v8225
        %v8291 = vadd.f32 %v6879, %v8228
        %v8292 = vadd.f32 %v6880, %v8231
        %v8293 = vadd.f32 %v6881, %v8234
        %v8294 = vadd.f32 %v6882, %v8237
        %v8295 = vadd.f32 %v6883, %v8240
        %v8296 = vadd.f32 %v6884, %v8243
        %v8297 = vadd.f32 %v6885, %v8246
        %v8298 = vadd.f32 %v6886, %v8249
        %v8299 = vadd.f32 %v6887, %v8252
        %v8300 = vadd.f32 %v6888, %v8255
        %v8301 = vadd.f32 %v6889, %v8258
        %v8302 = vadd.f32 %v6890, %v8261
        %v8303 = vadd.f32 %v6891, %v8264
        %v8304 = vadd.f32 %v6892, %v8267
        %v8305 = vadd.f32 %v6893, %v8270
        %v8306 = vadd.f32 %v6894, %v8273
        %v8307 = vmax.f32 %v8275, 0.0
        %v8308 = vmax.f32 %v8276, 0.0
        %v8309 = vmax.f32 %v8277, 0.0
        %v8310 = vmax.f32 %v8278, 0.0
        %v8311 = vmax.f32 %v8279, 0.0
        %v8312 = vmax.f32 %v8280, 0.0
        %v8313 = vmax.f32 %v8281, 0.0
        %v8314 = vmax.f32 %v8282, 0.0
        %v8315 = vmax.f32 %v8283, 0.0
        %v8316 = vmax.f32 %v8284, 0.0
        %v8317 = vmax.f32 %v8285, 0.0
        %v8318 = vmax.f32 %v8286, 0.0
        %v8319 = vmax.f32 %v8287, 0.0
        %v8320 = vmax.f32 %v8288, 0.0
        %v8321 = vmax.f32 %v8289, 0.0
        %v8322 = vmax.f32 %v8290, 0.0
        %v8323 = vmax.f32 %v8291, 0.0
        %v8324 = vmax.f32 %v8292, 0.0
        %v8325 = vmax.f32 %v8293, 0.0
        %v8326 = vmax.f32 %v8294, 0.0
        %v8327 = vmax.f32 %v8295, 0.0
        %v8328 = vmax.f32 %v8296, 0.0
        %v8329 = vmax.f32 %v8297, 0.0
        %v8330 = vmax.f32 %v8298, 0.0
        %v8331 = vmax.f32 %v8299, 0.0
        %v8332 = vmax.f32 %v8300, 0.0
        %v8333 = vmax.f32 %v8301, 0.0
        %v8334 = vmax.f32 %v8302, 0.0
        %v8335 = vmax.f32 %v8303, 0.0
        %v8336 = vmax.f32 %v8304, 0.0
        %v8337 = vmax.f32 %v8305, 0.0
        %v8338 = vmax.f32 %v8306, 0.0
        %8339 = vmatpush.msra.mxu0 0.0
        %8340 = vmatpush.msra.mxu0 0.0
        %8341 = vmatpush.msra.mxu0 0.0
        %8342 = vmatpush.msra.mxu0 0.0
        %8343 = vmatpush.msra.mxu0 0.0
        %8344 = vmatpush.msra.mxu0 0.0
        %8345 = vmatpush.msra.mxu0 0.0
        %8346 = vmatpush.msra.mxu0 0.0
        %8347 = vmatpush.msra.mxu0 0.0
        %8348 = vmatpush.msra.mxu0 0.0
        %8349 = vmatpush.msra.mxu0 0.0
        %8350 = vmatpush.msra.mxu0 0.0
        %8351 = vmatpush.msra.mxu0 0.0
        %8352 = vmatpush.msra.mxu0 0.0
        %8353 = vmatpush.msra.mxu0 %v8308
        %8354 = vmatpush.msra.mxu0 %v8307
        %8355 = vmatmul.f32.gmra.mxu0 %v6962
        %v8356 = vpop.f32.mrf.mxu0
        %v8357 = vadd.f32 0.0, %v8356
        %8358 = vmatmul.f32.gmra.mxu0 %v6965
        %v8359 = vpop.f32.mrf.mxu0
        %v8360 = vadd.f32 0.0, %v8359
        %8361 = vdwg.mxu0
        %8362 = vmatpush.msra.mxu0 0.0
        %8363 = vmatpush.msra.mxu0 0.0
        %8364 = vmatpush.msra.mxu0 0.0
        %8365 = vmatpush.msra.mxu0 0.0
        %8366 = vmatpush.msra.mxu0 0.0
        %8367 = vmatpush.msra.mxu0 0.0
        %8368 = vmatpush.msra.mxu0 0.0
        %8369 = vmatpush.msra.mxu0 0.0
        %8370 = vmatpush.msra.mxu0 0.0
        %8371 = vmatpush.msra.mxu0 0.0
        %8372 = vmatpush.msra.mxu0 0.0
        %8373 = vmatpush.msra.mxu0 0.0
        %8374 = vmatpush.msra.mxu0 0.0
        %8375 = vmatpush.msra.mxu0 0.0
        %8376 = vmatpush.msra.mxu0 %v8310
        %8377 = vmatpush.msra.mxu0 %v8309
        %8378 = vmatmul.f32.gmra.mxu0 %v6991
        %v8379 = vpop.f32.mrf.mxu0
        %v8380 = vadd.f32 0.0, %v8379
        %8381 = vmatmul.f32.gmra.mxu0 %v6994
        %v8382 = vpop.f32.mrf.mxu0
        %v8383 = vadd.f32 0.0, %v8382
        %8384 = vdwg.mxu0
        %8385 = vmatpush.msra.mxu0 0.0
        %8386 = vmatpush.msra.mxu0 0.0
        %8387 = vmatpush.msra.mxu0 0.0
        %8388 = vmatpush.msra.mxu0 0.0
        %8389 = vmatpush.msra.mxu0 0.0
        %8390 = vmatpush.msra.mxu0 0.0
        %8391 = vmatpush.msra.mxu0 0.0
        %8392 = vmatpush.msra.mxu0 0.0
        %8393 = vmatpush.msra.mxu0 0.0
        %8394 = vmatpush.msra.mxu0 0.0
        %8395 = vmatpush.msra.mxu0 0.0
        %8396 = vmatpush.msra.mxu0 0.0
        %8397 = vmatpush.msra.mxu0 0.0
        %8398 = vmatpush.msra.mxu0 0.0
        %8399 = vmatpush.msra.mxu0 %v8312
        %8400 = vmatpush.msra.mxu0 %v8311
        %8401 = vmatmul.f32.gmra.mxu0 %v7020
        %v8402 = vpop.f32.mrf.mxu0
        %v8403 = vadd.f32 0.0, %v8402
        %8404 = vmatmul.f32.gmra.mxu0 %v7023
        %v8405 = vpop.f32.mrf.mxu0
        %v8406 = vadd.f32 0.0, %v8405
        %8407 = vdwg.mxu0
        %8408 = vmatpush.msra.mxu0 0.0
        %8409 = vmatpush.msra.mxu0 0.0
        %8410 = vmatpush.msra.mxu0 0.0
        %8411 = vmatpush.msra.mxu0 0.0
        %8412 = vmatpush.msra.mxu0 0.0
        %8413 = vmatpush.msra.mxu0 0.0
        %8414 = vmatpush.msra.mxu0 0.0
        %8415 = vmatpush.msra.mxu0 0.0
        %8416 = vmatpush.msra.mxu0 0.0
        %8417 = vmatpush.msra.mxu0 0.0
        %8418 = vmatpush.msra.mxu0 0.0
        %8419 = vmatpush.msra.mxu0 0.0
        %8420 = vmatpush.msra.mxu0 0.0
        %8421 = vmatpush.msra.mxu0 0.0
        %8422 = vmatpush.msra.mxu0 %v8314
        %8423 = vmatpush.msra.mxu0 %v8313
        %8424 = vmatmul.f32.gmra.mxu0 %v7049
        %v8425 = vpop.f32.mrf.mxu0
        %v8426 = vadd.f32 0.0, %v8425
        %8427 = vmatmul.f32.gmra.mxu0 %v7052
        %v8428 = vpop.f32.mrf.mxu0
        %v8429 = vadd.f32 0.0, %v8428
        %8430 = vdwg.mxu0
        %8431 = vmatpush.msra.mxu0 0.0
        %8432 = vmatpush.msra.mxu0 0.0
        %8433 = vmatpush.msra.mxu0 0.0
        %8434 = vmatpush.msra.mxu0 0.0
        %8435 = vmatpush.msra.mxu0 0.0
        %8436 = vmatpush.msra.mxu0 0.0
        %8437 = vmatpush.msra.mxu0 0.0
        %8438 = vmatpush.msra.mxu0 0.0
        %8439 = vmatpush.msra.mxu0 0.0
        %8440 = vmatpush.msra.mxu0 0.0
        %8441 = vmatpush.msra.mxu0 0.0
        %8442 = vmatpush.msra.mxu0 0.0
        %8443 = vmatpush.msra.mxu0 0.0
        %8444 = vmatpush.msra.mxu0 0.0
        %8445 = vmatpush.msra.mxu0 %v8316
        %8446 = vmatpush.msra.mxu0 %v8315
        %8447 = vmatmul.f32.gmra.mxu0 %v7078
        %v8448 = vpop.f32.mrf.mxu0
        %v8449 = vadd.f32 0.0, %v8448
        %8450 = vmatmul.f32.gmra.mxu0 %v7081
        %v8451 = vpop.f32.mrf.mxu0
        %v8452 = vadd.f32 0.0, %v8451
        %8453 = vdwg.mxu0
        %8454 = vmatpush.msra.mxu0 0.0
        %8455 = vmatpush.msra.mxu0 0.0
        %8456 = vmatpush.msra.mxu0 0.0
        %8457 = vmatpush.msra.mxu0 0.0
        %8458 = vmatpush.msra.mxu0 0.0
        %8459 = vmatpush.msra.mxu0 0.0
        %8460 = vmatpush.msra.mxu0 0.0
        %8461 = vmatpush.msra.mxu0 0.0
        %8462 = vmatpush.msra.mxu0 0.0
        %8463 = vmatpush.msra.mxu0 0.0
        %8464 = vmatpush.msra.mxu0 0.0
        %8465 = vmatpush.msra.mxu0 0.0
        %8466 = vmatpush.msra.mxu0 0.0
        %8467 = vmatpush.msra.mxu0 0.0
        %8468 = vmatpush.msra.mxu0 %v8318
        %8469 = vmatpush.msra.mxu0 %v8317
        %8470 = vmatmul.f32.gmra.mxu0 %v7107
        %v8471 = vpop.f32.mrf.mxu0
        %v8472 = vadd.f32 0.0, %v8471
        %8473 = vmatmul.f32.gmra.mxu0 %v7110
        %v8474 = vpop.f32.mrf.mxu0
        %v8475 = vadd.f32 0.0, %v8474
        %8476 = vdwg.mxu0
        %8477 = vmatpush.msra.mxu0 0.0
        %8478 = vmatpush.msra.mxu0 0.0
        %8479 = vmatpush.msra.mxu0 0.0
        %8480 = vmatpush.msra.mxu0 0.0
        %8481 = vmatpush.msra.mxu0 0.0
        %8482 = vmatpush.msra.mxu0 0.0
        %8483 = vmatpush.msra.mxu0 0.0
        %8484 = vmatpush.msra.mxu0 0.0
        %8485 = vmatpush.msra.mxu0 0.0
        %8486 = vmatpush.msra.mxu0 0.0
        %8487 = vmatpush.msra.mxu0 0.0
        %8488 = vmatpush.msra.mxu0 0.0
        %8489 = vmatpush.msra.mxu0 0.0
        %8490 = vmatpush.msra.mxu0 0.0
        %8491 = vmatpush.msra.mxu0 %v8320
        %8492 = vmatpush.msra.mxu0 %v8319
        %8493 = vmatmul.f32.gmra.mxu0 %v7136
        %v8494 = vpop.f32.mrf.mxu0
        %v8495 = vadd.f32 0.0, %v8494
        %8496 = vmatmul.f32.gmra.mxu0 %v7139
        %v8497 = vpop.f32.mrf.mxu0
        %v8498 = vadd.f32 0.0, %v8497
        %8499 = vdwg.mxu0
        %8500 = vmatpush.msra.mxu0 0.0
        %8501 = vmatpush.msra.mxu0 0.0
        %8502 = vmatpush.msra.mxu0 0.0
        %8503 = vmatpush.msra.mxu0 0.0
        %8504 = vmatpush.msra.mxu0 0.0
        %8505 = vmatpush.msra.mxu0 0.0
        %8506 = vmatpush.msra.mxu0 0.0
        %8507 = vmatpush.msra.mxu0 0.0
        %8508 = vmatpush.msra.mxu0 0.0
        %8509 = vmatpush.msra.mxu0 0.0
        %8510 = vmatpush.msra.mxu0 0.0
        %8511 = vmatpush.msra.mxu0 0.0
        %8512 = vmatpush.msra.mxu0 0.0
        %8513 = vmatpush.msra.mxu0 0.0
        %8514 = vmatpush.msra.mxu0 %v8322
        %8515 = vmatpush.msra.mxu0 %v8321
        %8516 = vmatmul.f32.gmra.mxu0 %v7165
        %v8517 = vpop.f32.mrf.mxu0
        %v8518 = vadd.f32 0.0, %v8517
        %8519 = vmatmul.f32.gmra.mxu0 %v7168
        %v8520 = vpop.f32.mrf.mxu0
        %v8521 = vadd.f32 0.0, %v8520
        %8522 = vdwg.mxu0
        %8523 = vmatpush.msra.mxu0 0.0
        %8524 = vmatpush.msra.mxu0 0.0
        %8525 = vmatpush.msra.mxu0 0.0
        %8526 = vmatpush.msra.mxu0 0.0
        %8527 = vmatpush.msra.mxu0 0.0
        %8528 = vmatpush.msra.mxu0 0.0
        %8529 = vmatpush.msra.mxu0 0.0
        %8530 = vmatpush.msra.mxu0 0.0
        %8531 = vmatpush.msra.mxu0 0.0
        %8532 = vmatpush.msra.mxu0 0.0
        %8533 = vmatpush.msra.mxu0 0.0
        %8534 = vmatpush.msra.mxu0 0.0
        %8535 = vmatpush.msra.mxu0 0.0
        %8536 = vmatpush.msra.mxu0 0.0
        %8537 = vmatpush.msra.mxu0 %v8324
        %8538 = vmatpush.msra.mxu0 %v8323
        %8539 = vmatmul.f32.gmra.mxu0 %v7194
        %v8540 = vpop.f32.mrf.mxu0
        %v8541 = vadd.f32 0.0, %v8540
        %8542 = vmatmul.f32.gmra.mxu0 %v7197
        %v8543 = vpop.f32.mrf.mxu0
        %v8544 = vadd.f32 0.0, %v8543
        %8545 = vdwg.mxu0
        %8546 = vmatpush.msra.mxu0 0.0
        %8547 = vmatpush.msra.mxu0 0.0
        %8548 = vmatpush.msra.mxu0 0.0
        %8549 = vmatpush.msra.mxu0 0.0
        %8550 = vmatpush.msra.mxu0 0.0
        %8551 = vmatpush.msra.mxu0 0.0
        %8552 = vmatpush.msra.mxu0 0.0
        %8553 = vmatpush.msra.mxu0 0.0
        %8554 = vmatpush.msra.mxu0 0.0
        %8555 = vmatpush.msra.mxu0 0.0
        %8556 = vmatpush.msra.mxu0 0.0
        %8557 = vmatpush.msra.mxu0 0.0
        %8558 = vmatpush.msra.mxu0 0.0
        %8559 = vmatpush.msra.mxu0 0.0
        %8560 = vmatpush.msra.mxu0 %v8326
        %8561 = vmatpush.msra.mxu0 %v8325
        %8562 = vmatmul.f32.gmra.mxu0 %v7223
        %v8563 = vpop.f32.mrf.mxu0
        %v8564 = vadd.f32 0.0, %v8563
        %8565 = vmatmul.f32.gmra.mxu0 %v7226
        %v8566 = vpop.f32.mrf.mxu0
        %v8567 = vadd.f32 0.0, %v8566
        %8568 = vdwg.mxu0
        %8569 = vmatpush.msra.mxu0 0.0
        %8570 = vmatpush.msra.mxu0 0.0
        %8571 = vmatpush.msra.mxu0 0.0
        %8572 = vmatpush.msra.mxu0 0.0
        %8573 = vmatpush.msra.mxu0 0.0
        %8574 = vmatpush.msra.mxu0 0.0
        %8575 = vmatpush.msra.mxu0 0.0
        %8576 = vmatpush.msra.mxu0 0.0
        %8577 = vmatpush.msra.mxu0 0.0
        %8578 = vmatpush.msra.mxu0 0.0
        %8579 = vmatpush.msra.mxu0 0.0
        %8580 = vmatpush.msra.mxu0 0.0
        %8581 = vmatpush.msra.mxu0 0.0
        %8582 = vmatpush.msra.mxu0 0.0
        %8583 = vmatpush.msra.mxu0 %v8328
        %8584 = vmatpush.msra.mxu0 %v8327
        %8585 = vmatmul.f32.gmra.mxu0 %v7252
        %v8586 = vpop.f32.mrf.mxu0
        %v8587 = vadd.f32 0.0, %v8586
        %8588 = vmatmul.f32.gmra.mxu0 %v7255
        %v8589 = vpop.f32.mrf.mxu0
        %v8590 = vadd.f32 0.0, %v8589
        %8591 = vdwg.mxu0
        %8592 = vmatpush.msra.mxu0 0.0
        %8593 = vmatpush.msra.mxu0 0.0
        %8594 = vmatpush.msra.mxu0 0.0
        %8595 = vmatpush.msra.mxu0 0.0
        %8596 = vmatpush.msra.mxu0 0.0
        %8597 = vmatpush.msra.mxu0 0.0
        %8598 = vmatpush.msra.mxu0 0.0
        %8599 = vmatpush.msra.mxu0 0.0
        %8600 = vmatpush.msra.mxu0 0.0
        %8601 = vmatpush.msra.mxu0 0.0
        %8602 = vmatpush.msra.mxu0 0.0
        %8603 = vmatpush.msra.mxu0 0.0
        %8604 = vmatpush.msra.mxu0 0.0
        %8605 = vmatpush.msra.mxu0 0.0
        %8606 = vmatpush.msra.mxu0 %v8330
        %8607 = vmatpush.msra.mxu0 %v8329
        %8608 = vmatmul.f32.gmra.mxu0 %v7281
        %v8609 = vpop.f32.mrf.mxu0
        %v8610 = vadd.f32 0.0, %v8609
        %8611 = vmatmul.f32.gmra.mxu0 %v7284
        %v8612 = vpop.f32.mrf.mxu0
        %v8613 = vadd.f32 0.0, %v8612
        %8614 = vdwg.mxu0
        %8615 = vmatpush.msra.mxu0 0.0
        %8616 = vmatpush.msra.mxu0 0.0
        %8617 = vmatpush.msra.mxu0 0.0
        %8618 = vmatpush.msra.mxu0 0.0
        %8619 = vmatpush.msra.mxu0 0.0
        %8620 = vmatpush.msra.mxu0 0.0
        %8621 = vmatpush.msra.mxu0 0.0
        %8622 = vmatpush.msra.mxu0 0.0
        %8623 = vmatpush.msra.mxu0 0.0
        %8624 = vmatpush.msra.mxu0 0.0
        %8625 = vmatpush.msra.mxu0 0.0
        %8626 = vmatpush.msra.mxu0 0.0
        %8627 = vmatpush.msra.mxu0 0.0
        %8628 = vmatpush.msra.mxu0 0.0
        %8629 = vmatpush.msra.mxu0 %v8332
        %8630 = vmatpush.msra.mxu0 %v8331
        %8631 = vmatmul.f32.gmra.mxu0 %v7310
        %v8632 = vpop.f32.mrf.mxu0
        %v8633 = vadd.f32 0.0, %v8632
        %8634 = vmatmul.f32.gmra.mxu0 %v7313
        %v8635 = vpop.f32.mrf.mxu0
        %v8636 = vadd.f32 0.0, %v8635
        %8637 = vdwg.mxu0
        %8638 = vmatpush.msra.mxu0 0.0
        %8639 = vmatpush.msra.mxu0 0.0
        %8640 = vmatpush.msra.mxu0 0.0
        %8641 = vmatpush.msra.mxu0 0.0
        %8642 = vmatpush.msra.mxu0 0.0
        %8643 = vmatpush.msra.mxu0 0.0
        %8644 = vmatpush.msra.mxu0 0.0
        %8645 = vmatpush.msra.mxu0 0.0
        %8646 = vmatpush.msra.mxu0 0.0
        %8647 = vmatpush.msra.mxu0 0.0
        %8648 = vmatpush.msra.mxu0 0.0
        %8649 = vmatpush.msra.mxu0 0.0
        %8650 = vmatpush.msra.mxu0 0.0
        %8651 = vmatpush.msra.mxu0 0.0
        %8652 = vmatpush.msra.mxu0 %v8334
        %8653 = vmatpush.msra.mxu0 %v8333
        %8654 = vmatmul.f32.gmra.mxu0 %v7339
        %v8655 = vpop.f32.mrf.mxu0
        %v8656 = vadd.f32 0.0, %v8655
        %8657 = vmatmul.f32.gmra.mxu0 %v7342
        %v8658 = vpop.f32.mrf.mxu0
        %v8659 = vadd.f32 0.0, %v8658
        %8660 = vdwg.mxu0
        %8661 = vmatpush.msra.mxu0 0.0
        %8662 = vmatpush.msra.mxu0 0.0
        %8663 = vmatpush.msra.mxu0 0.0
        %8664 = vmatpush.msra.mxu0 0.0
        %8665 = vmatpush.msra.mxu0 0.0
        %8666 = vmatpush.msra.mxu0 0.0
        %8667 = vmatpush.msra.mxu0 0.0
        %8668 = vmatpush.msra.mxu0 0.0
        %8669 = vmatpush.msra.mxu0 0.0
        %8670 = vmatpush.msra.mxu0 0.0
        %8671 = vmatpush.msra.mxu0 0.0
        %8672 = vmatpush.msra.mxu0 0.0
        %8673 = vmatpush.msra.mxu0 0.0
        %8674 = vmatpush.msra.mxu0 0.0
        %8675 = vmatpush.msra.mxu0 %v8336
        %8676 = vmatpush.msra.mxu0 %v8335
        %8677 = vmatmul.f32.gmra.mxu0 %v7368
        %v8678 = vpop.f32.mrf.mxu0
        %v8679 = vadd.f32 0.0, %v8678
        %8680 = vmatmul.f32.gmra.mxu0 %v7371
        %v8681 = vpop.f32.mrf.mxu0
        %v8682 = vadd.f32 0.0, %v8681
        %8683 = vdwg.mxu0
        %8684 = vmatpush.msra.mxu0 0.0
        %8685 = vmatpush.msra.mxu0 0.0
        %8686 = vmatpush.msra.mxu0 0.0
        %8687 = vmatpush.msra.mxu0 0.0
        %8688 = vmatpush.msra.mxu0 0.0
        %8689 = vmatpush.msra.mxu0 0.0
        %8690 = vmatpush.msra.mxu0 0.0
        %8691 = vmatpush.msra.mxu0 0.0
        %8692 = vmatpush.msra.mxu0 0.0
        %8693 = vmatpush.msra.mxu0 0.0
        %8694 = vmatpush.msra.mxu0 0.0
        %8695 = vmatpush.msra.mxu0 0.0
        %8696 = vmatpush.msra.mxu0 0.0
        %8697 = vmatpush.msra.mxu0 0.0
        %8698 = vmatpush.msra.mxu0 %v8338
        %8699 = vmatpush.msra.mxu0 %v8337
        %8700 = vmatmul.f32.gmra.mxu0 %v7397
        %v8701 = vpop.f32.mrf.mxu0
        %v8702 = vadd.f32 0.0, %v8701
        %8703 = vmatmul.f32.gmra.mxu0 %v7400
        %v8704 = vpop.f32.mrf.mxu0
        %v8705 = vadd.f32 0.0, %v8704
        %8706 = vdwg.mxu0
        %v8708 = vsel %vm5660, %v8357, 0
        %v8711 = vsel %vm5660, %v8360, 0
        %v8714 = vsel %vm5660, %v8380, 0
        %v8717 = vsel %vm5660, %v8383, 0
        %v8720 = vsel %vm5660, %v8403, 0
        %v8723 = vsel %vm5660, %v8406, 0
        %v8726 = vsel %vm5660, %v8426, 0
        %v8729 = vsel %vm5660, %v8429, 0
        %v8732 = vsel %vm5660, %v8449, 0
        %v8735 = vsel %vm5660, %v8452, 0
        %v8738 = vsel %vm5660, %v8472, 0
        %v8741 = vsel %vm5660, %v8475, 0
        %v8744 = vsel %vm5660, %v8495, 0
        %v8747 = vsel %vm5660, %v8498, 0
        %v8750 = vsel %vm5660, %v8518, 0
        %v8753 = vsel %vm5660, %v8521, 0
        %v8756 = vsel %vm5660, %v8541, 0
        %v8759 = vsel %vm5660, %v8544, 0
        %v8762 = vsel %vm5660, %v8564, 0
        %v8765 = vsel %vm5660, %v8567, 0
        %v8768 = vsel %vm5660, %v8587, 0
        %v8771 = vsel %vm5660, %v8590, 0
        %v8774 = vsel %vm5660, %v8610, 0
        %v8777 = vsel %vm5660, %v8613, 0
        %v8780 = vsel %vm5660, %v8633, 0
        %v8783 = vsel %vm5660, %v8636, 0
        %v8786 = vsel %vm5660, %v8656, 0
        %v8789 = vsel %vm5660, %v8659, 0
        %v8792 = vsel %vm5660, %v8679, 0
        %v8795 = vsel %vm5660, %v8682, 0
        %v8798 = vsel %vm5660, %v8702, 0
        %v8801 = vsel %vm5660, %v8705, 0
        %8803 = vmatpush.msra.mxu0 0.0
        %8804 = vmatpush.msra.mxu0 0.0
        %8805 = vmatpush.msra.mxu0 0.0
        %8806 = vmatpush.msra.mxu0 0.0
        %8807 = vmatpush.msra.mxu0 0.0
        %8808 = vmatpush.msra.mxu0 0.0
        %8809 = vmatpush.msra.mxu0 0.0
        %8810 = vmatpush.msra.mxu0 0.0
        %8811 = vmatpush.msra.mxu0 0.0
        %8812 = vmatpush.msra.mxu0 0.0
        %8813 = vmatpush.msra.mxu0 0.0
        %8814 = vmatpush.msra.mxu0 0.0
        %8815 = vmatpush.msra.mxu0 %v229
        %8816 = vmatpush.msra.mxu0 %v228
        %8817 = vmatpush.msra.mxu0 %v227
        %8818 = vmatpush.msra.mxu0 %v226
        %8819 = vmatmul.f32.gmra.mxu0 %v8708
        %v8820 = vpop.f32.mrf.mxu0
        %v8821 = vadd.f32 %v6895, %v8820
        %8822 = vmatmul.f32.gmra.mxu0 %v8711
        %v8823 = vpop.f32.mrf.mxu0
        %v8824 = vadd.f32 %v6895, %v8823
        %8825 = vmatmul.f32.gmra.mxu0 %v8714
        %v8826 = vpop.f32.mrf.mxu0
        %v8827 = vadd.f32 %v6895, %v8826
        %8828 = vmatmul.f32.gmra.mxu0 %v8717
        %v8829 = vpop.f32.mrf.mxu0
        %v8830 = vadd.f32 %v6895, %v8829
        %8831 = vmatmul.f32.gmra.mxu0 %v8720
        %v8832 = vpop.f32.mrf.mxu0
        %v8833 = vadd.f32 %v6895, %v8832
        %8834 = vmatmul.f32.gmra.mxu0 %v8723
        %v8835 = vpop.f32.mrf.mxu0
        %v8836 = vadd.f32 %v6895, %v8835
        %8837 = vmatmul.f32.gmra.mxu0 %v8726
        %v8838 = vpop.f32.mrf.mxu0
        %v8839 = vadd.f32 %v6895, %v8838
        %8840 = vmatmul.f32.gmra.mxu0 %v8729
        %v8841 = vpop.f32.mrf.mxu0
        %v8842 = vadd.f32 %v6895, %v8841
        %8843 = vmatmul.f32.gmra.mxu0 %v8732
        %v8844 = vpop.f32.mrf.mxu0
        %v8845 = vadd.f32 %v6895, %v8844
        %8846 = vmatmul.f32.gmra.mxu0 %v8735
        %v8847 = vpop.f32.mrf.mxu0
        %v8848 = vadd.f32 %v6895, %v8847
        %8849 = vmatmul.f32.gmra.mxu0 %v8738
        %v8850 = vpop.f32.mrf.mxu0
        %v8851 = vadd.f32 %v6895, %v8850
        %8852 = vmatmul.f32.gmra.mxu0 %v8741
        %v8853 = vpop.f32.mrf.mxu0
        %v8854 = vadd.f32 %v6895, %v8853
        %8855 = vmatmul.f32.gmra.mxu0 %v8744
        %v8856 = vpop.f32.mrf.mxu0
        %v8857 = vadd.f32 %v6895, %v8856
        %8858 = vmatmul.f32.gmra.mxu0 %v8747
        %v8859 = vpop.f32.mrf.mxu0
        %v8860 = vadd.f32 %v6895, %v8859
        %8861 = vmatmul.f32.gmra.mxu0 %v8750
        %v8862 = vpop.f32.mrf.mxu0
        %v8863 = vadd.f32 %v6895, %v8862
        %8864 = vmatmul.f32.gmra.mxu0 %v8753
        %v8865 = vpop.f32.mrf.mxu0
        %v8866 = vadd.f32 %v6895, %v8865
        %8867 = vmatmul.f32.gmra.mxu0 %v8756
        %v8868 = vpop.f32.mrf.mxu0
        %v8869 = vadd.f32 %v6895, %v8868
        %8870 = vmatmul.f32.gmra.mxu0 %v8759
        %v8871 = vpop.f32.mrf.mxu0
        %v8872 = vadd.f32 %v6895, %v8871
        %8873 = vmatmul.f32.gmra.mxu0 %v8762
        %v8874 = vpop.f32.mrf.mxu0
        %v8875 = vadd.f32 %v6895, %v8874
        %8876 = vmatmul.f32.gmra.mxu0 %v8765
        %v8877 = vpop.f32.mrf.mxu0
        %v8878 = vadd.f32 %v6895, %v8877
        %8879 = vmatmul.f32.gmra.mxu0 %v8768
        %v8880 = vpop.f32.mrf.mxu0
        %v8881 = vadd.f32 %v6895, %v8880
        %8882 = vmatmul.f32.gmra.mxu0 %v8771
        %v8883 = vpop.f32.mrf.mxu0
        %v8884 = vadd.f32 %v6895, %v8883
        %8885 = vmatmul.f32.gmra.mxu0 %v8774
        %v8886 = vpop.f32.mrf.mxu0
        %v8887 = vadd.f32 %v6895, %v8886
        %8888 = vmatmul.f32.gmra.mxu0 %v8777
        %v8889 = vpop.f32.mrf.mxu0
        %v8890 = vadd.f32 %v6895, %v8889
        %8891 = vmatmul.f32.gmra.mxu0 %v8780
        %v8892 = vpop.f32.mrf.mxu0
        %v8893 = vadd.f32 %v6895, %v8892
        %8894 = vmatmul.f32.gmra.mxu0 %v8783
        %v8895 = vpop.f32.mrf.mxu0
        %v8896 = vadd.f32 %v6895, %v8895
        %8897 = vmatmul.f32.gmra.mxu0 %v8786
        %v8898 = vpop.f32.mrf.mxu0
        %v8899 = vadd.f32 %v6895, %v8898
        %8900 = vmatmul.f32.gmra.mxu0 %v8789
        %v8901 = vpop.f32.mrf.mxu0
        %v8902 = vadd.f32 %v6895, %v8901
        %8903 = vmatmul.f32.gmra.mxu0 %v8792
        %v8904 = vpop.f32.mrf.mxu0
        %v8905 = vadd.f32 %v6895, %v8904
        %8906 = vmatmul.f32.gmra.mxu0 %v8795
        %v8907 = vpop.f32.mrf.mxu0
        %v8908 = vadd.f32 %v6895, %v8907
        %8909 = vmatmul.f32.gmra.mxu0 %v8798
        %v8910 = vpop.f32.mrf.mxu0
        %v8911 = vadd.f32 %v6895, %v8910
        %8912 = vmatmul.f32.gmra.mxu0 %v8801
        %v8913 = vpop.f32.mrf.mxu0
        %v8914 = vadd.f32 %v6895, %v8913
        %8915 = vdwg.mxu0
        %v8916 = vadd.f32 %v6863, %v8821
        %v8917 = vadd.f32 %v6864, %v8824
        %v8918 = vadd.f32 %v6865, %v8827
        %v8919 = vadd.f32 %v6866, %v8830
        %v8920 = vadd.f32 %v6867, %v8833
        %v8921 = vadd.f32 %v6868, %v8836
        %v8922 = vadd.f32 %v6869, %v8839
        %v8923 = vadd.f32 %v6870, %v8842
        %v8924 = vadd.f32 %v6871, %v8845
        %v8925 = vadd.f32 %v6872, %v8848
        %v8926 = vadd.f32 %v6873, %v8851
        %v8927 = vadd.f32 %v6874, %v8854
        %v8928 = vadd.f32 %v6875, %v8857
        %v8929 = vadd.f32 %v6876, %v8860
        %v8930 = vadd.f32 %v6877, %v8863
        %v8931 = vadd.f32 %v6878, %v8866
        %v8932 = vadd.f32 %v6879, %v8869
        %v8933 = vadd.f32 %v6880, %v8872
        %v8934 = vadd.f32 %v6881, %v8875
        %v8935 = vadd.f32 %v6882, %v8878
        %v8936 = vadd.f32 %v6883, %v8881
        %v8937 = vadd.f32 %v6884, %v8884
        %v8938 = vadd.f32 %v6885, %v8887
        %v8939 = vadd.f32 %v6886, %v8890
        %v8940 = vadd.f32 %v6887, %v8893
        %v8941 = vadd.f32 %v6888, %v8896
        %v8942 = vadd.f32 %v6889, %v8899
        %v8943 = vadd.f32 %v6890, %v8902
        %v8944 = vadd.f32 %v6891, %v8905
        %v8945 = vadd.f32 %v6892, %v8908
        %v8946 = vadd.f32 %v6893, %v8911
        %v8947 = vadd.f32 %v6894, %v8914
        %v8948 = vmax.f32 %v8916, 0.0
        %v8949 = vmax.f32 %v8917, 0.0
        %v8950 = vmax.f32 %v8918, 0.0
        %v8951 = vmax.f32 %v8919, 0.0
        %v8952 = vmax.f32 %v8920, 0.0
        %v8953 = vmax.f32 %v8921, 0.0
        %v8954 = vmax.f32 %v8922, 0.0
        %v8955 = vmax.f32 %v8923, 0.0
        %v8956 = vmax.f32 %v8924, 0.0
        %v8957 = vmax.f32 %v8925, 0.0
        %v8958 = vmax.f32 %v8926, 0.0
        %v8959 = vmax.f32 %v8927, 0.0
        %v8960 = vmax.f32 %v8928, 0.0
        %v8961 = vmax.f32 %v8929, 0.0
        %v8962 = vmax.f32 %v8930, 0.0
        %v8963 = vmax.f32 %v8931, 0.0
        %v8964 = vmax.f32 %v8932, 0.0
        %v8965 = vmax.f32 %v8933, 0.0
        %v8966 = vmax.f32 %v8934, 0.0
        %v8967 = vmax.f32 %v8935, 0.0
        %v8968 = vmax.f32 %v8936, 0.0
        %v8969 = vmax.f32 %v8937, 0.0
        %v8970 = vmax.f32 %v8938, 0.0
        %v8971 = vmax.f32 %v8939, 0.0
        %v8972 = vmax.f32 %v8940, 0.0
        %v8973 = vmax.f32 %v8941, 0.0
        %v8974 = vmax.f32 %v8942, 0.0
        %v8975 = vmax.f32 %v8943, 0.0
        %v8976 = vmax.f32 %v8944, 0.0
        %v8977 = vmax.f32 %v8945, 0.0
        %v8978 = vmax.f32 %v8946, 0.0
        %v8979 = vmax.f32 %v8947, 0.0
        %v8980 = vlaneseq
        %v8981 = vand.u32 %v8980, 127
        %v8982 = vadd.s32 %v8981, 128
        %v8983 = vlaneseq
        %v8984 = vshrl.u32 %v8983, 7
        %v8985 = vadd.s32 %v8984, 8
        %v8986 = vmul.u32 %v8984, 16
        %v8987 = vmul.u32 %v8985, 16
        %vm8988 = vcmp.ge.s32.totalorder %v8981, %v8986
        %vm8989 = vcmp.ge.s32.totalorder %v8982, %v8986
        %vm8990 = vcmp.ge.s32.totalorder %v8981, %v8987
        %vm8991 = vcmp.ge.s32.totalorder %v8982, %v8987
        %v8992 = vadd.s32 %v8986, 16
        %v8993 = vadd.s32 %v8987, 16
        %vm8994 = vcmp.lt.s32.totalorder %v8981, %v8992
        %vm8995 = vcmp.lt.s32.totalorder %v8982, %v8992
        %vm8996 = vcmp.lt.s32.totalorder %v8981, %v8993
        %vm8997 = vcmp.lt.s32.totalorder %v8982, %v8993
        %vm8998 = vmand %vm8988, %vm8994
        %vm8999 = vmand %vm8989, %vm8995
        %vm9000 = vmand %vm8990, %vm8996
        %vm9001 = vmand %vm8991, %vm8997
        %v9002 = vsel %vm8998, 1.0, 0.0
        %v9003 = vsel %vm8999, 1.0, 0.0
        %v9004 = vsel %vm9000, 1.0, 0.0
        %v9005 = vsel %vm9001, 1.0, 0.0
        %9006 = vmatpush.msra.mxu0 %v8963
        %9007 = vmatpush.msra.mxu0 %v8962
        %9008 = vmatpush.msra.mxu0 %v8961
        %9009 = vmatpush.msra.mxu0 %v8960
        %9010 = vmatpush.msra.mxu0 %v8959
        %9011 = vmatpush.msra.mxu0 %v8958
        %9012 = vmatpush.msra.mxu0 %v8957
        %9013 = vmatpush.msra.mxu0 %v8956
        %9014 = vmatpush.msra.mxu0 %v8955
        %9015 = vmatpush.msra.mxu0 %v8954
        %9016 = vmatpush.msra.mxu0 %v8953
        %9017 = vmatpush.msra.mxu0 %v8952
        %9018 = vmatpush.msra.mxu0 %v8951
        %9019 = vmatpush.msra.mxu0 %v8950
        %9020 = vmatpush.msra.mxu0 %v8949
        %9021 = vmatpush.msra.mxu0 %v8948
        %9022 = vmatmul.f32.gmra.mxu0 %v9002
        %v9023 = vpop.f32.mrf.mxu0
        %v9024 = vadd.f32 0.0, %v9023
        %9025 = vmatmul.f32.gmra.mxu0 %v9004
        %v9026 = vpop.f32.mrf.mxu0
        %v9027 = vadd.f32 0.0, %v9026
        %9028 = vdwg.mxu0
        %9029 = vmatpush.msra.mxu0 %v8979
        %9030 = vmatpush.msra.mxu0 %v8978
        %9031 = vmatpush.msra.mxu0 %v8977
        %9032 = vmatpush.msra.mxu0 %v8976
        %9033 = vmatpush.msra.mxu0 %v8975
        %9034 = vmatpush.msra.mxu0 %v8974
        %9035 = vmatpush.msra.mxu0 %v8973
        %9036 = vmatpush.msra.mxu0 %v8972
        %9037 = vmatpush.msra.mxu0 %v8971
        %9038 = vmatpush.msra.mxu0 %v8970
        %9039 = vmatpush.msra.mxu0 %v8969
        %9040 = vmatpush.msra.mxu0 %v8968
        %9041 = vmatpush.msra.mxu0 %v8967
        %9042 = vmatpush.msra.mxu0 %v8966
        %9043 = vmatpush.msra.mxu0 %v8965
        %9044 = vmatpush.msra.mxu0 %v8964
        %9045 = vmatmul.f32.gmra.mxu0 %v9003
        %v9046 = vpop.f32.mrf.mxu0
        %v9047 = vadd.f32 %v9024, %v9046
        %9048 = vmatmul.f32.gmra.mxu0 %v9005
        %v9049 = vpop.f32.mrf.mxu0
        %v9050 = vadd.f32 %v9027, %v9049
        %9051 = vdwg.mxu0
        %v9052 = vperm.slane %v245, 7
        %v9054 = vsel %vm5660, %v9047, 0
        %v9057 = vsel %vm5660, %v9050, 0
        %9059 = vmatpush.msra.mxu0 0.0
        %9060 = vmatpush.msra.mxu0 0.0
        %9061 = vmatpush.msra.mxu0 0.0
        %9062 = vmatpush.msra.mxu0 0.0
        %9063 = vmatpush.msra.mxu0 0.0
        %9064 = vmatpush.msra.mxu0 0.0
        %9065 = vmatpush.msra.mxu0 0.0
        %9066 = vmatpush.msra.mxu0 0.0
        %9067 = vmatpush.msra.mxu0 0.0
        %9068 = vmatpush.msra.mxu0 0.0
        %9069 = vmatpush.msra.mxu0 0.0
        %9070 = vmatpush.msra.mxu0 0.0
        %9071 = vmatpush.msra.mxu0 %v239
        %9072 = vmatpush.msra.mxu0 %v238
        %9073 = vmatpush.msra.mxu0 %v237
        %9074 = vmatpush.msra.mxu0 %v236
        %9075 = vmatmul.f32.gmra.mxu0 %v9054
        %v9076 = vpop.f32.mrf.mxu0
        %v9077 = vadd.f32 %v9052, %v9076
        %9078 = vmatmul.f32.gmra.mxu0 %v9057
        %v9079 = vpop.f32.mrf.mxu0
        %v9080 = vadd.f32 %v9052, %v9079
        %9081 = vdwg.mxu0
        %v9082 = vmax.f32 %v9077, 0.0
        %v9083 = vmax.f32 %v9080, 0.0
        %v9084 = vperm.slane %v246, 0
        %v9086 = vsel %vm5660, %v8948, 0
        %v9089 = vsel %vm5660, %v8949, 0
        %v9092 = vsel %vm5660, %v8950, 0
        %v9095 = vsel %vm5660, %v8951, 0
        %v9098 = vsel %vm5660, %v8952, 0
        %v9101 = vsel %vm5660, %v8953, 0
        %v9104 = vsel %vm5660, %v8954, 0
        %v9107 = vsel %vm5660, %v8955, 0
        %v9110 = vsel %vm5660, %v8956, 0
        %v9113 = vsel %vm5660, %v8957, 0
        %v9116 = vsel %vm5660, %v8958, 0
        %v9119 = vsel %vm5660, %v8959, 0
        %v9122 = vsel %vm5660, %v8960, 0
        %v9125 = vsel %vm5660, %v8961, 0
        %v9128 = vsel %vm5660, %v8962, 0
        %v9131 = vsel %vm5660, %v8963, 0
        %v9134 = vsel %vm5660, %v8964, 0
        %v9137 = vsel %vm5660, %v8965, 0
        %v9140 = vsel %vm5660, %v8966, 0
        %v9143 = vsel %vm5660, %v8967, 0
        %v9146 = vsel %vm5660, %v8968, 0
        %v9149 = vsel %vm5660, %v8969, 0
        %v9152 = vsel %vm5660, %v8970, 0
        %v9155 = vsel %vm5660, %v8971, 0
        %v9158 = vsel %vm5660, %v8972, 0
        %v9161 = vsel %vm5660, %v8973, 0
        %v9164 = vsel %vm5660, %v8974, 0
        %v9167 = vsel %vm5660, %v8975, 0
        %v9170 = vsel %vm5660, %v8976, 0
        %v9173 = vsel %vm5660, %v8977, 0
        %v9176 = vsel %vm5660, %v8978, 0
        %v9179 = vsel %vm5660, %v8979, 0
        %9181 = vmatpush.msra.mxu0 0.0
        %9182 = vmatpush.msra.mxu0 0.0
        %9183 = vmatpush.msra.mxu0 0.0
        %9184 = vmatpush.msra.mxu0 0.0
        %9185 = vmatpush.msra.mxu0 0.0
        %9186 = vmatpush.msra.mxu0 0.0
        %9187 = vmatpush.msra.mxu0 0.0
        %9188 = vmatpush.msra.mxu0 0.0
        %9189 = vmatpush.msra.mxu0 0.0
        %9190 = vmatpush.msra.mxu0 0.0
        %9191 = vmatpush.msra.mxu0 0.0
        %9192 = vmatpush.msra.mxu0 0.0
        %9193 = vmatpush.msra.mxu0 %v244
        %9194 = vmatpush.msra.mxu0 %v243
        %9195 = vmatpush.msra.mxu0 %v242
        %9196 = vmatpush.msra.mxu0 %v241
        %9197 = vmatmul.f32.gmra.mxu0 %v9086
        %v9198 = vpop.f32.mrf.mxu0
        %v9199 = vadd.f32 %v9084, %v9198
        %9200 = vmatmul.f32.gmra.mxu0 %v9089
        %v9201 = vpop.f32.mrf.mxu0
        %v9202 = vadd.f32 %v9084, %v9201
        %9203 = vmatmul.f32.gmra.mxu0 %v9092
        %v9204 = vpop.f32.mrf.mxu0
        %v9205 = vadd.f32 %v9084, %v9204
        %9206 = vmatmul.f32.gmra.mxu0 %v9095
        %v9207 = vpop.f32.mrf.mxu0
        %v9208 = vadd.f32 %v9084, %v9207
        %9209 = vmatmul.f32.gmra.mxu0 %v9098
        %v9210 = vpop.f32.mrf.mxu0
        %v9211 = vadd.f32 %v9084, %v9210
        %9212 = vmatmul.f32.gmra.mxu0 %v9101
        %v9213 = vpop.f32.mrf.mxu0
        %v9214 = vadd.f32 %v9084, %v9213
        %9215 = vmatmul.f32.gmra.mxu0 %v9104
        %v9216 = vpop.f32.mrf.mxu0
        %v9217 = vadd.f32 %v9084, %v9216
        %9218 = vmatmul.f32.gmra.mxu0 %v9107
        %v9219 = vpop.f32.mrf.mxu0
        %v9220 = vadd.f32 %v9084, %v9219
        %9221 = vmatmul.f32.gmra.mxu0 %v9110
        %v9222 = vpop.f32.mrf.mxu0
        %v9223 = vadd.f32 %v9084, %v9222
        %9224 = vmatmul.f32.gmra.mxu0 %v9113
        %v9225 = vpop.f32.mrf.mxu0
        %v9226 = vadd.f32 %v9084, %v9225
        %9227 = vmatmul.f32.gmra.mxu0 %v9116
        %v9228 = vpop.f32.mrf.mxu0
        %v9229 = vadd.f32 %v9084, %v9228
        %9230 = vmatmul.f32.gmra.mxu0 %v9119
        %v9231 = vpop.f32.mrf.mxu0
        %v9232 = vadd.f32 %v9084, %v9231
        %9233 = vmatmul.f32.gmra.mxu0 %v9122
        %v9234 = vpop.f32.mrf.mxu0
        %v9235 = vadd.f32 %v9084, %v9234
        %9236 = vmatmul.f32.gmra.mxu0 %v9125
        %v9237 = vpop.f32.mrf.mxu0
        %v9238 = vadd.f32 %v9084, %v9237
        %9239 = vmatmul.f32.gmra.mxu0 %v9128
        %v9240 = vpop.f32.mrf.mxu0
        %v9241 = vadd.f32 %v9084, %v9240
        %9242 = vmatmul.f32.gmra.mxu0 %v9131
        %v9243 = vpop.f32.mrf.mxu0
        %v9244 = vadd.f32 %v9084, %v9243
        %9245 = vmatmul.f32.gmra.mxu0 %v9134
        %v9246 = vpop.f32.mrf.mxu0
        %v9247 = vadd.f32 %v9084, %v9246
        %9248 = vmatmul.f32.gmra.mxu0 %v9137
        %v9249 = vpop.f32.mrf.mxu0
        %v9250 = vadd.f32 %v9084, %v9249
        %9251 = vmatmul.f32.gmra.mxu0 %v9140
        %v9252 = vpop.f32.mrf.mxu0
        %v9253 = vadd.f32 %v9084, %v9252
        %9254 = vmatmul.f32.gmra.mxu0 %v9143
        %v9255 = vpop.f32.mrf.mxu0
        %v9256 = vadd.f32 %v9084, %v9255
        %9257 = vmatmul.f32.gmra.mxu0 %v9146
        %v9258 = vpop.f32.mrf.mxu0
        %v9259 = vadd.f32 %v9084, %v9258
        %9260 = vmatmul.f32.gmra.mxu0 %v9149
        %v9261 = vpop.f32.mrf.mxu0
        %v9262 = vadd.f32 %v9084, %v9261
        %9263 = vmatmul.f32.gmra.mxu0 %v9152
        %v9264 = vpop.f32.mrf.mxu0
        %v9265 = vadd.f32 %v9084, %v9264
        %9266 = vmatmul.f32.gmra.mxu0 %v9155
        %v9267 = vpop.f32.mrf.mxu0
        %v9268 = vadd.f32 %v9084, %v9267
        %9269 = vmatmul.f32.gmra.mxu0 %v9158
        %v9270 = vpop.f32.mrf.mxu0
        %v9271 = vadd.f32 %v9084, %v9270
        %9272 = vmatmul.f32.gmra.mxu0 %v9161
        %v9273 = vpop.f32.mrf.mxu0
        %v9274 = vadd.f32 %v9084, %v9273
        %9275 = vmatmul.f32.gmra.mxu0 %v9164
        %v9276 = vpop.f32.mrf.mxu0
        %v9277 = vadd.f32 %v9084, %v9276
        %9278 = vmatmul.f32.gmra.mxu0 %v9167
        %v9279 = vpop.f32.mrf.mxu0
        %v9280 = vadd.f32 %v9084, %v9279
        %9281 = vmatmul.f32.gmra.mxu0 %v9170
        %v9282 = vpop.f32.mrf.mxu0
        %v9283 = vadd.f32 %v9084, %v9282
        %9284 = vmatmul.f32.gmra.mxu0 %v9173
        %v9285 = vpop.f32.mrf.mxu0
        %v9286 = vadd.f32 %v9084, %v9285
        %9287 = vmatmul.f32.gmra.mxu0 %v9176
        %v9288 = vpop.f32.mrf.mxu0
        %v9289 = vadd.f32 %v9084, %v9288
        %9290 = vmatmul.f32.gmra.mxu0 %v9179
        %v9291 = vpop.f32.mrf.mxu0
        %v9292 = vadd.f32 %v9084, %v9291
        %9293 = vdwg.mxu0
        %v9294 = vmax.f32 %v9199, 0.0
        %v9295 = vmax.f32 %v9202, 0.0
        %v9296 = vmax.f32 %v9205, 0.0
        %v9297 = vmax.f32 %v9208, 0.0
        %v9298 = vmax.f32 %v9211, 0.0
        %v9299 = vmax.f32 %v9214, 0.0
        %v9300 = vmax.f32 %v9217, 0.0
        %v9301 = vmax.f32 %v9220, 0.0
        %v9302 = vmax.f32 %v9223, 0.0
        %v9303 = vmax.f32 %v9226, 0.0
        %v9304 = vmax.f32 %v9229, 0.0
        %v9305 = vmax.f32 %v9232, 0.0
        %v9306 = vmax.f32 %v9235, 0.0
        %v9307 = vmax.f32 %v9238, 0.0
        %v9308 = vmax.f32 %v9241, 0.0
        %v9309 = vmax.f32 %v9244, 0.0
        %v9310 = vmax.f32 %v9247, 0.0
        %v9311 = vmax.f32 %v9250, 0.0
        %v9312 = vmax.f32 %v9253, 0.0
        %v9313 = vmax.f32 %v9256, 0.0
        %v9314 = vmax.f32 %v9259, 0.0
        %v9315 = vmax.f32 %v9262, 0.0
        %v9316 = vmax.f32 %v9265, 0.0
        %v9317 = vmax.f32 %v9268, 0.0
        %v9318 = vmax.f32 %v9271, 0.0
        %v9319 = vmax.f32 %v9274, 0.0
        %v9320 = vmax.f32 %v9277, 0.0
        %v9321 = vmax.f32 %v9280, 0.0
        %v9322 = vmax.f32 %v9283, 0.0
        %v9323 = vmax.f32 %v9286, 0.0
        %v9324 = vmax.f32 %v9289, 0.0
        %v9325 = vmax.f32 %v9292, 0.0
        %v9327 = vrot.slane %v246, 1
        %v9328 = vsel %vm5660, %v9327, 0
        %v9331 = vsel %vm5660, %v9082, 0
        %v9334 = vsel %vm5660, %v9083, 0
        %9336 = vmatpush.xpose.msra.mxu0 0.0
        %9337 = vmatpush.xpose.msra.mxu0 0.0
        %9338 = vmatpush.xpose.msra.mxu0 0.0
        %9339 = vmatpush.xpose.msra.mxu0 0.0
        %9340 = vmatpush.xpose.msra.mxu0 0.0
        %9341 = vmatpush.xpose.msra.mxu0 0.0
        %9342 = vmatpush.xpose.msra.mxu0 0.0
        %9343 = vmatpush.xpose.msra.mxu0 0.0
        %9344 = vmatpush.xpose.msra.mxu0 0.0
        %9345 = vmatpush.xpose.msra.mxu0 0.0
        %9346 = vmatpush.xpose.msra.mxu0 0.0
        %9347 = vmatpush.xpose.msra.mxu0 0.0
        %9348 = vmatpush.xpose.msra.mxu0 0.0
        %9349 = vmatpush.xpose.msra.mxu0 0.0
        %9350 = vmatpush.xpose.msra.mxu0 %v9334
        %9351 = vmatpush.xpose.msra.mxu0 %v9331
        %9352 = vmatmul.f32.gmra.mxu0 %v9328
        %v9353 = vpop.f32.mrf.mxu0
        %v9354 = vadd.f32 0.0, %v9353
        %9355 = vdwg.mxu0
        %v9356 = vrot.slane %v246, 2
        %v9357 = vsel %vm5660, %v9356, 0
        %v9360 = vsel %vm5660, %v9294, 0
        %v9363 = vsel %vm5660, %v9295, 0
        %v9366 = vsel %vm5660, %v9296, 0
        %v9369 = vsel %vm5660, %v9297, 0
        %v9372 = vsel %vm5660, %v9298, 0
        %v9375 = vsel %vm5660, %v9299, 0
        %v9378 = vsel %vm5660, %v9300, 0
        %v9381 = vsel %vm5660, %v9301, 0
        %v9384 = vsel %vm5660, %v9302, 0
        %v9387 = vsel %vm5660, %v9303, 0
        %v9390 = vsel %vm5660, %v9304, 0
        %v9393 = vsel %vm5660, %v9305, 0
        %v9396 = vsel %vm5660, %v9306, 0
        %v9399 = vsel %vm5660, %v9307, 0
        %v9402 = vsel %vm5660, %v9308, 0
        %v9405 = vsel %vm5660, %v9309, 0
        %v9408 = vsel %vm5660, %v9310, 0
        %v9411 = vsel %vm5660, %v9311, 0
        %v9414 = vsel %vm5660, %v9312, 0
        %v9417 = vsel %vm5660, %v9313, 0
        %v9420 = vsel %vm5660, %v9314, 0
        %v9423 = vsel %vm5660, %v9315, 0
        %v9426 = vsel %vm5660, %v9316, 0
        %v9429 = vsel %vm5660, %v9317, 0
        %v9432 = vsel %vm5660, %v9318, 0
        %v9435 = vsel %vm5660, %v9319, 0
        %v9438 = vsel %vm5660, %v9320, 0
        %v9441 = vsel %vm5660, %v9321, 0
        %v9444 = vsel %vm5660, %v9322, 0
        %v9447 = vsel %vm5660, %v9323, 0
        %v9450 = vsel %vm5660, %v9324, 0
        %v9453 = vsel %vm5660, %v9325, 0
        %9455 = vmatpush.xpose.msra.mxu0 %v9405
        %9456 = vmatpush.xpose.msra.mxu0 %v9402
        %9457 = vmatpush.xpose.msra.mxu0 %v9399
        %9458 = vmatpush.xpose.msra.mxu0 %v9396
        %9459 = vmatpush.xpose.msra.mxu0 %v9393
        %9460 = vmatpush.xpose.msra.mxu0 %v9390
        %9461 = vmatpush.xpose.msra.mxu0 %v9387
        %9462 = vmatpush.xpose.msra.mxu0 %v9384
        %9463 = vmatpush.xpose.msra.mxu0 %v9381
        %9464 = vmatpush.xpose.msra.mxu0 %v9378
        %9465 = vmatpush.xpose.msra.mxu0 %v9375
        %9466 = vmatpush.xpose.msra.mxu0 %v9372
        %9467 = vmatpush.xpose.msra.mxu0 %v9369
        %9468 = vmatpush.xpose.msra.mxu0 %v9366
        %9469 = vmatpush.xpose.msra.mxu0 %v9363
        %9470 = vmatpush.xpose.msra.mxu0 %v9360
        %9471 = vmatmul.f32.gmra.mxu0 %v9357
        %v9472 = vpop.f32.mrf.mxu0
        %v9473 = vadd.f32 0.0, %v9472
        %9474 = vdwg.mxu0
        %9475 = vmatpush.xpose.msra.mxu0 %v9453
        %9476 = vmatpush.xpose.msra.mxu0 %v9450
        %9477 = vmatpush.xpose.msra.mxu0 %v9447
        %9478 = vmatpush.xpose.msra.mxu0 %v9444
        %9479 = vmatpush.xpose.msra.mxu0 %v9441
        %9480 = vmatpush.xpose.msra.mxu0 %v9438
        %9481 = vmatpush.xpose.msra.mxu0 %v9435
        %9482 = vmatpush.xpose.msra.mxu0 %v9432
        %9483 = vmatpush.xpose.msra.mxu0 %v9429
        %9484 = vmatpush.xpose.msra.mxu0 %v9426
        %9485 = vmatpush.xpose.msra.mxu0 %v9423
        %9486 = vmatpush.xpose.msra.mxu0 %v9420
        %9487 = vmatpush.xpose.msra.mxu0 %v9417
        %9488 = vmatpush.xpose.msra.mxu0 %v9414
        %9489 = vmatpush.xpose.msra.mxu0 %v9411
        %9490 = vmatpush.xpose.msra.mxu0 %v9408
        %9491 = vmatmul.f32.gmra.mxu0 %v9357
        %v9492 = vpop.f32.mrf.mxu0
        %v9493 = vadd.f32 0.0, %v9492
        %9494 = vdwg.mxu0
        %v9496 = vsel %vm6960, %v9354, 0
        %9498 = vmatpush.msra.mxu0 0.0
        %9499 = vmatpush.msra.mxu0 0.0
        %9500 = vmatpush.msra.mxu0 0.0
        %9501 = vmatpush.msra.mxu0 0.0
        %9502 = vmatpush.msra.mxu0 0.0
        %9503 = vmatpush.msra.mxu0 0.0
        %9504 = vmatpush.msra.mxu0 0.0
        %9505 = vmatpush.msra.mxu0 0.0
        %9506 = vmatpush.msra.mxu0 0.0
        %9507 = vmatpush.msra.mxu0 0.0
        %9508 = vmatpush.msra.mxu0 0.0
        %9509 = vmatpush.msra.mxu0 0.0
        %9510 = vmatpush.msra.mxu0 0.0
        %9511 = vmatpush.msra.mxu0 0.0
        %9512 = vmatpush.msra.mxu0 %v9004
        %9513 = vmatpush.msra.mxu0 %v9002
        %9514 = vmatmul.f32.gmra.mxu0 %v9496
        %v9515 = vpop.f32.mrf.mxu0
        %v9516 = vadd.f32 %v9473, %v9515
        %9517 = vdwg.mxu0
        %9518 = vmatpush.msra.mxu0 0.0
        %9519 = vmatpush.msra.mxu0 0.0
        %9520 = vmatpush.msra.mxu0 0.0
        %9521 = vmatpush.msra.mxu0 0.0
        %9522 = vmatpush.msra.mxu0 0.0
        %9523 = vmatpush.msra.mxu0 0.0
        %9524 = vmatpush.msra.mxu0 0.0
        %9525 = vmatpush.msra.mxu0 0.0
        %9526 = vmatpush.msra.mxu0 0.0
        %9527 = vmatpush.msra.mxu0 0.0
        %9528 = vmatpush.msra.mxu0 0.0
        %9529 = vmatpush.msra.mxu0 0.0
        %9530 = vmatpush.msra.mxu0 0.0
        %9531 = vmatpush.msra.mxu0 0.0
        %9532 = vmatpush.msra.mxu0 %v9005
        %9533 = vmatpush.msra.mxu0 %v9003
        %9534 = vmatmul.f32.gmra.mxu0 %v9496
        %v9535 = vpop.f32.mrf.mxu0
        %v9536 = vadd.f32 %v9493, %v9535
        %9537 = vdwg.mxu0
        %9538 = vset.pattern.permute.xlu0 0
        %9539 = vperm.xlu0 %9538, %v246
        %v9540 = vpop.permute.xlu0 %9539
        %v9541 = vrot.slane %v9540, 3
        %v9543 = vadd.f32 %v9516, %v9541
        %v9544 = vadd.f32 %v9536, %v9541
        %v9547 = vrot.slane %v9544, 7
        %vm9548 = vcmask 1040384
        %v9549 = vsel %vm9548, %v9543, %v9547
        %v9551 = vlaneseq
        %vm9552 = vcmp.ge.s32.totalorder %v9551, 0
        %vm9553 = vcmp.lt.s32.totalorder %v9551, 256
        %vm9554 = vmand %vm9552, %vm9553
        %9555 = vst.msk [vmem:[%s211] sm:$0x3] %vm9554, %v9549
        %s9556 = sand.u32 %s120, 1
        %s9557 = scalar_lea.sflag [#allocation3], %s9556
        %s9558 = sand.u32 %s120, 1
        %s9559 = smul.addr %s9558, 2
        %s9560 = scalar_lea.vmem [#allocation2], %s9559
        // Predicated region
        $region37: #{tpu_custom_call.1} parent=35 // pred_check
          %p9561 = pneg %p130
        $region38: #{tpu_custom_call.1} parent=35 // pred_check_branch
          %9563 = sbr.rel (%p9561) target = $region40
        $region39: #{tpu_custom_call.1} parent=35 // pred_region
          %9565 = vsyncadd %s9557, 0
          %s9566 = smul.addr %s18, 2
          %s9567 = scalar_lea.hbm %s4, %s9566
          %s9569 = sshll.u32 %s9560, 4
          %s9570 = int_to_ptr.vmem [resolvable:$true] %s9569
          %s9571 = sshll.u32 %s9567, 4
          %s9572 = int_to_ptr.hbm [resolvable:$true] %s9571
          %9574 = dma.vmem_to_hbm [thread:$0]  %s9570, 32, %s9572, %s9557
        $region40: #{tpu_custom_call.1} parent=35 // pred_fallthru
          _
      $region36: #{tpu_custom_call.1} parent=5 // pred_fallthru
        _
      %p9575 = scmp.le.s32.totalorder 2, %s13
      // Predicated region
      $region41: #{tpu_custom_call.1} parent=5 // pred_check
        %p9576 = pneg %p9575
      $region42: #{tpu_custom_call.1} parent=5 // pred_check_branch
        %9578 = sbr.rel (%p9576) target = $region44
      $region43: #{tpu_custom_call.1} parent=5 // pred_region
        %s9579 = ssub.s32 %s13, 2
        // Predicated region
        $region45: #{tpu_custom_call.1} parent=43 // pred_check
          %p9580 = pneg %p136
        $region46: #{tpu_custom_call.1} parent=43 // pred_check_branch
          %9582 = sbr.rel (%p9580) target = $region48
        $region47: #{tpu_custom_call.1} parent=43 // pred_region
          %s9583 = sand.u32 %s121, 1
          %s9584 = scalar_lea.sflag [#allocation3], %s9583
          %s9585 = sand.u32 %s121, 1
          %s9586 = smul.addr %s9585, 2
          %s9587 = scalar_lea.vmem [#allocation2], %s9586
          %9589 = dma.done %s9584, 32
        $region48: #{tpu_custom_call.1} parent=43 // pred_fallthru
          _
      $region44: #{tpu_custom_call.1} parent=5 // pred_fallthru
        _
    $region6: #{tpu_custom_call.1} parent=1 // loop_footer
      %s17 = sadd.s32 1, %s13
    $region7: #{tpu_custom_call.1} parent=1 // loop_footer_branch
      %12 = sbr.rel target = $region3
    $region8: #{tpu_custom_call.1} parent=1 // loop_exit
      _
    %9590 = vsyncpa [#allocation3], 1
    %s9591 = scalar_lea.sflag [#allocation3], 1
    %9592 = vsyncpa %s9591, 1

</llo_original>
